<compile_context>
chip_gen: v7x
topology: tpu7x:2x2x1
jax: 0.10.0
libtpu: 0.0.40
codegen_flags: <defaults>
</compile_context>

<pallas_src>
import jax
import jax.numpy as jnp
import numpy as np
from jax.experimental import pallas as pl
from jax.experimental.pallas import tpu as pltpu

EPS = 1e-5
LANE = 128


def _round_up(x, m):
    return (x + m - 1) // m * m


# ---------------------------------------------------------------------------
# Fused Pallas kernel: (conv3x3 + BN + ReLU) x 2 for one image
# ---------------------------------------------------------------------------
def _fused_conv_block_kernel(x_ref, w1_ref, b1_ref, w2_ref, b2_ref, o_ref,
                             acc_ref, h1_ref):
    # x_ref : (H+2, Wp2, C1p) bf16  padded input (1-px halo, width padded to Wp2)
    # w1_ref: (9, C1p, C2p)   bf16  conv1 weights with BN1 scale folded in
    # b1_ref: (1, C2p)        f32   BN1 shift (incl. conv bias)
    # w2_ref: (9, C2p, C2p)   bf16  conv2 weights with BN2 scale folded in
    # b2_ref: (1, C2p)        f32   BN2 shift (incl. conv bias)
    # o_ref : (H, W, C2p)     bf16  output image
    # acc_ref: (H*Wp2, C2p)   f32   VMEM accumulator (shared by both convs)
    # h1_ref : (H+2, Wp2, C2p) bf16 VMEM padded intermediate activation
    H, W, C2p = o_ref.shape
    _, Wp2, C1p = x_ref.shape
    L = H * Wp2

    # ---- conv1 (+ folded BN1 scale): 9 full-width-strip MXU dots ------------
    # Leading-axis (row) slices are contiguous -> no relayout feeding the MXU;
    # the dx shift is applied to the f32 result via pltpu.roll (XLU slot).
    # conv1 accumulates directly in "padded-column" coordinates (shift 1 - dx)
    # so the intermediate can be stored into h1_ref without a column shift.
    for dy in range(3):
        strip = x_ref[dy:dy + H, :, :].reshape(L, C1p)
        for dx in range(3):
            k = dy * 3 + dx
            full = jnp.dot(strip, w1_ref[k], preferred_element_type=jnp.float32)
            shift = (1 - dx) % L
            if shift:
                full = pltpu.roll(full, shift, 0)
            if k == 0:
                acc_ref[...] = full
            else:
                acc_ref[...] += full

    # ---- BN1 shift + ReLU; stage intermediate in VMEM only ------------------
    h1 = jnp.maximum(acc_ref[...] + b1_ref[...], 0.0).reshape(H, Wp2, C2p)
    col = jax.lax.broadcasted_iota(jnp.int32, (1, Wp2, 1), 1)
    h1 = jnp.where((col >= 1) & (col <= W), h1, 0.0)   # zero left/right halo cols
    h1_ref[1:H + 1, :, :] = h1.astype(h1_ref.dtype)
    # Zero only the top/bottom halo rows, every step (2*Wp2*C2p bf16 — cheap),
    # so correctness does not depend on which TensorCore ran grid step 0.
    zero_row = jnp.zeros((1, Wp2, C2p), h1_ref.dtype)
    h1_ref[0:1, :, :] = zero_row
    h1_ref[H + 1:H + 2, :, :] = zero_row

    # ---- conv2 (+ folded BN2 scale) -----------------------------------------
    # Accumulates in output-column coordinates (shift -dx) so the final store
    # is an aligned [:, :W] slice (no end-of-kernel shuffle).
    for dy in range(3):
        strip = h1_ref[dy:dy + H, :, :].reshape(L, C2p)
        for dx in range(3):
            k = dy * 3 + dx
            full = jnp.dot(strip, w2_ref[k], preferred_element_type=jnp.float32)
            shift = (-dx) % L
            if shift:
                full = pltpu.roll(full, shift, 0)
            if k == 0:
                acc_ref[...] = full
            else:
                acc_ref[...] += full

    # ---- BN2 shift + ReLU; lane-dense bf16 store -----------------------------
    out = jnp.maximum(acc_ref[...] + b2_ref[...], 0.0).reshape(H, Wp2, C2p)
    o_ref[...] = out[:, :W, :].astype(o_ref.dtype)


# ---------------------------------------------------------------------------
# pallas_call wrapper
# ---------------------------------------------------------------------------
def _const_spec(block_shape):
    """BlockSpec for a grid-constant operand; single-buffered when supported."""
    index_map = lambda *args: (0,) * len(block_shape)
    try:
        return pl.BlockSpec(block_shape, index_map, pipeline_mode=pl.Buffered(1))
    except Exception:  # older jax without pipeline_mode / Buffered
        return pl.BlockSpec(block_shape, index_map)


def _vmem_capacity_bytes():
    try:
        cap = int(pltpu.get_tpu_info().vmem_capacity_bytes)
        if cap > 0:
            return cap
    except Exception:
        pass
    return 128 * 1024 * 1024


def _vmem_bytes_estimate(H, W, Wp2, C1p, C2p):
    bf16, f32 = 2, 4
    x_blk = (H + 2) * Wp2 * C1p * bf16
    o_blk = H * W * C2p * bf16
    w_blks = 9 * (C1p + C2p) * C2p * bf16 + 2 * C2p * f32   # single-buffered
    scratch = H * Wp2 * C2p * f32 + (H + 2) * Wp2 * C2p * bf16
    return 2 * (x_blk + o_blk) + w_blks + scratch            # streamed blocks x2


def fused_conv_block_pallas(xp, w1, b1, w2, b2, N, H, W):
    """xp: (N*(H+2), Wp2, C1p) bf16; w*: (9, Cin_p, Cout_p) bf16; b*: (1, Cout_p) f32."""
    Wp2, C1p = xp.shape[1], xp.shape[2]
    C2p = w1.shape[-1]

    cap = _vmem_capacity_bytes()                 # ~128 MiB v5e/v6e, ~64 MiB v7x
    est = _vmem_bytes_estimate(H, W, Wp2, C1p, C2p)
    vmem_limit = int(min(int(cap * 0.75), max(2 * est, 16 * 1024 * 1024)))

    return pl.pallas_call(
        _fused_conv_block_kernel,
        out_shape=jax.ShapeDtypeStruct((N * H, W, C2p), jnp.bfloat16),
        grid_spec=pltpu.PrefetchScalarGridSpec(
            num_scalar_prefetch=0,
            grid=(N,),
            in_specs=[
                pl.BlockSpec((H + 2, Wp2, C1p), lambda n: (n, 0, 0)),
                _const_spec((9, C1p, C2p)),
                _const_spec((1, C2p)),
                _const_spec((9, C2p, C2p)),
                _const_spec((1, C2p)),
            ],
            out_specs=pl.BlockSpec((H, W, C2p), lambda n: (n, 0, 0)),
            scratch_shapes=[
                pltpu.VMEM((H * Wp2, C2p), jnp.float32),       # shared accumulator
                pltpu.VMEM((H + 2, Wp2, C2p), jnp.bfloat16),   # padded intermediate
            ],
        ),
        compiler_params=pltpu.CompilerParams(
            dimension_semantics=("parallel",),
            vmem_limit_bytes=vmem_limit,
        ),
    )(xp, w1, b1, w2, b2)


# ---------------------------------------------------------------------------
# Parameter preparation (plain JAX, runs once per call under jit)
# ---------------------------------------------------------------------------
def fold_bn(bias, gamma, beta, running_mean, running_var):
    """Fold conv bias + eval-mode BatchNorm into per-channel (scale, shift)."""
    scale = gamma / jnp.sqrt(running_var + EPS)
    shift = (bias - running_mean) * scale + beta
    return scale, shift


def _prep_weight(w_hwio, scale, cin_p, cout_p):
    """HWIO weight -> (9, cin_p, cout_p) bf16 with BN scale folded in."""
    cin, cout = w_hwio.shape[2], w_hwio.shape[3]
    w = w_hwio * scale[None, None, None, :]
    w = jnp.pad(w, ((0, 0), (0, 0), (0, cin_p - cin), (0, cout_p - cout)))
    return w.reshape(9, cin_p, cout_p).astype(jnp.bfloat16)


def _prep_shift(shift, cout_p):
    cout = shift.shape[0]
    return jnp.pad(shift, (0, cout_p - cout)).reshape(1, cout_p).astype(jnp.float32)


# ---------------------------------------------------------------------------
# conv_block forward (matches the PyTorch module, eval-mode BN)
# ---------------------------------------------------------------------------
@jax.jit
def conv_block_forward(x_nchw, params):
    N, Cin, H, W = x_nchw.shape
    Cout = params["w1"].shape[-1]
    C1p = _round_up(Cin, LANE)
    C2p = _round_up(Cout, LANE)
    Wp2 = _round_up(W + 2, 8)          # width (incl. halo) padded to sublane mult.

    s1, t1 = fold_bn(params["b1"], params["g1"], params["beta1"],
                     params["rm1"], params["rv1"])
    s2, t2 = fold_bn(params["b2"], params["g2"], params["beta2"],
                     params["rm2"], params["rv2"])
    w1 = _prep_weight(params["w1"], s1, C1p, C2p)
    w2 = _prep_weight(params["w2"], s2, C2p, C2p)
    b1 = _prep_shift(t1, C2p)
    b2 = _prep_shift(t2, C2p)

    # Cast to bf16 BEFORE transpose/pad (halves wrapper HBM traffic), then one
    # combined pad: 1-px spatial halo, right pad to Wp2, channel pad to C1p.
    x = jnp.transpose(x_nchw.astype(jnp.bfloat16), (0, 2, 3, 1))   # NCHW -> NHWC
    xp = jnp.pad(x, ((0, 0), (1, 1), (1, Wp2 - W - 1), (0, C1p - Cin)))
    xp = xp.reshape(N * (H + 2), Wp2, C1p)

    out = fused_conv_block_pallas(xp, w1, b1, w2, b2, N, H, W)     # (N*H, W, C2p) bf16
    out = out.reshape(N, H, W, C2p)[:, :, :, :Cout].astype(jnp.float32)
    return jnp.transpose(out, (0, 3, 1, 2))                        # NHWC -> NCHW


# ---------------------------------------------------------------------------
# Pure-JAX reference (lax.conv, f32) for correctness checking
# ---------------------------------------------------------------------------
def reference_forward(x_nchw, params):
    def conv(x, w_hwio, b):
        w_oihw = jnp.transpose(w_hwio, (3, 2, 0, 1))
        y = jax.lax.conv_general_dilated(
            x, w_oihw, window_strides=(1, 1), padding=((1, 1), (1, 1)),
            dimension_numbers=("NCHW", "OIHW", "NCHW"))
        return y + b.reshape(1, -1, 1, 1)

    def bn(y, g, bta, rm, rv):
        g, bta, rm, rv = (t.reshape(1, -1, 1, 1) for t in (g, bta, rm, rv))
        return (y - rm) / jnp.sqrt(rv + EPS) * g + bta

    y = conv(x_nchw, params["w1"], params["b1"])
    y = jnp.maximum(bn(y, params["g1"], params["beta1"], params["rm1"], params["rv1"]), 0.0)
    y = conv(y, params["w2"], params["b2"])
    y = jnp.maximum(bn(y, params["g2"], params["beta2"], params["rm2"], params["rv2"]), 0.0)
    return y


# ---------------------------------------------------------------------------
def make_params(key, cin, cout):
    ks = jax.random.split(key, 12)
    std1 = (2.0 / (9 * cin)) ** 0.5
    std2 = (2.0 / (9 * cout)) ** 0.5
    return {
        "w1": jax.random.normal(ks[0], (3, 3, cin, cout), jnp.float32) * std1,
        "b1": jax.random.normal(ks[1], (cout,), jnp.float32) * 0.1,
        "g1": 1.0 + 0.1 * jax.random.normal(ks[2], (cout,), jnp.float32),
        "beta1": 0.1 * jax.random.normal(ks[3], (cout,), jnp.float32),
        "rm1": 0.1 * jax.random.normal(ks[4], (cout,), jnp.float32),
        "rv1": jax.random.uniform(ks[5], (cout,), jnp.float32, 0.5, 1.5),
        "w2": jax.random.normal(ks[6], (3, 3, cout, cout), jnp.float32) * std2,
        "b2": jax.random.normal(ks[7], (cout,), jnp.float32) * 0.1,
        "g2": 1.0 + 0.1 * jax.random.normal(ks[8], (cout,), jnp.float32),
        "beta2": 0.1 * jax.random.normal(ks[9], (cout,), jnp.float32),
        "rm2": 0.1 * jax.random.normal(ks[10], (cout,), jnp.float32),
        "rv2": jax.random.uniform(ks[11], (cout,), jnp.float32, 0.5, 1.5),
    }


if __name__ == "__main__":
    key = jax.random.PRNGKey(0)
    k_x, k_p = jax.random.split(key)

    N, Cin, H, W = 2, 4, 16, 16
    Cout = 8

    x = jax.random.normal(k_x, (N, Cin, H, W), jnp.float32)       # NCHW, like PyTorch
    params = make_params(k_p, Cin, Cout)

    out = jax.block_until_ready(conv_block_forward(x, params))
    ref = jax.block_until_ready(reference_forward(x, params))

    assert out.shape == (N, Cout, H, W), out.shape
    # bf16 activations/weights/output with f32 accumulation vs f32 lax.conv
    # reference across two chained convs -> loosened tolerances.
    np.testing.assert_allclose(np.asarray(out), np.asarray(ref), rtol=5e-2, atol=1e-1)

    print("KERNEL_OK")
</pallas_src>

<mosaic_0001>
module attributes {stable_mosaic.version = 11 : i64} {
  func.func @_fused_conv_block_kernel(%arg0: i32, %arg1: memref<18x24x128xbf16, #tpu.memory_space<vmem>>, %arg2: memref<9x128x128xbf16, #tpu.memory_space<vmem>>, %arg3: memref<1x128xf32, #tpu.memory_space<vmem>>, %arg4: memref<9x128x128xbf16, #tpu.memory_space<vmem>>, %arg5: memref<1x128xf32, #tpu.memory_space<vmem>>, %arg6: memref<16x16x128xbf16, #tpu.memory_space<vmem>>, %arg7: memref<384x128xf32, #tpu.memory_space<vmem>>, %arg8: memref<18x24x128xbf16, #tpu.memory_space<vmem>>) attributes {dimension_semantics = [#tpu.dimension_semantics<parallel>], iteration_bounds = array<i64: 2>, scalar_prefetch = 0 : i64, scratch_operands = 2 : i64, tpu.core_type = #tpu.core_type<tc>, window_params = [{transform_indices = @transform_0, window_bounds = array<i64: 18, 24, 128>}, {pipeline_mode = #tpu.pipeline_mode<synchronous>, transform_indices = @transform_1, window_bounds = array<i64: 9, 128, 128>}, {pipeline_mode = #tpu.pipeline_mode<synchronous>, transform_indices = @transform_2, window_bounds = array<i64: 1, 128>}, {pipeline_mode = #tpu.pipeline_mode<synchronous>, transform_indices = @transform_3, window_bounds = array<i64: 9, 128, 128>}, {pipeline_mode = #tpu.pipeline_mode<synchronous>, transform_indices = @transform_4, window_bounds = array<i64: 1, 128>}, {transform_indices = @transform_5, window_bounds = array<i64: 16, 16, 128>}]} {
    %c0 = arith.constant 0 : index
    %c0_0 = arith.constant 0 : index
    %c0_1 = arith.constant 0 : index
    %0 = vector.load %arg1[%c0, %c0_0, %c0_1] : memref<18x24x128xbf16, #tpu.memory_space<vmem>>, vector<16x24x128xbf16>
    %1 = vector.shape_cast %0 : vector<16x24x128xbf16> to vector<384x128xbf16>
    %c0_2 = arith.constant 0 : index
    %c0_3 = arith.constant 0 : index
    %c0_4 = arith.constant 0 : index
    %2 = vector.load %arg2[%c0_2, %c0_3, %c0_4] : memref<9x128x128xbf16, #tpu.memory_space<vmem>>, vector<1x128x128xbf16>
    %3 = vector.shape_cast %2 : vector<1x128x128xbf16> to vector<128x128xbf16>
    %cst = arith.constant dense<0.000000e+00> : vector<384x128xf32>
    %4 = tpu.matmul %1, %3, %cst {dimension_numbers = #tpu.dot_dimension_numbers<[1], [0], [0], [1], [0, 0, 1, 1], [], []>} : vector<384x128xbf16>, vector<128x128xbf16>, vector<384x128xf32> -> vector<384x128xf32>
    %c1_i32 = arith.constant 1 : i32
    %5 = tpu.dynamic_rotate %4 by %c1_i32 dim 0 : vector<384x128xf32>, i32 -> vector<384x128xf32>
    %c0_5 = arith.constant 0 : index
    %c0_6 = arith.constant 0 : index
    %6 = vector.load %arg7[%c0_5, %c0_6] : memref<384x128xf32, #tpu.memory_space<vmem>>, vector<384x128xf32>
    tpu.vector_store %arg7[%c0_5, %c0_6], %5 {strides = array<i32>} : memref<384x128xf32, #tpu.memory_space<vmem>>, vector<384x128xf32>,
    %c1 = arith.constant 1 : index
    %c0_7 = arith.constant 0 : index
    %c0_8 = arith.constant 0 : index
    %7 = vector.load %arg2[%c1, %c0_7, %c0_8] : memref<9x128x128xbf16, #tpu.memory_space<vmem>>, vector<1x128x128xbf16>
    %8 = vector.shape_cast %7 : vector<1x128x128xbf16> to vector<128x128xbf16>
    %cst_9 = arith.constant dense<0.000000e+00> : vector<384x128xf32>
    %9 = tpu.matmul %1, %8, %cst_9 {dimension_numbers = #tpu.dot_dimension_numbers<[1], [0], [0], [1], [0, 0, 1, 1], [], []>} : vector<384x128xbf16>, vector<128x128xbf16>, vector<384x128xf32> -> vector<384x128xf32>
    %c0_10 = arith.constant 0 : index
    %c0_11 = arith.constant 0 : index
    %10 = vector.load %arg7[%c0_10, %c0_11] : memref<384x128xf32, #tpu.memory_space<vmem>>, vector<384x128xf32>
    %11 = arith.addf %10, %9 : vector<384x128xf32>
    %c0_12 = arith.constant 0 : index
    %c0_13 = arith.constant 0 : index
    %12 = vector.load %arg7[%c0_12, %c0_13] : memref<384x128xf32, #tpu.memory_space<vmem>>, vector<384x128xf32>
    tpu.vector_store %arg7[%c0_12, %c0_13], %11 {strides = array<i32>} : memref<384x128xf32, #tpu.memory_space<vmem>>, vector<384x128xf32>,
    %c2 = arith.constant 2 : index
    %c0_14 = arith.constant 0 : index
    %c0_15 = arith.constant 0 : index
    %13 = vector.load %arg2[%c2, %c0_14, %c0_15] : memref<9x128x128xbf16, #tpu.memory_space<vmem>>, vector<1x128x128xbf16>
    %14 = vector.shape_cast %13 : vector<1x128x128xbf16> to vector<128x128xbf16>
    %cst_16 = arith.constant dense<0.000000e+00> : vector<384x128xf32>
    %15 = tpu.matmul %1, %14, %cst_16 {dimension_numbers = #tpu.dot_dimension_numbers<[1], [0], [0], [1], [0, 0, 1, 1], [], []>} : vector<384x128xbf16>, vector<128x128xbf16>, vector<384x128xf32> -> vector<384x128xf32>
    %c383_i32 = arith.constant 383 : i32
    %16 = tpu.dynamic_rotate %15 by %c383_i32 dim 0 : vector<384x128xf32>, i32 -> vector<384x128xf32>
    %c0_17 = arith.constant 0 : index
    %c0_18 = arith.constant 0 : index
    %17 = vector.load %arg7[%c0_17, %c0_18] : memref<384x128xf32, #tpu.memory_space<vmem>>, vector<384x128xf32>
    %18 = arith.addf %17, %16 : vector<384x128xf32>
    %c0_19 = arith.constant 0 : index
    %c0_20 = arith.constant 0 : index
    %19 = vector.load %arg7[%c0_19, %c0_20] : memref<384x128xf32, #tpu.memory_space<vmem>>, vector<384x128xf32>
    tpu.vector_store %arg7[%c0_19, %c0_20], %18 {strides = array<i32>} : memref<384x128xf32, #tpu.memory_space<vmem>>, vector<384x128xf32>,
    %c1_21 = arith.constant 1 : index
    %c0_22 = arith.constant 0 : index
    %c0_23 = arith.constant 0 : index
    %20 = vector.load %arg1[%c1_21, %c0_22, %c0_23] : memref<18x24x128xbf16, #tpu.memory_space<vmem>>, vector<16x24x128xbf16>
    %21 = vector.shape_cast %20 : vector<16x24x128xbf16> to vector<384x128xbf16>
    %c3 = arith.constant 3 : index
    %c0_24 = arith.constant 0 : index
    %c0_25 = arith.constant 0 : index
    %22 = vector.load %arg2[%c3, %c0_24, %c0_25] : memref<9x128x128xbf16, #tpu.memory_space<vmem>>, vector<1x128x128xbf16>
    %23 = vector.shape_cast %22 : vector<1x128x128xbf16> to vector<128x128xbf16>
    %cst_26 = arith.constant dense<0.000000e+00> : vector<384x128xf32>
    %24 = tpu.matmul %21, %23, %cst_26 {dimension_numbers = #tpu.dot_dimension_numbers<[1], [0], [0], [1], [0, 0, 1, 1], [], []>} : vector<384x128xbf16>, vector<128x128xbf16>, vector<384x128xf32> -> vector<384x128xf32>
    %c1_i32_27 = arith.constant 1 : i32
    %25 = tpu.dynamic_rotate %24 by %c1_i32_27 dim 0 : vector<384x128xf32>, i32 -> vector<384x128xf32>
    %c0_28 = arith.constant 0 : index
    %c0_29 = arith.constant 0 : index
    %26 = vector.load %arg7[%c0_28, %c0_29] : memref<384x128xf32, #tpu.memory_space<vmem>>, vector<384x128xf32>
    %27 = arith.addf %26, %25 : vector<384x128xf32>
    %c0_30 = arith.constant 0 : index
    %c0_31 = arith.constant 0 : index
    %28 = vector.load %arg7[%c0_30, %c0_31] : memref<384x128xf32, #tpu.memory_space<vmem>>, vector<384x128xf32>
    tpu.vector_store %arg7[%c0_30, %c0_31], %27 {strides = array<i32>} : memref<384x128xf32, #tpu.memory_space<vmem>>, vector<384x128xf32>,
    %c4 = arith.constant 4 : index
    %c0_32 = arith.constant 0 : index
    %c0_33 = arith.constant 0 : index
    %29 = vector.load %arg2[%c4, %c0_32, %c0_33] : memref<9x128x128xbf16, #tpu.memory_space<vmem>>, vector<1x128x128xbf16>
    %30 = vector.shape_cast %29 : vector<1x128x128xbf16> to vector<128x128xbf16>
    %cst_34 = arith.constant dense<0.000000e+00> : vector<384x128xf32>
    %31 = tpu.matmul %21, %30, %cst_34 {dimension_numbers = #tpu.dot_dimension_numbers<[1], [0], [0], [1], [0, 0, 1, 1], [], []>} : vector<384x128xbf16>, vector<128x128xbf16>, vector<384x128xf32> -> vector<384x128xf32>
    %c0_35 = arith.constant 0 : index
    %c0_36 = arith.constant 0 : index
    %32 = vector.load %arg7[%c0_35, %c0_36] : memref<384x128xf32, #tpu.memory_space<vmem>>, vector<384x128xf32>
    %33 = arith.addf %32, %31 : vector<384x128xf32>
    %c0_37 = arith.constant 0 : index
    %c0_38 = arith.constant 0 : index
    %34 = vector.load %arg7[%c0_37, %c0_38] : memref<384x128xf32, #tpu.memory_space<vmem>>, vector<384x128xf32>
    tpu.vector_store %arg7[%c0_37, %c0_38], %33 {strides = array<i32>} : memref<384x128xf32, #tpu.memory_space<vmem>>, vector<384x128xf32>,
    %c5 = arith.constant 5 : index
    %c0_39 = arith.constant 0 : index
    %c0_40 = arith.constant 0 : index
    %35 = vector.load %arg2[%c5, %c0_39, %c0_40] : memref<9x128x128xbf16, #tpu.memory_space<vmem>>, vector<1x128x128xbf16>
    %36 = vector.shape_cast %35 : vector<1x128x128xbf16> to vector<128x128xbf16>
    %cst_41 = arith.constant dense<0.000000e+00> : vector<384x128xf32>
    %37 = tpu.matmul %21, %36, %cst_41 {dimension_numbers = #tpu.dot_dimension_numbers<[1], [0], [0], [1], [0, 0, 1, 1], [], []>} : vector<384x128xbf16>, vector<128x128xbf16>, vector<384x128xf32> -> vector<384x128xf32>
    %c383_i32_42 = arith.constant 383 : i32
    %38 = tpu.dynamic_rotate %37 by %c383_i32_42 dim 0 : vector<384x128xf32>, i32 -> vector<384x128xf32>
    %c0_43 = arith.constant 0 : index
    %c0_44 = arith.constant 0 : index
    %39 = vector.load %arg7[%c0_43, %c0_44] : memref<384x128xf32, #tpu.memory_space<vmem>>, vector<384x128xf32>
    %40 = arith.addf %39, %38 : vector<384x128xf32>
    %c0_45 = arith.constant 0 : index
    %c0_46 = arith.constant 0 : index
    %41 = vector.load %arg7[%c0_45, %c0_46] : memref<384x128xf32, #tpu.memory_space<vmem>>, vector<384x128xf32>
    tpu.vector_store %arg7[%c0_45, %c0_46], %40 {strides = array<i32>} : memref<384x128xf32, #tpu.memory_space<vmem>>, vector<384x128xf32>,
    %c2_47 = arith.constant 2 : index
    %c0_48 = arith.constant 0 : index
    %c0_49 = arith.constant 0 : index
    %42 = vector.load %arg1[%c2_47, %c0_48, %c0_49] : memref<18x24x128xbf16, #tpu.memory_space<vmem>>, vector<16x24x128xbf16>
    %43 = vector.shape_cast %42 : vector<16x24x128xbf16> to vector<384x128xbf16>
    %c6 = arith.constant 6 : index
    %c0_50 = arith.constant 0 : index
    %c0_51 = arith.constant 0 : index
    %44 = vector.load %arg2[%c6, %c0_50, %c0_51] : memref<9x128x128xbf16, #tpu.memory_space<vmem>>, vector<1x128x128xbf16>
    %45 = vector.shape_cast %44 : vector<1x128x128xbf16> to vector<128x128xbf16>
    %cst_52 = arith.constant dense<0.000000e+00> : vector<384x128xf32>
    %46 = tpu.matmul %43, %45, %cst_52 {dimension_numbers = #tpu.dot_dimension_numbers<[1], [0], [0], [1], [0, 0, 1, 1], [], []>} : vector<384x128xbf16>, vector<128x128xbf16>, vector<384x128xf32> -> vector<384x128xf32>
    %c1_i32_53 = arith.constant 1 : i32
    %47 = tpu.dynamic_rotate %46 by %c1_i32_53 dim 0 : vector<384x128xf32>, i32 -> vector<384x128xf32>
    %c0_54 = arith.constant 0 : index
    %c0_55 = arith.constant 0 : index
    %48 = vector.load %arg7[%c0_54, %c0_55] : memref<384x128xf32, #tpu.memory_space<vmem>>, vector<384x128xf32>
    %49 = arith.addf %48, %47 : vector<384x128xf32>
    %c0_56 = arith.constant 0 : index
    %c0_57 = arith.constant 0 : index
    %50 = vector.load %arg7[%c0_56, %c0_57] : memref<384x128xf32, #tpu.memory_space<vmem>>, vector<384x128xf32>
    tpu.vector_store %arg7[%c0_56, %c0_57], %49 {strides = array<i32>} : memref<384x128xf32, #tpu.memory_space<vmem>>, vector<384x128xf32>,
    %c7 = arith.constant 7 : index
    %c0_58 = arith.constant 0 : index
    %c0_59 = arith.constant 0 : index
    %51 = vector.load %arg2[%c7, %c0_58, %c0_59] : memref<9x128x128xbf16, #tpu.memory_space<vmem>>, vector<1x128x128xbf16>
    %52 = vector.shape_cast %51 : vector<1x128x128xbf16> to vector<128x128xbf16>
    %cst_60 = arith.constant dense<0.000000e+00> : vector<384x128xf32>
    %53 = tpu.matmul %43, %52, %cst_60 {dimension_numbers = #tpu.dot_dimension_numbers<[1], [0], [0], [1], [0, 0, 1, 1], [], []>} : vector<384x128xbf16>, vector<128x128xbf16>, vector<384x128xf32> -> vector<384x128xf32>
    %c0_61 = arith.constant 0 : index
    %c0_62 = arith.constant 0 : index
    %54 = vector.load %arg7[%c0_61, %c0_62] : memref<384x128xf32, #tpu.memory_space<vmem>>, vector<384x128xf32>
    %55 = arith.addf %54, %53 : vector<384x128xf32>
    %c0_63 = arith.constant 0 : index
    %c0_64 = arith.constant 0 : index
    %56 = vector.load %arg7[%c0_63, %c0_64] : memref<384x128xf32, #tpu.memory_space<vmem>>, vector<384x128xf32>
    tpu.vector_store %arg7[%c0_63, %c0_64], %55 {strides = array<i32>} : memref<384x128xf32, #tpu.memory_space<vmem>>, vector<384x128xf32>,
    %c8 = arith.constant 8 : index
    %c0_65 = arith.constant 0 : index
    %c0_66 = arith.constant 0 : index
    %57 = vector.load %arg2[%c8, %c0_65, %c0_66] : memref<9x128x128xbf16, #tpu.memory_space<vmem>>, vector<1x128x128xbf16>
    %58 = vector.shape_cast %57 : vector<1x128x128xbf16> to vector<128x128xbf16>
    %cst_67 = arith.constant dense<0.000000e+00> : vector<384x128xf32>
    %59 = tpu.matmul %43, %58, %cst_67 {dimension_numbers = #tpu.dot_dimension_numbers<[1], [0], [0], [1], [0, 0, 1, 1], [], []>} : vector<384x128xbf16>, vector<128x128xbf16>, vector<384x128xf32> -> vector<384x128xf32>
    %c383_i32_68 = arith.constant 383 : i32
    %60 = tpu.dynamic_rotate %59 by %c383_i32_68 dim 0 : vector<384x128xf32>, i32 -> vector<384x128xf32>
    %c0_69 = arith.constant 0 : index
    %c0_70 = arith.constant 0 : index
    %61 = vector.load %arg7[%c0_69, %c0_70] : memref<384x128xf32, #tpu.memory_space<vmem>>, vector<384x128xf32>
    %62 = arith.addf %61, %60 : vector<384x128xf32>
    %c0_71 = arith.constant 0 : index
    %c0_72 = arith.constant 0 : index
    %63 = vector.load %arg7[%c0_71, %c0_72] : memref<384x128xf32, #tpu.memory_space<vmem>>, vector<384x128xf32>
    tpu.vector_store %arg7[%c0_71, %c0_72], %62 {strides = array<i32>} : memref<384x128xf32, #tpu.memory_space<vmem>>, vector<384x128xf32>,
    %c0_73 = arith.constant 0 : index
    %c0_74 = arith.constant 0 : index
    %64 = vector.load %arg7[%c0_73, %c0_74] : memref<384x128xf32, #tpu.memory_space<vmem>>, vector<384x128xf32>
    %c0_75 = arith.constant 0 : index
    %c0_76 = arith.constant 0 : index
    %65 = vector.load %arg3[%c0_75, %c0_76] : memref<1x128xf32, #tpu.memory_space<vmem>>, vector<1x128xf32>
    %66 = vector.broadcast %65 : vector<1x128xf32> to vector<384x128xf32>
    %67 = arith.addf %64, %66 : vector<384x128xf32>
    %cst_77 = arith.constant 0.000000e+00 : f32
    %68 = vector.broadcast %cst_77 : f32 to vector<384x128xf32>
    %69 = arith.maximumf %67, %68 : vector<384x128xf32>
    %70 = vector.shape_cast %69 : vector<384x128xf32> to vector<16x24x128xf32>
    %71 = tpu.iota {dimensions = array<i32: 1>} : vector<1x24x1xi32>
    %c1_i32_78 = arith.constant 1 : i32
    %72 = vector.broadcast %c1_i32_78 : i32 to vector<1x24x1xi32>
    %73 = arith.cmpi sge, %71, %72 : vector<1x24x1xi32>
    %c16_i32 = arith.constant 16 : i32
    %74 = vector.broadcast %c16_i32 : i32 to vector<1x24x1xi32>
    %75 = arith.cmpi sle, %71, %74 : vector<1x24x1xi32>
    %76 = arith.andi %73, %75 : vector<1x24x1xi1>
    %cst_79 = arith.constant 0.000000e+00 : f32
    %77 = vector.shape_cast %76 : vector<1x24x1xi1> to vector<1x24x1xi1>
    %78 = vector.broadcast %77 : vector<1x24x1xi1> to vector<16x24x128xi1>
    %79 = vector.broadcast %cst_79 : f32 to vector<16x24x128xf32>
    %80 = arith.select %78, %70, %79 : vector<16x24x128xi1>, vector<16x24x128xf32>
    %81 = arith.truncf %80 : vector<16x24x128xf32> to vector<16x24x128xbf16>
    %c1_80 = arith.constant 1 : index
    %c0_81 = arith.constant 0 : index
    %c0_82 = arith.constant 0 : index
    %82 = vector.load %arg8[%c1_80, %c0_81, %c0_82] : memref<18x24x128xbf16, #tpu.memory_space<vmem>>, vector<16x24x128xbf16>
    tpu.vector_store %arg8[%c1_80, %c0_81, %c0_82], %81 {strides = array<i32>} : memref<18x24x128xbf16, #tpu.memory_space<vmem>>, vector<16x24x128xbf16>,
    %cst_83 = arith.constant 0.000000e+00 : bf16
    %83 = vector.broadcast %cst_83 : bf16 to vector<1x24x128xbf16>
    %c0_84 = arith.constant 0 : index
    %c0_85 = arith.constant 0 : index
    %c0_86 = arith.constant 0 : index
    %84 = vector.load %arg8[%c0_84, %c0_85, %c0_86] : memref<18x24x128xbf16, #tpu.memory_space<vmem>>, vector<1x24x128xbf16>
    tpu.vector_store %arg8[%c0_84, %c0_85, %c0_86], %83 {strides = array<i32>} : memref<18x24x128xbf16, #tpu.memory_space<vmem>>, vector<1x24x128xbf16>,
    %c17 = arith.constant 17 : index
    %c0_87 = arith.constant 0 : index
    %c0_88 = arith.constant 0 : index
    %85 = vector.load %arg8[%c17, %c0_87, %c0_88] : memref<18x24x128xbf16, #tpu.memory_space<vmem>>, vector<1x24x128xbf16>
    tpu.vector_store %arg8[%c17, %c0_87, %c0_88], %83 {strides = array<i32>} : memref<18x24x128xbf16, #tpu.memory_space<vmem>>, vector<1x24x128xbf16>,
    %c0_89 = arith.constant 0 : index
    %c0_90 = arith.constant 0 : index
    %c0_91 = arith.constant 0 : index
    %86 = vector.load %arg8[%c0_89, %c0_90, %c0_91] : memref<18x24x128xbf16, #tpu.memory_space<vmem>>, vector<16x24x128xbf16>
    %87 = vector.shape_cast %86 : vector<16x24x128xbf16> to vector<384x128xbf16>
    %c0_92 = arith.constant 0 : index
    %c0_93 = arith.constant 0 : index
    %c0_94 = arith.constant 0 : index
    %88 = vector.load %arg4[%c0_92, %c0_93, %c0_94] : memref<9x128x128xbf16, #tpu.memory_space<vmem>>, vector<1x128x128xbf16>
    %89 = vector.shape_cast %88 : vector<1x128x128xbf16> to vector<128x128xbf16>
    %cst_95 = arith.constant dense<0.000000e+00> : vector<384x128xf32>
    %90 = tpu.matmul %87, %89, %cst_95 {dimension_numbers = #tpu.dot_dimension_numbers<[1], [0], [0], [1], [0, 0, 1, 1], [], []>} : vector<384x128xbf16>, vector<128x128xbf16>, vector<384x128xf32> -> vector<384x128xf32>
    %c0_96 = arith.constant 0 : index
    %c0_97 = arith.constant 0 : index
    %91 = vector.load %arg7[%c0_96, %c0_97] : memref<384x128xf32, #tpu.memory_space<vmem>>, vector<384x128xf32>
    tpu.vector_store %arg7[%c0_96, %c0_97], %90 {strides = array<i32>} : memref<384x128xf32, #tpu.memory_space<vmem>>, vector<384x128xf32>,
    %c1_98 = arith.constant 1 : index
    %c0_99 = arith.constant 0 : index
    %c0_100 = arith.constant 0 : index
    %92 = vector.load %arg4[%c1_98, %c0_99, %c0_100] : memref<9x128x128xbf16, #tpu.memory_space<vmem>>, vector<1x128x128xbf16>
    %93 = vector.shape_cast %92 : vector<1x128x128xbf16> to vector<128x128xbf16>
    %cst_101 = arith.constant dense<0.000000e+00> : vector<384x128xf32>
    %94 = tpu.matmul %87, %93, %cst_101 {dimension_numbers = #tpu.dot_dimension_numbers<[1], [0], [0], [1], [0, 0, 1, 1], [], []>} : vector<384x128xbf16>, vector<128x128xbf16>, vector<384x128xf32> -> vector<384x128xf32>
    %c383_i32_102 = arith.constant 383 : i32
    %95 = tpu.dynamic_rotate %94 by %c383_i32_102 dim 0 : vector<384x128xf32>, i32 -> vector<384x128xf32>
    %c0_103 = arith.constant 0 : index
    %c0_104 = arith.constant 0 : index
    %96 = vector.load %arg7[%c0_103, %c0_104] : memref<384x128xf32, #tpu.memory_space<vmem>>, vector<384x128xf32>
    %97 = arith.addf %96, %95 : vector<384x128xf32>
    %c0_105 = arith.constant 0 : index
    %c0_106 = arith.constant 0 : index
    %98 = vector.load %arg7[%c0_105, %c0_106] : memref<384x128xf32, #tpu.memory_space<vmem>>, vector<384x128xf32>
    tpu.vector_store %arg7[%c0_105, %c0_106], %97 {strides = array<i32>} : memref<384x128xf32, #tpu.memory_space<vmem>>, vector<384x128xf32>,
    %c2_107 = arith.constant 2 : index
    %c0_108 = arith.constant 0 : index
    %c0_109 = arith.constant 0 : index
    %99 = vector.load %arg4[%c2_107, %c0_108, %c0_109] : memref<9x128x128xbf16, #tpu.memory_space<vmem>>, vector<1x128x128xbf16>
    %100 = vector.shape_cast %99 : vector<1x128x128xbf16> to vector<128x128xbf16>
    %cst_110 = arith.constant dense<0.000000e+00> : vector<384x128xf32>
    %101 = tpu.matmul %87, %100, %cst_110 {dimension_numbers = #tpu.dot_dimension_numbers<[1], [0], [0], [1], [0, 0, 1, 1], [], []>} : vector<384x128xbf16>, vector<128x128xbf16>, vector<384x128xf32> -> vector<384x128xf32>
    %c382_i32 = arith.constant 382 : i32
    %102 = tpu.dynamic_rotate %101 by %c382_i32 dim 0 : vector<384x128xf32>, i32 -> vector<384x128xf32>
    %c0_111 = arith.constant 0 : index
    %c0_112 = arith.constant 0 : index
    %103 = vector.load %arg7[%c0_111, %c0_112] : memref<384x128xf32, #tpu.memory_space<vmem>>, vector<384x128xf32>
    %104 = arith.addf %103, %102 : vector<384x128xf32>
    %c0_113 = arith.constant 0 : index
    %c0_114 = arith.constant 0 : index
    %105 = vector.load %arg7[%c0_113, %c0_114] : memref<384x128xf32, #tpu.memory_space<vmem>>, vector<384x128xf32>
    tpu.vector_store %arg7[%c0_113, %c0_114], %104 {strides = array<i32>} : memref<384x128xf32, #tpu.memory_space<vmem>>, vector<384x128xf32>,
    %c1_115 = arith.constant 1 : index
    %c0_116 = arith.constant 0 : index
    %c0_117 = arith.constant 0 : index
    %106 = vector.load %arg8[%c1_115, %c0_116, %c0_117] : memref<18x24x128xbf16, #tpu.memory_space<vmem>>, vector<16x24x128xbf16>
    %107 = vector.shape_cast %106 : vector<16x24x128xbf16> to vector<384x128xbf16>
    %c3_118 = arith.constant 3 : index
    %c0_119 = arith.constant 0 : index
    %c0_120 = arith.constant 0 : index
    %108 = vector.load %arg4[%c3_118, %c0_119, %c0_120] : memref<9x128x128xbf16, #tpu.memory_space<vmem>>, vector<1x128x128xbf16>
    %109 = vector.shape_cast %108 : vector<1x128x128xbf16> to vector<128x128xbf16>
    %cst_121 = arith.constant dense<0.000000e+00> : vector<384x128xf32>
    %110 = tpu.matmul %107, %109, %cst_121 {dimension_numbers = #tpu.dot_dimension_numbers<[1], [0], [0], [1], [0, 0, 1, 1], [], []>} : vector<384x128xbf16>, vector<128x128xbf16>, vector<384x128xf32> -> vector<384x128xf32>
    %c0_122 = arith.constant 0 : index
    %c0_123 = arith.constant 0 : index
    %111 = vector.load %arg7[%c0_122, %c0_123] : memref<384x128xf32, #tpu.memory_space<vmem>>, vector<384x128xf32>
    %112 = arith.addf %111, %110 : vector<384x128xf32>
    %c0_124 = arith.constant 0 : index
    %c0_125 = arith.constant 0 : index
    %113 = vector.load %arg7[%c0_124, %c0_125] : memref<384x128xf32, #tpu.memory_space<vmem>>, vector<384x128xf32>
    tpu.vector_store %arg7[%c0_124, %c0_125], %112 {strides = array<i32>} : memref<384x128xf32, #tpu.memory_space<vmem>>, vector<384x128xf32>,
    %c4_126 = arith.constant 4 : index
    %c0_127 = arith.constant 0 : index
    %c0_128 = arith.constant 0 : index
    %114 = vector.load %arg4[%c4_126, %c0_127, %c0_128] : memref<9x128x128xbf16, #tpu.memory_space<vmem>>, vector<1x128x128xbf16>
    %115 = vector.shape_cast %114 : vector<1x128x128xbf16> to vector<128x128xbf16>
    %cst_129 = arith.constant dense<0.000000e+00> : vector<384x128xf32>
    %116 = tpu.matmul %107, %115, %cst_129 {dimension_numbers = #tpu.dot_dimension_numbers<[1], [0], [0], [1], [0, 0, 1, 1], [], []>} : vector<384x128xbf16>, vector<128x128xbf16>, vector<384x128xf32> -> vector<384x128xf32>
    %c383_i32_130 = arith.constant 383 : i32
    %117 = tpu.dynamic_rotate %116 by %c383_i32_130 dim 0 : vector<384x128xf32>, i32 -> vector<384x128xf32>
    %c0_131 = arith.constant 0 : index
    %c0_132 = arith.constant 0 : index
    %118 = vector.load %arg7[%c0_131, %c0_132] : memref<384x128xf32, #tpu.memory_space<vmem>>, vector<384x128xf32>
    %119 = arith.addf %118, %117 : vector<384x128xf32>
    %c0_133 = arith.constant 0 : index
    %c0_134 = arith.constant 0 : index
    %120 = vector.load %arg7[%c0_133, %c0_134] : memref<384x128xf32, #tpu.memory_space<vmem>>, vector<384x128xf32>
    tpu.vector_store %arg7[%c0_133, %c0_134], %119 {strides = array<i32>} : memref<384x128xf32, #tpu.memory_space<vmem>>, vector<384x128xf32>,
    %c5_135 = arith.constant 5 : index
    %c0_136 = arith.constant 0 : index
    %c0_137 = arith.constant 0 : index
    %121 = vector.load %arg4[%c5_135, %c0_136, %c0_137] : memref<9x128x128xbf16, #tpu.memory_space<vmem>>, vector<1x128x128xbf16>
    %122 = vector.shape_cast %121 : vector<1x128x128xbf16> to vector<128x128xbf16>
    %cst_138 = arith.constant dense<0.000000e+00> : vector<384x128xf32>
    %123 = tpu.matmul %107, %122, %cst_138 {dimension_numbers = #tpu.dot_dimension_numbers<[1], [0], [0], [1], [0, 0, 1, 1], [], []>} : vector<384x128xbf16>, vector<128x128xbf16>, vector<384x128xf32> -> vector<384x128xf32>
    %c382_i32_139 = arith.constant 382 : i32
    %124 = tpu.dynamic_rotate %123 by %c382_i32_139 dim 0 : vector<384x128xf32>, i32 -> vector<384x128xf32>
    %c0_140 = arith.constant 0 : index
    %c0_141 = arith.constant 0 : index
    %125 = vector.load %arg7[%c0_140, %c0_141] : memref<384x128xf32, #tpu.memory_space<vmem>>, vector<384x128xf32>
    %126 = arith.addf %125, %124 : vector<384x128xf32>
    %c0_142 = arith.constant 0 : index
    %c0_143 = arith.constant 0 : index
    %127 = vector.load %arg7[%c0_142, %c0_143] : memref<384x128xf32, #tpu.memory_space<vmem>>, vector<384x128xf32>
    tpu.vector_store %arg7[%c0_142, %c0_143], %126 {strides = array<i32>} : memref<384x128xf32, #tpu.memory_space<vmem>>, vector<384x128xf32>,
    %c2_144 = arith.constant 2 : index
    %c0_145 = arith.constant 0 : index
    %c0_146 = arith.constant 0 : index
    %128 = vector.load %arg8[%c2_144, %c0_145, %c0_146] : memref<18x24x128xbf16, #tpu.memory_space<vmem>>, vector<16x24x128xbf16>
    %129 = vector.shape_cast %128 : vector<16x24x128xbf16> to vector<384x128xbf16>
    %c6_147 = arith.constant 6 : index
    %c0_148 = arith.constant 0 : index
    %c0_149 = arith.constant 0 : index
    %130 = vector.load %arg4[%c6_147, %c0_148, %c0_149] : memref<9x128x128xbf16, #tpu.memory_space<vmem>>, vector<1x128x128xbf16>
    %131 = vector.shape_cast %130 : vector<1x128x128xbf16> to vector<128x128xbf16>
    %cst_150 = arith.constant dense<0.000000e+00> : vector<384x128xf32>
    %132 = tpu.matmul %129, %131, %cst_150 {dimension_numbers = #tpu.dot_dimension_numbers<[1], [0], [0], [1], [0, 0, 1, 1], [], []>} : vector<384x128xbf16>, vector<128x128xbf16>, vector<384x128xf32> -> vector<384x128xf32>
    %c0_151 = arith.constant 0 : index
    %c0_152 = arith.constant 0 : index
    %133 = vector.load %arg7[%c0_151, %c0_152] : memref<384x128xf32, #tpu.memory_space<vmem>>, vector<384x128xf32>
    %134 = arith.addf %133, %132 : vector<384x128xf32>
    %c0_153 = arith.constant 0 : index
    %c0_154 = arith.constant 0 : index
    %135 = vector.load %arg7[%c0_153, %c0_154] : memref<384x128xf32, #tpu.memory_space<vmem>>, vector<384x128xf32>
    tpu.vector_store %arg7[%c0_153, %c0_154], %134 {strides = array<i32>} : memref<384x128xf32, #tpu.memory_space<vmem>>, vector<384x128xf32>,
    %c7_155 = arith.constant 7 : index
    %c0_156 = arith.constant 0 : index
    %c0_157 = arith.constant 0 : index
    %136 = vector.load %arg4[%c7_155, %c0_156, %c0_157] : memref<9x128x128xbf16, #tpu.memory_space<vmem>>, vector<1x128x128xbf16>
    %137 = vector.shape_cast %136 : vector<1x128x128xbf16> to vector<128x128xbf16>
    %cst_158 = arith.constant dense<0.000000e+00> : vector<384x128xf32>
    %138 = tpu.matmul %129, %137, %cst_158 {dimension_numbers = #tpu.dot_dimension_numbers<[1], [0], [0], [1], [0, 0, 1, 1], [], []>} : vector<384x128xbf16>, vector<128x128xbf16>, vector<384x128xf32> -> vector<384x128xf32>
    %c383_i32_159 = arith.constant 383 : i32
    %139 = tpu.dynamic_rotate %138 by %c383_i32_159 dim 0 : vector<384x128xf32>, i32 -> vector<384x128xf32>
    %c0_160 = arith.constant 0 : index
    %c0_161 = arith.constant 0 : index
    %140 = vector.load %arg7[%c0_160, %c0_161] : memref<384x128xf32, #tpu.memory_space<vmem>>, vector<384x128xf32>
    %141 = arith.addf %140, %139 : vector<384x128xf32>
    %c0_162 = arith.constant 0 : index
    %c0_163 = arith.constant 0 : index
    %142 = vector.load %arg7[%c0_162, %c0_163] : memref<384x128xf32, #tpu.memory_space<vmem>>, vector<384x128xf32>
    tpu.vector_store %arg7[%c0_162, %c0_163], %141 {strides = array<i32>} : memref<384x128xf32, #tpu.memory_space<vmem>>, vector<384x128xf32>,
    %c8_164 = arith.constant 8 : index
    %c0_165 = arith.constant 0 : index
    %c0_166 = arith.constant 0 : index
    %143 = vector.load %arg4[%c8_164, %c0_165, %c0_166] : memref<9x128x128xbf16, #tpu.memory_space<vmem>>, vector<1x128x128xbf16>
    %144 = vector.shape_cast %143 : vector<1x128x128xbf16> to vector<128x128xbf16>
    %cst_167 = arith.constant dense<0.000000e+00> : vector<384x128xf32>
    %145 = tpu.matmul %129, %144, %cst_167 {dimension_numbers = #tpu.dot_dimension_numbers<[1], [0], [0], [1], [0, 0, 1, 1], [], []>} : vector<384x128xbf16>, vector<128x128xbf16>, vector<384x128xf32> -> vector<384x128xf32>
    %c382_i32_168 = arith.constant 382 : i32
    %146 = tpu.dynamic_rotate %145 by %c382_i32_168 dim 0 : vector<384x128xf32>, i32 -> vector<384x128xf32>
    %c0_169 = arith.constant 0 : index
    %c0_170 = arith.constant 0 : index
    %147 = vector.load %arg7[%c0_169, %c0_170] : memref<384x128xf32, #tpu.memory_space<vmem>>, vector<384x128xf32>
    %148 = arith.addf %147, %146 : vector<384x128xf32>
    %c0_171 = arith.constant 0 : index
    %c0_172 = arith.constant 0 : index
    %149 = vector.load %arg7[%c0_171, %c0_172] : memref<384x128xf32, #tpu.memory_space<vmem>>, vector<384x128xf32>
    tpu.vector_store %arg7[%c0_171, %c0_172], %148 {strides = array<i32>} : memref<384x128xf32, #tpu.memory_space<vmem>>, vector<384x128xf32>,
    %c0_173 = arith.constant 0 : index
    %c0_174 = arith.constant 0 : index
    %150 = vector.load %arg7[%c0_173, %c0_174] : memref<384x128xf32, #tpu.memory_space<vmem>>, vector<384x128xf32>
    %c0_175 = arith.constant 0 : index
    %c0_176 = arith.constant 0 : index
    %151 = vector.load %arg5[%c0_175, %c0_176] : memref<1x128xf32, #tpu.memory_space<vmem>>, vector<1x128xf32>
    %152 = vector.broadcast %151 : vector<1x128xf32> to vector<384x128xf32>
    %153 = arith.addf %150, %152 : vector<384x128xf32>
    %cst_177 = arith.constant 0.000000e+00 : f32
    %154 = vector.broadcast %cst_177 : f32 to vector<384x128xf32>
    %155 = arith.maximumf %153, %154 : vector<384x128xf32>
    %156 = vector.shape_cast %155 : vector<384x128xf32> to vector<16x24x128xf32>
    %157 = vector.extract_strided_slice %156 {offsets = [0, 0, 0], sizes = [16, 16, 128], strides = [1, 1, 1]} : vector<16x24x128xf32> to vector<16x16x128xf32>
    %158 = arith.truncf %157 : vector<16x16x128xf32> to vector<16x16x128xbf16>
    %c0_178 = arith.constant 0 : index
    %c0_179 = arith.constant 0 : index
    %c0_180 = arith.constant 0 : index
    %159 = vector.load %arg6[%c0_178, %c0_179, %c0_180] : memref<16x16x128xbf16, #tpu.memory_space<vmem>>, vector<16x16x128xbf16>
    tpu.vector_store %arg6[%c0_178, %c0_179, %c0_180], %158 {strides = array<i32>} : memref<16x16x128xbf16, #tpu.memory_space<vmem>>, vector<16x16x128xbf16>,
    return
  }
  func.func @transform_0(%arg0: i32) -> (i32, i32, i32) {
    %c0_i32 = arith.constant 0 : i32
    %c0_i32_0 = arith.constant 0 : i32
    %c0_i32_1 = arith.constant 0 : i32
    return %arg0, %c0_i32, %c0_i32_0 : i32, i32, i32
  }
  func.func @transform_1(%arg0: i32) -> (i32, i32, i32) {
    %c0_i32 = arith.constant 0 : i32
    %c0_i32_0 = arith.constant 0 : i32
    %c0_i32_1 = arith.constant 0 : i32
    %c0_i32_2 = arith.constant 0 : i32
    return %c0_i32, %c0_i32_0, %c0_i32_1 : i32, i32, i32
  }
  func.func @transform_2(%arg0: i32) -> (i32, i32) {
    %c0_i32 = arith.constant 0 : i32
    %c0_i32_0 = arith.constant 0 : i32
    %c0_i32_1 = arith.constant 0 : i32
    return %c0_i32, %c0_i32_0 : i32, i32
  }
  func.func @transform_3(%arg0: i32) -> (i32, i32, i32) {
    %c0_i32 = arith.constant 0 : i32
    %c0_i32_0 = arith.constant 0 : i32
    %c0_i32_1 = arith.constant 0 : i32
    %c0_i32_2 = arith.constant 0 : i32
    return %c0_i32, %c0_i32_0, %c0_i32_1 : i32, i32, i32
  }
  func.func @transform_4(%arg0: i32) -> (i32, i32) {
    %c0_i32 = arith.constant 0 : i32
    %c0_i32_0 = arith.constant 0 : i32
    %c0_i32_1 = arith.constant 0 : i32
    return %c0_i32, %c0_i32_0 : i32, i32
  }
  func.func @transform_5(%arg0: i32) -> (i32, i32, i32) {
    %c0_i32 = arith.constant 0 : i32
    %c0_i32_0 = arith.constant 0 : i32
    %c0_i32_1 = arith.constant 0 : i32
    return %arg0, %c0_i32, %c0_i32_0 : i32, i32, i32
  }
}

</mosaic_0001>

<llo_original>
// kernel: conv_block_forward.1
$region0: #{conv_block_forward.1}
  #allocation0 [shape = 'u32[]', space=smem, size = 0x4, offset = 0x4, fixed_abs, tag = 'smem constant byte address 0x4 - core index']
  #allocation1 [shape = 'u32[144,128]{1,0:T(1,128)}', space=vmem, size = 0x12000, scoped, tag = 'internal scratch']
  #allocation2 [shape = 'f32[384,128]{1,0:T(8,128)}', space=vmem, size = 0x30000, scoped, tag = 'scratch operand']
  #allocation3 [shape = 'bf16[18,24,128]{2,1,0:T(8,128)(2,1)}', space=vmem, size = 0x1b000, scoped, tag = 'scratch operand']
  %s0 = inlined_call_operand.vmem [shape: bf16[36,24,128], index: 0, kind: input, shape index: {}]
  %s1 = inlined_call_operand.vmem [shape: bf16[9,128,128], index: 1, kind: input, shape index: {}]
  %s2 = inlined_call_operand.vmem [shape: f32[1,128], index: 2, kind: input, shape index: {}]
  %s3 = inlined_call_operand.vmem [shape: bf16[9,128,128], index: 3, kind: input, shape index: {}]
  %s4 = inlined_call_operand.vmem [shape: f32[1,128], index: 4, kind: input, shape index: {}]
  %s5 = inlined_call_operand.vmem [shape: bf16[32,16,128], index: 5, kind: output, shape index: {}]
  %s6 = sld [smem:[#allocation0]]
  $region53: #{conv_block_forward.1} parent=0
    _
  %s8 = ssub.s32 1, %s6
  %s9 = scalar_select 0, %s8, %s6
  loop: start=0, step=1, limit=4
  $region2: #{conv_block_forward.1} parent=0 // loop_pre_header
    _
  $region3: #{conv_block_forward.1} parent=0 // loop_header
    %s11 = sphi 0, %s15
    %p12 = scmp.ge.s32.totalorder %s11, 4
    %s21 = sphi 0, %s23
    %s24 = sphi 0, %s21
    %s25 = sphi 0, %s24
    %s41 = sphi 0, %s25
    %s45 = sphi 0, %s45
    %s47 = sphi 0, %s45
    %s48 = sphi 0, %s47
    %s62 = sphi 0, %s48
    %s66 = sphi 0, %s66
    %s68 = sphi 0, %s66
    %s69 = sphi 0, %s68
    %s83 = sphi 0, %s69
    %s87 = sphi 0, %s87
    %s89 = sphi 0, %s87
    %s90 = sphi 0, %s89
    %s104 = sphi 0, %s90
    %s108 = sphi 0, %s108
    %s110 = sphi 0, %s108
    %s111 = sphi 0, %s110
    %s125 = sphi 0, %s111
    %s131 = sphi 0, %s133
    %s134 = sphi 0, %s131
    %s135 = sphi 0, %s134
    %s151 = sphi 0, %s135
  $region4: #{conv_block_forward.1} parent=0 // loop_header_branch
    %14 = sbr.rel (%p12) target = $region8
  $region5: #{conv_block_forward.1} parent=0 // loop_body
    %s16 = ssub.s32 %s11, 1
    %s17 = ssub.s32 %s11, 2
    %s18 = sadd.s32 %s11, 1
    %s19 = ssub.s32 %s11, %s18
    %p20 = scmp.eq.s32.totalorder %s19, 0
    %s22 = sadd.s32 %s21, 1
    %s23 = scalar_select %p20, %s21, %s22
    %p26 = pneg %p20
    %p27 = scmp.eq.s32.totalorder %s11, 1
    %p28 = por %p26, %p27
    %p29 = scmp.ne.s32.totalorder %s21, %s24
    %p30 = scmp.eq.s32.totalorder %s11, 0
    %p31 = por %p29, %p30
    %p32 = scmp.ne.s32.totalorder %s21, %s24
    %p33 = scmp.eq.s32.totalorder %s16, 1
    %p34 = por %p32, %p33
    %p35 = scmp.ne.s32.totalorder %s24, %s25
    %p36 = scmp.eq.s32.totalorder %s16, 0
    %p37 = por %p35, %p36
    %p38 = scmp.ne.s32.totalorder %s24, %s25
    %p39 = scmp.eq.s32.totalorder %s17, 1
    %p40 = por %p38, %p39
    %p42 = scmp.ne.s32.totalorder %s25, %s41
    %p43 = scmp.eq.s32.totalorder %s17, 0
    %p44 = por %p42, %p43
    %s46 = sadd.s32 %s45, 1
    %p49 = scmp.eq.s32.totalorder %s11, 1
    %p50 = scmp.ne.s32.totalorder %s45, %s47
    %p51 = scmp.eq.s32.totalorder %s11, 0
    %p52 = por %p50, %p51
    %p53 = scmp.ne.s32.totalorder %s45, %s47
    %p54 = scmp.eq.s32.totalorder %s16, 1
    %p55 = por %p53, %p54
    %p56 = scmp.ne.s32.totalorder %s47, %s48
    %p57 = scmp.eq.s32.totalorder %s16, 0
    %p58 = por %p56, %p57
    %p59 = scmp.ne.s32.totalorder %s47, %s48
    %p60 = scmp.eq.s32.totalorder %s17, 1
    %p61 = por %p59, %p60
    %p63 = scmp.ne.s32.totalorder %s48, %s62
    %p64 = scmp.eq.s32.totalorder %s17, 0
    %p65 = por %p63, %p64
    %s67 = sadd.s32 %s66, 1
    %p70 = scmp.eq.s32.totalorder %s11, 1
    %p71 = scmp.ne.s32.totalorder %s66, %s68
    %p72 = scmp.eq.s32.totalorder %s11, 0
    %p73 = por %p71, %p72
    %p74 = scmp.ne.s32.totalorder %s66, %s68
    %p75 = scmp.eq.s32.totalorder %s16, 1
    %p76 = por %p74, %p75
    %p77 = scmp.ne.s32.totalorder %s68, %s69
    %p78 = scmp.eq.s32.totalorder %s16, 0
    %p79 = por %p77, %p78
    %p80 = scmp.ne.s32.totalorder %s68, %s69
    %p81 = scmp.eq.s32.totalorder %s17, 1
    %p82 = por %p80, %p81
    %p84 = scmp.ne.s32.totalorder %s69, %s83
    %p85 = scmp.eq.s32.totalorder %s17, 0
    %p86 = por %p84, %p85
    %s88 = sadd.s32 %s87, 1
    %p91 = scmp.eq.s32.totalorder %s11, 1
    %p92 = scmp.ne.s32.totalorder %s87, %s89
    %p93 = scmp.eq.s32.totalorder %s11, 0
    %p94 = por %p92, %p93
    %p95 = scmp.ne.s32.totalorder %s87, %s89
    %p96 = scmp.eq.s32.totalorder %s16, 1
    %p97 = por %p95, %p96
    %p98 = scmp.ne.s32.totalorder %s89, %s90
    %p99 = scmp.eq.s32.totalorder %s16, 0
    %p100 = por %p98, %p99
    %p101 = scmp.ne.s32.totalorder %s89, %s90
    %p102 = scmp.eq.s32.totalorder %s17, 1
    %p103 = por %p101, %p102
    %p105 = scmp.ne.s32.totalorder %s90, %s104
    %p106 = scmp.eq.s32.totalorder %s17, 0
    %p107 = por %p105, %p106
    %s109 = sadd.s32 %s108, 1
    %p112 = scmp.eq.s32.totalorder %s11, 1
    %p113 = scmp.ne.s32.totalorder %s108, %s110
    %p114 = scmp.eq.s32.totalorder %s11, 0
    %p115 = por %p113, %p114
    %p116 = scmp.ne.s32.totalorder %s108, %s110
    %p117 = scmp.eq.s32.totalorder %s16, 1
    %p118 = por %p116, %p117
    %p119 = scmp.ne.s32.totalorder %s110, %s111
    %p120 = scmp.eq.s32.totalorder %s16, 0
    %p121 = por %p119, %p120
    %p122 = scmp.ne.s32.totalorder %s110, %s111
    %p123 = scmp.eq.s32.totalorder %s17, 1
    %p124 = por %p122, %p123
    %p126 = scmp.ne.s32.totalorder %s111, %s125
    %p127 = scmp.eq.s32.totalorder %s17, 0
    %p128 = por %p126, %p127
    %s129 = ssub.s32 %s11, %s18
    %p130 = scmp.eq.s32.totalorder %s129, 0
    %s132 = sadd.s32 %s131, 1
    %s133 = scalar_select %p130, %s131, %s132
    %p136 = pneg %p130
    %p137 = scmp.eq.s32.totalorder %s11, 1
    %p138 = por %p136, %p137
    %p139 = scmp.ne.s32.totalorder %s131, %s134
    %p140 = scmp.eq.s32.totalorder %s11, 0
    %p141 = por %p139, %p140
    %p142 = scmp.ne.s32.totalorder %s131, %s134
    %p143 = scmp.eq.s32.totalorder %s16, 1
    %p144 = por %p142, %p143
    %p145 = scmp.ne.s32.totalorder %s134, %s135
    %p146 = scmp.eq.s32.totalorder %s16, 0
    %p147 = por %p145, %p146
    %p148 = scmp.ne.s32.totalorder %s134, %s135
    %p149 = scmp.eq.s32.totalorder %s17, 1
    %p150 = por %p148, %p149
    %p152 = scmp.ne.s32.totalorder %s135, %s151
    %p153 = scmp.eq.s32.totalorder %s17, 0
    %p154 = por %p152, %p153
    %p155 = scmp.le.s32.totalorder 1, %s11
    %p156 = scmp.lt.s32.totalorder %s11, 3
    %p157 = pnand %p155, %p156
    %p158 = pneg %p157
    // Predicated region
    $region9: #{conv_block_forward.1} parent=5 // pred_check
      _
    $region10: #{conv_block_forward.1} parent=5 // pred_check_branch
      %160 = sbr.rel (%p157) target = $region12
    $region11: #{conv_block_forward.1} parent=5 // pred_region
      %s161 = ssub.s32 %s11, 1
      // Predicated region
      $region13: #{conv_block_forward.1} parent=11 // pred_check
        %p162 = pneg %p58
      $region14: #{conv_block_forward.1} parent=11 // pred_check_branch
        %164 = sbr.rel (%p162) target = $region16
      $region15: #{conv_block_forward.1} parent=11 // pred_region
        _
      $region16: #{conv_block_forward.1} parent=11 // pred_fallthru
        _
      // Predicated region
      $region17: #{conv_block_forward.1} parent=11 // pred_check
        %p165 = pneg %p79
      $region18: #{conv_block_forward.1} parent=11 // pred_check_branch
        %167 = sbr.rel (%p165) target = $region20
      $region19: #{conv_block_forward.1} parent=11 // pred_region
        _
      $region20: #{conv_block_forward.1} parent=11 // pred_fallthru
        _
      // Predicated region
      $region21: #{conv_block_forward.1} parent=11 // pred_check
        %p168 = pneg %p100
      $region22: #{conv_block_forward.1} parent=11 // pred_check_branch
        %170 = sbr.rel (%p168) target = $region24
      $region23: #{conv_block_forward.1} parent=11 // pred_region
        _
      $region24: #{conv_block_forward.1} parent=11 // pred_fallthru
        _
      // Predicated region
      $region25: #{conv_block_forward.1} parent=11 // pred_check
        %p171 = pneg %p121
      $region26: #{conv_block_forward.1} parent=11 // pred_check_branch
        %173 = sbr.rel (%p171) target = $region28
      $region27: #{conv_block_forward.1} parent=11 // pred_region
        _
      $region28: #{conv_block_forward.1} parent=11 // pred_fallthru
        _
    $region12: #{conv_block_forward.1} parent=5 // pred_fallthru
      _
    %p174 = scmp.lt.s32.totalorder %s11, 2
    // Predicated region
    $region29: #{conv_block_forward.1} parent=5 // pred_check
      %p175 = pneg %p174
    $region30: #{conv_block_forward.1} parent=5 // pred_check_branch
      %177 = sbr.rel (%p175) target = $region32
    $region31: #{conv_block_forward.1} parent=5 // pred_region
      // Predicated region
      $region33: #{conv_block_forward.1} parent=31 // pred_check
        %p178 = pneg %p31
      $region34: #{conv_block_forward.1} parent=31 // pred_check_branch
        %180 = sbr.rel (%p178) target = $region36
      $region35: #{conv_block_forward.1} parent=31 // pred_region
        %s181 = smul.u32 18, %s11
        %p182 = scmp.lt.s32.totalorder %s181, 35
        %s183 = scalar_select %p182, %s181, 35
        %s184 = smul.addr %s183, 3
        %s185 = smul.addr %s184, 4
        %s186 = scalar_lea.vmem %s0, %s185
        %s187 = smul.u32 18, %s11
      $region36: #{conv_block_forward.1} parent=31 // pred_fallthru
        _
    $region32: #{conv_block_forward.1} parent=5 // pred_fallthru
      _
    %p188 = scmp.le.s32.totalorder 1, %s11
    %p189 = scmp.lt.s32.totalorder %s11, 3
    %p190 = pnand %p188, %p189
    %p191 = pneg %p190
    // Predicated region
    $region37: #{conv_block_forward.1} parent=5 // pred_check
      _
    $region38: #{conv_block_forward.1} parent=5 // pred_check_branch
      %193 = sbr.rel (%p190) target = $region40
    $region39: #{conv_block_forward.1} parent=5 // pred_region
      %s194 = ssub.s32 %s11, 1
      %s195 = smul.u32 18, %s16
      %p196 = scmp.lt.s32.totalorder %s195, 35
      %s197 = scalar_select %p196, %s195, 35
      %s198 = smul.addr %s197, 3
      %s199 = smul.addr %s198, 4
      %s200 = scalar_lea.vmem %s0, %s199
      %p201 = pneg %p37
      %p202 = pneg %p34
      %p203 = pneg %p58
      %p204 = pneg %p55
      %p205 = pneg %p79
      %p206 = pneg %p76
      %p207 = pneg %p100
      %p208 = pneg %p97
      %p209 = pneg %p121
      %p210 = pneg %p118
      %p211 = pneg %p147
      %p212 = pneg %p144
      %s213 = smul.u32 16, %s16
      %p214 = scmp.lt.s32.totalorder %s213, 31
      %s215 = scalar_select %p214, %s213, 31
      %s216 = smul.addr %s215, 2
      %s217 = smul.addr %s216, 4
      %s218 = scalar_lea.vmem %s5, %s217
      %s219 = smul.u32 18, %s16
      %p220 = scmp.lt.s32.totalorder %s219, 35
      %s221 = scalar_select %p220, %s219, 35
      %s222 = smul.addr %s221, 3
      %s223 = smul.addr %s222, 4
      %s224 = scalar_lea.vmem %s0, %s223
      %s225 = smul.u32 18, %s16
      %s226 = smul.u32 16, %s16
      %p227 = scmp.lt.s32.totalorder %s226, 31
      %s228 = scalar_select %p227, %s226, 31
      %s229 = smul.addr %s228, 2
      %s230 = smul.addr %s229, 4
      %s231 = scalar_lea.vmem %s5, %s230
      %s232 = smul.u32 16, %s16
      %v234 = vld [vmem:[%s224] sm:$0xf]
      %v235 = vld [vmem:[%s224 + $0x4] sm:$0xf]
      %v236 = vld [vmem:[%s224 + $0x8] sm:$0xf]
      %v237 = vld [vmem:[%s224 + $0xc] sm:$0xf]
      %v238 = vld [vmem:[%s224 + $0x10] sm:$0xf]
      %v239 = vld [vmem:[%s224 + $0x14] sm:$0xf]
      %v240 = vld [vmem:[%s224 + $0x18] sm:$0xf]
      %v241 = vld [vmem:[%s224 + $0x1c] sm:$0xf]
      %v242 = vld [vmem:[%s224 + $0x20] sm:$0xf]
      %v243 = vld [vmem:[%s224 + $0x24] sm:$0xf]
      %v244 = vld [vmem:[%s224 + $0x28] sm:$0xf]
      %v245 = vld [vmem:[%s224 + $0x2c] sm:$0xf]
      %v246 = vld [vmem:[%s224 + $0x30] sm:$0xf]
      %v247 = vld [vmem:[%s224 + $0x34] sm:$0xf]
      %v248 = vld [vmem:[%s224 + $0x38] sm:$0xf]
      %v249 = vld [vmem:[%s224 + $0x3c] sm:$0xf]
      %v250 = vld [vmem:[%s224 + $0x40] sm:$0xf]
      %v251 = vld [vmem:[%s224 + $0x44] sm:$0xf]
      %v252 = vld [vmem:[%s224 + $0x48] sm:$0xf]
      %v253 = vld [vmem:[%s224 + $0x4c] sm:$0xf]
      %v254 = vld [vmem:[%s224 + $0x50] sm:$0xf]
      %v255 = vld [vmem:[%s224 + $0x54] sm:$0xf]
      %v256 = vld [vmem:[%s224 + $0x58] sm:$0xf]
      %v257 = vld [vmem:[%s224 + $0x5c] sm:$0xf]
      %v258 = vld [vmem:[%s224 + $0x60] sm:$0xf]
      %v259 = vld [vmem:[%s224 + $0x64] sm:$0xf]
      %v260 = vld [vmem:[%s224 + $0x68] sm:$0xf]
      %v261 = vld [vmem:[%s224 + $0x6c] sm:$0xf]
      %v262 = vld [vmem:[%s224 + $0x70] sm:$0xf]
      %v263 = vld [vmem:[%s224 + $0x74] sm:$0xf]
      %v264 = vld [vmem:[%s224 + $0x78] sm:$0xf]
      %v265 = vld [vmem:[%s224 + $0x7c] sm:$0xf]
      %v266 = vld [vmem:[%s224 + $0x80] sm:$0xf]
      %v267 = vld [vmem:[%s224 + $0x84] sm:$0xf]
      %v268 = vld [vmem:[%s224 + $0x88] sm:$0xf]
      %v269 = vld [vmem:[%s224 + $0x8c] sm:$0xf]
      %v270 = vld [vmem:[%s224 + $0x90] sm:$0xf]
      %v271 = vld [vmem:[%s224 + $0x94] sm:$0xf]
      %v272 = vld [vmem:[%s224 + $0x98] sm:$0xf]
      %v273 = vld [vmem:[%s224 + $0x9c] sm:$0xf]
      %v274 = vld [vmem:[%s224 + $0xa0] sm:$0xf]
      %v275 = vld [vmem:[%s224 + $0xa4] sm:$0xf]
      %v276 = vld [vmem:[%s224 + $0xa8] sm:$0xf]
      %v277 = vld [vmem:[%s224 + $0xac] sm:$0xf]
      %v278 = vld [vmem:[%s224 + $0xb0] sm:$0xf]
      %v279 = vld [vmem:[%s224 + $0xb4] sm:$0xf]
      %v280 = vld [vmem:[%s224 + $0xb8] sm:$0xf]
      %v281 = vld [vmem:[%s224 + $0xbc] sm:$0xf]
      %v282 = vld [vmem:[%s1] sm:$0xf]
      %v283 = vld [vmem:[%s1 + $0x4] sm:$0xf]
      %v284 = vld [vmem:[%s1 + $0x8] sm:$0xf]
      %v285 = vld [vmem:[%s1 + $0xc] sm:$0xf]
      %v286 = vld [vmem:[%s1 + $0x10] sm:$0xf]
      %v287 = vld [vmem:[%s1 + $0x14] sm:$0xf]
      %v288 = vld [vmem:[%s1 + $0x18] sm:$0xf]
      %v289 = vld [vmem:[%s1 + $0x1c] sm:$0xf]
      %v290 = vld [vmem:[%s1 + $0x20] sm:$0xf]
      %v291 = vld [vmem:[%s1 + $0x24] sm:$0xf]
      %v292 = vld [vmem:[%s1 + $0x28] sm:$0xf]
      %v293 = vld [vmem:[%s1 + $0x2c] sm:$0xf]
      %v294 = vld [vmem:[%s1 + $0x30] sm:$0xf]
      %v295 = vld [vmem:[%s1 + $0x34] sm:$0xf]
      %v296 = vld [vmem:[%s1 + $0x38] sm:$0xf]
      %v297 = vld [vmem:[%s1 + $0x3c] sm:$0xf]
      %v346 = vunpack.c.l.b16 %v234
      %v347 = vunpack.c.l.b16 %v235
      %v348 = vunpack.c.l.b16 %v236
      %v349 = vunpack.c.l.b16 %v237
      %v350 = vunpack.c.l.b16 %v238
      %v351 = vunpack.c.l.b16 %v239
      %v352 = vunpack.c.l.b16 %v240
      %v353 = vunpack.c.l.b16 %v241
      %v354 = vunpack.c.l.b16 %v242
      %v355 = vunpack.c.l.b16 %v243
      %v356 = vunpack.c.l.b16 %v244
      %v357 = vunpack.c.l.b16 %v245
      %v358 = vunpack.c.l.b16 %v246
      %v359 = vunpack.c.l.b16 %v247
      %v360 = vunpack.c.l.b16 %v248
      %v361 = vunpack.c.l.b16 %v249
      %v362 = vunpack.c.l.b16 %v250
      %v363 = vunpack.c.l.b16 %v251
      %v364 = vunpack.c.l.b16 %v252
      %v365 = vunpack.c.l.b16 %v253
      %v366 = vunpack.c.l.b16 %v254
      %v367 = vunpack.c.l.b16 %v255
      %v368 = vunpack.c.l.b16 %v256
      %v369 = vunpack.c.l.b16 %v257
      %v370 = vunpack.c.l.b16 %v258
      %v371 = vunpack.c.l.b16 %v259
      %v372 = vunpack.c.l.b16 %v260
      %v373 = vunpack.c.l.b16 %v261
      %v374 = vunpack.c.l.b16 %v262
      %v375 = vunpack.c.l.b16 %v263
      %v376 = vunpack.c.l.b16 %v264
      %v377 = vunpack.c.l.b16 %v265
      %v378 = vunpack.c.l.b16 %v266
      %v379 = vunpack.c.l.b16 %v267
      %v380 = vunpack.c.l.b16 %v268
      %v381 = vunpack.c.l.b16 %v269
      %v382 = vunpack.c.l.b16 %v270
      %v383 = vunpack.c.l.b16 %v271
      %v384 = vunpack.c.l.b16 %v272
      %v385 = vunpack.c.l.b16 %v273
      %v386 = vunpack.c.l.b16 %v274
      %v387 = vunpack.c.l.b16 %v275
      %v388 = vunpack.c.l.b16 %v276
      %v389 = vunpack.c.l.b16 %v277
      %v390 = vunpack.c.l.b16 %v278
      %v391 = vunpack.c.l.b16 %v279
      %v392 = vunpack.c.l.b16 %v280
      %v393 = vunpack.c.l.b16 %v281
      %v394 = vpack.c.b16 %v347, %v346
      %v395 = vpack.c.b16 %v349, %v348
      %v396 = vpack.c.b16 %v351, %v350
      %v397 = vpack.c.b16 %v353, %v352
      %v398 = vpack.c.b16 %v355, %v354
      %v399 = vpack.c.b16 %v357, %v356
      %v400 = vpack.c.b16 %v359, %v358
      %v401 = vpack.c.b16 %v361, %v360
      %v402 = vpack.c.b16 %v363, %v362
      %v403 = vpack.c.b16 %v365, %v364
      %v404 = vpack.c.b16 %v367, %v366
      %v405 = vpack.c.b16 %v369, %v368
      %v406 = vpack.c.b16 %v371, %v370
      %v407 = vpack.c.b16 %v373, %v372
      %v408 = vpack.c.b16 %v375, %v374
      %v409 = vpack.c.b16 %v377, %v376
      %v410 = vpack.c.b16 %v379, %v378
      %v411 = vpack.c.b16 %v381, %v380
      %v412 = vpack.c.b16 %v383, %v382
      %v413 = vpack.c.b16 %v385, %v384
      %v414 = vpack.c.b16 %v387, %v386
      %v415 = vpack.c.b16 %v389, %v388
      %v416 = vpack.c.b16 %v391, %v390
      %v417 = vpack.c.b16 %v393, %v392
      %v458 = vunpack.c.l.b16 %v282
      %v459 = vunpack.c.l.b16 %v283
      %v460 = vunpack.c.l.b16 %v284
      %v461 = vunpack.c.l.b16 %v285
      %v462 = vunpack.c.l.b16 %v286
      %v463 = vunpack.c.l.b16 %v287
      %v464 = vunpack.c.l.b16 %v288
      %v465 = vunpack.c.l.b16 %v289
      %v466 = vunpack.c.l.b16 %v290
      %v467 = vunpack.c.l.b16 %v291
      %v468 = vunpack.c.l.b16 %v292
      %v469 = vunpack.c.l.b16 %v293
      %v470 = vunpack.c.l.b16 %v294
      %v471 = vunpack.c.l.b16 %v295
      %v472 = vunpack.c.l.b16 %v296
      %v473 = vunpack.c.l.b16 %v297
      %v474 = vpack.c.b16 %v459, %v458
      %v475 = vpack.c.b16 %v461, %v460
      %v476 = vpack.c.b16 %v463, %v462
      %v477 = vpack.c.b16 %v465, %v464
      %v478 = vpack.c.b16 %v467, %v466
      %v479 = vpack.c.b16 %v469, %v468
      %v480 = vpack.c.b16 %v471, %v470
      %v481 = vpack.c.b16 %v473, %v472
      %490 = vmatprep.subr.bf16.mxu0 0
      %491 = vmatpush1.bf16.msra.mxu0 %v474
      %492 = vmatprep.subr.bf16.mxu0 0
      %493 = vmatpush1.bf16.msra.mxu0 %v475
      %494 = vmatprep.subr.bf16.mxu0 0
      %495 = vmatpush1.bf16.msra.mxu0 %v476
      %496 = vmatprep.subr.bf16.mxu0 0
      %497 = vmatpush1.bf16.msra.mxu0 %v477
      %498 = vmatprep.subr.bf16.mxu0 0
      %499 = vmatpush1.bf16.msra.mxu0 %v478
      %500 = vmatprep.subr.bf16.mxu0 0
      %501 = vmatpush1.bf16.msra.mxu0 %v479
      %502 = vmatprep.subr.bf16.mxu0 0
      %503 = vmatpush1.bf16.msra.mxu0 %v480
      %504 = vmatprep.subr.bf16.mxu0 0
      %505 = vmatpush1.bf16.msra.mxu0 %v481
      %506 = vmatprep.subr.bf16.mxu0 0
      %507 = vmatpush1.bf16.msra.mxu0 0
      %508 = vmatprep.subr.bf16.mxu0 0
      %509 = vmatpush1.bf16.msra.mxu0 0
      %510 = vmatprep.subr.bf16.mxu0 0
      %511 = vmatpush1.bf16.msra.mxu0 0
      %512 = vmatprep.subr.bf16.mxu0 0
      %513 = vmatpush1.bf16.msra.mxu0 0
      %514 = vmatprep.subr.bf16.mxu0 0
      %515 = vmatpush1.bf16.msra.mxu0 0
      %516 = vmatprep.subr.bf16.mxu0 0
      %517 = vmatpush1.bf16.msra.mxu0 0
      %518 = vmatprep.subr.bf16.mxu0 0
      %519 = vmatpush1.bf16.msra.mxu0 0
      %520 = vmatprep.subr.bf16.mxu0 0
      %521 = vmatpush1.bf16.msra.mxu0 0
      %522 = vmatprep.mubr.bf16.mxu0 0
      %523 = vmatmul.mubr.bf16.gmra.mrb[0].mxu0 %v394
      %v524 = vpop.f32.mrb[0].mxu0
      %v525 = vadd.f32 0.0, %v524
      %v526 = vpop.f32.mrb[0].mxu0
      %v527 = vpop.f32.mrb[0].mxu0
      %v528 = vadd.f32 0.0, %v527
      %v529 = vpop.f32.mrb[0].mxu0
      %530 = vmatprep.mubr.bf16.mxu0 0
      %531 = vmatmul.mubr.bf16.gmra.mrb[0].mxu0 %v395
      %v532 = vpop.f32.mrb[0].mxu0
      %v533 = vadd.f32 0.0, %v532
      %v534 = vpop.f32.mrb[0].mxu0
      %v535 = vpop.f32.mrb[0].mxu0
      %v536 = vadd.f32 0.0, %v535
      %v537 = vpop.f32.mrb[0].mxu0
      %538 = vmatprep.mubr.bf16.mxu0 0
      %539 = vmatmul.mubr.bf16.gmra.mrb[0].mxu0 %v396
      %v540 = vpop.f32.mrb[0].mxu0
      %v541 = vadd.f32 0.0, %v540
      %v542 = vpop.f32.mrb[0].mxu0
      %v543 = vpop.f32.mrb[0].mxu0
      %v544 = vadd.f32 0.0, %v543
      %v545 = vpop.f32.mrb[0].mxu0
      %546 = vmatprep.mubr.bf16.mxu0 0
      %547 = vmatmul.mubr.bf16.gmra.mrb[0].mxu0 %v397
      %v548 = vpop.f32.mrb[0].mxu0
      %v549 = vadd.f32 0.0, %v548
      %v550 = vpop.f32.mrb[0].mxu0
      %v551 = vpop.f32.mrb[0].mxu0
      %v552 = vadd.f32 0.0, %v551
      %v553 = vpop.f32.mrb[0].mxu0
      %554 = vmatprep.mubr.bf16.mxu0 0
      %555 = vmatmul.mubr.bf16.gmra.mrb[0].mxu0 %v398
      %v556 = vpop.f32.mrb[0].mxu0
      %v557 = vadd.f32 0.0, %v556
      %v558 = vpop.f32.mrb[0].mxu0
      %v559 = vpop.f32.mrb[0].mxu0
      %v560 = vadd.f32 0.0, %v559
      %v561 = vpop.f32.mrb[0].mxu0
      %562 = vmatprep.mubr.bf16.mxu0 0
      %563 = vmatmul.mubr.bf16.gmra.mrb[0].mxu0 %v399
      %v564 = vpop.f32.mrb[0].mxu0
      %v565 = vadd.f32 0.0, %v564
      %v566 = vpop.f32.mrb[0].mxu0
      %v567 = vpop.f32.mrb[0].mxu0
      %v568 = vadd.f32 0.0, %v567
      %v569 = vpop.f32.mrb[0].mxu0
      %570 = vmatprep.mubr.bf16.mxu0 0
      %571 = vmatmul.mubr.bf16.gmra.mrb[0].mxu0 %v400
      %v572 = vpop.f32.mrb[0].mxu0
      %v573 = vadd.f32 0.0, %v572
      %v574 = vpop.f32.mrb[0].mxu0
      %v575 = vpop.f32.mrb[0].mxu0
      %v576 = vadd.f32 0.0, %v575
      %v577 = vpop.f32.mrb[0].mxu0
      %578 = vmatprep.mubr.bf16.mxu0 0
      %579 = vmatmul.mubr.bf16.gmra.mrb[0].mxu0 %v401
      %v580 = vpop.f32.mrb[0].mxu0
      %v581 = vadd.f32 0.0, %v580
      %v582 = vpop.f32.mrb[0].mxu0
      %v583 = vpop.f32.mrb[0].mxu0
      %v584 = vadd.f32 0.0, %v583
      %v585 = vpop.f32.mrb[0].mxu0
      %586 = vmatprep.mubr.bf16.mxu0 0
      %587 = vmatmul.mubr.bf16.gmra.mrb[0].mxu0 %v402
      %v588 = vpop.f32.mrb[0].mxu0
      %v589 = vadd.f32 0.0, %v588
      %v590 = vpop.f32.mrb[0].mxu0
      %v591 = vpop.f32.mrb[0].mxu0
      %v592 = vadd.f32 0.0, %v591
      %v593 = vpop.f32.mrb[0].mxu0
      %594 = vmatprep.mubr.bf16.mxu0 0
      %595 = vmatmul.mubr.bf16.gmra.mrb[0].mxu0 %v403
      %v596 = vpop.f32.mrb[0].mxu0
      %v597 = vadd.f32 0.0, %v596
      %v598 = vpop.f32.mrb[0].mxu0
      %v599 = vpop.f32.mrb[0].mxu0
      %v600 = vadd.f32 0.0, %v599
      %v601 = vpop.f32.mrb[0].mxu0
      %602 = vmatprep.mubr.bf16.mxu0 0
      %603 = vmatmul.mubr.bf16.gmra.mrb[0].mxu0 %v404
      %v604 = vpop.f32.mrb[0].mxu0
      %v605 = vadd.f32 0.0, %v604
      %v606 = vpop.f32.mrb[0].mxu0
      %v607 = vpop.f32.mrb[0].mxu0
      %v608 = vadd.f32 0.0, %v607
      %v609 = vpop.f32.mrb[0].mxu0
      %610 = vmatprep.mubr.bf16.mxu0 0
      %611 = vmatmul.mubr.bf16.gmra.mrb[0].mxu0 %v405
      %v612 = vpop.f32.mrb[0].mxu0
      %v613 = vadd.f32 0.0, %v612
      %v614 = vpop.f32.mrb[0].mxu0
      %v615 = vpop.f32.mrb[0].mxu0
      %v616 = vadd.f32 0.0, %v615
      %v617 = vpop.f32.mrb[0].mxu0
      %618 = vmatprep.mubr.bf16.mxu0 0
      %619 = vmatmul.mubr.bf16.gmra.mrb[0].mxu0 %v406
      %v620 = vpop.f32.mrb[0].mxu0
      %v621 = vadd.f32 0.0, %v620
      %v622 = vpop.f32.mrb[0].mxu0
      %v623 = vpop.f32.mrb[0].mxu0
      %v624 = vadd.f32 0.0, %v623
      %v625 = vpop.f32.mrb[0].mxu0
      %626 = vmatprep.mubr.bf16.mxu0 0
      %627 = vmatmul.mubr.bf16.gmra.mrb[0].mxu0 %v407
      %v628 = vpop.f32.mrb[0].mxu0
      %v629 = vadd.f32 0.0, %v628
      %v630 = vpop.f32.mrb[0].mxu0
      %v631 = vpop.f32.mrb[0].mxu0
      %v632 = vadd.f32 0.0, %v631
      %v633 = vpop.f32.mrb[0].mxu0
      %634 = vmatprep.mubr.bf16.mxu0 0
      %635 = vmatmul.mubr.bf16.gmra.mrb[0].mxu0 %v408
      %v636 = vpop.f32.mrb[0].mxu0
      %v637 = vadd.f32 0.0, %v636
      %v638 = vpop.f32.mrb[0].mxu0
      %v639 = vpop.f32.mrb[0].mxu0
      %v640 = vadd.f32 0.0, %v639
      %v641 = vpop.f32.mrb[0].mxu0
      %642 = vmatprep.mubr.bf16.mxu0 0
      %643 = vmatmul.mubr.bf16.gmra.mrb[0].mxu0 %v409
      %v644 = vpop.f32.mrb[0].mxu0
      %v645 = vadd.f32 0.0, %v644
      %v646 = vpop.f32.mrb[0].mxu0
      %v647 = vpop.f32.mrb[0].mxu0
      %v648 = vadd.f32 0.0, %v647
      %v649 = vpop.f32.mrb[0].mxu0
      %650 = vmatprep.mubr.bf16.mxu0 0
      %651 = vmatmul.mubr.bf16.gmra.mrb[0].mxu0 %v410
      %v652 = vpop.f32.mrb[0].mxu0
      %v653 = vadd.f32 0.0, %v652
      %v654 = vpop.f32.mrb[0].mxu0
      %v655 = vpop.f32.mrb[0].mxu0
      %v656 = vadd.f32 0.0, %v655
      %v657 = vpop.f32.mrb[0].mxu0
      %658 = vmatprep.mubr.bf16.mxu0 0
      %659 = vmatmul.mubr.bf16.gmra.mrb[0].mxu0 %v411
      %v660 = vpop.f32.mrb[0].mxu0
      %v661 = vadd.f32 0.0, %v660
      %v662 = vpop.f32.mrb[0].mxu0
      %v663 = vpop.f32.mrb[0].mxu0
      %v664 = vadd.f32 0.0, %v663
      %v665 = vpop.f32.mrb[0].mxu0
      %666 = vmatprep.mubr.bf16.mxu0 0
      %667 = vmatmul.mubr.bf16.gmra.mrb[0].mxu0 %v412
      %v668 = vpop.f32.mrb[0].mxu0
      %v669 = vadd.f32 0.0, %v668
      %v670 = vpop.f32.mrb[0].mxu0
      %v671 = vpop.f32.mrb[0].mxu0
      %v672 = vadd.f32 0.0, %v671
      %v673 = vpop.f32.mrb[0].mxu0
      %674 = vmatprep.mubr.bf16.mxu0 0
      %675 = vmatmul.mubr.bf16.gmra.mrb[0].mxu0 %v413
      %v676 = vpop.f32.mrb[0].mxu0
      %v677 = vadd.f32 0.0, %v676
      %v678 = vpop.f32.mrb[0].mxu0
      %v679 = vpop.f32.mrb[0].mxu0
      %v680 = vadd.f32 0.0, %v679
      %v681 = vpop.f32.mrb[0].mxu0
      %682 = vmatprep.mubr.bf16.mxu0 0
      %683 = vmatmul.mubr.bf16.gmra.mrb[0].mxu0 %v414
      %v684 = vpop.f32.mrb[0].mxu0
      %v685 = vadd.f32 0.0, %v684
      %v686 = vpop.f32.mrb[0].mxu0
      %v687 = vpop.f32.mrb[0].mxu0
      %v688 = vadd.f32 0.0, %v687
      %v689 = vpop.f32.mrb[0].mxu0
      %690 = vmatprep.mubr.bf16.mxu0 0
      %691 = vmatmul.mubr.bf16.gmra.mrb[0].mxu0 %v415
      %v692 = vpop.f32.mrb[0].mxu0
      %v693 = vadd.f32 0.0, %v692
      %v694 = vpop.f32.mrb[0].mxu0
      %v695 = vpop.f32.mrb[0].mxu0
      %v696 = vadd.f32 0.0, %v695
      %v697 = vpop.f32.mrb[0].mxu0
      %698 = vmatprep.mubr.bf16.mxu0 0
      %699 = vmatmul.mubr.bf16.gmra.mrb[0].mxu0 %v416
      %v700 = vpop.f32.mrb[0].mxu0
      %v701 = vadd.f32 0.0, %v700
      %v702 = vpop.f32.mrb[0].mxu0
      %v703 = vpop.f32.mrb[0].mxu0
      %v704 = vadd.f32 0.0, %v703
      %v705 = vpop.f32.mrb[0].mxu0
      %706 = vmatprep.mubr.bf16.mxu0 0
      %707 = vmatmul.mubr.bf16.gmra.mrb[0].mxu0 %v417
      %v708 = vpop.f32.mrb[0].mxu0
      %v709 = vadd.f32 0.0, %v708
      %v710 = vpop.f32.mrb[0].mxu0
      %v711 = vpop.f32.mrb[0].mxu0
      %v712 = vadd.f32 0.0, %v711
      %v713 = vpop.f32.mrb[0].mxu0
      %714 = vdwg.mxu0
      %v715 = vrot.slane %v525, 7
      %v716 = vrot.slane %v528, 7
      %v717 = vrot.slane %v533, 7
      %v718 = vrot.slane %v536, 7
      %v719 = vrot.slane %v541, 7
      %v720 = vrot.slane %v544, 7
      %v721 = vrot.slane %v549, 7
      %v722 = vrot.slane %v552, 7
      %v723 = vrot.slane %v557, 7
      %v724 = vrot.slane %v560, 7
      %v725 = vrot.slane %v565, 7
      %v726 = vrot.slane %v568, 7
      %v727 = vrot.slane %v573, 7
      %v728 = vrot.slane %v576, 7
      %v729 = vrot.slane %v581, 7
      %v730 = vrot.slane %v584, 7
      %v731 = vrot.slane %v589, 7
      %v732 = vrot.slane %v592, 7
      %v733 = vrot.slane %v597, 7
      %v734 = vrot.slane %v600, 7
      %v735 = vrot.slane %v605, 7
      %v736 = vrot.slane %v608, 7
      %v737 = vrot.slane %v613, 7
      %v738 = vrot.slane %v616, 7
      %v739 = vrot.slane %v621, 7
      %v740 = vrot.slane %v624, 7
      %v741 = vrot.slane %v629, 7
      %v742 = vrot.slane %v632, 7
      %v743 = vrot.slane %v637, 7
      %v744 = vrot.slane %v640, 7
      %v745 = vrot.slane %v645, 7
      %v746 = vrot.slane %v648, 7
      %v747 = vrot.slane %v653, 7
      %v748 = vrot.slane %v656, 7
      %v749 = vrot.slane %v661, 7
      %v750 = vrot.slane %v664, 7
      %v751 = vrot.slane %v669, 7
      %v752 = vrot.slane %v672, 7
      %v753 = vrot.slane %v677, 7
      %v754 = vrot.slane %v680, 7
      %v755 = vrot.slane %v685, 7
      %v756 = vrot.slane %v688, 7
      %v757 = vrot.slane %v693, 7
      %v758 = vrot.slane %v696, 7
      %v759 = vrot.slane %v701, 7
      %v760 = vrot.slane %v704, 7
      %v761 = vrot.slane %v709, 7
      %v762 = vrot.slane %v712, 7
      %v763 = vlaneseq
      %v764 = vshrl.u32 %v763, 7
      %vm765 = vcmp.lt.s32.totalorder %v764, 1
      %v766 = vsel %vm765, %v761, %v762
      %v767 = vsel %vm765, %v760, %v761
      %v768 = vsel %vm765, %v759, %v760
      %v769 = vsel %vm765, %v758, %v759
      %v770 = vsel %vm765, %v757, %v758
      %v771 = vsel %vm765, %v756, %v757
      %v772 = vsel %vm765, %v755, %v756
      %v773 = vsel %vm765, %v754, %v755
      %v774 = vsel %vm765, %v753, %v754
      %v775 = vsel %vm765, %v752, %v753
      %v776 = vsel %vm765, %v751, %v752
      %v777 = vsel %vm765, %v750, %v751
      %v778 = vsel %vm765, %v749, %v750
      %v779 = vsel %vm765, %v748, %v749
      %v780 = vsel %vm765, %v747, %v748
      %v781 = vsel %vm765, %v746, %v747
      %v782 = vsel %vm765, %v745, %v746
      %v783 = vsel %vm765, %v744, %v745
      %v784 = vsel %vm765, %v743, %v744
      %v785 = vsel %vm765, %v742, %v743
      %v786 = vsel %vm765, %v741, %v742
      %v787 = vsel %vm765, %v740, %v741
      %v788 = vsel %vm765, %v739, %v740
      %v789 = vsel %vm765, %v738, %v739
      %v790 = vsel %vm765, %v737, %v738
      %v791 = vsel %vm765, %v736, %v737
      %v792 = vsel %vm765, %v735, %v736
      %v793 = vsel %vm765, %v734, %v735
      %v794 = vsel %vm765, %v733, %v734
      %v795 = vsel %vm765, %v732, %v733
      %v796 = vsel %vm765, %v731, %v732
      %v797 = vsel %vm765, %v730, %v731
      %v798 = vsel %vm765, %v729, %v730
      %v799 = vsel %vm765, %v728, %v729
      %v800 = vsel %vm765, %v727, %v728
      %v801 = vsel %vm765, %v726, %v727
      %v802 = vsel %vm765, %v725, %v726
      %v803 = vsel %vm765, %v724, %v725
      %v804 = vsel %vm765, %v723, %v724
      %v805 = vsel %vm765, %v722, %v723
      %v806 = vsel %vm765, %v721, %v722
      %v807 = vsel %vm765, %v720, %v721
      %v808 = vsel %vm765, %v719, %v720
      %v809 = vsel %vm765, %v718, %v719
      %v810 = vsel %vm765, %v717, %v718
      %v811 = vsel %vm765, %v716, %v717
      %v812 = vsel %vm765, %v715, %v716
      %v813 = vsel %vm765, %v762, %v715
      %814 = vst [vmem:[#allocation2] sm:$0xff] %v813
      %815 = vst [vmem:[#allocation2 + $0x8] sm:$0xff] %v812
      %816 = vst [vmem:[#allocation2 + $0x10] sm:$0xff] %v811
      %817 = vst [vmem:[#allocation2 + $0x18] sm:$0xff] %v810
      %818 = vst [vmem:[#allocation2 + $0x20] sm:$0xff] %v809
      %819 = vst [vmem:[#allocation2 + $0x28] sm:$0xff] %v808
      %820 = vst [vmem:[#allocation2 + $0x30] sm:$0xff] %v807
      %821 = vst [vmem:[#allocation2 + $0x38] sm:$0xff] %v806
      %822 = vst [vmem:[#allocation2 + $0x40] sm:$0xff] %v805
      %823 = vst [vmem:[#allocation2 + $0x48] sm:$0xff] %v804
      %824 = vst [vmem:[#allocation2 + $0x50] sm:$0xff] %v803
      %825 = vst [vmem:[#allocation2 + $0x58] sm:$0xff] %v802
      %826 = vst [vmem:[#allocation2 + $0x60] sm:$0xff] %v801
      %827 = vst [vmem:[#allocation2 + $0x68] sm:$0xff] %v800
      %828 = vst [vmem:[#allocation2 + $0x70] sm:$0xff] %v799
      %829 = vst [vmem:[#allocation2 + $0x78] sm:$0xff] %v798
      %830 = vst [vmem:[#allocation2 + $0x80] sm:$0xff] %v797
      %831 = vst [vmem:[#allocation2 + $0x88] sm:$0xff] %v796
      %832 = vst [vmem:[#allocation2 + $0x90] sm:$0xff] %v795
      %833 = vst [vmem:[#allocation2 + $0x98] sm:$0xff] %v794
      %834 = vst [vmem:[#allocation2 + $0xa0] sm:$0xff] %v793
      %835 = vst [vmem:[#allocation2 + $0xa8] sm:$0xff] %v792
      %836 = vst [vmem:[#allocation2 + $0xb0] sm:$0xff] %v791
      %837 = vst [vmem:[#allocation2 + $0xb8] sm:$0xff] %v790
      %838 = vst [vmem:[#allocation2 + $0xc0] sm:$0xff] %v789
      %839 = vst [vmem:[#allocation2 + $0xc8] sm:$0xff] %v788
      %840 = vst [vmem:[#allocation2 + $0xd0] sm:$0xff] %v787
      %841 = vst [vmem:[#allocation2 + $0xd8] sm:$0xff] %v786
      %842 = vst [vmem:[#allocation2 + $0xe0] sm:$0xff] %v785
      %843 = vst [vmem:[#allocation2 + $0xe8] sm:$0xff] %v784
      %844 = vst [vmem:[#allocation2 + $0xf0] sm:$0xff] %v783
      %845 = vst [vmem:[#allocation2 + $0xf8] sm:$0xff] %v782
      %846 = vst [vmem:[#allocation2 + $0x100] sm:$0xff] %v781
      %847 = vst [vmem:[#allocation2 + $0x108] sm:$0xff] %v780
      %848 = vst [vmem:[#allocation2 + $0x110] sm:$0xff] %v779
      %849 = vst [vmem:[#allocation2 + $0x118] sm:$0xff] %v778
      %850 = vst [vmem:[#allocation2 + $0x120] sm:$0xff] %v777
      %851 = vst [vmem:[#allocation2 + $0x128] sm:$0xff] %v776
      %852 = vst [vmem:[#allocation2 + $0x130] sm:$0xff] %v775
      %853 = vst [vmem:[#allocation2 + $0x138] sm:$0xff] %v774
      %854 = vst [vmem:[#allocation2 + $0x140] sm:$0xff] %v773
      %855 = vst [vmem:[#allocation2 + $0x148] sm:$0xff] %v772
      %856 = vst [vmem:[#allocation2 + $0x150] sm:$0xff] %v771
      %857 = vst [vmem:[#allocation2 + $0x158] sm:$0xff] %v770
      %858 = vst [vmem:[#allocation2 + $0x160] sm:$0xff] %v769
      %859 = vst [vmem:[#allocation2 + $0x168] sm:$0xff] %v768
      %860 = vst [vmem:[#allocation2 + $0x170] sm:$0xff] %v767
      %861 = vst [vmem:[#allocation2 + $0x178] sm:$0xff] %v766
      %s862 = scalar_lea.vmem %s1, 64
      %v863 = vld [vmem:[%s862] sm:$0xf]
      %v864 = vld [vmem:[%s862 + $0x4] sm:$0xf]
      %v865 = vld [vmem:[%s862 + $0x8] sm:$0xf]
      %v866 = vld [vmem:[%s862 + $0xc] sm:$0xf]
      %v867 = vld [vmem:[%s862 + $0x10] sm:$0xf]
      %v868 = vld [vmem:[%s862 + $0x14] sm:$0xf]
      %v869 = vld [vmem:[%s862 + $0x18] sm:$0xf]
      %v870 = vld [vmem:[%s862 + $0x1c] sm:$0xf]
      %v871 = vld [vmem:[%s862 + $0x20] sm:$0xf]
      %v872 = vld [vmem:[%s862 + $0x24] sm:$0xf]
      %v873 = vld [vmem:[%s862 + $0x28] sm:$0xf]
      %v874 = vld [vmem:[%s862 + $0x2c] sm:$0xf]
      %v875 = vld [vmem:[%s862 + $0x30] sm:$0xf]
      %v876 = vld [vmem:[%s862 + $0x34] sm:$0xf]
      %v877 = vld [vmem:[%s862 + $0x38] sm:$0xf]
      %v878 = vld [vmem:[%s862 + $0x3c] sm:$0xf]
      %v895 = vunpack.c.l.b16 %v863
      %v896 = vunpack.c.l.b16 %v864
      %v897 = vunpack.c.l.b16 %v865
      %v898 = vunpack.c.l.b16 %v866
      %v899 = vunpack.c.l.b16 %v867
      %v900 = vunpack.c.l.b16 %v868
      %v901 = vunpack.c.l.b16 %v869
      %v902 = vunpack.c.l.b16 %v870
      %v903 = vunpack.c.l.b16 %v871
      %v904 = vunpack.c.l.b16 %v872
      %v905 = vunpack.c.l.b16 %v873
      %v906 = vunpack.c.l.b16 %v874
      %v907 = vunpack.c.l.b16 %v875
      %v908 = vunpack.c.l.b16 %v876
      %v909 = vunpack.c.l.b16 %v877
      %v910 = vunpack.c.l.b16 %v878
      %v911 = vpack.c.b16 %v896, %v895
      %v912 = vpack.c.b16 %v898, %v897
      %v913 = vpack.c.b16 %v900, %v899
      %v914 = vpack.c.b16 %v902, %v901
      %v915 = vpack.c.b16 %v904, %v903
      %v916 = vpack.c.b16 %v906, %v905
      %v917 = vpack.c.b16 %v908, %v907
      %v918 = vpack.c.b16 %v910, %v909
      %927 = vmatprep.subr.bf16.mxu0 0
      %928 = vmatpush1.bf16.msra.mxu0 %v911
      %929 = vmatprep.subr.bf16.mxu0 0
      %930 = vmatpush1.bf16.msra.mxu0 %v912
      %931 = vmatprep.subr.bf16.mxu0 0
      %932 = vmatpush1.bf16.msra.mxu0 %v913
      %933 = vmatprep.subr.bf16.mxu0 0
      %934 = vmatpush1.bf16.msra.mxu0 %v914
      %935 = vmatprep.subr.bf16.mxu0 0
      %936 = vmatpush1.bf16.msra.mxu0 %v915
      %937 = vmatprep.subr.bf16.mxu0 0
      %938 = vmatpush1.bf16.msra.mxu0 %v916
      %939 = vmatprep.subr.bf16.mxu0 0
      %940 = vmatpush1.bf16.msra.mxu0 %v917
      %941 = vmatprep.subr.bf16.mxu0 0
      %942 = vmatpush1.bf16.msra.mxu0 %v918
      %943 = vmatprep.subr.bf16.mxu0 0
      %944 = vmatpush1.bf16.msra.mxu0 0
      %945 = vmatprep.subr.bf16.mxu0 0
      %946 = vmatpush1.bf16.msra.mxu0 0
      %947 = vmatprep.subr.bf16.mxu0 0
      %948 = vmatpush1.bf16.msra.mxu0 0
      %949 = vmatprep.subr.bf16.mxu0 0
      %950 = vmatpush1.bf16.msra.mxu0 0
      %951 = vmatprep.subr.bf16.mxu0 0
      %952 = vmatpush1.bf16.msra.mxu0 0
      %953 = vmatprep.subr.bf16.mxu0 0
      %954 = vmatpush1.bf16.msra.mxu0 0
      %955 = vmatprep.subr.bf16.mxu0 0
      %956 = vmatpush1.bf16.msra.mxu0 0
      %957 = vmatprep.subr.bf16.mxu0 0
      %958 = vmatpush1.bf16.msra.mxu0 0
      %959 = vmatprep.mubr.bf16.mxu0 0
      %960 = vmatmul.mubr.bf16.gmra.mrb[0].mxu0 %v394
      %v961 = vpop.f32.mrb[0].mxu0
      %v962 = vadd.f32 0.0, %v961
      %v963 = vpop.f32.mrb[0].mxu0
      %v964 = vpop.f32.mrb[0].mxu0
      %v965 = vadd.f32 0.0, %v964
      %v966 = vpop.f32.mrb[0].mxu0
      %967 = vmatprep.mubr.bf16.mxu0 0
      %968 = vmatmul.mubr.bf16.gmra.mrb[0].mxu0 %v395
      %v969 = vpop.f32.mrb[0].mxu0
      %v970 = vadd.f32 0.0, %v969
      %v971 = vpop.f32.mrb[0].mxu0
      %v972 = vpop.f32.mrb[0].mxu0
      %v973 = vadd.f32 0.0, %v972
      %v974 = vpop.f32.mrb[0].mxu0
      %975 = vmatprep.mubr.bf16.mxu0 0
      %976 = vmatmul.mubr.bf16.gmra.mrb[0].mxu0 %v396
      %v977 = vpop.f32.mrb[0].mxu0
      %v978 = vadd.f32 0.0, %v977
      %v979 = vpop.f32.mrb[0].mxu0
      %v980 = vpop.f32.mrb[0].mxu0
      %v981 = vadd.f32 0.0, %v980
      %v982 = vpop.f32.mrb[0].mxu0
      %983 = vmatprep.mubr.bf16.mxu0 0
      %984 = vmatmul.mubr.bf16.gmra.mrb[0].mxu0 %v397
      %v985 = vpop.f32.mrb[0].mxu0
      %v986 = vadd.f32 0.0, %v985
      %v987 = vpop.f32.mrb[0].mxu0
      %v988 = vpop.f32.mrb[0].mxu0
      %v989 = vadd.f32 0.0, %v988
      %v990 = vpop.f32.mrb[0].mxu0
      %991 = vmatprep.mubr.bf16.mxu0 0
      %992 = vmatmul.mubr.bf16.gmra.mrb[0].mxu0 %v398
      %v993 = vpop.f32.mrb[0].mxu0
      %v994 = vadd.f32 0.0, %v993
      %v995 = vpop.f32.mrb[0].mxu0
      %v996 = vpop.f32.mrb[0].mxu0
      %v997 = vadd.f32 0.0, %v996
      %v998 = vpop.f32.mrb[0].mxu0
      %999 = vmatprep.mubr.bf16.mxu0 0
      %1000 = vmatmul.mubr.bf16.gmra.mrb[0].mxu0 %v399
      %v1001 = vpop.f32.mrb[0].mxu0
      %v1002 = vadd.f32 0.0, %v1001
      %v1003 = vpop.f32.mrb[0].mxu0
      %v1004 = vpop.f32.mrb[0].mxu0
      %v1005 = vadd.f32 0.0, %v1004
      %v1006 = vpop.f32.mrb[0].mxu0
      %1007 = vmatprep.mubr.bf16.mxu0 0
      %1008 = vmatmul.mubr.bf16.gmra.mrb[0].mxu0 %v400
      %v1009 = vpop.f32.mrb[0].mxu0
      %v1010 = vadd.f32 0.0, %v1009
      %v1011 = vpop.f32.mrb[0].mxu0
      %v1012 = vpop.f32.mrb[0].mxu0
      %v1013 = vadd.f32 0.0, %v1012
      %v1014 = vpop.f32.mrb[0].mxu0
      %1015 = vmatprep.mubr.bf16.mxu0 0
      %1016 = vmatmul.mubr.bf16.gmra.mrb[0].mxu0 %v401
      %v1017 = vpop.f32.mrb[0].mxu0
      %v1018 = vadd.f32 0.0, %v1017
      %v1019 = vpop.f32.mrb[0].mxu0
      %v1020 = vpop.f32.mrb[0].mxu0
      %v1021 = vadd.f32 0.0, %v1020
      %v1022 = vpop.f32.mrb[0].mxu0
      %1023 = vmatprep.mubr.bf16.mxu0 0
      %1024 = vmatmul.mubr.bf16.gmra.mrb[0].mxu0 %v402
      %v1025 = vpop.f32.mrb[0].mxu0
      %v1026 = vadd.f32 0.0, %v1025
      %v1027 = vpop.f32.mrb[0].mxu0
      %v1028 = vpop.f32.mrb[0].mxu0
      %v1029 = vadd.f32 0.0, %v1028
      %v1030 = vpop.f32.mrb[0].mxu0
      %1031 = vmatprep.mubr.bf16.mxu0 0
      %1032 = vmatmul.mubr.bf16.gmra.mrb[0].mxu0 %v403
      %v1033 = vpop.f32.mrb[0].mxu0
      %v1034 = vadd.f32 0.0, %v1033
      %v1035 = vpop.f32.mrb[0].mxu0
      %v1036 = vpop.f32.mrb[0].mxu0
      %v1037 = vadd.f32 0.0, %v1036
      %v1038 = vpop.f32.mrb[0].mxu0
      %1039 = vmatprep.mubr.bf16.mxu0 0
      %1040 = vmatmul.mubr.bf16.gmra.mrb[0].mxu0 %v404
      %v1041 = vpop.f32.mrb[0].mxu0
      %v1042 = vadd.f32 0.0, %v1041
      %v1043 = vpop.f32.mrb[0].mxu0
      %v1044 = vpop.f32.mrb[0].mxu0
      %v1045 = vadd.f32 0.0, %v1044
      %v1046 = vpop.f32.mrb[0].mxu0
      %1047 = vmatprep.mubr.bf16.mxu0 0
      %1048 = vmatmul.mubr.bf16.gmra.mrb[0].mxu0 %v405
      %v1049 = vpop.f32.mrb[0].mxu0
      %v1050 = vadd.f32 0.0, %v1049
      %v1051 = vpop.f32.mrb[0].mxu0
      %v1052 = vpop.f32.mrb[0].mxu0
      %v1053 = vadd.f32 0.0, %v1052
      %v1054 = vpop.f32.mrb[0].mxu0
      %1055 = vmatprep.mubr.bf16.mxu0 0
      %1056 = vmatmul.mubr.bf16.gmra.mrb[0].mxu0 %v406
      %v1057 = vpop.f32.mrb[0].mxu0
      %v1058 = vadd.f32 0.0, %v1057
      %v1059 = vpop.f32.mrb[0].mxu0
      %v1060 = vpop.f32.mrb[0].mxu0
      %v1061 = vadd.f32 0.0, %v1060
      %v1062 = vpop.f32.mrb[0].mxu0
      %1063 = vmatprep.mubr.bf16.mxu0 0
      %1064 = vmatmul.mubr.bf16.gmra.mrb[0].mxu0 %v407
      %v1065 = vpop.f32.mrb[0].mxu0
      %v1066 = vadd.f32 0.0, %v1065
      %v1067 = vpop.f32.mrb[0].mxu0
      %v1068 = vpop.f32.mrb[0].mxu0
      %v1069 = vadd.f32 0.0, %v1068
      %v1070 = vpop.f32.mrb[0].mxu0
      %1071 = vmatprep.mubr.bf16.mxu0 0
      %1072 = vmatmul.mubr.bf16.gmra.mrb[0].mxu0 %v408
      %v1073 = vpop.f32.mrb[0].mxu0
      %v1074 = vadd.f32 0.0, %v1073
      %v1075 = vpop.f32.mrb[0].mxu0
      %v1076 = vpop.f32.mrb[0].mxu0
      %v1077 = vadd.f32 0.0, %v1076
      %v1078 = vpop.f32.mrb[0].mxu0
      %1079 = vmatprep.mubr.bf16.mxu0 0
      %1080 = vmatmul.mubr.bf16.gmra.mrb[0].mxu0 %v409
      %v1081 = vpop.f32.mrb[0].mxu0
      %v1082 = vadd.f32 0.0, %v1081
      %v1083 = vpop.f32.mrb[0].mxu0
      %v1084 = vpop.f32.mrb[0].mxu0
      %v1085 = vadd.f32 0.0, %v1084
      %v1086 = vpop.f32.mrb[0].mxu0
      %1087 = vmatprep.mubr.bf16.mxu0 0
      %1088 = vmatmul.mubr.bf16.gmra.mrb[0].mxu0 %v410
      %v1089 = vpop.f32.mrb[0].mxu0
      %v1090 = vadd.f32 0.0, %v1089
      %v1091 = vpop.f32.mrb[0].mxu0
      %v1092 = vpop.f32.mrb[0].mxu0
      %v1093 = vadd.f32 0.0, %v1092
      %v1094 = vpop.f32.mrb[0].mxu0
      %1095 = vmatprep.mubr.bf16.mxu0 0
      %1096 = vmatmul.mubr.bf16.gmra.mrb[0].mxu0 %v411
      %v1097 = vpop.f32.mrb[0].mxu0
      %v1098 = vadd.f32 0.0, %v1097
      %v1099 = vpop.f32.mrb[0].mxu0
      %v1100 = vpop.f32.mrb[0].mxu0
      %v1101 = vadd.f32 0.0, %v1100
      %v1102 = vpop.f32.mrb[0].mxu0
      %1103 = vmatprep.mubr.bf16.mxu0 0
      %1104 = vmatmul.mubr.bf16.gmra.mrb[0].mxu0 %v412
      %v1105 = vpop.f32.mrb[0].mxu0
      %v1106 = vadd.f32 0.0, %v1105
      %v1107 = vpop.f32.mrb[0].mxu0
      %v1108 = vpop.f32.mrb[0].mxu0
      %v1109 = vadd.f32 0.0, %v1108
      %v1110 = vpop.f32.mrb[0].mxu0
      %1111 = vmatprep.mubr.bf16.mxu0 0
      %1112 = vmatmul.mubr.bf16.gmra.mrb[0].mxu0 %v413
      %v1113 = vpop.f32.mrb[0].mxu0
      %v1114 = vadd.f32 0.0, %v1113
      %v1115 = vpop.f32.mrb[0].mxu0
      %v1116 = vpop.f32.mrb[0].mxu0
      %v1117 = vadd.f32 0.0, %v1116
      %v1118 = vpop.f32.mrb[0].mxu0
      %1119 = vmatprep.mubr.bf16.mxu0 0
      %1120 = vmatmul.mubr.bf16.gmra.mrb[0].mxu0 %v414
      %v1121 = vpop.f32.mrb[0].mxu0
      %v1122 = vadd.f32 0.0, %v1121
      %v1123 = vpop.f32.mrb[0].mxu0
      %v1124 = vpop.f32.mrb[0].mxu0
      %v1125 = vadd.f32 0.0, %v1124
      %v1126 = vpop.f32.mrb[0].mxu0
      %1127 = vmatprep.mubr.bf16.mxu0 0
      %1128 = vmatmul.mubr.bf16.gmra.mrb[0].mxu0 %v415
      %v1129 = vpop.f32.mrb[0].mxu0
      %v1130 = vadd.f32 0.0, %v1129
      %v1131 = vpop.f32.mrb[0].mxu0
      %v1132 = vpop.f32.mrb[0].mxu0
      %v1133 = vadd.f32 0.0, %v1132
      %v1134 = vpop.f32.mrb[0].mxu0
      %1135 = vmatprep.mubr.bf16.mxu0 0
      %1136 = vmatmul.mubr.bf16.gmra.mrb[0].mxu0 %v416
      %v1137 = vpop.f32.mrb[0].mxu0
      %v1138 = vadd.f32 0.0, %v1137
      %v1139 = vpop.f32.mrb[0].mxu0
      %v1140 = vpop.f32.mrb[0].mxu0
      %v1141 = vadd.f32 0.0, %v1140
      %v1142 = vpop.f32.mrb[0].mxu0
      %1143 = vmatprep.mubr.bf16.mxu0 0
      %1144 = vmatmul.mubr.bf16.gmra.mrb[0].mxu0 %v417
      %v1145 = vpop.f32.mrb[0].mxu0
      %v1146 = vadd.f32 0.0, %v1145
      %v1147 = vpop.f32.mrb[0].mxu0
      %v1148 = vpop.f32.mrb[0].mxu0
      %v1149 = vadd.f32 0.0, %v1148
      %v1150 = vpop.f32.mrb[0].mxu0
      %1151 = vdwg.mxu0
      %v1152 = vld [vmem:[#allocation2] sm:$0xff]
      %v1153 = vld [vmem:[#allocation2 + $0x8] sm:$0xff]
      %v1154 = vld [vmem:[#allocation2 + $0x10] sm:$0xff]
      %v1155 = vld [vmem:[#allocation2 + $0x18] sm:$0xff]
      %v1156 = vld [vmem:[#allocation2 + $0x20] sm:$0xff]
      %v1157 = vld [vmem:[#allocation2 + $0x28] sm:$0xff]
      %v1158 = vld [vmem:[#allocation2 + $0x30] sm:$0xff]
      %v1159 = vld [vmem:[#allocation2 + $0x38] sm:$0xff]
      %v1160 = vld [vmem:[#allocation2 + $0x40] sm:$0xff]
      %v1161 = vld [vmem:[#allocation2 + $0x48] sm:$0xff]
      %v1162 = vld [vmem:[#allocation2 + $0x50] sm:$0xff]
      %v1163 = vld [vmem:[#allocation2 + $0x58] sm:$0xff]
      %v1164 = vld [vmem:[#allocation2 + $0x60] sm:$0xff]
      %v1165 = vld [vmem:[#allocation2 + $0x68] sm:$0xff]
      %v1166 = vld [vmem:[#allocation2 + $0x70] sm:$0xff]
      %v1167 = vld [vmem:[#allocation2 + $0x78] sm:$0xff]
      %v1168 = vld [vmem:[#allocation2 + $0x80] sm:$0xff]
      %v1169 = vld [vmem:[#allocation2 + $0x88] sm:$0xff]
      %v1170 = vld [vmem:[#allocation2 + $0x90] sm:$0xff]
      %v1171 = vld [vmem:[#allocation2 + $0x98] sm:$0xff]
      %v1172 = vld [vmem:[#allocation2 + $0xa0] sm:$0xff]
      %v1173 = vld [vmem:[#allocation2 + $0xa8] sm:$0xff]
      %v1174 = vld [vmem:[#allocation2 + $0xb0] sm:$0xff]
      %v1175 = vld [vmem:[#allocation2 + $0xb8] sm:$0xff]
      %v1176 = vld [vmem:[#allocation2 + $0xc0] sm:$0xff]
      %v1177 = vld [vmem:[#allocation2 + $0xc8] sm:$0xff]
      %v1178 = vld [vmem:[#allocation2 + $0xd0] sm:$0xff]
      %v1179 = vld [vmem:[#allocation2 + $0xd8] sm:$0xff]
      %v1180 = vld [vmem:[#allocation2 + $0xe0] sm:$0xff]
      %v1181 = vld [vmem:[#allocation2 + $0xe8] sm:$0xff]
      %v1182 = vld [vmem:[#allocation2 + $0xf0] sm:$0xff]
      %v1183 = vld [vmem:[#allocation2 + $0xf8] sm:$0xff]
      %v1184 = vld [vmem:[#allocation2 + $0x100] sm:$0xff]
      %v1185 = vld [vmem:[#allocation2 + $0x108] sm:$0xff]
      %v1186 = vld [vmem:[#allocation2 + $0x110] sm:$0xff]
      %v1187 = vld [vmem:[#allocation2 + $0x118] sm:$0xff]
      %v1188 = vld [vmem:[#allocation2 + $0x120] sm:$0xff]
      %v1189 = vld [vmem:[#allocation2 + $0x128] sm:$0xff]
      %v1190 = vld [vmem:[#allocation2 + $0x130] sm:$0xff]
      %v1191 = vld [vmem:[#allocation2 + $0x138] sm:$0xff]
      %v1192 = vld [vmem:[#allocation2 + $0x140] sm:$0xff]
      %v1193 = vld [vmem:[#allocation2 + $0x148] sm:$0xff]
      %v1194 = vld [vmem:[#allocation2 + $0x150] sm:$0xff]
      %v1195 = vld [vmem:[#allocation2 + $0x158] sm:$0xff]
      %v1196 = vld [vmem:[#allocation2 + $0x160] sm:$0xff]
      %v1197 = vld [vmem:[#allocation2 + $0x168] sm:$0xff]
      %v1198 = vld [vmem:[#allocation2 + $0x170] sm:$0xff]
      %v1199 = vld [vmem:[#allocation2 + $0x178] sm:$0xff]
      %v1200 = vadd.f32 %v1152, %v962
      %v1201 = vadd.f32 %v1153, %v965
      %v1202 = vadd.f32 %v1154, %v970
      %v1203 = vadd.f32 %v1155, %v973
      %v1204 = vadd.f32 %v1156, %v978
      %v1205 = vadd.f32 %v1157, %v981
      %v1206 = vadd.f32 %v1158, %v986
      %v1207 = vadd.f32 %v1159, %v989
      %v1208 = vadd.f32 %v1160, %v994
      %v1209 = vadd.f32 %v1161, %v997
      %v1210 = vadd.f32 %v1162, %v1002
      %v1211 = vadd.f32 %v1163, %v1005
      %v1212 = vadd.f32 %v1164, %v1010
      %v1213 = vadd.f32 %v1165, %v1013
      %v1214 = vadd.f32 %v1166, %v1018
      %v1215 = vadd.f32 %v1167, %v1021
      %v1216 = vadd.f32 %v1168, %v1026
      %v1217 = vadd.f32 %v1169, %v1029
      %v1218 = vadd.f32 %v1170, %v1034
      %v1219 = vadd.f32 %v1171, %v1037
      %v1220 = vadd.f32 %v1172, %v1042
      %v1221 = vadd.f32 %v1173, %v1045
      %v1222 = vadd.f32 %v1174, %v1050
      %v1223 = vadd.f32 %v1175, %v1053
      %v1224 = vadd.f32 %v1176, %v1058
      %v1225 = vadd.f32 %v1177, %v1061
      %v1226 = vadd.f32 %v1178, %v1066
      %v1227 = vadd.f32 %v1179, %v1069
      %v1228 = vadd.f32 %v1180, %v1074
      %v1229 = vadd.f32 %v1181, %v1077
      %v1230 = vadd.f32 %v1182, %v1082
      %v1231 = vadd.f32 %v1183, %v1085
      %v1232 = vadd.f32 %v1184, %v1090
      %v1233 = vadd.f32 %v1185, %v1093
      %v1234 = vadd.f32 %v1186, %v1098
      %v1235 = vadd.f32 %v1187, %v1101
      %v1236 = vadd.f32 %v1188, %v1106
      %v1237 = vadd.f32 %v1189, %v1109
      %v1238 = vadd.f32 %v1190, %v1114
      %v1239 = vadd.f32 %v1191, %v1117
      %v1240 = vadd.f32 %v1192, %v1122
      %v1241 = vadd.f32 %v1193, %v1125
      %v1242 = vadd.f32 %v1194, %v1130
      %v1243 = vadd.f32 %v1195, %v1133
      %v1244 = vadd.f32 %v1196, %v1138
      %v1245 = vadd.f32 %v1197, %v1141
      %v1246 = vadd.f32 %v1198, %v1146
      %v1247 = vadd.f32 %v1199, %v1149
      %1248 = vst [vmem:[#allocation2] sm:$0xff] %v1200
      %1249 = vst [vmem:[#allocation2 + $0x8] sm:$0xff] %v1201
      %1250 = vst [vmem:[#allocation2 + $0x10] sm:$0xff] %v1202
      %1251 = vst [vmem:[#allocation2 + $0x18] sm:$0xff] %v1203
      %1252 = vst [vmem:[#allocation2 + $0x20] sm:$0xff] %v1204
      %1253 = vst [vmem:[#allocation2 + $0x28] sm:$0xff] %v1205
      %1254 = vst [vmem:[#allocation2 + $0x30] sm:$0xff] %v1206
      %1255 = vst [vmem:[#allocation2 + $0x38] sm:$0xff] %v1207
      %1256 = vst [vmem:[#allocation2 + $0x40] sm:$0xff] %v1208
      %1257 = vst [vmem:[#allocation2 + $0x48] sm:$0xff] %v1209
      %1258 = vst [vmem:[#allocation2 + $0x50] sm:$0xff] %v1210
      %1259 = vst [vmem:[#allocation2 + $0x58] sm:$0xff] %v1211
      %1260 = vst [vmem:[#allocation2 + $0x60] sm:$0xff] %v1212
      %1261 = vst [vmem:[#allocation2 + $0x68] sm:$0xff] %v1213
      %1262 = vst [vmem:[#allocation2 + $0x70] sm:$0xff] %v1214
      %1263 = vst [vmem:[#allocation2 + $0x78] sm:$0xff] %v1215
      %1264 = vst [vmem:[#allocation2 + $0x80] sm:$0xff] %v1216
      %1265 = vst [vmem:[#allocation2 + $0x88] sm:$0xff] %v1217
      %1266 = vst [vmem:[#allocation2 + $0x90] sm:$0xff] %v1218
      %1267 = vst [vmem:[#allocation2 + $0x98] sm:$0xff] %v1219
      %1268 = vst [vmem:[#allocation2 + $0xa0] sm:$0xff] %v1220
      %1269 = vst [vmem:[#allocation2 + $0xa8] sm:$0xff] %v1221
      %1270 = vst [vmem:[#allocation2 + $0xb0] sm:$0xff] %v1222
      %1271 = vst [vmem:[#allocation2 + $0xb8] sm:$0xff] %v1223
      %1272 = vst [vmem:[#allocation2 + $0xc0] sm:$0xff] %v1224
      %1273 = vst [vmem:[#allocation2 + $0xc8] sm:$0xff] %v1225
      %1274 = vst [vmem:[#allocation2 + $0xd0] sm:$0xff] %v1226
      %1275 = vst [vmem:[#allocation2 + $0xd8] sm:$0xff] %v1227
      %1276 = vst [vmem:[#allocation2 + $0xe0] sm:$0xff] %v1228
      %1277 = vst [vmem:[#allocation2 + $0xe8] sm:$0xff] %v1229
      %1278 = vst [vmem:[#allocation2 + $0xf0] sm:$0xff] %v1230
      %1279 = vst [vmem:[#allocation2 + $0xf8] sm:$0xff] %v1231
      %1280 = vst [vmem:[#allocation2 + $0x100] sm:$0xff] %v1232
      %1281 = vst [vmem:[#allocation2 + $0x108] sm:$0xff] %v1233
      %1282 = vst [vmem:[#allocation2 + $0x110] sm:$0xff] %v1234
      %1283 = vst [vmem:[#allocation2 + $0x118] sm:$0xff] %v1235
      %1284 = vst [vmem:[#allocation2 + $0x120] sm:$0xff] %v1236
      %1285 = vst [vmem:[#allocation2 + $0x128] sm:$0xff] %v1237
      %1286 = vst [vmem:[#allocation2 + $0x130] sm:$0xff] %v1238
      %1287 = vst [vmem:[#allocation2 + $0x138] sm:$0xff] %v1239
      %1288 = vst [vmem:[#allocation2 + $0x140] sm:$0xff] %v1240
      %1289 = vst [vmem:[#allocation2 + $0x148] sm:$0xff] %v1241
      %1290 = vst [vmem:[#allocation2 + $0x150] sm:$0xff] %v1242
      %1291 = vst [vmem:[#allocation2 + $0x158] sm:$0xff] %v1243
      %1292 = vst [vmem:[#allocation2 + $0x160] sm:$0xff] %v1244
      %1293 = vst [vmem:[#allocation2 + $0x168] sm:$0xff] %v1245
      %1294 = vst [vmem:[#allocation2 + $0x170] sm:$0xff] %v1246
      %1295 = vst [vmem:[#allocation2 + $0x178] sm:$0xff] %v1247
      %s1296 = scalar_lea.vmem %s1, 128
      %v1297 = vld [vmem:[%s1296] sm:$0xf]
      %v1298 = vld [vmem:[%s1296 + $0x4] sm:$0xf]
      %v1299 = vld [vmem:[%s1296 + $0x8] sm:$0xf]
      %v1300 = vld [vmem:[%s1296 + $0xc] sm:$0xf]
      %v1301 = vld [vmem:[%s1296 + $0x10] sm:$0xf]
      %v1302 = vld [vmem:[%s1296 + $0x14] sm:$0xf]
      %v1303 = vld [vmem:[%s1296 + $0x18] sm:$0xf]
      %v1304 = vld [vmem:[%s1296 + $0x1c] sm:$0xf]
      %v1305 = vld [vmem:[%s1296 + $0x20] sm:$0xf]
      %v1306 = vld [vmem:[%s1296 + $0x24] sm:$0xf]
      %v1307 = vld [vmem:[%s1296 + $0x28] sm:$0xf]
      %v1308 = vld [vmem:[%s1296 + $0x2c] sm:$0xf]
      %v1309 = vld [vmem:[%s1296 + $0x30] sm:$0xf]
      %v1310 = vld [vmem:[%s1296 + $0x34] sm:$0xf]
      %v1311 = vld [vmem:[%s1296 + $0x38] sm:$0xf]
      %v1312 = vld [vmem:[%s1296 + $0x3c] sm:$0xf]
      %v1329 = vunpack.c.l.b16 %v1297
      %v1330 = vunpack.c.l.b16 %v1298
      %v1331 = vunpack.c.l.b16 %v1299
      %v1332 = vunpack.c.l.b16 %v1300
      %v1333 = vunpack.c.l.b16 %v1301
      %v1334 = vunpack.c.l.b16 %v1302
      %v1335 = vunpack.c.l.b16 %v1303
      %v1336 = vunpack.c.l.b16 %v1304
      %v1337 = vunpack.c.l.b16 %v1305
      %v1338 = vunpack.c.l.b16 %v1306
      %v1339 = vunpack.c.l.b16 %v1307
      %v1340 = vunpack.c.l.b16 %v1308
      %v1341 = vunpack.c.l.b16 %v1309
      %v1342 = vunpack.c.l.b16 %v1310
      %v1343 = vunpack.c.l.b16 %v1311
      %v1344 = vunpack.c.l.b16 %v1312
      %v1345 = vpack.c.b16 %v1330, %v1329
      %v1346 = vpack.c.b16 %v1332, %v1331
      %v1347 = vpack.c.b16 %v1334, %v1333
      %v1348 = vpack.c.b16 %v1336, %v1335
      %v1349 = vpack.c.b16 %v1338, %v1337
      %v1350 = vpack.c.b16 %v1340, %v1339
      %v1351 = vpack.c.b16 %v1342, %v1341
      %v1352 = vpack.c.b16 %v1344, %v1343
      %1361 = vmatprep.subr.bf16.mxu0 0
      %1362 = vmatpush1.bf16.msra.mxu0 %v1345
      %1363 = vmatprep.subr.bf16.mxu0 0
      %1364 = vmatpush1.bf16.msra.mxu0 %v1346
      %1365 = vmatprep.subr.bf16.mxu0 0
      %1366 = vmatpush1.bf16.msra.mxu0 %v1347
      %1367 = vmatprep.subr.bf16.mxu0 0
      %1368 = vmatpush1.bf16.msra.mxu0 %v1348
      %1369 = vmatprep.subr.bf16.mxu0 0
      %1370 = vmatpush1.bf16.msra.mxu0 %v1349
      %1371 = vmatprep.subr.bf16.mxu0 0
      %1372 = vmatpush1.bf16.msra.mxu0 %v1350
      %1373 = vmatprep.subr.bf16.mxu0 0
      %1374 = vmatpush1.bf16.msra.mxu0 %v1351
      %1375 = vmatprep.subr.bf16.mxu0 0
      %1376 = vmatpush1.bf16.msra.mxu0 %v1352
      %1377 = vmatprep.subr.bf16.mxu0 0
      %1378 = vmatpush1.bf16.msra.mxu0 0
      %1379 = vmatprep.subr.bf16.mxu0 0
      %1380 = vmatpush1.bf16.msra.mxu0 0
      %1381 = vmatprep.subr.bf16.mxu0 0
      %1382 = vmatpush1.bf16.msra.mxu0 0
      %1383 = vmatprep.subr.bf16.mxu0 0
      %1384 = vmatpush1.bf16.msra.mxu0 0
      %1385 = vmatprep.subr.bf16.mxu0 0
      %1386 = vmatpush1.bf16.msra.mxu0 0
      %1387 = vmatprep.subr.bf16.mxu0 0
      %1388 = vmatpush1.bf16.msra.mxu0 0
      %1389 = vmatprep.subr.bf16.mxu0 0
      %1390 = vmatpush1.bf16.msra.mxu0 0
      %1391 = vmatprep.subr.bf16.mxu0 0
      %1392 = vmatpush1.bf16.msra.mxu0 0
      %1393 = vmatprep.mubr.bf16.mxu0 0
      %1394 = vmatmul.mubr.bf16.gmra.mrb[0].mxu0 %v394
      %v1395 = vpop.f32.mrb[0].mxu0
      %v1396 = vadd.f32 0.0, %v1395
      %v1397 = vpop.f32.mrb[0].mxu0
      %v1398 = vpop.f32.mrb[0].mxu0
      %v1399 = vadd.f32 0.0, %v1398
      %v1400 = vpop.f32.mrb[0].mxu0
      %1401 = vmatprep.mubr.bf16.mxu0 0
      %1402 = vmatmul.mubr.bf16.gmra.mrb[0].mxu0 %v395
      %v1403 = vpop.f32.mrb[0].mxu0
      %v1404 = vadd.f32 0.0, %v1403
      %v1405 = vpop.f32.mrb[0].mxu0
      %v1406 = vpop.f32.mrb[0].mxu0
      %v1407 = vadd.f32 0.0, %v1406
      %v1408 = vpop.f32.mrb[0].mxu0
      %1409 = vmatprep.mubr.bf16.mxu0 0
      %1410 = vmatmul.mubr.bf16.gmra.mrb[0].mxu0 %v396
      %v1411 = vpop.f32.mrb[0].mxu0
      %v1412 = vadd.f32 0.0, %v1411
      %v1413 = vpop.f32.mrb[0].mxu0
      %v1414 = vpop.f32.mrb[0].mxu0
      %v1415 = vadd.f32 0.0, %v1414
      %v1416 = vpop.f32.mrb[0].mxu0
      %1417 = vmatprep.mubr.bf16.mxu0 0
      %1418 = vmatmul.mubr.bf16.gmra.mrb[0].mxu0 %v397
      %v1419 = vpop.f32.mrb[0].mxu0
      %v1420 = vadd.f32 0.0, %v1419
      %v1421 = vpop.f32.mrb[0].mxu0
      %v1422 = vpop.f32.mrb[0].mxu0
      %v1423 = vadd.f32 0.0, %v1422
      %v1424 = vpop.f32.mrb[0].mxu0
      %1425 = vmatprep.mubr.bf16.mxu0 0
      %1426 = vmatmul.mubr.bf16.gmra.mrb[0].mxu0 %v398
      %v1427 = vpop.f32.mrb[0].mxu0
      %v1428 = vadd.f32 0.0, %v1427
      %v1429 = vpop.f32.mrb[0].mxu0
      %v1430 = vpop.f32.mrb[0].mxu0
      %v1431 = vadd.f32 0.0, %v1430
      %v1432 = vpop.f32.mrb[0].mxu0
      %1433 = vmatprep.mubr.bf16.mxu0 0
      %1434 = vmatmul.mubr.bf16.gmra.mrb[0].mxu0 %v399
      %v1435 = vpop.f32.mrb[0].mxu0
      %v1436 = vadd.f32 0.0, %v1435
      %v1437 = vpop.f32.mrb[0].mxu0
      %v1438 = vpop.f32.mrb[0].mxu0
      %v1439 = vadd.f32 0.0, %v1438
      %v1440 = vpop.f32.mrb[0].mxu0
      %1441 = vmatprep.mubr.bf16.mxu0 0
      %1442 = vmatmul.mubr.bf16.gmra.mrb[0].mxu0 %v400
      %v1443 = vpop.f32.mrb[0].mxu0
      %v1444 = vadd.f32 0.0, %v1443
      %v1445 = vpop.f32.mrb[0].mxu0
      %v1446 = vpop.f32.mrb[0].mxu0
      %v1447 = vadd.f32 0.0, %v1446
      %v1448 = vpop.f32.mrb[0].mxu0
      %1449 = vmatprep.mubr.bf16.mxu0 0
      %1450 = vmatmul.mubr.bf16.gmra.mrb[0].mxu0 %v401
      %v1451 = vpop.f32.mrb[0].mxu0
      %v1452 = vadd.f32 0.0, %v1451
      %v1453 = vpop.f32.mrb[0].mxu0
      %v1454 = vpop.f32.mrb[0].mxu0
      %v1455 = vadd.f32 0.0, %v1454
      %v1456 = vpop.f32.mrb[0].mxu0
      %1457 = vmatprep.mubr.bf16.mxu0 0
      %1458 = vmatmul.mubr.bf16.gmra.mrb[0].mxu0 %v402
      %v1459 = vpop.f32.mrb[0].mxu0
      %v1460 = vadd.f32 0.0, %v1459
      %v1461 = vpop.f32.mrb[0].mxu0
      %v1462 = vpop.f32.mrb[0].mxu0
      %v1463 = vadd.f32 0.0, %v1462
      %v1464 = vpop.f32.mrb[0].mxu0
      %1465 = vmatprep.mubr.bf16.mxu0 0
      %1466 = vmatmul.mubr.bf16.gmra.mrb[0].mxu0 %v403
      %v1467 = vpop.f32.mrb[0].mxu0
      %v1468 = vadd.f32 0.0, %v1467
      %v1469 = vpop.f32.mrb[0].mxu0
      %v1470 = vpop.f32.mrb[0].mxu0
      %v1471 = vadd.f32 0.0, %v1470
      %v1472 = vpop.f32.mrb[0].mxu0
      %1473 = vmatprep.mubr.bf16.mxu0 0
      %1474 = vmatmul.mubr.bf16.gmra.mrb[0].mxu0 %v404
      %v1475 = vpop.f32.mrb[0].mxu0
      %v1476 = vadd.f32 0.0, %v1475
      %v1477 = vpop.f32.mrb[0].mxu0
      %v1478 = vpop.f32.mrb[0].mxu0
      %v1479 = vadd.f32 0.0, %v1478
      %v1480 = vpop.f32.mrb[0].mxu0
      %1481 = vmatprep.mubr.bf16.mxu0 0
      %1482 = vmatmul.mubr.bf16.gmra.mrb[0].mxu0 %v405
      %v1483 = vpop.f32.mrb[0].mxu0
      %v1484 = vadd.f32 0.0, %v1483
      %v1485 = vpop.f32.mrb[0].mxu0
      %v1486 = vpop.f32.mrb[0].mxu0
      %v1487 = vadd.f32 0.0, %v1486
      %v1488 = vpop.f32.mrb[0].mxu0
      %1489 = vmatprep.mubr.bf16.mxu0 0
      %1490 = vmatmul.mubr.bf16.gmra.mrb[0].mxu0 %v406
      %v1491 = vpop.f32.mrb[0].mxu0
      %v1492 = vadd.f32 0.0, %v1491
      %v1493 = vpop.f32.mrb[0].mxu0
      %v1494 = vpop.f32.mrb[0].mxu0
      %v1495 = vadd.f32 0.0, %v1494
      %v1496 = vpop.f32.mrb[0].mxu0
      %1497 = vmatprep.mubr.bf16.mxu0 0
      %1498 = vmatmul.mubr.bf16.gmra.mrb[0].mxu0 %v407
      %v1499 = vpop.f32.mrb[0].mxu0
      %v1500 = vadd.f32 0.0, %v1499
      %v1501 = vpop.f32.mrb[0].mxu0
      %v1502 = vpop.f32.mrb[0].mxu0
      %v1503 = vadd.f32 0.0, %v1502
      %v1504 = vpop.f32.mrb[0].mxu0
      %1505 = vmatprep.mubr.bf16.mxu0 0
      %1506 = vmatmul.mubr.bf16.gmra.mrb[0].mxu0 %v408
      %v1507 = vpop.f32.mrb[0].mxu0
      %v1508 = vadd.f32 0.0, %v1507
      %v1509 = vpop.f32.mrb[0].mxu0
      %v1510 = vpop.f32.mrb[0].mxu0
      %v1511 = vadd.f32 0.0, %v1510
      %v1512 = vpop.f32.mrb[0].mxu0
      %1513 = vmatprep.mubr.bf16.mxu0 0
      %1514 = vmatmul.mubr.bf16.gmra.mrb[0].mxu0 %v409
      %v1515 = vpop.f32.mrb[0].mxu0
      %v1516 = vadd.f32 0.0, %v1515
      %v1517 = vpop.f32.mrb[0].mxu0
      %v1518 = vpop.f32.mrb[0].mxu0
      %v1519 = vadd.f32 0.0, %v1518
      %v1520 = vpop.f32.mrb[0].mxu0
      %1521 = vmatprep.mubr.bf16.mxu0 0
      %1522 = vmatmul.mubr.bf16.gmra.mrb[0].mxu0 %v410
      %v1523 = vpop.f32.mrb[0].mxu0
      %v1524 = vadd.f32 0.0, %v1523
      %v1525 = vpop.f32.mrb[0].mxu0
      %v1526 = vpop.f32.mrb[0].mxu0
      %v1527 = vadd.f32 0.0, %v1526
      %v1528 = vpop.f32.mrb[0].mxu0
      %1529 = vmatprep.mubr.bf16.mxu0 0
      %1530 = vmatmul.mubr.bf16.gmra.mrb[0].mxu0 %v411
      %v1531 = vpop.f32.mrb[0].mxu0
      %v1532 = vadd.f32 0.0, %v1531
      %v1533 = vpop.f32.mrb[0].mxu0
      %v1534 = vpop.f32.mrb[0].mxu0
      %v1535 = vadd.f32 0.0, %v1534
      %v1536 = vpop.f32.mrb[0].mxu0
      %1537 = vmatprep.mubr.bf16.mxu0 0
      %1538 = vmatmul.mubr.bf16.gmra.mrb[0].mxu0 %v412
      %v1539 = vpop.f32.mrb[0].mxu0
      %v1540 = vadd.f32 0.0, %v1539
      %v1541 = vpop.f32.mrb[0].mxu0
      %v1542 = vpop.f32.mrb[0].mxu0
      %v1543 = vadd.f32 0.0, %v1542
      %v1544 = vpop.f32.mrb[0].mxu0
      %1545 = vmatprep.mubr.bf16.mxu0 0
      %1546 = vmatmul.mubr.bf16.gmra.mrb[0].mxu0 %v413
      %v1547 = vpop.f32.mrb[0].mxu0
      %v1548 = vadd.f32 0.0, %v1547
      %v1549 = vpop.f32.mrb[0].mxu0
      %v1550 = vpop.f32.mrb[0].mxu0
      %v1551 = vadd.f32 0.0, %v1550
      %v1552 = vpop.f32.mrb[0].mxu0
      %1553 = vmatprep.mubr.bf16.mxu0 0
      %1554 = vmatmul.mubr.bf16.gmra.mrb[0].mxu0 %v414
      %v1555 = vpop.f32.mrb[0].mxu0
      %v1556 = vadd.f32 0.0, %v1555
      %v1557 = vpop.f32.mrb[0].mxu0
      %v1558 = vpop.f32.mrb[0].mxu0
      %v1559 = vadd.f32 0.0, %v1558
      %v1560 = vpop.f32.mrb[0].mxu0
      %1561 = vmatprep.mubr.bf16.mxu0 0
      %1562 = vmatmul.mubr.bf16.gmra.mrb[0].mxu0 %v415
      %v1563 = vpop.f32.mrb[0].mxu0
      %v1564 = vadd.f32 0.0, %v1563
      %v1565 = vpop.f32.mrb[0].mxu0
      %v1566 = vpop.f32.mrb[0].mxu0
      %v1567 = vadd.f32 0.0, %v1566
      %v1568 = vpop.f32.mrb[0].mxu0
      %1569 = vmatprep.mubr.bf16.mxu0 0
      %1570 = vmatmul.mubr.bf16.gmra.mrb[0].mxu0 %v416
      %v1571 = vpop.f32.mrb[0].mxu0
      %v1572 = vadd.f32 0.0, %v1571
      %v1573 = vpop.f32.mrb[0].mxu0
      %v1574 = vpop.f32.mrb[0].mxu0
      %v1575 = vadd.f32 0.0, %v1574
      %v1576 = vpop.f32.mrb[0].mxu0
      %1577 = vmatprep.mubr.bf16.mxu0 0
      %1578 = vmatmul.mubr.bf16.gmra.mrb[0].mxu0 %v417
      %v1579 = vpop.f32.mrb[0].mxu0
      %v1580 = vadd.f32 0.0, %v1579
      %v1581 = vpop.f32.mrb[0].mxu0
      %v1582 = vpop.f32.mrb[0].mxu0
      %v1583 = vadd.f32 0.0, %v1582
      %v1584 = vpop.f32.mrb[0].mxu0
      %1585 = vdwg.mxu0
      %v1586 = vrot.slane %v1396, 1
      %v1587 = vrot.slane %v1399, 1
      %v1588 = vrot.slane %v1404, 1
      %v1589 = vrot.slane %v1407, 1
      %v1590 = vrot.slane %v1412, 1
      %v1591 = vrot.slane %v1415, 1
      %v1592 = vrot.slane %v1420, 1
      %v1593 = vrot.slane %v1423, 1
      %v1594 = vrot.slane %v1428, 1
      %v1595 = vrot.slane %v1431, 1
      %v1596 = vrot.slane %v1436, 1
      %v1597 = vrot.slane %v1439, 1
      %v1598 = vrot.slane %v1444, 1
      %v1599 = vrot.slane %v1447, 1
      %v1600 = vrot.slane %v1452, 1
      %v1601 = vrot.slane %v1455, 1
      %v1602 = vrot.slane %v1460, 1
      %v1603 = vrot.slane %v1463, 1
      %v1604 = vrot.slane %v1468, 1
      %v1605 = vrot.slane %v1471, 1
      %v1606 = vrot.slane %v1476, 1
      %v1607 = vrot.slane %v1479, 1
      %v1608 = vrot.slane %v1484, 1
      %v1609 = vrot.slane %v1487, 1
      %v1610 = vrot.slane %v1492, 1
      %v1611 = vrot.slane %v1495, 1
      %v1612 = vrot.slane %v1500, 1
      %v1613 = vrot.slane %v1503, 1
      %v1614 = vrot.slane %v1508, 1
      %v1615 = vrot.slane %v1511, 1
      %v1616 = vrot.slane %v1516, 1
      %v1617 = vrot.slane %v1519, 1
      %v1618 = vrot.slane %v1524, 1
      %v1619 = vrot.slane %v1527, 1
      %v1620 = vrot.slane %v1532, 1
      %v1621 = vrot.slane %v1535, 1
      %v1622 = vrot.slane %v1540, 1
      %v1623 = vrot.slane %v1543, 1
      %v1624 = vrot.slane %v1548, 1
      %v1625 = vrot.slane %v1551, 1
      %v1626 = vrot.slane %v1556, 1
      %v1627 = vrot.slane %v1559, 1
      %v1628 = vrot.slane %v1564, 1
      %v1629 = vrot.slane %v1567, 1
      %v1630 = vrot.slane %v1572, 1
      %v1631 = vrot.slane %v1575, 1
      %v1632 = vrot.slane %v1580, 1
      %v1633 = vrot.slane %v1583, 1
      %vm1634 = vcmp.lt.s32.totalorder %v764, 7
      %v1635 = vsel %vm1634, %v1632, %v1633
      %v1636 = vsel %vm1634, %v1631, %v1632
      %v1637 = vsel %vm1634, %v1630, %v1631
      %v1638 = vsel %vm1634, %v1629, %v1630
      %v1639 = vsel %vm1634, %v1628, %v1629
      %v1640 = vsel %vm1634, %v1627, %v1628
      %v1641 = vsel %vm1634, %v1626, %v1627
      %v1642 = vsel %vm1634, %v1625, %v1626
      %v1643 = vsel %vm1634, %v1624, %v1625
      %v1644 = vsel %vm1634, %v1623, %v1624
      %v1645 = vsel %vm1634, %v1622, %v1623
      %v1646 = vsel %vm1634, %v1621, %v1622
      %v1647 = vsel %vm1634, %v1620, %v1621
      %v1648 = vsel %vm1634, %v1619, %v1620
      %v1649 = vsel %vm1634, %v1618, %v1619
      %v1650 = vsel %vm1634, %v1617, %v1618
      %v1651 = vsel %vm1634, %v1616, %v1617
      %v1652 = vsel %vm1634, %v1615, %v1616
      %v1653 = vsel %vm1634, %v1614, %v1615
      %v1654 = vsel %vm1634, %v1613, %v1614
      %v1655 = vsel %vm1634, %v1612, %v1613
      %v1656 = vsel %vm1634, %v1611, %v1612
      %v1657 = vsel %vm1634, %v1610, %v1611
      %v1658 = vsel %vm1634, %v1609, %v1610
      %v1659 = vsel %vm1634, %v1608, %v1609
      %v1660 = vsel %vm1634, %v1607, %v1608
      %v1661 = vsel %vm1634, %v1606, %v1607
      %v1662 = vsel %vm1634, %v1605, %v1606
      %v1663 = vsel %vm1634, %v1604, %v1605
      %v1664 = vsel %vm1634, %v1603, %v1604
      %v1665 = vsel %vm1634, %v1602, %v1603
      %v1666 = vsel %vm1634, %v1601, %v1602
      %v1667 = vsel %vm1634, %v1600, %v1601
      %v1668 = vsel %vm1634, %v1599, %v1600
      %v1669 = vsel %vm1634, %v1598, %v1599
      %v1670 = vsel %vm1634, %v1597, %v1598
      %v1671 = vsel %vm1634, %v1596, %v1597
      %v1672 = vsel %vm1634, %v1595, %v1596
      %v1673 = vsel %vm1634, %v1594, %v1595
      %v1674 = vsel %vm1634, %v1593, %v1594
      %v1675 = vsel %vm1634, %v1592, %v1593
      %v1676 = vsel %vm1634, %v1591, %v1592
      %v1677 = vsel %vm1634, %v1590, %v1591
      %v1678 = vsel %vm1634, %v1589, %v1590
      %v1679 = vsel %vm1634, %v1588, %v1589
      %v1680 = vsel %vm1634, %v1587, %v1588
      %v1681 = vsel %vm1634, %v1586, %v1587
      %v1682 = vsel %vm1634, %v1633, %v1586
      %v1683 = vld [vmem:[#allocation2] sm:$0xff]
      %v1684 = vld [vmem:[#allocation2 + $0x8] sm:$0xff]
      %v1685 = vld [vmem:[#allocation2 + $0x10] sm:$0xff]
      %v1686 = vld [vmem:[#allocation2 + $0x18] sm:$0xff]
      %v1687 = vld [vmem:[#allocation2 + $0x20] sm:$0xff]
      %v1688 = vld [vmem:[#allocation2 + $0x28] sm:$0xff]
      %v1689 = vld [vmem:[#allocation2 + $0x30] sm:$0xff]
      %v1690 = vld [vmem:[#allocation2 + $0x38] sm:$0xff]
      %v1691 = vld [vmem:[#allocation2 + $0x40] sm:$0xff]
      %v1692 = vld [vmem:[#allocation2 + $0x48] sm:$0xff]
      %v1693 = vld [vmem:[#allocation2 + $0x50] sm:$0xff]
      %v1694 = vld [vmem:[#allocation2 + $0x58] sm:$0xff]
      %v1695 = vld [vmem:[#allocation2 + $0x60] sm:$0xff]
      %v1696 = vld [vmem:[#allocation2 + $0x68] sm:$0xff]
      %v1697 = vld [vmem:[#allocation2 + $0x70] sm:$0xff]
      %v1698 = vld [vmem:[#allocation2 + $0x78] sm:$0xff]
      %v1699 = vld [vmem:[#allocation2 + $0x80] sm:$0xff]
      %v1700 = vld [vmem:[#allocation2 + $0x88] sm:$0xff]
      %v1701 = vld [vmem:[#allocation2 + $0x90] sm:$0xff]
      %v1702 = vld [vmem:[#allocation2 + $0x98] sm:$0xff]
      %v1703 = vld [vmem:[#allocation2 + $0xa0] sm:$0xff]
      %v1704 = vld [vmem:[#allocation2 + $0xa8] sm:$0xff]
      %v1705 = vld [vmem:[#allocation2 + $0xb0] sm:$0xff]
      %v1706 = vld [vmem:[#allocation2 + $0xb8] sm:$0xff]
      %v1707 = vld [vmem:[#allocation2 + $0xc0] sm:$0xff]
      %v1708 = vld [vmem:[#allocation2 + $0xc8] sm:$0xff]
      %v1709 = vld [vmem:[#allocation2 + $0xd0] sm:$0xff]
      %v1710 = vld [vmem:[#allocation2 + $0xd8] sm:$0xff]
      %v1711 = vld [vmem:[#allocation2 + $0xe0] sm:$0xff]
      %v1712 = vld [vmem:[#allocation2 + $0xe8] sm:$0xff]
      %v1713 = vld [vmem:[#allocation2 + $0xf0] sm:$0xff]
      %v1714 = vld [vmem:[#allocation2 + $0xf8] sm:$0xff]
      %v1715 = vld [vmem:[#allocation2 + $0x100] sm:$0xff]
      %v1716 = vld [vmem:[#allocation2 + $0x108] sm:$0xff]
      %v1717 = vld [vmem:[#allocation2 + $0x110] sm:$0xff]
      %v1718 = vld [vmem:[#allocation2 + $0x118] sm:$0xff]
      %v1719 = vld [vmem:[#allocation2 + $0x120] sm:$0xff]
      %v1720 = vld [vmem:[#allocation2 + $0x128] sm:$0xff]
      %v1721 = vld [vmem:[#allocation2 + $0x130] sm:$0xff]
      %v1722 = vld [vmem:[#allocation2 + $0x138] sm:$0xff]
      %v1723 = vld [vmem:[#allocation2 + $0x140] sm:$0xff]
      %v1724 = vld [vmem:[#allocation2 + $0x148] sm:$0xff]
      %v1725 = vld [vmem:[#allocation2 + $0x150] sm:$0xff]
      %v1726 = vld [vmem:[#allocation2 + $0x158] sm:$0xff]
      %v1727 = vld [vmem:[#allocation2 + $0x160] sm:$0xff]
      %v1728 = vld [vmem:[#allocation2 + $0x168] sm:$0xff]
      %v1729 = vld [vmem:[#allocation2 + $0x170] sm:$0xff]
      %v1730 = vld [vmem:[#allocation2 + $0x178] sm:$0xff]
      %v1731 = vadd.f32 %v1683, %v1681
      %v1732 = vadd.f32 %v1684, %v1680
      %v1733 = vadd.f32 %v1685, %v1679
      %v1734 = vadd.f32 %v1686, %v1678
      %v1735 = vadd.f32 %v1687, %v1677
      %v1736 = vadd.f32 %v1688, %v1676
      %v1737 = vadd.f32 %v1689, %v1675
      %v1738 = vadd.f32 %v1690, %v1674
      %v1739 = vadd.f32 %v1691, %v1673
      %v1740 = vadd.f32 %v1692, %v1672
      %v1741 = vadd.f32 %v1693, %v1671
      %v1742 = vadd.f32 %v1694, %v1670
      %v1743 = vadd.f32 %v1695, %v1669
      %v1744 = vadd.f32 %v1696, %v1668
      %v1745 = vadd.f32 %v1697, %v1667
      %v1746 = vadd.f32 %v1698, %v1666
      %v1747 = vadd.f32 %v1699, %v1665
      %v1748 = vadd.f32 %v1700, %v1664
      %v1749 = vadd.f32 %v1701, %v1663
      %v1750 = vadd.f32 %v1702, %v1662
      %v1751 = vadd.f32 %v1703, %v1661
      %v1752 = vadd.f32 %v1704, %v1660
      %v1753 = vadd.f32 %v1705, %v1659
      %v1754 = vadd.f32 %v1706, %v1658
      %v1755 = vadd.f32 %v1707, %v1657
      %v1756 = vadd.f32 %v1708, %v1656
      %v1757 = vadd.f32 %v1709, %v1655
      %v1758 = vadd.f32 %v1710, %v1654
      %v1759 = vadd.f32 %v1711, %v1653
      %v1760 = vadd.f32 %v1712, %v1652
      %v1761 = vadd.f32 %v1713, %v1651
      %v1762 = vadd.f32 %v1714, %v1650
      %v1763 = vadd.f32 %v1715, %v1649
      %v1764 = vadd.f32 %v1716, %v1648
      %v1765 = vadd.f32 %v1717, %v1647
      %v1766 = vadd.f32 %v1718, %v1646
      %v1767 = vadd.f32 %v1719, %v1645
      %v1768 = vadd.f32 %v1720, %v1644
      %v1769 = vadd.f32 %v1721, %v1643
      %v1770 = vadd.f32 %v1722, %v1642
      %v1771 = vadd.f32 %v1723, %v1641
      %v1772 = vadd.f32 %v1724, %v1640
      %v1773 = vadd.f32 %v1725, %v1639
      %v1774 = vadd.f32 %v1726, %v1638
      %v1775 = vadd.f32 %v1727, %v1637
      %v1776 = vadd.f32 %v1728, %v1636
      %v1777 = vadd.f32 %v1729, %v1635
      %v1778 = vadd.f32 %v1730, %v1682
      %1779 = vst [vmem:[#allocation2] sm:$0xff] %v1731
      %1780 = vst [vmem:[#allocation2 + $0x8] sm:$0xff] %v1732
      %1781 = vst [vmem:[#allocation2 + $0x10] sm:$0xff] %v1733
      %1782 = vst [vmem:[#allocation2 + $0x18] sm:$0xff] %v1734
      %1783 = vst [vmem:[#allocation2 + $0x20] sm:$0xff] %v1735
      %1784 = vst [vmem:[#allocation2 + $0x28] sm:$0xff] %v1736
      %1785 = vst [vmem:[#allocation2 + $0x30] sm:$0xff] %v1737
      %1786 = vst [vmem:[#allocation2 + $0x38] sm:$0xff] %v1738
      %1787 = vst [vmem:[#allocation2 + $0x40] sm:$0xff] %v1739
      %1788 = vst [vmem:[#allocation2 + $0x48] sm:$0xff] %v1740
      %1789 = vst [vmem:[#allocation2 + $0x50] sm:$0xff] %v1741
      %1790 = vst [vmem:[#allocation2 + $0x58] sm:$0xff] %v1742
      %1791 = vst [vmem:[#allocation2 + $0x60] sm:$0xff] %v1743
      %1792 = vst [vmem:[#allocation2 + $0x68] sm:$0xff] %v1744
      %1793 = vst [vmem:[#allocation2 + $0x70] sm:$0xff] %v1745
      %1794 = vst [vmem:[#allocation2 + $0x78] sm:$0xff] %v1746
      %1795 = vst [vmem:[#allocation2 + $0x80] sm:$0xff] %v1747
      %1796 = vst [vmem:[#allocation2 + $0x88] sm:$0xff] %v1748
      %1797 = vst [vmem:[#allocation2 + $0x90] sm:$0xff] %v1749
      %1798 = vst [vmem:[#allocation2 + $0x98] sm:$0xff] %v1750
      %1799 = vst [vmem:[#allocation2 + $0xa0] sm:$0xff] %v1751
      %1800 = vst [vmem:[#allocation2 + $0xa8] sm:$0xff] %v1752
      %1801 = vst [vmem:[#allocation2 + $0xb0] sm:$0xff] %v1753
      %1802 = vst [vmem:[#allocation2 + $0xb8] sm:$0xff] %v1754
      %1803 = vst [vmem:[#allocation2 + $0xc0] sm:$0xff] %v1755
      %1804 = vst [vmem:[#allocation2 + $0xc8] sm:$0xff] %v1756
      %1805 = vst [vmem:[#allocation2 + $0xd0] sm:$0xff] %v1757
      %1806 = vst [vmem:[#allocation2 + $0xd8] sm:$0xff] %v1758
      %1807 = vst [vmem:[#allocation2 + $0xe0] sm:$0xff] %v1759
      %1808 = vst [vmem:[#allocation2 + $0xe8] sm:$0xff] %v1760
      %1809 = vst [vmem:[#allocation2 + $0xf0] sm:$0xff] %v1761
      %1810 = vst [vmem:[#allocation2 + $0xf8] sm:$0xff] %v1762
      %1811 = vst [vmem:[#allocation2 + $0x100] sm:$0xff] %v1763
      %1812 = vst [vmem:[#allocation2 + $0x108] sm:$0xff] %v1764
      %1813 = vst [vmem:[#allocation2 + $0x110] sm:$0xff] %v1765
      %1814 = vst [vmem:[#allocation2 + $0x118] sm:$0xff] %v1766
      %1815 = vst [vmem:[#allocation2 + $0x120] sm:$0xff] %v1767
      %1816 = vst [vmem:[#allocation2 + $0x128] sm:$0xff] %v1768
      %1817 = vst [vmem:[#allocation2 + $0x130] sm:$0xff] %v1769
      %1818 = vst [vmem:[#allocation2 + $0x138] sm:$0xff] %v1770
      %1819 = vst [vmem:[#allocation2 + $0x140] sm:$0xff] %v1771
      %1820 = vst [vmem:[#allocation2 + $0x148] sm:$0xff] %v1772
      %1821 = vst [vmem:[#allocation2 + $0x150] sm:$0xff] %v1773
      %1822 = vst [vmem:[#allocation2 + $0x158] sm:$0xff] %v1774
      %1823 = vst [vmem:[#allocation2 + $0x160] sm:$0xff] %v1775
      %1824 = vst [vmem:[#allocation2 + $0x168] sm:$0xff] %v1776
      %1825 = vst [vmem:[#allocation2 + $0x170] sm:$0xff] %v1777
      %1826 = vst [vmem:[#allocation2 + $0x178] sm:$0xff] %v1778
      %s1827 = scalar_lea.vmem %s224, 12
      %v1828 = vld [vmem:[%s1827] sm:$0xf]
      %v1829 = vld [vmem:[%s1827 + $0x4] sm:$0xf]
      %v1830 = vld [vmem:[%s1827 + $0x8] sm:$0xf]
      %v1831 = vld [vmem:[%s1827 + $0xc] sm:$0xf]
      %v1832 = vld [vmem:[%s1827 + $0x10] sm:$0xf]
      %v1833 = vld [vmem:[%s1827 + $0x14] sm:$0xf]
      %v1834 = vld [vmem:[%s1827 + $0x18] sm:$0xf]
      %v1835 = vld [vmem:[%s1827 + $0x1c] sm:$0xf]
      %v1836 = vld [vmem:[%s1827 + $0x20] sm:$0xf]
      %v1837 = vld [vmem:[%s1827 + $0x24] sm:$0xf]
      %v1838 = vld [vmem:[%s1827 + $0x28] sm:$0xf]
      %v1839 = vld [vmem:[%s1827 + $0x2c] sm:$0xf]
      %v1840 = vld [vmem:[%s1827 + $0x30] sm:$0xf]
      %v1841 = vld [vmem:[%s1827 + $0x34] sm:$0xf]
      %v1842 = vld [vmem:[%s1827 + $0x38] sm:$0xf]
      %v1843 = vld [vmem:[%s1827 + $0x3c] sm:$0xf]
      %v1844 = vld [vmem:[%s1827 + $0x40] sm:$0xf]
      %v1845 = vld [vmem:[%s1827 + $0x44] sm:$0xf]
      %v1846 = vld [vmem:[%s1827 + $0x48] sm:$0xf]
      %v1847 = vld [vmem:[%s1827 + $0x4c] sm:$0xf]
      %v1848 = vld [vmem:[%s1827 + $0x50] sm:$0xf]
      %v1849 = vld [vmem:[%s1827 + $0x54] sm:$0xf]
      %v1850 = vld [vmem:[%s1827 + $0x58] sm:$0xf]
      %v1851 = vld [vmem:[%s1827 + $0x5c] sm:$0xf]
      %v1852 = vld [vmem:[%s1827 + $0x60] sm:$0xf]
      %v1853 = vld [vmem:[%s1827 + $0x64] sm:$0xf]
      %v1854 = vld [vmem:[%s1827 + $0x68] sm:$0xf]
      %v1855 = vld [vmem:[%s1827 + $0x6c] sm:$0xf]
      %v1856 = vld [vmem:[%s1827 + $0x70] sm:$0xf]
      %v1857 = vld [vmem:[%s1827 + $0x74] sm:$0xf]
      %v1858 = vld [vmem:[%s1827 + $0x78] sm:$0xf]
      %v1859 = vld [vmem:[%s1827 + $0x7c] sm:$0xf]
      %v1860 = vld [vmem:[%s1827 + $0x80] sm:$0xf]
      %v1861 = vld [vmem:[%s1827 + $0x84] sm:$0xf]
      %v1862 = vld [vmem:[%s1827 + $0x88] sm:$0xf]
      %v1863 = vld [vmem:[%s1827 + $0x8c] sm:$0xf]
      %v1864 = vld [vmem:[%s1827 + $0x90] sm:$0xf]
      %v1865 = vld [vmem:[%s1827 + $0x94] sm:$0xf]
      %v1866 = vld [vmem:[%s1827 + $0x98] sm:$0xf]
      %v1867 = vld [vmem:[%s1827 + $0x9c] sm:$0xf]
      %v1868 = vld [vmem:[%s1827 + $0xa0] sm:$0xf]
      %v1869 = vld [vmem:[%s1827 + $0xa4] sm:$0xf]
      %v1870 = vld [vmem:[%s1827 + $0xa8] sm:$0xf]
      %v1871 = vld [vmem:[%s1827 + $0xac] sm:$0xf]
      %v1872 = vld [vmem:[%s1827 + $0xb0] sm:$0xf]
      %v1873 = vld [vmem:[%s1827 + $0xb4] sm:$0xf]
      %v1874 = vld [vmem:[%s1827 + $0xb8] sm:$0xf]
      %v1875 = vld [vmem:[%s1827 + $0xbc] sm:$0xf]
      %s1876 = scalar_lea.vmem %s1, 192
      %v1877 = vld [vmem:[%s1876] sm:$0xf]
      %v1878 = vld [vmem:[%s1876 + $0x4] sm:$0xf]
      %v1879 = vld [vmem:[%s1876 + $0x8] sm:$0xf]
      %v1880 = vld [vmem:[%s1876 + $0xc] sm:$0xf]
      %v1881 = vld [vmem:[%s1876 + $0x10] sm:$0xf]
      %v1882 = vld [vmem:[%s1876 + $0x14] sm:$0xf]
      %v1883 = vld [vmem:[%s1876 + $0x18] sm:$0xf]
      %v1884 = vld [vmem:[%s1876 + $0x1c] sm:$0xf]
      %v1885 = vld [vmem:[%s1876 + $0x20] sm:$0xf]
      %v1886 = vld [vmem:[%s1876 + $0x24] sm:$0xf]
      %v1887 = vld [vmem:[%s1876 + $0x28] sm:$0xf]
      %v1888 = vld [vmem:[%s1876 + $0x2c] sm:$0xf]
      %v1889 = vld [vmem:[%s1876 + $0x30] sm:$0xf]
      %v1890 = vld [vmem:[%s1876 + $0x34] sm:$0xf]
      %v1891 = vld [vmem:[%s1876 + $0x38] sm:$0xf]
      %v1892 = vld [vmem:[%s1876 + $0x3c] sm:$0xf]
      %v1941 = vunpack.c.l.b16 %v1828
      %v1942 = vunpack.c.l.b16 %v1829
      %v1943 = vunpack.c.l.b16 %v1830
      %v1944 = vunpack.c.l.b16 %v1831
      %v1945 = vunpack.c.l.b16 %v1832
      %v1946 = vunpack.c.l.b16 %v1833
      %v1947 = vunpack.c.l.b16 %v1834
      %v1948 = vunpack.c.l.b16 %v1835
      %v1949 = vunpack.c.l.b16 %v1836
      %v1950 = vunpack.c.l.b16 %v1837
      %v1951 = vunpack.c.l.b16 %v1838
      %v1952 = vunpack.c.l.b16 %v1839
      %v1953 = vunpack.c.l.b16 %v1840
      %v1954 = vunpack.c.l.b16 %v1841
      %v1955 = vunpack.c.l.b16 %v1842
      %v1956 = vunpack.c.l.b16 %v1843
      %v1957 = vunpack.c.l.b16 %v1844
      %v1958 = vunpack.c.l.b16 %v1845
      %v1959 = vunpack.c.l.b16 %v1846
      %v1960 = vunpack.c.l.b16 %v1847
      %v1961 = vunpack.c.l.b16 %v1848
      %v1962 = vunpack.c.l.b16 %v1849
      %v1963 = vunpack.c.l.b16 %v1850
      %v1964 = vunpack.c.l.b16 %v1851
      %v1965 = vunpack.c.l.b16 %v1852
      %v1966 = vunpack.c.l.b16 %v1853
      %v1967 = vunpack.c.l.b16 %v1854
      %v1968 = vunpack.c.l.b16 %v1855
      %v1969 = vunpack.c.l.b16 %v1856
      %v1970 = vunpack.c.l.b16 %v1857
      %v1971 = vunpack.c.l.b16 %v1858
      %v1972 = vunpack.c.l.b16 %v1859
      %v1973 = vunpack.c.l.b16 %v1860
      %v1974 = vunpack.c.l.b16 %v1861
      %v1975 = vunpack.c.l.b16 %v1862
      %v1976 = vunpack.c.l.b16 %v1863
      %v1977 = vunpack.c.l.b16 %v1864
      %v1978 = vunpack.c.l.b16 %v1865
      %v1979 = vunpack.c.l.b16 %v1866
      %v1980 = vunpack.c.l.b16 %v1867
      %v1981 = vunpack.c.l.b16 %v1868
      %v1982 = vunpack.c.l.b16 %v1869
      %v1983 = vunpack.c.l.b16 %v1870
      %v1984 = vunpack.c.l.b16 %v1871
      %v1985 = vunpack.c.l.b16 %v1872
      %v1986 = vunpack.c.l.b16 %v1873
      %v1987 = vunpack.c.l.b16 %v1874
      %v1988 = vunpack.c.l.b16 %v1875
      %v1989 = vpack.c.b16 %v1942, %v1941
      %v1990 = vpack.c.b16 %v1944, %v1943
      %v1991 = vpack.c.b16 %v1946, %v1945
      %v1992 = vpack.c.b16 %v1948, %v1947
      %v1993 = vpack.c.b16 %v1950, %v1949
      %v1994 = vpack.c.b16 %v1952, %v1951
      %v1995 = vpack.c.b16 %v1954, %v1953
      %v1996 = vpack.c.b16 %v1956, %v1955
      %v1997 = vpack.c.b16 %v1958, %v1957
      %v1998 = vpack.c.b16 %v1960, %v1959
      %v1999 = vpack.c.b16 %v1962, %v1961
      %v2000 = vpack.c.b16 %v1964, %v1963
      %v2001 = vpack.c.b16 %v1966, %v1965
      %v2002 = vpack.c.b16 %v1968, %v1967
      %v2003 = vpack.c.b16 %v1970, %v1969
      %v2004 = vpack.c.b16 %v1972, %v1971
      %v2005 = vpack.c.b16 %v1974, %v1973
      %v2006 = vpack.c.b16 %v1976, %v1975
      %v2007 = vpack.c.b16 %v1978, %v1977
      %v2008 = vpack.c.b16 %v1980, %v1979
      %v2009 = vpack.c.b16 %v1982, %v1981
      %v2010 = vpack.c.b16 %v1984, %v1983
      %v2011 = vpack.c.b16 %v1986, %v1985
      %v2012 = vpack.c.b16 %v1988, %v1987
      %v2053 = vunpack.c.l.b16 %v1877
      %v2054 = vunpack.c.l.b16 %v1878
      %v2055 = vunpack.c.l.b16 %v1879
      %v2056 = vunpack.c.l.b16 %v1880
      %v2057 = vunpack.c.l.b16 %v1881
      %v2058 = vunpack.c.l.b16 %v1882
      %v2059 = vunpack.c.l.b16 %v1883
      %v2060 = vunpack.c.l.b16 %v1884
      %v2061 = vunpack.c.l.b16 %v1885
      %v2062 = vunpack.c.l.b16 %v1886
      %v2063 = vunpack.c.l.b16 %v1887
      %v2064 = vunpack.c.l.b16 %v1888
      %v2065 = vunpack.c.l.b16 %v1889
      %v2066 = vunpack.c.l.b16 %v1890
      %v2067 = vunpack.c.l.b16 %v1891
      %v2068 = vunpack.c.l.b16 %v1892
      %v2069 = vpack.c.b16 %v2054, %v2053
      %v2070 = vpack.c.b16 %v2056, %v2055
      %v2071 = vpack.c.b16 %v2058, %v2057
      %v2072 = vpack.c.b16 %v2060, %v2059
      %v2073 = vpack.c.b16 %v2062, %v2061
      %v2074 = vpack.c.b16 %v2064, %v2063
      %v2075 = vpack.c.b16 %v2066, %v2065
      %v2076 = vpack.c.b16 %v2068, %v2067
      %2085 = vmatprep.subr.bf16.mxu0 0
      %2086 = vmatpush1.bf16.msra.mxu0 %v2069
      %2087 = vmatprep.subr.bf16.mxu0 0
      %2088 = vmatpush1.bf16.msra.mxu0 %v2070
      %2089 = vmatprep.subr.bf16.mxu0 0
      %2090 = vmatpush1.bf16.msra.mxu0 %v2071
      %2091 = vmatprep.subr.bf16.mxu0 0
      %2092 = vmatpush1.bf16.msra.mxu0 %v2072
      %2093 = vmatprep.subr.bf16.mxu0 0
      %2094 = vmatpush1.bf16.msra.mxu0 %v2073
      %2095 = vmatprep.subr.bf16.mxu0 0
      %2096 = vmatpush1.bf16.msra.mxu0 %v2074
      %2097 = vmatprep.subr.bf16.mxu0 0
      %2098 = vmatpush1.bf16.msra.mxu0 %v2075
      %2099 = vmatprep.subr.bf16.mxu0 0
      %2100 = vmatpush1.bf16.msra.mxu0 %v2076
      %2101 = vmatprep.subr.bf16.mxu0 0
      %2102 = vmatpush1.bf16.msra.mxu0 0
      %2103 = vmatprep.subr.bf16.mxu0 0
      %2104 = vmatpush1.bf16.msra.mxu0 0
      %2105 = vmatprep.subr.bf16.mxu0 0
      %2106 = vmatpush1.bf16.msra.mxu0 0
      %2107 = vmatprep.subr.bf16.mxu0 0
      %2108 = vmatpush1.bf16.msra.mxu0 0
      %2109 = vmatprep.subr.bf16.mxu0 0
      %2110 = vmatpush1.bf16.msra.mxu0 0
      %2111 = vmatprep.subr.bf16.mxu0 0
      %2112 = vmatpush1.bf16.msra.mxu0 0
      %2113 = vmatprep.subr.bf16.mxu0 0
      %2114 = vmatpush1.bf16.msra.mxu0 0
      %2115 = vmatprep.subr.bf16.mxu0 0
      %2116 = vmatpush1.bf16.msra.mxu0 0
      %2117 = vmatprep.mubr.bf16.mxu0 0
      %2118 = vmatmul.mubr.bf16.gmra.mrb[0].mxu0 %v1989
      %v2119 = vpop.f32.mrb[0].mxu0
      %v2120 = vadd.f32 0.0, %v2119
      %v2121 = vpop.f32.mrb[0].mxu0
      %v2122 = vpop.f32.mrb[0].mxu0
      %v2123 = vadd.f32 0.0, %v2122
      %v2124 = vpop.f32.mrb[0].mxu0
      %2125 = vmatprep.mubr.bf16.mxu0 0
      %2126 = vmatmul.mubr.bf16.gmra.mrb[0].mxu0 %v1990
      %v2127 = vpop.f32.mrb[0].mxu0
      %v2128 = vadd.f32 0.0, %v2127
      %v2129 = vpop.f32.mrb[0].mxu0
      %v2130 = vpop.f32.mrb[0].mxu0
      %v2131 = vadd.f32 0.0, %v2130
      %v2132 = vpop.f32.mrb[0].mxu0
      %2133 = vmatprep.mubr.bf16.mxu0 0
      %2134 = vmatmul.mubr.bf16.gmra.mrb[0].mxu0 %v1991
      %v2135 = vpop.f32.mrb[0].mxu0
      %v2136 = vadd.f32 0.0, %v2135
      %v2137 = vpop.f32.mrb[0].mxu0
      %v2138 = vpop.f32.mrb[0].mxu0
      %v2139 = vadd.f32 0.0, %v2138
      %v2140 = vpop.f32.mrb[0].mxu0
      %2141 = vmatprep.mubr.bf16.mxu0 0
      %2142 = vmatmul.mubr.bf16.gmra.mrb[0].mxu0 %v1992
      %v2143 = vpop.f32.mrb[0].mxu0
      %v2144 = vadd.f32 0.0, %v2143
      %v2145 = vpop.f32.mrb[0].mxu0
      %v2146 = vpop.f32.mrb[0].mxu0
      %v2147 = vadd.f32 0.0, %v2146
      %v2148 = vpop.f32.mrb[0].mxu0
      %2149 = vmatprep.mubr.bf16.mxu0 0
      %2150 = vmatmul.mubr.bf16.gmra.mrb[0].mxu0 %v1993
      %v2151 = vpop.f32.mrb[0].mxu0
      %v2152 = vadd.f32 0.0, %v2151
      %v2153 = vpop.f32.mrb[0].mxu0
      %v2154 = vpop.f32.mrb[0].mxu0
      %v2155 = vadd.f32 0.0, %v2154
      %v2156 = vpop.f32.mrb[0].mxu0
      %2157 = vmatprep.mubr.bf16.mxu0 0
      %2158 = vmatmul.mubr.bf16.gmra.mrb[0].mxu0 %v1994
      %v2159 = vpop.f32.mrb[0].mxu0
      %v2160 = vadd.f32 0.0, %v2159
      %v2161 = vpop.f32.mrb[0].mxu0
      %v2162 = vpop.f32.mrb[0].mxu0
      %v2163 = vadd.f32 0.0, %v2162
      %v2164 = vpop.f32.mrb[0].mxu0
      %2165 = vmatprep.mubr.bf16.mxu0 0
      %2166 = vmatmul.mubr.bf16.gmra.mrb[0].mxu0 %v1995
      %v2167 = vpop.f32.mrb[0].mxu0
      %v2168 = vadd.f32 0.0, %v2167
      %v2169 = vpop.f32.mrb[0].mxu0
      %v2170 = vpop.f32.mrb[0].mxu0
      %v2171 = vadd.f32 0.0, %v2170
      %v2172 = vpop.f32.mrb[0].mxu0
      %2173 = vmatprep.mubr.bf16.mxu0 0
      %2174 = vmatmul.mubr.bf16.gmra.mrb[0].mxu0 %v1996
      %v2175 = vpop.f32.mrb[0].mxu0
      %v2176 = vadd.f32 0.0, %v2175
      %v2177 = vpop.f32.mrb[0].mxu0
      %v2178 = vpop.f32.mrb[0].mxu0
      %v2179 = vadd.f32 0.0, %v2178
      %v2180 = vpop.f32.mrb[0].mxu0
      %2181 = vmatprep.mubr.bf16.mxu0 0
      %2182 = vmatmul.mubr.bf16.gmra.mrb[0].mxu0 %v1997
      %v2183 = vpop.f32.mrb[0].mxu0
      %v2184 = vadd.f32 0.0, %v2183
      %v2185 = vpop.f32.mrb[0].mxu0
      %v2186 = vpop.f32.mrb[0].mxu0
      %v2187 = vadd.f32 0.0, %v2186
      %v2188 = vpop.f32.mrb[0].mxu0
      %2189 = vmatprep.mubr.bf16.mxu0 0
      %2190 = vmatmul.mubr.bf16.gmra.mrb[0].mxu0 %v1998
      %v2191 = vpop.f32.mrb[0].mxu0
      %v2192 = vadd.f32 0.0, %v2191
      %v2193 = vpop.f32.mrb[0].mxu0
      %v2194 = vpop.f32.mrb[0].mxu0
      %v2195 = vadd.f32 0.0, %v2194
      %v2196 = vpop.f32.mrb[0].mxu0
      %2197 = vmatprep.mubr.bf16.mxu0 0
      %2198 = vmatmul.mubr.bf16.gmra.mrb[0].mxu0 %v1999
      %v2199 = vpop.f32.mrb[0].mxu0
      %v2200 = vadd.f32 0.0, %v2199
      %v2201 = vpop.f32.mrb[0].mxu0
      %v2202 = vpop.f32.mrb[0].mxu0
      %v2203 = vadd.f32 0.0, %v2202
      %v2204 = vpop.f32.mrb[0].mxu0
      %2205 = vmatprep.mubr.bf16.mxu0 0
      %2206 = vmatmul.mubr.bf16.gmra.mrb[0].mxu0 %v2000
      %v2207 = vpop.f32.mrb[0].mxu0
      %v2208 = vadd.f32 0.0, %v2207
      %v2209 = vpop.f32.mrb[0].mxu0
      %v2210 = vpop.f32.mrb[0].mxu0
      %v2211 = vadd.f32 0.0, %v2210
      %v2212 = vpop.f32.mrb[0].mxu0
      %2213 = vmatprep.mubr.bf16.mxu0 0
      %2214 = vmatmul.mubr.bf16.gmra.mrb[0].mxu0 %v2001
      %v2215 = vpop.f32.mrb[0].mxu0
      %v2216 = vadd.f32 0.0, %v2215
      %v2217 = vpop.f32.mrb[0].mxu0
      %v2218 = vpop.f32.mrb[0].mxu0
      %v2219 = vadd.f32 0.0, %v2218
      %v2220 = vpop.f32.mrb[0].mxu0
      %2221 = vmatprep.mubr.bf16.mxu0 0
      %2222 = vmatmul.mubr.bf16.gmra.mrb[0].mxu0 %v2002
      %v2223 = vpop.f32.mrb[0].mxu0
      %v2224 = vadd.f32 0.0, %v2223
      %v2225 = vpop.f32.mrb[0].mxu0
      %v2226 = vpop.f32.mrb[0].mxu0
      %v2227 = vadd.f32 0.0, %v2226
      %v2228 = vpop.f32.mrb[0].mxu0
      %2229 = vmatprep.mubr.bf16.mxu0 0
      %2230 = vmatmul.mubr.bf16.gmra.mrb[0].mxu0 %v2003
      %v2231 = vpop.f32.mrb[0].mxu0
      %v2232 = vadd.f32 0.0, %v2231
      %v2233 = vpop.f32.mrb[0].mxu0
      %v2234 = vpop.f32.mrb[0].mxu0
      %v2235 = vadd.f32 0.0, %v2234
      %v2236 = vpop.f32.mrb[0].mxu0
      %2237 = vmatprep.mubr.bf16.mxu0 0
      %2238 = vmatmul.mubr.bf16.gmra.mrb[0].mxu0 %v2004
      %v2239 = vpop.f32.mrb[0].mxu0
      %v2240 = vadd.f32 0.0, %v2239
      %v2241 = vpop.f32.mrb[0].mxu0
      %v2242 = vpop.f32.mrb[0].mxu0
      %v2243 = vadd.f32 0.0, %v2242
      %v2244 = vpop.f32.mrb[0].mxu0
      %2245 = vmatprep.mubr.bf16.mxu0 0
      %2246 = vmatmul.mubr.bf16.gmra.mrb[0].mxu0 %v2005
      %v2247 = vpop.f32.mrb[0].mxu0
      %v2248 = vadd.f32 0.0, %v2247
      %v2249 = vpop.f32.mrb[0].mxu0
      %v2250 = vpop.f32.mrb[0].mxu0
      %v2251 = vadd.f32 0.0, %v2250
      %v2252 = vpop.f32.mrb[0].mxu0
      %2253 = vmatprep.mubr.bf16.mxu0 0
      %2254 = vmatmul.mubr.bf16.gmra.mrb[0].mxu0 %v2006
      %v2255 = vpop.f32.mrb[0].mxu0
      %v2256 = vadd.f32 0.0, %v2255
      %v2257 = vpop.f32.mrb[0].mxu0
      %v2258 = vpop.f32.mrb[0].mxu0
      %v2259 = vadd.f32 0.0, %v2258
      %v2260 = vpop.f32.mrb[0].mxu0
      %2261 = vmatprep.mubr.bf16.mxu0 0
      %2262 = vmatmul.mubr.bf16.gmra.mrb[0].mxu0 %v2007
      %v2263 = vpop.f32.mrb[0].mxu0
      %v2264 = vadd.f32 0.0, %v2263
      %v2265 = vpop.f32.mrb[0].mxu0
      %v2266 = vpop.f32.mrb[0].mxu0
      %v2267 = vadd.f32 0.0, %v2266
      %v2268 = vpop.f32.mrb[0].mxu0
      %2269 = vmatprep.mubr.bf16.mxu0 0
      %2270 = vmatmul.mubr.bf16.gmra.mrb[0].mxu0 %v2008
      %v2271 = vpop.f32.mrb[0].mxu0
      %v2272 = vadd.f32 0.0, %v2271
      %v2273 = vpop.f32.mrb[0].mxu0
      %v2274 = vpop.f32.mrb[0].mxu0
      %v2275 = vadd.f32 0.0, %v2274
      %v2276 = vpop.f32.mrb[0].mxu0
      %2277 = vmatprep.mubr.bf16.mxu0 0
      %2278 = vmatmul.mubr.bf16.gmra.mrb[0].mxu0 %v2009
      %v2279 = vpop.f32.mrb[0].mxu0
      %v2280 = vadd.f32 0.0, %v2279
      %v2281 = vpop.f32.mrb[0].mxu0
      %v2282 = vpop.f32.mrb[0].mxu0
      %v2283 = vadd.f32 0.0, %v2282
      %v2284 = vpop.f32.mrb[0].mxu0
      %2285 = vmatprep.mubr.bf16.mxu0 0
      %2286 = vmatmul.mubr.bf16.gmra.mrb[0].mxu0 %v2010
      %v2287 = vpop.f32.mrb[0].mxu0
      %v2288 = vadd.f32 0.0, %v2287
      %v2289 = vpop.f32.mrb[0].mxu0
      %v2290 = vpop.f32.mrb[0].mxu0
      %v2291 = vadd.f32 0.0, %v2290
      %v2292 = vpop.f32.mrb[0].mxu0
      %2293 = vmatprep.mubr.bf16.mxu0 0
      %2294 = vmatmul.mubr.bf16.gmra.mrb[0].mxu0 %v2011
      %v2295 = vpop.f32.mrb[0].mxu0
      %v2296 = vadd.f32 0.0, %v2295
      %v2297 = vpop.f32.mrb[0].mxu0
      %v2298 = vpop.f32.mrb[0].mxu0
      %v2299 = vadd.f32 0.0, %v2298
      %v2300 = vpop.f32.mrb[0].mxu0
      %2301 = vmatprep.mubr.bf16.mxu0 0
      %2302 = vmatmul.mubr.bf16.gmra.mrb[0].mxu0 %v2012
      %v2303 = vpop.f32.mrb[0].mxu0
      %v2304 = vadd.f32 0.0, %v2303
      %v2305 = vpop.f32.mrb[0].mxu0
      %v2306 = vpop.f32.mrb[0].mxu0
      %v2307 = vadd.f32 0.0, %v2306
      %v2308 = vpop.f32.mrb[0].mxu0
      %2309 = vdwg.mxu0
      %v2310 = vrot.slane %v2120, 7
      %v2311 = vrot.slane %v2123, 7
      %v2312 = vrot.slane %v2128, 7
      %v2313 = vrot.slane %v2131, 7
      %v2314 = vrot.slane %v2136, 7
      %v2315 = vrot.slane %v2139, 7
      %v2316 = vrot.slane %v2144, 7
      %v2317 = vrot.slane %v2147, 7
      %v2318 = vrot.slane %v2152, 7
      %v2319 = vrot.slane %v2155, 7
      %v2320 = vrot.slane %v2160, 7
      %v2321 = vrot.slane %v2163, 7
      %v2322 = vrot.slane %v2168, 7
      %v2323 = vrot.slane %v2171, 7
      %v2324 = vrot.slane %v2176, 7
      %v2325 = vrot.slane %v2179, 7
      %v2326 = vrot.slane %v2184, 7
      %v2327 = vrot.slane %v2187, 7
      %v2328 = vrot.slane %v2192, 7
      %v2329 = vrot.slane %v2195, 7
      %v2330 = vrot.slane %v2200, 7
      %v2331 = vrot.slane %v2203, 7
      %v2332 = vrot.slane %v2208, 7
      %v2333 = vrot.slane %v2211, 7
      %v2334 = vrot.slane %v2216, 7
      %v2335 = vrot.slane %v2219, 7
      %v2336 = vrot.slane %v2224, 7
      %v2337 = vrot.slane %v2227, 7
      %v2338 = vrot.slane %v2232, 7
      %v2339 = vrot.slane %v2235, 7
      %v2340 = vrot.slane %v2240, 7
      %v2341 = vrot.slane %v2243, 7
      %v2342 = vrot.slane %v2248, 7
      %v2343 = vrot.slane %v2251, 7
      %v2344 = vrot.slane %v2256, 7
      %v2345 = vrot.slane %v2259, 7
      %v2346 = vrot.slane %v2264, 7
      %v2347 = vrot.slane %v2267, 7
      %v2348 = vrot.slane %v2272, 7
      %v2349 = vrot.slane %v2275, 7
      %v2350 = vrot.slane %v2280, 7
      %v2351 = vrot.slane %v2283, 7
      %v2352 = vrot.slane %v2288, 7
      %v2353 = vrot.slane %v2291, 7
      %v2354 = vrot.slane %v2296, 7
      %v2355 = vrot.slane %v2299, 7
      %v2356 = vrot.slane %v2304, 7
      %v2357 = vrot.slane %v2307, 7
      %v2358 = vsel %vm765, %v2356, %v2357
      %v2359 = vsel %vm765, %v2355, %v2356
      %v2360 = vsel %vm765, %v2354, %v2355
      %v2361 = vsel %vm765, %v2353, %v2354
      %v2362 = vsel %vm765, %v2352, %v2353
      %v2363 = vsel %vm765, %v2351, %v2352
      %v2364 = vsel %vm765, %v2350, %v2351
      %v2365 = vsel %vm765, %v2349, %v2350
      %v2366 = vsel %vm765, %v2348, %v2349
      %v2367 = vsel %vm765, %v2347, %v2348
      %v2368 = vsel %vm765, %v2346, %v2347
      %v2369 = vsel %vm765, %v2345, %v2346
      %v2370 = vsel %vm765, %v2344, %v2345
      %v2371 = vsel %vm765, %v2343, %v2344
      %v2372 = vsel %vm765, %v2342, %v2343
      %v2373 = vsel %vm765, %v2341, %v2342
      %v2374 = vsel %vm765, %v2340, %v2341
      %v2375 = vsel %vm765, %v2339, %v2340
      %v2376 = vsel %vm765, %v2338, %v2339
      %v2377 = vsel %vm765, %v2337, %v2338
      %v2378 = vsel %vm765, %v2336, %v2337
      %v2379 = vsel %vm765, %v2335, %v2336
      %v2380 = vsel %vm765, %v2334, %v2335
      %v2381 = vsel %vm765, %v2333, %v2334
      %v2382 = vsel %vm765, %v2332, %v2333
      %v2383 = vsel %vm765, %v2331, %v2332
      %v2384 = vsel %vm765, %v2330, %v2331
      %v2385 = vsel %vm765, %v2329, %v2330
      %v2386 = vsel %vm765, %v2328, %v2329
      %v2387 = vsel %vm765, %v2327, %v2328
      %v2388 = vsel %vm765, %v2326, %v2327
      %v2389 = vsel %vm765, %v2325, %v2326
      %v2390 = vsel %vm765, %v2324, %v2325
      %v2391 = vsel %vm765, %v2323, %v2324
      %v2392 = vsel %vm765, %v2322, %v2323
      %v2393 = vsel %vm765, %v2321, %v2322
      %v2394 = vsel %vm765, %v2320, %v2321
      %v2395 = vsel %vm765, %v2319, %v2320
      %v2396 = vsel %vm765, %v2318, %v2319
      %v2397 = vsel %vm765, %v2317, %v2318
      %v2398 = vsel %vm765, %v2316, %v2317
      %v2399 = vsel %vm765, %v2315, %v2316
      %v2400 = vsel %vm765, %v2314, %v2315
      %v2401 = vsel %vm765, %v2313, %v2314
      %v2402 = vsel %vm765, %v2312, %v2313
      %v2403 = vsel %vm765, %v2311, %v2312
      %v2404 = vsel %vm765, %v2310, %v2311
      %v2405 = vsel %vm765, %v2357, %v2310
      %v2406 = vld [vmem:[#allocation2] sm:$0xff]
      %v2407 = vld [vmem:[#allocation2 + $0x8] sm:$0xff]
      %v2408 = vld [vmem:[#allocation2 + $0x10] sm:$0xff]
      %v2409 = vld [vmem:[#allocation2 + $0x18] sm:$0xff]
      %v2410 = vld [vmem:[#allocation2 + $0x20] sm:$0xff]
      %v2411 = vld [vmem:[#allocation2 + $0x28] sm:$0xff]
      %v2412 = vld [vmem:[#allocation2 + $0x30] sm:$0xff]
      %v2413 = vld [vmem:[#allocation2 + $0x38] sm:$0xff]
      %v2414 = vld [vmem:[#allocation2 + $0x40] sm:$0xff]
      %v2415 = vld [vmem:[#allocation2 + $0x48] sm:$0xff]
      %v2416 = vld [vmem:[#allocation2 + $0x50] sm:$0xff]
      %v2417 = vld [vmem:[#allocation2 + $0x58] sm:$0xff]
      %v2418 = vld [vmem:[#allocation2 + $0x60] sm:$0xff]
      %v2419 = vld [vmem:[#allocation2 + $0x68] sm:$0xff]
      %v2420 = vld [vmem:[#allocation2 + $0x70] sm:$0xff]
      %v2421 = vld [vmem:[#allocation2 + $0x78] sm:$0xff]
      %v2422 = vld [vmem:[#allocation2 + $0x80] sm:$0xff]
      %v2423 = vld [vmem:[#allocation2 + $0x88] sm:$0xff]
      %v2424 = vld [vmem:[#allocation2 + $0x90] sm:$0xff]
      %v2425 = vld [vmem:[#allocation2 + $0x98] sm:$0xff]
      %v2426 = vld [vmem:[#allocation2 + $0xa0] sm:$0xff]
      %v2427 = vld [vmem:[#allocation2 + $0xa8] sm:$0xff]
      %v2428 = vld [vmem:[#allocation2 + $0xb0] sm:$0xff]
      %v2429 = vld [vmem:[#allocation2 + $0xb8] sm:$0xff]
      %v2430 = vld [vmem:[#allocation2 + $0xc0] sm:$0xff]
      %v2431 = vld [vmem:[#allocation2 + $0xc8] sm:$0xff]
      %v2432 = vld [vmem:[#allocation2 + $0xd0] sm:$0xff]
      %v2433 = vld [vmem:[#allocation2 + $0xd8] sm:$0xff]
      %v2434 = vld [vmem:[#allocation2 + $0xe0] sm:$0xff]
      %v2435 = vld [vmem:[#allocation2 + $0xe8] sm:$0xff]
      %v2436 = vld [vmem:[#allocation2 + $0xf0] sm:$0xff]
      %v2437 = vld [vmem:[#allocation2 + $0xf8] sm:$0xff]
      %v2438 = vld [vmem:[#allocation2 + $0x100] sm:$0xff]
      %v2439 = vld [vmem:[#allocation2 + $0x108] sm:$0xff]
      %v2440 = vld [vmem:[#allocation2 + $0x110] sm:$0xff]
      %v2441 = vld [vmem:[#allocation2 + $0x118] sm:$0xff]
      %v2442 = vld [vmem:[#allocation2 + $0x120] sm:$0xff]
      %v2443 = vld [vmem:[#allocation2 + $0x128] sm:$0xff]
      %v2444 = vld [vmem:[#allocation2 + $0x130] sm:$0xff]
      %v2445 = vld [vmem:[#allocation2 + $0x138] sm:$0xff]
      %v2446 = vld [vmem:[#allocation2 + $0x140] sm:$0xff]
      %v2447 = vld [vmem:[#allocation2 + $0x148] sm:$0xff]
      %v2448 = vld [vmem:[#allocation2 + $0x150] sm:$0xff]
      %v2449 = vld [vmem:[#allocation2 + $0x158] sm:$0xff]
      %v2450 = vld [vmem:[#allocation2 + $0x160] sm:$0xff]
      %v2451 = vld [vmem:[#allocation2 + $0x168] sm:$0xff]
      %v2452 = vld [vmem:[#allocation2 + $0x170] sm:$0xff]
      %v2453 = vld [vmem:[#allocation2 + $0x178] sm:$0xff]
      %v2454 = vadd.f32 %v2406, %v2405
      %v2455 = vadd.f32 %v2407, %v2404
      %v2456 = vadd.f32 %v2408, %v2403
      %v2457 = vadd.f32 %v2409, %v2402
      %v2458 = vadd.f32 %v2410, %v2401
      %v2459 = vadd.f32 %v2411, %v2400
      %v2460 = vadd.f32 %v2412, %v2399
      %v2461 = vadd.f32 %v2413, %v2398
      %v2462 = vadd.f32 %v2414, %v2397
      %v2463 = vadd.f32 %v2415, %v2396
      %v2464 = vadd.f32 %v2416, %v2395
      %v2465 = vadd.f32 %v2417, %v2394
      %v2466 = vadd.f32 %v2418, %v2393
      %v2467 = vadd.f32 %v2419, %v2392
      %v2468 = vadd.f32 %v2420, %v2391
      %v2469 = vadd.f32 %v2421, %v2390
      %v2470 = vadd.f32 %v2422, %v2389
      %v2471 = vadd.f32 %v2423, %v2388
      %v2472 = vadd.f32 %v2424, %v2387
      %v2473 = vadd.f32 %v2425, %v2386
      %v2474 = vadd.f32 %v2426, %v2385
      %v2475 = vadd.f32 %v2427, %v2384
      %v2476 = vadd.f32 %v2428, %v2383
      %v2477 = vadd.f32 %v2429, %v2382
      %v2478 = vadd.f32 %v2430, %v2381
      %v2479 = vadd.f32 %v2431, %v2380
      %v2480 = vadd.f32 %v2432, %v2379
      %v2481 = vadd.f32 %v2433, %v2378
      %v2482 = vadd.f32 %v2434, %v2377
      %v2483 = vadd.f32 %v2435, %v2376
      %v2484 = vadd.f32 %v2436, %v2375
      %v2485 = vadd.f32 %v2437, %v2374
      %v2486 = vadd.f32 %v2438, %v2373
      %v2487 = vadd.f32 %v2439, %v2372
      %v2488 = vadd.f32 %v2440, %v2371
      %v2489 = vadd.f32 %v2441, %v2370
      %v2490 = vadd.f32 %v2442, %v2369
      %v2491 = vadd.f32 %v2443, %v2368
      %v2492 = vadd.f32 %v2444, %v2367
      %v2493 = vadd.f32 %v2445, %v2366
      %v2494 = vadd.f32 %v2446, %v2365
      %v2495 = vadd.f32 %v2447, %v2364
      %v2496 = vadd.f32 %v2448, %v2363
      %v2497 = vadd.f32 %v2449, %v2362
      %v2498 = vadd.f32 %v2450, %v2361
      %v2499 = vadd.f32 %v2451, %v2360
      %v2500 = vadd.f32 %v2452, %v2359
      %v2501 = vadd.f32 %v2453, %v2358
      %2502 = vst [vmem:[#allocation2] sm:$0xff] %v2454
      %2503 = vst [vmem:[#allocation2 + $0x8] sm:$0xff] %v2455
      %2504 = vst [vmem:[#allocation2 + $0x10] sm:$0xff] %v2456
      %2505 = vst [vmem:[#allocation2 + $0x18] sm:$0xff] %v2457
      %2506 = vst [vmem:[#allocation2 + $0x20] sm:$0xff] %v2458
      %2507 = vst [vmem:[#allocation2 + $0x28] sm:$0xff] %v2459
      %2508 = vst [vmem:[#allocation2 + $0x30] sm:$0xff] %v2460
      %2509 = vst [vmem:[#allocation2 + $0x38] sm:$0xff] %v2461
      %2510 = vst [vmem:[#allocation2 + $0x40] sm:$0xff] %v2462
      %2511 = vst [vmem:[#allocation2 + $0x48] sm:$0xff] %v2463
      %2512 = vst [vmem:[#allocation2 + $0x50] sm:$0xff] %v2464
      %2513 = vst [vmem:[#allocation2 + $0x58] sm:$0xff] %v2465
      %2514 = vst [vmem:[#allocation2 + $0x60] sm:$0xff] %v2466
      %2515 = vst [vmem:[#allocation2 + $0x68] sm:$0xff] %v2467
      %2516 = vst [vmem:[#allocation2 + $0x70] sm:$0xff] %v2468
      %2517 = vst [vmem:[#allocation2 + $0x78] sm:$0xff] %v2469
      %2518 = vst [vmem:[#allocation2 + $0x80] sm:$0xff] %v2470
      %2519 = vst [vmem:[#allocation2 + $0x88] sm:$0xff] %v2471
      %2520 = vst [vmem:[#allocation2 + $0x90] sm:$0xff] %v2472
      %2521 = vst [vmem:[#allocation2 + $0x98] sm:$0xff] %v2473
      %2522 = vst [vmem:[#allocation2 + $0xa0] sm:$0xff] %v2474
      %2523 = vst [vmem:[#allocation2 + $0xa8] sm:$0xff] %v2475
      %2524 = vst [vmem:[#allocation2 + $0xb0] sm:$0xff] %v2476
      %2525 = vst [vmem:[#allocation2 + $0xb8] sm:$0xff] %v2477
      %2526 = vst [vmem:[#allocation2 + $0xc0] sm:$0xff] %v2478
      %2527 = vst [vmem:[#allocation2 + $0xc8] sm:$0xff] %v2479
      %2528 = vst [vmem:[#allocation2 + $0xd0] sm:$0xff] %v2480
      %2529 = vst [vmem:[#allocation2 + $0xd8] sm:$0xff] %v2481
      %2530 = vst [vmem:[#allocation2 + $0xe0] sm:$0xff] %v2482
      %2531 = vst [vmem:[#allocation2 + $0xe8] sm:$0xff] %v2483
      %2532 = vst [vmem:[#allocation2 + $0xf0] sm:$0xff] %v2484
      %2533 = vst [vmem:[#allocation2 + $0xf8] sm:$0xff] %v2485
      %2534 = vst [vmem:[#allocation2 + $0x100] sm:$0xff] %v2486
      %2535 = vst [vmem:[#allocation2 + $0x108] sm:$0xff] %v2487
      %2536 = vst [vmem:[#allocation2 + $0x110] sm:$0xff] %v2488
      %2537 = vst [vmem:[#allocation2 + $0x118] sm:$0xff] %v2489
      %2538 = vst [vmem:[#allocation2 + $0x120] sm:$0xff] %v2490
      %2539 = vst [vmem:[#allocation2 + $0x128] sm:$0xff] %v2491
      %2540 = vst [vmem:[#allocation2 + $0x130] sm:$0xff] %v2492
      %2541 = vst [vmem:[#allocation2 + $0x138] sm:$0xff] %v2493
      %2542 = vst [vmem:[#allocation2 + $0x140] sm:$0xff] %v2494
      %2543 = vst [vmem:[#allocation2 + $0x148] sm:$0xff] %v2495
      %2544 = vst [vmem:[#allocation2 + $0x150] sm:$0xff] %v2496
      %2545 = vst [vmem:[#allocation2 + $0x158] sm:$0xff] %v2497
      %2546 = vst [vmem:[#allocation2 + $0x160] sm:$0xff] %v2498
      %2547 = vst [vmem:[#allocation2 + $0x168] sm:$0xff] %v2499
      %2548 = vst [vmem:[#allocation2 + $0x170] sm:$0xff] %v2500
      %2549 = vst [vmem:[#allocation2 + $0x178] sm:$0xff] %v2501
      %s2550 = scalar_lea.vmem %s1, 256
      %v2551 = vld [vmem:[%s2550] sm:$0xf]
      %v2552 = vld [vmem:[%s2550 + $0x4] sm:$0xf]
      %v2553 = vld [vmem:[%s2550 + $0x8] sm:$0xf]
      %v2554 = vld [vmem:[%s2550 + $0xc] sm:$0xf]
      %v2555 = vld [vmem:[%s2550 + $0x10] sm:$0xf]
      %v2556 = vld [vmem:[%s2550 + $0x14] sm:$0xf]
      %v2557 = vld [vmem:[%s2550 + $0x18] sm:$0xf]
      %v2558 = vld [vmem:[%s2550 + $0x1c] sm:$0xf]
      %v2559 = vld [vmem:[%s2550 + $0x20] sm:$0xf]
      %v2560 = vld [vmem:[%s2550 + $0x24] sm:$0xf]
      %v2561 = vld [vmem:[%s2550 + $0x28] sm:$0xf]
      %v2562 = vld [vmem:[%s2550 + $0x2c] sm:$0xf]
      %v2563 = vld [vmem:[%s2550 + $0x30] sm:$0xf]
      %v2564 = vld [vmem:[%s2550 + $0x34] sm:$0xf]
      %v2565 = vld [vmem:[%s2550 + $0x38] sm:$0xf]
      %v2566 = vld [vmem:[%s2550 + $0x3c] sm:$0xf]
      %v2583 = vunpack.c.l.b16 %v2551
      %v2584 = vunpack.c.l.b16 %v2552
      %v2585 = vunpack.c.l.b16 %v2553
      %v2586 = vunpack.c.l.b16 %v2554
      %v2587 = vunpack.c.l.b16 %v2555
      %v2588 = vunpack.c.l.b16 %v2556
      %v2589 = vunpack.c.l.b16 %v2557
      %v2590 = vunpack.c.l.b16 %v2558
      %v2591 = vunpack.c.l.b16 %v2559
      %v2592 = vunpack.c.l.b16 %v2560
      %v2593 = vunpack.c.l.b16 %v2561
      %v2594 = vunpack.c.l.b16 %v2562
      %v2595 = vunpack.c.l.b16 %v2563
      %v2596 = vunpack.c.l.b16 %v2564
      %v2597 = vunpack.c.l.b16 %v2565
      %v2598 = vunpack.c.l.b16 %v2566
      %v2599 = vpack.c.b16 %v2584, %v2583
      %v2600 = vpack.c.b16 %v2586, %v2585
      %v2601 = vpack.c.b16 %v2588, %v2587
      %v2602 = vpack.c.b16 %v2590, %v2589
      %v2603 = vpack.c.b16 %v2592, %v2591
      %v2604 = vpack.c.b16 %v2594, %v2593
      %v2605 = vpack.c.b16 %v2596, %v2595
      %v2606 = vpack.c.b16 %v2598, %v2597
      %2615 = vmatprep.subr.bf16.mxu0 0
      %2616 = vmatpush1.bf16.msra.mxu0 %v2599
      %2617 = vmatprep.subr.bf16.mxu0 0
      %2618 = vmatpush1.bf16.msra.mxu0 %v2600
      %2619 = vmatprep.subr.bf16.mxu0 0
      %2620 = vmatpush1.bf16.msra.mxu0 %v2601
      %2621 = vmatprep.subr.bf16.mxu0 0
      %2622 = vmatpush1.bf16.msra.mxu0 %v2602
      %2623 = vmatprep.subr.bf16.mxu0 0
      %2624 = vmatpush1.bf16.msra.mxu0 %v2603
      %2625 = vmatprep.subr.bf16.mxu0 0
      %2626 = vmatpush1.bf16.msra.mxu0 %v2604
      %2627 = vmatprep.subr.bf16.mxu0 0
      %2628 = vmatpush1.bf16.msra.mxu0 %v2605
      %2629 = vmatprep.subr.bf16.mxu0 0
      %2630 = vmatpush1.bf16.msra.mxu0 %v2606
      %2631 = vmatprep.subr.bf16.mxu0 0
      %2632 = vmatpush1.bf16.msra.mxu0 0
      %2633 = vmatprep.subr.bf16.mxu0 0
      %2634 = vmatpush1.bf16.msra.mxu0 0
      %2635 = vmatprep.subr.bf16.mxu0 0
      %2636 = vmatpush1.bf16.msra.mxu0 0
      %2637 = vmatprep.subr.bf16.mxu0 0
      %2638 = vmatpush1.bf16.msra.mxu0 0
      %2639 = vmatprep.subr.bf16.mxu0 0
      %2640 = vmatpush1.bf16.msra.mxu0 0
      %2641 = vmatprep.subr.bf16.mxu0 0
      %2642 = vmatpush1.bf16.msra.mxu0 0
      %2643 = vmatprep.subr.bf16.mxu0 0
      %2644 = vmatpush1.bf16.msra.mxu0 0
      %2645 = vmatprep.subr.bf16.mxu0 0
      %2646 = vmatpush1.bf16.msra.mxu0 0
      %2647 = vmatprep.mubr.bf16.mxu0 0
      %2648 = vmatmul.mubr.bf16.gmra.mrb[0].mxu0 %v1989
      %v2649 = vpop.f32.mrb[0].mxu0
      %v2650 = vadd.f32 0.0, %v2649
      %v2651 = vpop.f32.mrb[0].mxu0
      %v2652 = vpop.f32.mrb[0].mxu0
      %v2653 = vadd.f32 0.0, %v2652
      %v2654 = vpop.f32.mrb[0].mxu0
      %2655 = vmatprep.mubr.bf16.mxu0 0
      %2656 = vmatmul.mubr.bf16.gmra.mrb[0].mxu0 %v1990
      %v2657 = vpop.f32.mrb[0].mxu0
      %v2658 = vadd.f32 0.0, %v2657
      %v2659 = vpop.f32.mrb[0].mxu0
      %v2660 = vpop.f32.mrb[0].mxu0
      %v2661 = vadd.f32 0.0, %v2660
      %v2662 = vpop.f32.mrb[0].mxu0
      %2663 = vmatprep.mubr.bf16.mxu0 0
      %2664 = vmatmul.mubr.bf16.gmra.mrb[0].mxu0 %v1991
      %v2665 = vpop.f32.mrb[0].mxu0
      %v2666 = vadd.f32 0.0, %v2665
      %v2667 = vpop.f32.mrb[0].mxu0
      %v2668 = vpop.f32.mrb[0].mxu0
      %v2669 = vadd.f32 0.0, %v2668
      %v2670 = vpop.f32.mrb[0].mxu0
      %2671 = vmatprep.mubr.bf16.mxu0 0
      %2672 = vmatmul.mubr.bf16.gmra.mrb[0].mxu0 %v1992
      %v2673 = vpop.f32.mrb[0].mxu0
      %v2674 = vadd.f32 0.0, %v2673
      %v2675 = vpop.f32.mrb[0].mxu0
      %v2676 = vpop.f32.mrb[0].mxu0
      %v2677 = vadd.f32 0.0, %v2676
      %v2678 = vpop.f32.mrb[0].mxu0
      %2679 = vmatprep.mubr.bf16.mxu0 0
      %2680 = vmatmul.mubr.bf16.gmra.mrb[0].mxu0 %v1993
      %v2681 = vpop.f32.mrb[0].mxu0
      %v2682 = vadd.f32 0.0, %v2681
      %v2683 = vpop.f32.mrb[0].mxu0
      %v2684 = vpop.f32.mrb[0].mxu0
      %v2685 = vadd.f32 0.0, %v2684
      %v2686 = vpop.f32.mrb[0].mxu0
      %2687 = vmatprep.mubr.bf16.mxu0 0
      %2688 = vmatmul.mubr.bf16.gmra.mrb[0].mxu0 %v1994
      %v2689 = vpop.f32.mrb[0].mxu0
      %v2690 = vadd.f32 0.0, %v2689
      %v2691 = vpop.f32.mrb[0].mxu0
      %v2692 = vpop.f32.mrb[0].mxu0
      %v2693 = vadd.f32 0.0, %v2692
      %v2694 = vpop.f32.mrb[0].mxu0
      %2695 = vmatprep.mubr.bf16.mxu0 0
      %2696 = vmatmul.mubr.bf16.gmra.mrb[0].mxu0 %v1995
      %v2697 = vpop.f32.mrb[0].mxu0
      %v2698 = vadd.f32 0.0, %v2697
      %v2699 = vpop.f32.mrb[0].mxu0
      %v2700 = vpop.f32.mrb[0].mxu0
      %v2701 = vadd.f32 0.0, %v2700
      %v2702 = vpop.f32.mrb[0].mxu0
      %2703 = vmatprep.mubr.bf16.mxu0 0
      %2704 = vmatmul.mubr.bf16.gmra.mrb[0].mxu0 %v1996
      %v2705 = vpop.f32.mrb[0].mxu0
      %v2706 = vadd.f32 0.0, %v2705
      %v2707 = vpop.f32.mrb[0].mxu0
      %v2708 = vpop.f32.mrb[0].mxu0
      %v2709 = vadd.f32 0.0, %v2708
      %v2710 = vpop.f32.mrb[0].mxu0
      %2711 = vmatprep.mubr.bf16.mxu0 0
      %2712 = vmatmul.mubr.bf16.gmra.mrb[0].mxu0 %v1997
      %v2713 = vpop.f32.mrb[0].mxu0
      %v2714 = vadd.f32 0.0, %v2713
      %v2715 = vpop.f32.mrb[0].mxu0
      %v2716 = vpop.f32.mrb[0].mxu0
      %v2717 = vadd.f32 0.0, %v2716
      %v2718 = vpop.f32.mrb[0].mxu0
      %2719 = vmatprep.mubr.bf16.mxu0 0
      %2720 = vmatmul.mubr.bf16.gmra.mrb[0].mxu0 %v1998
      %v2721 = vpop.f32.mrb[0].mxu0
      %v2722 = vadd.f32 0.0, %v2721
      %v2723 = vpop.f32.mrb[0].mxu0
      %v2724 = vpop.f32.mrb[0].mxu0
      %v2725 = vadd.f32 0.0, %v2724
      %v2726 = vpop.f32.mrb[0].mxu0
      %2727 = vmatprep.mubr.bf16.mxu0 0
      %2728 = vmatmul.mubr.bf16.gmra.mrb[0].mxu0 %v1999
      %v2729 = vpop.f32.mrb[0].mxu0
      %v2730 = vadd.f32 0.0, %v2729
      %v2731 = vpop.f32.mrb[0].mxu0
      %v2732 = vpop.f32.mrb[0].mxu0
      %v2733 = vadd.f32 0.0, %v2732
      %v2734 = vpop.f32.mrb[0].mxu0
      %2735 = vmatprep.mubr.bf16.mxu0 0
      %2736 = vmatmul.mubr.bf16.gmra.mrb[0].mxu0 %v2000
      %v2737 = vpop.f32.mrb[0].mxu0
      %v2738 = vadd.f32 0.0, %v2737
      %v2739 = vpop.f32.mrb[0].mxu0
      %v2740 = vpop.f32.mrb[0].mxu0
      %v2741 = vadd.f32 0.0, %v2740
      %v2742 = vpop.f32.mrb[0].mxu0
      %2743 = vmatprep.mubr.bf16.mxu0 0
      %2744 = vmatmul.mubr.bf16.gmra.mrb[0].mxu0 %v2001
      %v2745 = vpop.f32.mrb[0].mxu0
      %v2746 = vadd.f32 0.0, %v2745
      %v2747 = vpop.f32.mrb[0].mxu0
      %v2748 = vpop.f32.mrb[0].mxu0
      %v2749 = vadd.f32 0.0, %v2748
      %v2750 = vpop.f32.mrb[0].mxu0
      %2751 = vmatprep.mubr.bf16.mxu0 0
      %2752 = vmatmul.mubr.bf16.gmra.mrb[0].mxu0 %v2002
      %v2753 = vpop.f32.mrb[0].mxu0
      %v2754 = vadd.f32 0.0, %v2753
      %v2755 = vpop.f32.mrb[0].mxu0
      %v2756 = vpop.f32.mrb[0].mxu0
      %v2757 = vadd.f32 0.0, %v2756
      %v2758 = vpop.f32.mrb[0].mxu0
      %2759 = vmatprep.mubr.bf16.mxu0 0
      %2760 = vmatmul.mubr.bf16.gmra.mrb[0].mxu0 %v2003
      %v2761 = vpop.f32.mrb[0].mxu0
      %v2762 = vadd.f32 0.0, %v2761
      %v2763 = vpop.f32.mrb[0].mxu0
      %v2764 = vpop.f32.mrb[0].mxu0
      %v2765 = vadd.f32 0.0, %v2764
      %v2766 = vpop.f32.mrb[0].mxu0
      %2767 = vmatprep.mubr.bf16.mxu0 0
      %2768 = vmatmul.mubr.bf16.gmra.mrb[0].mxu0 %v2004
      %v2769 = vpop.f32.mrb[0].mxu0
      %v2770 = vadd.f32 0.0, %v2769
      %v2771 = vpop.f32.mrb[0].mxu0
      %v2772 = vpop.f32.mrb[0].mxu0
      %v2773 = vadd.f32 0.0, %v2772
      %v2774 = vpop.f32.mrb[0].mxu0
      %2775 = vmatprep.mubr.bf16.mxu0 0
      %2776 = vmatmul.mubr.bf16.gmra.mrb[0].mxu0 %v2005
      %v2777 = vpop.f32.mrb[0].mxu0
      %v2778 = vadd.f32 0.0, %v2777
      %v2779 = vpop.f32.mrb[0].mxu0
      %v2780 = vpop.f32.mrb[0].mxu0
      %v2781 = vadd.f32 0.0, %v2780
      %v2782 = vpop.f32.mrb[0].mxu0
      %2783 = vmatprep.mubr.bf16.mxu0 0
      %2784 = vmatmul.mubr.bf16.gmra.mrb[0].mxu0 %v2006
      %v2785 = vpop.f32.mrb[0].mxu0
      %v2786 = vadd.f32 0.0, %v2785
      %v2787 = vpop.f32.mrb[0].mxu0
      %v2788 = vpop.f32.mrb[0].mxu0
      %v2789 = vadd.f32 0.0, %v2788
      %v2790 = vpop.f32.mrb[0].mxu0
      %2791 = vmatprep.mubr.bf16.mxu0 0
      %2792 = vmatmul.mubr.bf16.gmra.mrb[0].mxu0 %v2007
      %v2793 = vpop.f32.mrb[0].mxu0
      %v2794 = vadd.f32 0.0, %v2793
      %v2795 = vpop.f32.mrb[0].mxu0
      %v2796 = vpop.f32.mrb[0].mxu0
      %v2797 = vadd.f32 0.0, %v2796
      %v2798 = vpop.f32.mrb[0].mxu0
      %2799 = vmatprep.mubr.bf16.mxu0 0
      %2800 = vmatmul.mubr.bf16.gmra.mrb[0].mxu0 %v2008
      %v2801 = vpop.f32.mrb[0].mxu0
      %v2802 = vadd.f32 0.0, %v2801
      %v2803 = vpop.f32.mrb[0].mxu0
      %v2804 = vpop.f32.mrb[0].mxu0
      %v2805 = vadd.f32 0.0, %v2804
      %v2806 = vpop.f32.mrb[0].mxu0
      %2807 = vmatprep.mubr.bf16.mxu0 0
      %2808 = vmatmul.mubr.bf16.gmra.mrb[0].mxu0 %v2009
      %v2809 = vpop.f32.mrb[0].mxu0
      %v2810 = vadd.f32 0.0, %v2809
      %v2811 = vpop.f32.mrb[0].mxu0
      %v2812 = vpop.f32.mrb[0].mxu0
      %v2813 = vadd.f32 0.0, %v2812
      %v2814 = vpop.f32.mrb[0].mxu0
      %2815 = vmatprep.mubr.bf16.mxu0 0
      %2816 = vmatmul.mubr.bf16.gmra.mrb[0].mxu0 %v2010
      %v2817 = vpop.f32.mrb[0].mxu0
      %v2818 = vadd.f32 0.0, %v2817
      %v2819 = vpop.f32.mrb[0].mxu0
      %v2820 = vpop.f32.mrb[0].mxu0
      %v2821 = vadd.f32 0.0, %v2820
      %v2822 = vpop.f32.mrb[0].mxu0
      %2823 = vmatprep.mubr.bf16.mxu0 0
      %2824 = vmatmul.mubr.bf16.gmra.mrb[0].mxu0 %v2011
      %v2825 = vpop.f32.mrb[0].mxu0
      %v2826 = vadd.f32 0.0, %v2825
      %v2827 = vpop.f32.mrb[0].mxu0
      %v2828 = vpop.f32.mrb[0].mxu0
      %v2829 = vadd.f32 0.0, %v2828
      %v2830 = vpop.f32.mrb[0].mxu0
      %2831 = vmatprep.mubr.bf16.mxu0 0
      %2832 = vmatmul.mubr.bf16.gmra.mrb[0].mxu0 %v2012
      %v2833 = vpop.f32.mrb[0].mxu0
      %v2834 = vadd.f32 0.0, %v2833
      %v2835 = vpop.f32.mrb[0].mxu0
      %v2836 = vpop.f32.mrb[0].mxu0
      %v2837 = vadd.f32 0.0, %v2836
      %v2838 = vpop.f32.mrb[0].mxu0
      %2839 = vdwg.mxu0
      %v2840 = vld [vmem:[#allocation2] sm:$0xff]
      %v2841 = vld [vmem:[#allocation2 + $0x8] sm:$0xff]
      %v2842 = vld [vmem:[#allocation2 + $0x10] sm:$0xff]
      %v2843 = vld [vmem:[#allocation2 + $0x18] sm:$0xff]
      %v2844 = vld [vmem:[#allocation2 + $0x20] sm:$0xff]
      %v2845 = vld [vmem:[#allocation2 + $0x28] sm:$0xff]
      %v2846 = vld [vmem:[#allocation2 + $0x30] sm:$0xff]
      %v2847 = vld [vmem:[#allocation2 + $0x38] sm:$0xff]
      %v2848 = vld [vmem:[#allocation2 + $0x40] sm:$0xff]
      %v2849 = vld [vmem:[#allocation2 + $0x48] sm:$0xff]
      %v2850 = vld [vmem:[#allocation2 + $0x50] sm:$0xff]
      %v2851 = vld [vmem:[#allocation2 + $0x58] sm:$0xff]
      %v2852 = vld [vmem:[#allocation2 + $0x60] sm:$0xff]
      %v2853 = vld [vmem:[#allocation2 + $0x68] sm:$0xff]
      %v2854 = vld [vmem:[#allocation2 + $0x70] sm:$0xff]
      %v2855 = vld [vmem:[#allocation2 + $0x78] sm:$0xff]
      %v2856 = vld [vmem:[#allocation2 + $0x80] sm:$0xff]
      %v2857 = vld [vmem:[#allocation2 + $0x88] sm:$0xff]
      %v2858 = vld [vmem:[#allocation2 + $0x90] sm:$0xff]
      %v2859 = vld [vmem:[#allocation2 + $0x98] sm:$0xff]
      %v2860 = vld [vmem:[#allocation2 + $0xa0] sm:$0xff]
      %v2861 = vld [vmem:[#allocation2 + $0xa8] sm:$0xff]
      %v2862 = vld [vmem:[#allocation2 + $0xb0] sm:$0xff]
      %v2863 = vld [vmem:[#allocation2 + $0xb8] sm:$0xff]
      %v2864 = vld [vmem:[#allocation2 + $0xc0] sm:$0xff]
      %v2865 = vld [vmem:[#allocation2 + $0xc8] sm:$0xff]
      %v2866 = vld [vmem:[#allocation2 + $0xd0] sm:$0xff]
      %v2867 = vld [vmem:[#allocation2 + $0xd8] sm:$0xff]
      %v2868 = vld [vmem:[#allocation2 + $0xe0] sm:$0xff]
      %v2869 = vld [vmem:[#allocation2 + $0xe8] sm:$0xff]
      %v2870 = vld [vmem:[#allocation2 + $0xf0] sm:$0xff]
      %v2871 = vld [vmem:[#allocation2 + $0xf8] sm:$0xff]
      %v2872 = vld [vmem:[#allocation2 + $0x100] sm:$0xff]
      %v2873 = vld [vmem:[#allocation2 + $0x108] sm:$0xff]
      %v2874 = vld [vmem:[#allocation2 + $0x110] sm:$0xff]
      %v2875 = vld [vmem:[#allocation2 + $0x118] sm:$0xff]
      %v2876 = vld [vmem:[#allocation2 + $0x120] sm:$0xff]
      %v2877 = vld [vmem:[#allocation2 + $0x128] sm:$0xff]
      %v2878 = vld [vmem:[#allocation2 + $0x130] sm:$0xff]
      %v2879 = vld [vmem:[#allocation2 + $0x138] sm:$0xff]
      %v2880 = vld [vmem:[#allocation2 + $0x140] sm:$0xff]
      %v2881 = vld [vmem:[#allocation2 + $0x148] sm:$0xff]
      %v2882 = vld [vmem:[#allocation2 + $0x150] sm:$0xff]
      %v2883 = vld [vmem:[#allocation2 + $0x158] sm:$0xff]
      %v2884 = vld [vmem:[#allocation2 + $0x160] sm:$0xff]
      %v2885 = vld [vmem:[#allocation2 + $0x168] sm:$0xff]
      %v2886 = vld [vmem:[#allocation2 + $0x170] sm:$0xff]
      %v2887 = vld [vmem:[#allocation2 + $0x178] sm:$0xff]
      %v2888 = vadd.f32 %v2840, %v2650
      %v2889 = vadd.f32 %v2841, %v2653
      %v2890 = vadd.f32 %v2842, %v2658
      %v2891 = vadd.f32 %v2843, %v2661
      %v2892 = vadd.f32 %v2844, %v2666
      %v2893 = vadd.f32 %v2845, %v2669
      %v2894 = vadd.f32 %v2846, %v2674
      %v2895 = vadd.f32 %v2847, %v2677
      %v2896 = vadd.f32 %v2848, %v2682
      %v2897 = vadd.f32 %v2849, %v2685
      %v2898 = vadd.f32 %v2850, %v2690
      %v2899 = vadd.f32 %v2851, %v2693
      %v2900 = vadd.f32 %v2852, %v2698
      %v2901 = vadd.f32 %v2853, %v2701
      %v2902 = vadd.f32 %v2854, %v2706
      %v2903 = vadd.f32 %v2855, %v2709
      %v2904 = vadd.f32 %v2856, %v2714
      %v2905 = vadd.f32 %v2857, %v2717
      %v2906 = vadd.f32 %v2858, %v2722
      %v2907 = vadd.f32 %v2859, %v2725
      %v2908 = vadd.f32 %v2860, %v2730
      %v2909 = vadd.f32 %v2861, %v2733
      %v2910 = vadd.f32 %v2862, %v2738
      %v2911 = vadd.f32 %v2863, %v2741
      %v2912 = vadd.f32 %v2864, %v2746
      %v2913 = vadd.f32 %v2865, %v2749
      %v2914 = vadd.f32 %v2866, %v2754
      %v2915 = vadd.f32 %v2867, %v2757
      %v2916 = vadd.f32 %v2868, %v2762
      %v2917 = vadd.f32 %v2869, %v2765
      %v2918 = vadd.f32 %v2870, %v2770
      %v2919 = vadd.f32 %v2871, %v2773
      %v2920 = vadd.f32 %v2872, %v2778
      %v2921 = vadd.f32 %v2873, %v2781
      %v2922 = vadd.f32 %v2874, %v2786
      %v2923 = vadd.f32 %v2875, %v2789
      %v2924 = vadd.f32 %v2876, %v2794
      %v2925 = vadd.f32 %v2877, %v2797
      %v2926 = vadd.f32 %v2878, %v2802
      %v2927 = vadd.f32 %v2879, %v2805
      %v2928 = vadd.f32 %v2880, %v2810
      %v2929 = vadd.f32 %v2881, %v2813
      %v2930 = vadd.f32 %v2882, %v2818
      %v2931 = vadd.f32 %v2883, %v2821
      %v2932 = vadd.f32 %v2884, %v2826
      %v2933 = vadd.f32 %v2885, %v2829
      %v2934 = vadd.f32 %v2886, %v2834
      %v2935 = vadd.f32 %v2887, %v2837
      %2936 = vst [vmem:[#allocation2] sm:$0xff] %v2888
      %2937 = vst [vmem:[#allocation2 + $0x8] sm:$0xff] %v2889
      %2938 = vst [vmem:[#allocation2 + $0x10] sm:$0xff] %v2890
      %2939 = vst [vmem:[#allocation2 + $0x18] sm:$0xff] %v2891
      %2940 = vst [vmem:[#allocation2 + $0x20] sm:$0xff] %v2892
      %2941 = vst [vmem:[#allocation2 + $0x28] sm:$0xff] %v2893
      %2942 = vst [vmem:[#allocation2 + $0x30] sm:$0xff] %v2894
      %2943 = vst [vmem:[#allocation2 + $0x38] sm:$0xff] %v2895
      %2944 = vst [vmem:[#allocation2 + $0x40] sm:$0xff] %v2896
      %2945 = vst [vmem:[#allocation2 + $0x48] sm:$0xff] %v2897
      %2946 = vst [vmem:[#allocation2 + $0x50] sm:$0xff] %v2898
      %2947 = vst [vmem:[#allocation2 + $0x58] sm:$0xff] %v2899
      %2948 = vst [vmem:[#allocation2 + $0x60] sm:$0xff] %v2900
      %2949 = vst [vmem:[#allocation2 + $0x68] sm:$0xff] %v2901
      %2950 = vst [vmem:[#allocation2 + $0x70] sm:$0xff] %v2902
      %2951 = vst [vmem:[#allocation2 + $0x78] sm:$0xff] %v2903
      %2952 = vst [vmem:[#allocation2 + $0x80] sm:$0xff] %v2904
      %2953 = vst [vmem:[#allocation2 + $0x88] sm:$0xff] %v2905
      %2954 = vst [vmem:[#allocation2 + $0x90] sm:$0xff] %v2906
      %2955 = vst [vmem:[#allocation2 + $0x98] sm:$0xff] %v2907
      %2956 = vst [vmem:[#allocation2 + $0xa0] sm:$0xff] %v2908
      %2957 = vst [vmem:[#allocation2 + $0xa8] sm:$0xff] %v2909
      %2958 = vst [vmem:[#allocation2 + $0xb0] sm:$0xff] %v2910
      %2959 = vst [vmem:[#allocation2 + $0xb8] sm:$0xff] %v2911
      %2960 = vst [vmem:[#allocation2 + $0xc0] sm:$0xff] %v2912
      %2961 = vst [vmem:[#allocation2 + $0xc8] sm:$0xff] %v2913
      %2962 = vst [vmem:[#allocation2 + $0xd0] sm:$0xff] %v2914
      %2963 = vst [vmem:[#allocation2 + $0xd8] sm:$0xff] %v2915
      %2964 = vst [vmem:[#allocation2 + $0xe0] sm:$0xff] %v2916
      %2965 = vst [vmem:[#allocation2 + $0xe8] sm:$0xff] %v2917
      %2966 = vst [vmem:[#allocation2 + $0xf0] sm:$0xff] %v2918
      %2967 = vst [vmem:[#allocation2 + $0xf8] sm:$0xff] %v2919
      %2968 = vst [vmem:[#allocation2 + $0x100] sm:$0xff] %v2920
      %2969 = vst [vmem:[#allocation2 + $0x108] sm:$0xff] %v2921
      %2970 = vst [vmem:[#allocation2 + $0x110] sm:$0xff] %v2922
      %2971 = vst [vmem:[#allocation2 + $0x118] sm:$0xff] %v2923
      %2972 = vst [vmem:[#allocation2 + $0x120] sm:$0xff] %v2924
      %2973 = vst [vmem:[#allocation2 + $0x128] sm:$0xff] %v2925
      %2974 = vst [vmem:[#allocation2 + $0x130] sm:$0xff] %v2926
      %2975 = vst [vmem:[#allocation2 + $0x138] sm:$0xff] %v2927
      %2976 = vst [vmem:[#allocation2 + $0x140] sm:$0xff] %v2928
      %2977 = vst [vmem:[#allocation2 + $0x148] sm:$0xff] %v2929
      %2978 = vst [vmem:[#allocation2 + $0x150] sm:$0xff] %v2930
      %2979 = vst [vmem:[#allocation2 + $0x158] sm:$0xff] %v2931
      %2980 = vst [vmem:[#allocation2 + $0x160] sm:$0xff] %v2932
      %2981 = vst [vmem:[#allocation2 + $0x168] sm:$0xff] %v2933
      %2982 = vst [vmem:[#allocation2 + $0x170] sm:$0xff] %v2934
      %2983 = vst [vmem:[#allocation2 + $0x178] sm:$0xff] %v2935
      %s2984 = scalar_lea.vmem %s1, 320
      %v2985 = vld [vmem:[%s2984] sm:$0xf]
      %v2986 = vld [vmem:[%s2984 + $0x4] sm:$0xf]
      %v2987 = vld [vmem:[%s2984 + $0x8] sm:$0xf]
      %v2988 = vld [vmem:[%s2984 + $0xc] sm:$0xf]
      %v2989 = vld [vmem:[%s2984 + $0x10] sm:$0xf]
      %v2990 = vld [vmem:[%s2984 + $0x14] sm:$0xf]
      %v2991 = vld [vmem:[%s2984 + $0x18] sm:$0xf]
      %v2992 = vld [vmem:[%s2984 + $0x1c] sm:$0xf]
      %v2993 = vld [vmem:[%s2984 + $0x20] sm:$0xf]
      %v2994 = vld [vmem:[%s2984 + $0x24] sm:$0xf]
      %v2995 = vld [vmem:[%s2984 + $0x28] sm:$0xf]
      %v2996 = vld [vmem:[%s2984 + $0x2c] sm:$0xf]
      %v2997 = vld [vmem:[%s2984 + $0x30] sm:$0xf]
      %v2998 = vld [vmem:[%s2984 + $0x34] sm:$0xf]
      %v2999 = vld [vmem:[%s2984 + $0x38] sm:$0xf]
      %v3000 = vld [vmem:[%s2984 + $0x3c] sm:$0xf]
      %v3017 = vunpack.c.l.b16 %v2985
      %v3018 = vunpack.c.l.b16 %v2986
      %v3019 = vunpack.c.l.b16 %v2987
      %v3020 = vunpack.c.l.b16 %v2988
      %v3021 = vunpack.c.l.b16 %v2989
      %v3022 = vunpack.c.l.b16 %v2990
      %v3023 = vunpack.c.l.b16 %v2991
      %v3024 = vunpack.c.l.b16 %v2992
      %v3025 = vunpack.c.l.b16 %v2993
      %v3026 = vunpack.c.l.b16 %v2994
      %v3027 = vunpack.c.l.b16 %v2995
      %v3028 = vunpack.c.l.b16 %v2996
      %v3029 = vunpack.c.l.b16 %v2997
      %v3030 = vunpack.c.l.b16 %v2998
      %v3031 = vunpack.c.l.b16 %v2999
      %v3032 = vunpack.c.l.b16 %v3000
      %v3033 = vpack.c.b16 %v3018, %v3017
      %v3034 = vpack.c.b16 %v3020, %v3019
      %v3035 = vpack.c.b16 %v3022, %v3021
      %v3036 = vpack.c.b16 %v3024, %v3023
      %v3037 = vpack.c.b16 %v3026, %v3025
      %v3038 = vpack.c.b16 %v3028, %v3027
      %v3039 = vpack.c.b16 %v3030, %v3029
      %v3040 = vpack.c.b16 %v3032, %v3031
      %3049 = vmatprep.subr.bf16.mxu0 0
      %3050 = vmatpush1.bf16.msra.mxu0 %v3033
      %3051 = vmatprep.subr.bf16.mxu0 0
      %3052 = vmatpush1.bf16.msra.mxu0 %v3034
      %3053 = vmatprep.subr.bf16.mxu0 0
      %3054 = vmatpush1.bf16.msra.mxu0 %v3035
      %3055 = vmatprep.subr.bf16.mxu0 0
      %3056 = vmatpush1.bf16.msra.mxu0 %v3036
      %3057 = vmatprep.subr.bf16.mxu0 0
      %3058 = vmatpush1.bf16.msra.mxu0 %v3037
      %3059 = vmatprep.subr.bf16.mxu0 0
      %3060 = vmatpush1.bf16.msra.mxu0 %v3038
      %3061 = vmatprep.subr.bf16.mxu0 0
      %3062 = vmatpush1.bf16.msra.mxu0 %v3039
      %3063 = vmatprep.subr.bf16.mxu0 0
      %3064 = vmatpush1.bf16.msra.mxu0 %v3040
      %3065 = vmatprep.subr.bf16.mxu0 0
      %3066 = vmatpush1.bf16.msra.mxu0 0
      %3067 = vmatprep.subr.bf16.mxu0 0
      %3068 = vmatpush1.bf16.msra.mxu0 0
      %3069 = vmatprep.subr.bf16.mxu0 0
      %3070 = vmatpush1.bf16.msra.mxu0 0
      %3071 = vmatprep.subr.bf16.mxu0 0
      %3072 = vmatpush1.bf16.msra.mxu0 0
      %3073 = vmatprep.subr.bf16.mxu0 0
      %3074 = vmatpush1.bf16.msra.mxu0 0
      %3075 = vmatprep.subr.bf16.mxu0 0
      %3076 = vmatpush1.bf16.msra.mxu0 0
      %3077 = vmatprep.subr.bf16.mxu0 0
      %3078 = vmatpush1.bf16.msra.mxu0 0
      %3079 = vmatprep.subr.bf16.mxu0 0
      %3080 = vmatpush1.bf16.msra.mxu0 0
      %3081 = vmatprep.mubr.bf16.mxu0 0
      %3082 = vmatmul.mubr.bf16.gmra.mrb[0].mxu0 %v1989
      %v3083 = vpop.f32.mrb[0].mxu0
      %v3084 = vadd.f32 0.0, %v3083
      %v3085 = vpop.f32.mrb[0].mxu0
      %v3086 = vpop.f32.mrb[0].mxu0
      %v3087 = vadd.f32 0.0, %v3086
      %v3088 = vpop.f32.mrb[0].mxu0
      %3089 = vmatprep.mubr.bf16.mxu0 0
      %3090 = vmatmul.mubr.bf16.gmra.mrb[0].mxu0 %v1990
      %v3091 = vpop.f32.mrb[0].mxu0
      %v3092 = vadd.f32 0.0, %v3091
      %v3093 = vpop.f32.mrb[0].mxu0
      %v3094 = vpop.f32.mrb[0].mxu0
      %v3095 = vadd.f32 0.0, %v3094
      %v3096 = vpop.f32.mrb[0].mxu0
      %3097 = vmatprep.mubr.bf16.mxu0 0
      %3098 = vmatmul.mubr.bf16.gmra.mrb[0].mxu0 %v1991
      %v3099 = vpop.f32.mrb[0].mxu0
      %v3100 = vadd.f32 0.0, %v3099
      %v3101 = vpop.f32.mrb[0].mxu0
      %v3102 = vpop.f32.mrb[0].mxu0
      %v3103 = vadd.f32 0.0, %v3102
      %v3104 = vpop.f32.mrb[0].mxu0
      %3105 = vmatprep.mubr.bf16.mxu0 0
      %3106 = vmatmul.mubr.bf16.gmra.mrb[0].mxu0 %v1992
      %v3107 = vpop.f32.mrb[0].mxu0
      %v3108 = vadd.f32 0.0, %v3107
      %v3109 = vpop.f32.mrb[0].mxu0
      %v3110 = vpop.f32.mrb[0].mxu0
      %v3111 = vadd.f32 0.0, %v3110
      %v3112 = vpop.f32.mrb[0].mxu0
      %3113 = vmatprep.mubr.bf16.mxu0 0
      %3114 = vmatmul.mubr.bf16.gmra.mrb[0].mxu0 %v1993
      %v3115 = vpop.f32.mrb[0].mxu0
      %v3116 = vadd.f32 0.0, %v3115
      %v3117 = vpop.f32.mrb[0].mxu0
      %v3118 = vpop.f32.mrb[0].mxu0
      %v3119 = vadd.f32 0.0, %v3118
      %v3120 = vpop.f32.mrb[0].mxu0
      %3121 = vmatprep.mubr.bf16.mxu0 0
      %3122 = vmatmul.mubr.bf16.gmra.mrb[0].mxu0 %v1994
      %v3123 = vpop.f32.mrb[0].mxu0
      %v3124 = vadd.f32 0.0, %v3123
      %v3125 = vpop.f32.mrb[0].mxu0
      %v3126 = vpop.f32.mrb[0].mxu0
      %v3127 = vadd.f32 0.0, %v3126
      %v3128 = vpop.f32.mrb[0].mxu0
      %3129 = vmatprep.mubr.bf16.mxu0 0
      %3130 = vmatmul.mubr.bf16.gmra.mrb[0].mxu0 %v1995
      %v3131 = vpop.f32.mrb[0].mxu0
      %v3132 = vadd.f32 0.0, %v3131
      %v3133 = vpop.f32.mrb[0].mxu0
      %v3134 = vpop.f32.mrb[0].mxu0
      %v3135 = vadd.f32 0.0, %v3134
      %v3136 = vpop.f32.mrb[0].mxu0
      %3137 = vmatprep.mubr.bf16.mxu0 0
      %3138 = vmatmul.mubr.bf16.gmra.mrb[0].mxu0 %v1996
      %v3139 = vpop.f32.mrb[0].mxu0
      %v3140 = vadd.f32 0.0, %v3139
      %v3141 = vpop.f32.mrb[0].mxu0
      %v3142 = vpop.f32.mrb[0].mxu0
      %v3143 = vadd.f32 0.0, %v3142
      %v3144 = vpop.f32.mrb[0].mxu0
      %3145 = vmatprep.mubr.bf16.mxu0 0
      %3146 = vmatmul.mubr.bf16.gmra.mrb[0].mxu0 %v1997
      %v3147 = vpop.f32.mrb[0].mxu0
      %v3148 = vadd.f32 0.0, %v3147
      %v3149 = vpop.f32.mrb[0].mxu0
      %v3150 = vpop.f32.mrb[0].mxu0
      %v3151 = vadd.f32 0.0, %v3150
      %v3152 = vpop.f32.mrb[0].mxu0
      %3153 = vmatprep.mubr.bf16.mxu0 0
      %3154 = vmatmul.mubr.bf16.gmra.mrb[0].mxu0 %v1998
      %v3155 = vpop.f32.mrb[0].mxu0
      %v3156 = vadd.f32 0.0, %v3155
      %v3157 = vpop.f32.mrb[0].mxu0
      %v3158 = vpop.f32.mrb[0].mxu0
      %v3159 = vadd.f32 0.0, %v3158
      %v3160 = vpop.f32.mrb[0].mxu0
      %3161 = vmatprep.mubr.bf16.mxu0 0
      %3162 = vmatmul.mubr.bf16.gmra.mrb[0].mxu0 %v1999
      %v3163 = vpop.f32.mrb[0].mxu0
      %v3164 = vadd.f32 0.0, %v3163
      %v3165 = vpop.f32.mrb[0].mxu0
      %v3166 = vpop.f32.mrb[0].mxu0
      %v3167 = vadd.f32 0.0, %v3166
      %v3168 = vpop.f32.mrb[0].mxu0
      %3169 = vmatprep.mubr.bf16.mxu0 0
      %3170 = vmatmul.mubr.bf16.gmra.mrb[0].mxu0 %v2000
      %v3171 = vpop.f32.mrb[0].mxu0
      %v3172 = vadd.f32 0.0, %v3171
      %v3173 = vpop.f32.mrb[0].mxu0
      %v3174 = vpop.f32.mrb[0].mxu0
      %v3175 = vadd.f32 0.0, %v3174
      %v3176 = vpop.f32.mrb[0].mxu0
      %3177 = vmatprep.mubr.bf16.mxu0 0
      %3178 = vmatmul.mubr.bf16.gmra.mrb[0].mxu0 %v2001
      %v3179 = vpop.f32.mrb[0].mxu0
      %v3180 = vadd.f32 0.0, %v3179
      %v3181 = vpop.f32.mrb[0].mxu0
      %v3182 = vpop.f32.mrb[0].mxu0
      %v3183 = vadd.f32 0.0, %v3182
      %v3184 = vpop.f32.mrb[0].mxu0
      %3185 = vmatprep.mubr.bf16.mxu0 0
      %3186 = vmatmul.mubr.bf16.gmra.mrb[0].mxu0 %v2002
      %v3187 = vpop.f32.mrb[0].mxu0
      %v3188 = vadd.f32 0.0, %v3187
      %v3189 = vpop.f32.mrb[0].mxu0
      %v3190 = vpop.f32.mrb[0].mxu0
      %v3191 = vadd.f32 0.0, %v3190
      %v3192 = vpop.f32.mrb[0].mxu0
      %3193 = vmatprep.mubr.bf16.mxu0 0
      %3194 = vmatmul.mubr.bf16.gmra.mrb[0].mxu0 %v2003
      %v3195 = vpop.f32.mrb[0].mxu0
      %v3196 = vadd.f32 0.0, %v3195
      %v3197 = vpop.f32.mrb[0].mxu0
      %v3198 = vpop.f32.mrb[0].mxu0
      %v3199 = vadd.f32 0.0, %v3198
      %v3200 = vpop.f32.mrb[0].mxu0
      %3201 = vmatprep.mubr.bf16.mxu0 0
      %3202 = vmatmul.mubr.bf16.gmra.mrb[0].mxu0 %v2004
      %v3203 = vpop.f32.mrb[0].mxu0
      %v3204 = vadd.f32 0.0, %v3203
      %v3205 = vpop.f32.mrb[0].mxu0
      %v3206 = vpop.f32.mrb[0].mxu0
      %v3207 = vadd.f32 0.0, %v3206
      %v3208 = vpop.f32.mrb[0].mxu0
      %3209 = vmatprep.mubr.bf16.mxu0 0
      %3210 = vmatmul.mubr.bf16.gmra.mrb[0].mxu0 %v2005
      %v3211 = vpop.f32.mrb[0].mxu0
      %v3212 = vadd.f32 0.0, %v3211
      %v3213 = vpop.f32.mrb[0].mxu0
      %v3214 = vpop.f32.mrb[0].mxu0
      %v3215 = vadd.f32 0.0, %v3214
      %v3216 = vpop.f32.mrb[0].mxu0
      %3217 = vmatprep.mubr.bf16.mxu0 0
      %3218 = vmatmul.mubr.bf16.gmra.mrb[0].mxu0 %v2006
      %v3219 = vpop.f32.mrb[0].mxu0
      %v3220 = vadd.f32 0.0, %v3219
      %v3221 = vpop.f32.mrb[0].mxu0
      %v3222 = vpop.f32.mrb[0].mxu0
      %v3223 = vadd.f32 0.0, %v3222
      %v3224 = vpop.f32.mrb[0].mxu0
      %3225 = vmatprep.mubr.bf16.mxu0 0
      %3226 = vmatmul.mubr.bf16.gmra.mrb[0].mxu0 %v2007
      %v3227 = vpop.f32.mrb[0].mxu0
      %v3228 = vadd.f32 0.0, %v3227
      %v3229 = vpop.f32.mrb[0].mxu0
      %v3230 = vpop.f32.mrb[0].mxu0
      %v3231 = vadd.f32 0.0, %v3230
      %v3232 = vpop.f32.mrb[0].mxu0
      %3233 = vmatprep.mubr.bf16.mxu0 0
      %3234 = vmatmul.mubr.bf16.gmra.mrb[0].mxu0 %v2008
      %v3235 = vpop.f32.mrb[0].mxu0
      %v3236 = vadd.f32 0.0, %v3235
      %v3237 = vpop.f32.mrb[0].mxu0
      %v3238 = vpop.f32.mrb[0].mxu0
      %v3239 = vadd.f32 0.0, %v3238
      %v3240 = vpop.f32.mrb[0].mxu0
      %3241 = vmatprep.mubr.bf16.mxu0 0
      %3242 = vmatmul.mubr.bf16.gmra.mrb[0].mxu0 %v2009
      %v3243 = vpop.f32.mrb[0].mxu0
      %v3244 = vadd.f32 0.0, %v3243
      %v3245 = vpop.f32.mrb[0].mxu0
      %v3246 = vpop.f32.mrb[0].mxu0
      %v3247 = vadd.f32 0.0, %v3246
      %v3248 = vpop.f32.mrb[0].mxu0
      %3249 = vmatprep.mubr.bf16.mxu0 0
      %3250 = vmatmul.mubr.bf16.gmra.mrb[0].mxu0 %v2010
      %v3251 = vpop.f32.mrb[0].mxu0
      %v3252 = vadd.f32 0.0, %v3251
      %v3253 = vpop.f32.mrb[0].mxu0
      %v3254 = vpop.f32.mrb[0].mxu0
      %v3255 = vadd.f32 0.0, %v3254
      %v3256 = vpop.f32.mrb[0].mxu0
      %3257 = vmatprep.mubr.bf16.mxu0 0
      %3258 = vmatmul.mubr.bf16.gmra.mrb[0].mxu0 %v2011
      %v3259 = vpop.f32.mrb[0].mxu0
      %v3260 = vadd.f32 0.0, %v3259
      %v3261 = vpop.f32.mrb[0].mxu0
      %v3262 = vpop.f32.mrb[0].mxu0
      %v3263 = vadd.f32 0.0, %v3262
      %v3264 = vpop.f32.mrb[0].mxu0
      %3265 = vmatprep.mubr.bf16.mxu0 0
      %3266 = vmatmul.mubr.bf16.gmra.mrb[0].mxu0 %v2012
      %v3267 = vpop.f32.mrb[0].mxu0
      %v3268 = vadd.f32 0.0, %v3267
      %v3269 = vpop.f32.mrb[0].mxu0
      %v3270 = vpop.f32.mrb[0].mxu0
      %v3271 = vadd.f32 0.0, %v3270
      %v3272 = vpop.f32.mrb[0].mxu0
      %3273 = vdwg.mxu0
      %v3274 = vrot.slane %v3084, 1
      %v3275 = vrot.slane %v3087, 1
      %v3276 = vrot.slane %v3092, 1
      %v3277 = vrot.slane %v3095, 1
      %v3278 = vrot.slane %v3100, 1
      %v3279 = vrot.slane %v3103, 1
      %v3280 = vrot.slane %v3108, 1
      %v3281 = vrot.slane %v3111, 1
      %v3282 = vrot.slane %v3116, 1
      %v3283 = vrot.slane %v3119, 1
      %v3284 = vrot.slane %v3124, 1
      %v3285 = vrot.slane %v3127, 1
      %v3286 = vrot.slane %v3132, 1
      %v3287 = vrot.slane %v3135, 1
      %v3288 = vrot.slane %v3140, 1
      %v3289 = vrot.slane %v3143, 1
      %v3290 = vrot.slane %v3148, 1
      %v3291 = vrot.slane %v3151, 1
      %v3292 = vrot.slane %v3156, 1
      %v3293 = vrot.slane %v3159, 1
      %v3294 = vrot.slane %v3164, 1
      %v3295 = vrot.slane %v3167, 1
      %v3296 = vrot.slane %v3172, 1
      %v3297 = vrot.slane %v3175, 1
      %v3298 = vrot.slane %v3180, 1
      %v3299 = vrot.slane %v3183, 1
      %v3300 = vrot.slane %v3188, 1
      %v3301 = vrot.slane %v3191, 1
      %v3302 = vrot.slane %v3196, 1
      %v3303 = vrot.slane %v3199, 1
      %v3304 = vrot.slane %v3204, 1
      %v3305 = vrot.slane %v3207, 1
      %v3306 = vrot.slane %v3212, 1
      %v3307 = vrot.slane %v3215, 1
      %v3308 = vrot.slane %v3220, 1
      %v3309 = vrot.slane %v3223, 1
      %v3310 = vrot.slane %v3228, 1
      %v3311 = vrot.slane %v3231, 1
      %v3312 = vrot.slane %v3236, 1
      %v3313 = vrot.slane %v3239, 1
      %v3314 = vrot.slane %v3244, 1
      %v3315 = vrot.slane %v3247, 1
      %v3316 = vrot.slane %v3252, 1
      %v3317 = vrot.slane %v3255, 1
      %v3318 = vrot.slane %v3260, 1
      %v3319 = vrot.slane %v3263, 1
      %v3320 = vrot.slane %v3268, 1
      %v3321 = vrot.slane %v3271, 1
      %v3322 = vsel %vm1634, %v3320, %v3321
      %v3323 = vsel %vm1634, %v3319, %v3320
      %v3324 = vsel %vm1634, %v3318, %v3319
      %v3325 = vsel %vm1634, %v3317, %v3318
      %v3326 = vsel %vm1634, %v3316, %v3317
      %v3327 = vsel %vm1634, %v3315, %v3316
      %v3328 = vsel %vm1634, %v3314, %v3315
      %v3329 = vsel %vm1634, %v3313, %v3314
      %v3330 = vsel %vm1634, %v3312, %v3313
      %v3331 = vsel %vm1634, %v3311, %v3312
      %v3332 = vsel %vm1634, %v3310, %v3311
      %v3333 = vsel %vm1634, %v3309, %v3310
      %v3334 = vsel %vm1634, %v3308, %v3309
      %v3335 = vsel %vm1634, %v3307, %v3308
      %v3336 = vsel %vm1634, %v3306, %v3307
      %v3337 = vsel %vm1634, %v3305, %v3306
      %v3338 = vsel %vm1634, %v3304, %v3305
      %v3339 = vsel %vm1634, %v3303, %v3304
      %v3340 = vsel %vm1634, %v3302, %v3303
      %v3341 = vsel %vm1634, %v3301, %v3302
      %v3342 = vsel %vm1634, %v3300, %v3301
      %v3343 = vsel %vm1634, %v3299, %v3300
      %v3344 = vsel %vm1634, %v3298, %v3299
      %v3345 = vsel %vm1634, %v3297, %v3298
      %v3346 = vsel %vm1634, %v3296, %v3297
      %v3347 = vsel %vm1634, %v3295, %v3296
      %v3348 = vsel %vm1634, %v3294, %v3295
      %v3349 = vsel %vm1634, %v3293, %v3294
      %v3350 = vsel %vm1634, %v3292, %v3293
      %v3351 = vsel %vm1634, %v3291, %v3292
      %v3352 = vsel %vm1634, %v3290, %v3291
      %v3353 = vsel %vm1634, %v3289, %v3290
      %v3354 = vsel %vm1634, %v3288, %v3289
      %v3355 = vsel %vm1634, %v3287, %v3288
      %v3356 = vsel %vm1634, %v3286, %v3287
      %v3357 = vsel %vm1634, %v3285, %v3286
      %v3358 = vsel %vm1634, %v3284, %v3285
      %v3359 = vsel %vm1634, %v3283, %v3284
      %v3360 = vsel %vm1634, %v3282, %v3283
      %v3361 = vsel %vm1634, %v3281, %v3282
      %v3362 = vsel %vm1634, %v3280, %v3281
      %v3363 = vsel %vm1634, %v3279, %v3280
      %v3364 = vsel %vm1634, %v3278, %v3279
      %v3365 = vsel %vm1634, %v3277, %v3278
      %v3366 = vsel %vm1634, %v3276, %v3277
      %v3367 = vsel %vm1634, %v3275, %v3276
      %v3368 = vsel %vm1634, %v3274, %v3275
      %v3369 = vsel %vm1634, %v3321, %v3274
      %v3370 = vld [vmem:[#allocation2] sm:$0xff]
      %v3371 = vld [vmem:[#allocation2 + $0x8] sm:$0xff]
      %v3372 = vld [vmem:[#allocation2 + $0x10] sm:$0xff]
      %v3373 = vld [vmem:[#allocation2 + $0x18] sm:$0xff]
      %v3374 = vld [vmem:[#allocation2 + $0x20] sm:$0xff]
      %v3375 = vld [vmem:[#allocation2 + $0x28] sm:$0xff]
      %v3376 = vld [vmem:[#allocation2 + $0x30] sm:$0xff]
      %v3377 = vld [vmem:[#allocation2 + $0x38] sm:$0xff]
      %v3378 = vld [vmem:[#allocation2 + $0x40] sm:$0xff]
      %v3379 = vld [vmem:[#allocation2 + $0x48] sm:$0xff]
      %v3380 = vld [vmem:[#allocation2 + $0x50] sm:$0xff]
      %v3381 = vld [vmem:[#allocation2 + $0x58] sm:$0xff]
      %v3382 = vld [vmem:[#allocation2 + $0x60] sm:$0xff]
      %v3383 = vld [vmem:[#allocation2 + $0x68] sm:$0xff]
      %v3384 = vld [vmem:[#allocation2 + $0x70] sm:$0xff]
      %v3385 = vld [vmem:[#allocation2 + $0x78] sm:$0xff]
      %v3386 = vld [vmem:[#allocation2 + $0x80] sm:$0xff]
      %v3387 = vld [vmem:[#allocation2 + $0x88] sm:$0xff]
      %v3388 = vld [vmem:[#allocation2 + $0x90] sm:$0xff]
      %v3389 = vld [vmem:[#allocation2 + $0x98] sm:$0xff]
      %v3390 = vld [vmem:[#allocation2 + $0xa0] sm:$0xff]
      %v3391 = vld [vmem:[#allocation2 + $0xa8] sm:$0xff]
      %v3392 = vld [vmem:[#allocation2 + $0xb0] sm:$0xff]
      %v3393 = vld [vmem:[#allocation2 + $0xb8] sm:$0xff]
      %v3394 = vld [vmem:[#allocation2 + $0xc0] sm:$0xff]
      %v3395 = vld [vmem:[#allocation2 + $0xc8] sm:$0xff]
      %v3396 = vld [vmem:[#allocation2 + $0xd0] sm:$0xff]
      %v3397 = vld [vmem:[#allocation2 + $0xd8] sm:$0xff]
      %v3398 = vld [vmem:[#allocation2 + $0xe0] sm:$0xff]
      %v3399 = vld [vmem:[#allocation2 + $0xe8] sm:$0xff]
      %v3400 = vld [vmem:[#allocation2 + $0xf0] sm:$0xff]
      %v3401 = vld [vmem:[#allocation2 + $0xf8] sm:$0xff]
      %v3402 = vld [vmem:[#allocation2 + $0x100] sm:$0xff]
      %v3403 = vld [vmem:[#allocation2 + $0x108] sm:$0xff]
      %v3404 = vld [vmem:[#allocation2 + $0x110] sm:$0xff]
      %v3405 = vld [vmem:[#allocation2 + $0x118] sm:$0xff]
      %v3406 = vld [vmem:[#allocation2 + $0x120] sm:$0xff]
      %v3407 = vld [vmem:[#allocation2 + $0x128] sm:$0xff]
      %v3408 = vld [vmem:[#allocation2 + $0x130] sm:$0xff]
      %v3409 = vld [vmem:[#allocation2 + $0x138] sm:$0xff]
      %v3410 = vld [vmem:[#allocation2 + $0x140] sm:$0xff]
      %v3411 = vld [vmem:[#allocation2 + $0x148] sm:$0xff]
      %v3412 = vld [vmem:[#allocation2 + $0x150] sm:$0xff]
      %v3413 = vld [vmem:[#allocation2 + $0x158] sm:$0xff]
      %v3414 = vld [vmem:[#allocation2 + $0x160] sm:$0xff]
      %v3415 = vld [vmem:[#allocation2 + $0x168] sm:$0xff]
      %v3416 = vld [vmem:[#allocation2 + $0x170] sm:$0xff]
      %v3417 = vld [vmem:[#allocation2 + $0x178] sm:$0xff]
      %v3418 = vadd.f32 %v3370, %v3368
      %v3419 = vadd.f32 %v3371, %v3367
      %v3420 = vadd.f32 %v3372, %v3366
      %v3421 = vadd.f32 %v3373, %v3365
      %v3422 = vadd.f32 %v3374, %v3364
      %v3423 = vadd.f32 %v3375, %v3363
      %v3424 = vadd.f32 %v3376, %v3362
      %v3425 = vadd.f32 %v3377, %v3361
      %v3426 = vadd.f32 %v3378, %v3360
      %v3427 = vadd.f32 %v3379, %v3359
      %v3428 = vadd.f32 %v3380, %v3358
      %v3429 = vadd.f32 %v3381, %v3357
      %v3430 = vadd.f32 %v3382, %v3356
      %v3431 = vadd.f32 %v3383, %v3355
      %v3432 = vadd.f32 %v3384, %v3354
      %v3433 = vadd.f32 %v3385, %v3353
      %v3434 = vadd.f32 %v3386, %v3352
      %v3435 = vadd.f32 %v3387, %v3351
      %v3436 = vadd.f32 %v3388, %v3350
      %v3437 = vadd.f32 %v3389, %v3349
      %v3438 = vadd.f32 %v3390, %v3348
      %v3439 = vadd.f32 %v3391, %v3347
      %v3440 = vadd.f32 %v3392, %v3346
      %v3441 = vadd.f32 %v3393, %v3345
      %v3442 = vadd.f32 %v3394, %v3344
      %v3443 = vadd.f32 %v3395, %v3343
      %v3444 = vadd.f32 %v3396, %v3342
      %v3445 = vadd.f32 %v3397, %v3341
      %v3446 = vadd.f32 %v3398, %v3340
      %v3447 = vadd.f32 %v3399, %v3339
      %v3448 = vadd.f32 %v3400, %v3338
      %v3449 = vadd.f32 %v3401, %v3337
      %v3450 = vadd.f32 %v3402, %v3336
      %v3451 = vadd.f32 %v3403, %v3335
      %v3452 = vadd.f32 %v3404, %v3334
      %v3453 = vadd.f32 %v3405, %v3333
      %v3454 = vadd.f32 %v3406, %v3332
      %v3455 = vadd.f32 %v3407, %v3331
      %v3456 = vadd.f32 %v3408, %v3330
      %v3457 = vadd.f32 %v3409, %v3329
      %v3458 = vadd.f32 %v3410, %v3328
      %v3459 = vadd.f32 %v3411, %v3327
      %v3460 = vadd.f32 %v3412, %v3326
      %v3461 = vadd.f32 %v3413, %v3325
      %v3462 = vadd.f32 %v3414, %v3324
      %v3463 = vadd.f32 %v3415, %v3323
      %v3464 = vadd.f32 %v3416, %v3322
      %v3465 = vadd.f32 %v3417, %v3369
      %3466 = vst [vmem:[#allocation2] sm:$0xff] %v3418
      %3467 = vst [vmem:[#allocation2 + $0x8] sm:$0xff] %v3419
      %3468 = vst [vmem:[#allocation2 + $0x10] sm:$0xff] %v3420
      %3469 = vst [vmem:[#allocation2 + $0x18] sm:$0xff] %v3421
      %3470 = vst [vmem:[#allocation2 + $0x20] sm:$0xff] %v3422
      %3471 = vst [vmem:[#allocation2 + $0x28] sm:$0xff] %v3423
      %3472 = vst [vmem:[#allocation2 + $0x30] sm:$0xff] %v3424
      %3473 = vst [vmem:[#allocation2 + $0x38] sm:$0xff] %v3425
      %3474 = vst [vmem:[#allocation2 + $0x40] sm:$0xff] %v3426
      %3475 = vst [vmem:[#allocation2 + $0x48] sm:$0xff] %v3427
      %3476 = vst [vmem:[#allocation2 + $0x50] sm:$0xff] %v3428
      %3477 = vst [vmem:[#allocation2 + $0x58] sm:$0xff] %v3429
      %3478 = vst [vmem:[#allocation2 + $0x60] sm:$0xff] %v3430
      %3479 = vst [vmem:[#allocation2 + $0x68] sm:$0xff] %v3431
      %3480 = vst [vmem:[#allocation2 + $0x70] sm:$0xff] %v3432
      %3481 = vst [vmem:[#allocation2 + $0x78] sm:$0xff] %v3433
      %3482 = vst [vmem:[#allocation2 + $0x80] sm:$0xff] %v3434
      %3483 = vst [vmem:[#allocation2 + $0x88] sm:$0xff] %v3435
      %3484 = vst [vmem:[#allocation2 + $0x90] sm:$0xff] %v3436
      %3485 = vst [vmem:[#allocation2 + $0x98] sm:$0xff] %v3437
      %3486 = vst [vmem:[#allocation2 + $0xa0] sm:$0xff] %v3438
      %3487 = vst [vmem:[#allocation2 + $0xa8] sm:$0xff] %v3439
      %3488 = vst [vmem:[#allocation2 + $0xb0] sm:$0xff] %v3440
      %3489 = vst [vmem:[#allocation2 + $0xb8] sm:$0xff] %v3441
      %3490 = vst [vmem:[#allocation2 + $0xc0] sm:$0xff] %v3442
      %3491 = vst [vmem:[#allocation2 + $0xc8] sm:$0xff] %v3443
      %3492 = vst [vmem:[#allocation2 + $0xd0] sm:$0xff] %v3444
      %3493 = vst [vmem:[#allocation2 + $0xd8] sm:$0xff] %v3445
      %3494 = vst [vmem:[#allocation2 + $0xe0] sm:$0xff] %v3446
      %3495 = vst [vmem:[#allocation2 + $0xe8] sm:$0xff] %v3447
      %3496 = vst [vmem:[#allocation2 + $0xf0] sm:$0xff] %v3448
      %3497 = vst [vmem:[#allocation2 + $0xf8] sm:$0xff] %v3449
      %3498 = vst [vmem:[#allocation2 + $0x100] sm:$0xff] %v3450
      %3499 = vst [vmem:[#allocation2 + $0x108] sm:$0xff] %v3451
      %3500 = vst [vmem:[#allocation2 + $0x110] sm:$0xff] %v3452
      %3501 = vst [vmem:[#allocation2 + $0x118] sm:$0xff] %v3453
      %3502 = vst [vmem:[#allocation2 + $0x120] sm:$0xff] %v3454
      %3503 = vst [vmem:[#allocation2 + $0x128] sm:$0xff] %v3455
      %3504 = vst [vmem:[#allocation2 + $0x130] sm:$0xff] %v3456
      %3505 = vst [vmem:[#allocation2 + $0x138] sm:$0xff] %v3457
      %3506 = vst [vmem:[#allocation2 + $0x140] sm:$0xff] %v3458
      %3507 = vst [vmem:[#allocation2 + $0x148] sm:$0xff] %v3459
      %3508 = vst [vmem:[#allocation2 + $0x150] sm:$0xff] %v3460
      %3509 = vst [vmem:[#allocation2 + $0x158] sm:$0xff] %v3461
      %3510 = vst [vmem:[#allocation2 + $0x160] sm:$0xff] %v3462
      %3511 = vst [vmem:[#allocation2 + $0x168] sm:$0xff] %v3463
      %3512 = vst [vmem:[#allocation2 + $0x170] sm:$0xff] %v3464
      %3513 = vst [vmem:[#allocation2 + $0x178] sm:$0xff] %v3465
      %s3514 = scalar_lea.vmem %s224, 24
      %v3515 = vld [vmem:[%s3514] sm:$0xf]
      %v3516 = vld [vmem:[%s3514 + $0x4] sm:$0xf]
      %v3517 = vld [vmem:[%s3514 + $0x8] sm:$0xf]
      %v3518 = vld [vmem:[%s3514 + $0xc] sm:$0xf]
      %v3519 = vld [vmem:[%s3514 + $0x10] sm:$0xf]
      %v3520 = vld [vmem:[%s3514 + $0x14] sm:$0xf]
      %v3521 = vld [vmem:[%s3514 + $0x18] sm:$0xf]
      %v3522 = vld [vmem:[%s3514 + $0x1c] sm:$0xf]
      %v3523 = vld [vmem:[%s3514 + $0x20] sm:$0xf]
      %v3524 = vld [vmem:[%s3514 + $0x24] sm:$0xf]
      %v3525 = vld [vmem:[%s3514 + $0x28] sm:$0xf]
      %v3526 = vld [vmem:[%s3514 + $0x2c] sm:$0xf]
      %v3527 = vld [vmem:[%s3514 + $0x30] sm:$0xf]
      %v3528 = vld [vmem:[%s3514 + $0x34] sm:$0xf]
      %v3529 = vld [vmem:[%s3514 + $0x38] sm:$0xf]
      %v3530 = vld [vmem:[%s3514 + $0x3c] sm:$0xf]
      %v3531 = vld [vmem:[%s3514 + $0x40] sm:$0xf]
      %v3532 = vld [vmem:[%s3514 + $0x44] sm:$0xf]
      %v3533 = vld [vmem:[%s3514 + $0x48] sm:$0xf]
      %v3534 = vld [vmem:[%s3514 + $0x4c] sm:$0xf]
      %v3535 = vld [vmem:[%s3514 + $0x50] sm:$0xf]
      %v3536 = vld [vmem:[%s3514 + $0x54] sm:$0xf]
      %v3537 = vld [vmem:[%s3514 + $0x58] sm:$0xf]
      %v3538 = vld [vmem:[%s3514 + $0x5c] sm:$0xf]
      %v3539 = vld [vmem:[%s3514 + $0x60] sm:$0xf]
      %v3540 = vld [vmem:[%s3514 + $0x64] sm:$0xf]
      %v3541 = vld [vmem:[%s3514 + $0x68] sm:$0xf]
      %v3542 = vld [vmem:[%s3514 + $0x6c] sm:$0xf]
      %v3543 = vld [vmem:[%s3514 + $0x70] sm:$0xf]
      %v3544 = vld [vmem:[%s3514 + $0x74] sm:$0xf]
      %v3545 = vld [vmem:[%s3514 + $0x78] sm:$0xf]
      %v3546 = vld [vmem:[%s3514 + $0x7c] sm:$0xf]
      %v3547 = vld [vmem:[%s3514 + $0x80] sm:$0xf]
      %v3548 = vld [vmem:[%s3514 + $0x84] sm:$0xf]
      %v3549 = vld [vmem:[%s3514 + $0x88] sm:$0xf]
      %v3550 = vld [vmem:[%s3514 + $0x8c] sm:$0xf]
      %v3551 = vld [vmem:[%s3514 + $0x90] sm:$0xf]
      %v3552 = vld [vmem:[%s3514 + $0x94] sm:$0xf]
      %v3553 = vld [vmem:[%s3514 + $0x98] sm:$0xf]
      %v3554 = vld [vmem:[%s3514 + $0x9c] sm:$0xf]
      %v3555 = vld [vmem:[%s3514 + $0xa0] sm:$0xf]
      %v3556 = vld [vmem:[%s3514 + $0xa4] sm:$0xf]
      %v3557 = vld [vmem:[%s3514 + $0xa8] sm:$0xf]
      %v3558 = vld [vmem:[%s3514 + $0xac] sm:$0xf]
      %v3559 = vld [vmem:[%s3514 + $0xb0] sm:$0xf]
      %v3560 = vld [vmem:[%s3514 + $0xb4] sm:$0xf]
      %v3561 = vld [vmem:[%s3514 + $0xb8] sm:$0xf]
      %v3562 = vld [vmem:[%s3514 + $0xbc] sm:$0xf]
      %s3563 = scalar_lea.vmem %s1, 384
      %v3564 = vld [vmem:[%s3563] sm:$0xf]
      %v3565 = vld [vmem:[%s3563 + $0x4] sm:$0xf]
      %v3566 = vld [vmem:[%s3563 + $0x8] sm:$0xf]
      %v3567 = vld [vmem:[%s3563 + $0xc] sm:$0xf]
      %v3568 = vld [vmem:[%s3563 + $0x10] sm:$0xf]
      %v3569 = vld [vmem:[%s3563 + $0x14] sm:$0xf]
      %v3570 = vld [vmem:[%s3563 + $0x18] sm:$0xf]
      %v3571 = vld [vmem:[%s3563 + $0x1c] sm:$0xf]
      %v3572 = vld [vmem:[%s3563 + $0x20] sm:$0xf]
      %v3573 = vld [vmem:[%s3563 + $0x24] sm:$0xf]
      %v3574 = vld [vmem:[%s3563 + $0x28] sm:$0xf]
      %v3575 = vld [vmem:[%s3563 + $0x2c] sm:$0xf]
      %v3576 = vld [vmem:[%s3563 + $0x30] sm:$0xf]
      %v3577 = vld [vmem:[%s3563 + $0x34] sm:$0xf]
      %v3578 = vld [vmem:[%s3563 + $0x38] sm:$0xf]
      %v3579 = vld [vmem:[%s3563 + $0x3c] sm:$0xf]
      %v3628 = vunpack.c.l.b16 %v3515
      %v3629 = vunpack.c.l.b16 %v3516
      %v3630 = vunpack.c.l.b16 %v3517
      %v3631 = vunpack.c.l.b16 %v3518
      %v3632 = vunpack.c.l.b16 %v3519
      %v3633 = vunpack.c.l.b16 %v3520
      %v3634 = vunpack.c.l.b16 %v3521
      %v3635 = vunpack.c.l.b16 %v3522
      %v3636 = vunpack.c.l.b16 %v3523
      %v3637 = vunpack.c.l.b16 %v3524
      %v3638 = vunpack.c.l.b16 %v3525
      %v3639 = vunpack.c.l.b16 %v3526
      %v3640 = vunpack.c.l.b16 %v3527
      %v3641 = vunpack.c.l.b16 %v3528
      %v3642 = vunpack.c.l.b16 %v3529
      %v3643 = vunpack.c.l.b16 %v3530
      %v3644 = vunpack.c.l.b16 %v3531
      %v3645 = vunpack.c.l.b16 %v3532
      %v3646 = vunpack.c.l.b16 %v3533
      %v3647 = vunpack.c.l.b16 %v3534
      %v3648 = vunpack.c.l.b16 %v3535
      %v3649 = vunpack.c.l.b16 %v3536
      %v3650 = vunpack.c.l.b16 %v3537
      %v3651 = vunpack.c.l.b16 %v3538
      %v3652 = vunpack.c.l.b16 %v3539
      %v3653 = vunpack.c.l.b16 %v3540
      %v3654 = vunpack.c.l.b16 %v3541
      %v3655 = vunpack.c.l.b16 %v3542
      %v3656 = vunpack.c.l.b16 %v3543
      %v3657 = vunpack.c.l.b16 %v3544
      %v3658 = vunpack.c.l.b16 %v3545
      %v3659 = vunpack.c.l.b16 %v3546
      %v3660 = vunpack.c.l.b16 %v3547
      %v3661 = vunpack.c.l.b16 %v3548
      %v3662 = vunpack.c.l.b16 %v3549
      %v3663 = vunpack.c.l.b16 %v3550
      %v3664 = vunpack.c.l.b16 %v3551
      %v3665 = vunpack.c.l.b16 %v3552
      %v3666 = vunpack.c.l.b16 %v3553
      %v3667 = vunpack.c.l.b16 %v3554
      %v3668 = vunpack.c.l.b16 %v3555
      %v3669 = vunpack.c.l.b16 %v3556
      %v3670 = vunpack.c.l.b16 %v3557
      %v3671 = vunpack.c.l.b16 %v3558
      %v3672 = vunpack.c.l.b16 %v3559
      %v3673 = vunpack.c.l.b16 %v3560
      %v3674 = vunpack.c.l.b16 %v3561
      %v3675 = vunpack.c.l.b16 %v3562
      %v3676 = vpack.c.b16 %v3629, %v3628
      %v3677 = vpack.c.b16 %v3631, %v3630
      %v3678 = vpack.c.b16 %v3633, %v3632
      %v3679 = vpack.c.b16 %v3635, %v3634
      %v3680 = vpack.c.b16 %v3637, %v3636
      %v3681 = vpack.c.b16 %v3639, %v3638
      %v3682 = vpack.c.b16 %v3641, %v3640
      %v3683 = vpack.c.b16 %v3643, %v3642
      %v3684 = vpack.c.b16 %v3645, %v3644
      %v3685 = vpack.c.b16 %v3647, %v3646
      %v3686 = vpack.c.b16 %v3649, %v3648
      %v3687 = vpack.c.b16 %v3651, %v3650
      %v3688 = vpack.c.b16 %v3653, %v3652
      %v3689 = vpack.c.b16 %v3655, %v3654
      %v3690 = vpack.c.b16 %v3657, %v3656
      %v3691 = vpack.c.b16 %v3659, %v3658
      %v3692 = vpack.c.b16 %v3661, %v3660
      %v3693 = vpack.c.b16 %v3663, %v3662
      %v3694 = vpack.c.b16 %v3665, %v3664
      %v3695 = vpack.c.b16 %v3667, %v3666
      %v3696 = vpack.c.b16 %v3669, %v3668
      %v3697 = vpack.c.b16 %v3671, %v3670
      %v3698 = vpack.c.b16 %v3673, %v3672
      %v3699 = vpack.c.b16 %v3675, %v3674
      %v3740 = vunpack.c.l.b16 %v3564
      %v3741 = vunpack.c.l.b16 %v3565
      %v3742 = vunpack.c.l.b16 %v3566
      %v3743 = vunpack.c.l.b16 %v3567
      %v3744 = vunpack.c.l.b16 %v3568
      %v3745 = vunpack.c.l.b16 %v3569
      %v3746 = vunpack.c.l.b16 %v3570
      %v3747 = vunpack.c.l.b16 %v3571
      %v3748 = vunpack.c.l.b16 %v3572
      %v3749 = vunpack.c.l.b16 %v3573
      %v3750 = vunpack.c.l.b16 %v3574
      %v3751 = vunpack.c.l.b16 %v3575
      %v3752 = vunpack.c.l.b16 %v3576
      %v3753 = vunpack.c.l.b16 %v3577
      %v3754 = vunpack.c.l.b16 %v3578
      %v3755 = vunpack.c.l.b16 %v3579
      %v3756 = vpack.c.b16 %v3741, %v3740
      %v3757 = vpack.c.b16 %v3743, %v3742
      %v3758 = vpack.c.b16 %v3745, %v3744
      %v3759 = vpack.c.b16 %v3747, %v3746
      %v3760 = vpack.c.b16 %v3749, %v3748
      %v3761 = vpack.c.b16 %v3751, %v3750
      %v3762 = vpack.c.b16 %v3753, %v3752
      %v3763 = vpack.c.b16 %v3755, %v3754
      %3772 = vmatprep.subr.bf16.mxu0 0
      %3773 = vmatpush1.bf16.msra.mxu0 %v3756
      %3774 = vmatprep.subr.bf16.mxu0 0
      %3775 = vmatpush1.bf16.msra.mxu0 %v3757
      %3776 = vmatprep.subr.bf16.mxu0 0
      %3777 = vmatpush1.bf16.msra.mxu0 %v3758
      %3778 = vmatprep.subr.bf16.mxu0 0
      %3779 = vmatpush1.bf16.msra.mxu0 %v3759
      %3780 = vmatprep.subr.bf16.mxu0 0
      %3781 = vmatpush1.bf16.msra.mxu0 %v3760
      %3782 = vmatprep.subr.bf16.mxu0 0
      %3783 = vmatpush1.bf16.msra.mxu0 %v3761
      %3784 = vmatprep.subr.bf16.mxu0 0
      %3785 = vmatpush1.bf16.msra.mxu0 %v3762
      %3786 = vmatprep.subr.bf16.mxu0 0
      %3787 = vmatpush1.bf16.msra.mxu0 %v3763
      %3788 = vmatprep.subr.bf16.mxu0 0
      %3789 = vmatpush1.bf16.msra.mxu0 0
      %3790 = vmatprep.subr.bf16.mxu0 0
      %3791 = vmatpush1.bf16.msra.mxu0 0
      %3792 = vmatprep.subr.bf16.mxu0 0
      %3793 = vmatpush1.bf16.msra.mxu0 0
      %3794 = vmatprep.subr.bf16.mxu0 0
      %3795 = vmatpush1.bf16.msra.mxu0 0
      %3796 = vmatprep.subr.bf16.mxu0 0
      %3797 = vmatpush1.bf16.msra.mxu0 0
      %3798 = vmatprep.subr.bf16.mxu0 0
      %3799 = vmatpush1.bf16.msra.mxu0 0
      %3800 = vmatprep.subr.bf16.mxu0 0
      %3801 = vmatpush1.bf16.msra.mxu0 0
      %3802 = vmatprep.subr.bf16.mxu0 0
      %3803 = vmatpush1.bf16.msra.mxu0 0
      %3804 = vmatprep.mubr.bf16.mxu0 0
      %3805 = vmatmul.mubr.bf16.gmra.mrb[0].mxu0 %v3676
      %v3806 = vpop.f32.mrb[0].mxu0
      %v3807 = vadd.f32 0.0, %v3806
      %v3808 = vpop.f32.mrb[0].mxu0
      %v3809 = vpop.f32.mrb[0].mxu0
      %v3810 = vadd.f32 0.0, %v3809
      %v3811 = vpop.f32.mrb[0].mxu0
      %3812 = vmatprep.mubr.bf16.mxu0 0
      %3813 = vmatmul.mubr.bf16.gmra.mrb[0].mxu0 %v3677
      %v3814 = vpop.f32.mrb[0].mxu0
      %v3815 = vadd.f32 0.0, %v3814
      %v3816 = vpop.f32.mrb[0].mxu0
      %v3817 = vpop.f32.mrb[0].mxu0
      %v3818 = vadd.f32 0.0, %v3817
      %v3819 = vpop.f32.mrb[0].mxu0
      %3820 = vmatprep.mubr.bf16.mxu0 0
      %3821 = vmatmul.mubr.bf16.gmra.mrb[0].mxu0 %v3678
      %v3822 = vpop.f32.mrb[0].mxu0
      %v3823 = vadd.f32 0.0, %v3822
      %v3824 = vpop.f32.mrb[0].mxu0
      %v3825 = vpop.f32.mrb[0].mxu0
      %v3826 = vadd.f32 0.0, %v3825
      %v3827 = vpop.f32.mrb[0].mxu0
      %3828 = vmatprep.mubr.bf16.mxu0 0
      %3829 = vmatmul.mubr.bf16.gmra.mrb[0].mxu0 %v3679
      %v3830 = vpop.f32.mrb[0].mxu0
      %v3831 = vadd.f32 0.0, %v3830
      %v3832 = vpop.f32.mrb[0].mxu0
      %v3833 = vpop.f32.mrb[0].mxu0
      %v3834 = vadd.f32 0.0, %v3833
      %v3835 = vpop.f32.mrb[0].mxu0
      %3836 = vmatprep.mubr.bf16.mxu0 0
      %3837 = vmatmul.mubr.bf16.gmra.mrb[0].mxu0 %v3680
      %v3838 = vpop.f32.mrb[0].mxu0
      %v3839 = vadd.f32 0.0, %v3838
      %v3840 = vpop.f32.mrb[0].mxu0
      %v3841 = vpop.f32.mrb[0].mxu0
      %v3842 = vadd.f32 0.0, %v3841
      %v3843 = vpop.f32.mrb[0].mxu0
      %3844 = vmatprep.mubr.bf16.mxu0 0
      %3845 = vmatmul.mubr.bf16.gmra.mrb[0].mxu0 %v3681
      %v3846 = vpop.f32.mrb[0].mxu0
      %v3847 = vadd.f32 0.0, %v3846
      %v3848 = vpop.f32.mrb[0].mxu0
      %v3849 = vpop.f32.mrb[0].mxu0
      %v3850 = vadd.f32 0.0, %v3849
      %v3851 = vpop.f32.mrb[0].mxu0
      %3852 = vmatprep.mubr.bf16.mxu0 0
      %3853 = vmatmul.mubr.bf16.gmra.mrb[0].mxu0 %v3682
      %v3854 = vpop.f32.mrb[0].mxu0
      %v3855 = vadd.f32 0.0, %v3854
      %v3856 = vpop.f32.mrb[0].mxu0
      %v3857 = vpop.f32.mrb[0].mxu0
      %v3858 = vadd.f32 0.0, %v3857
      %v3859 = vpop.f32.mrb[0].mxu0
      %3860 = vmatprep.mubr.bf16.mxu0 0
      %3861 = vmatmul.mubr.bf16.gmra.mrb[0].mxu0 %v3683
      %v3862 = vpop.f32.mrb[0].mxu0
      %v3863 = vadd.f32 0.0, %v3862
      %v3864 = vpop.f32.mrb[0].mxu0
      %v3865 = vpop.f32.mrb[0].mxu0
      %v3866 = vadd.f32 0.0, %v3865
      %v3867 = vpop.f32.mrb[0].mxu0
      %3868 = vmatprep.mubr.bf16.mxu0 0
      %3869 = vmatmul.mubr.bf16.gmra.mrb[0].mxu0 %v3684
      %v3870 = vpop.f32.mrb[0].mxu0
      %v3871 = vadd.f32 0.0, %v3870
      %v3872 = vpop.f32.mrb[0].mxu0
      %v3873 = vpop.f32.mrb[0].mxu0
      %v3874 = vadd.f32 0.0, %v3873
      %v3875 = vpop.f32.mrb[0].mxu0
      %3876 = vmatprep.mubr.bf16.mxu0 0
      %3877 = vmatmul.mubr.bf16.gmra.mrb[0].mxu0 %v3685
      %v3878 = vpop.f32.mrb[0].mxu0
      %v3879 = vadd.f32 0.0, %v3878
      %v3880 = vpop.f32.mrb[0].mxu0
      %v3881 = vpop.f32.mrb[0].mxu0
      %v3882 = vadd.f32 0.0, %v3881
      %v3883 = vpop.f32.mrb[0].mxu0
      %3884 = vmatprep.mubr.bf16.mxu0 0
      %3885 = vmatmul.mubr.bf16.gmra.mrb[0].mxu0 %v3686
      %v3886 = vpop.f32.mrb[0].mxu0
      %v3887 = vadd.f32 0.0, %v3886
      %v3888 = vpop.f32.mrb[0].mxu0
      %v3889 = vpop.f32.mrb[0].mxu0
      %v3890 = vadd.f32 0.0, %v3889
      %v3891 = vpop.f32.mrb[0].mxu0
      %3892 = vmatprep.mubr.bf16.mxu0 0
      %3893 = vmatmul.mubr.bf16.gmra.mrb[0].mxu0 %v3687
      %v3894 = vpop.f32.mrb[0].mxu0
      %v3895 = vadd.f32 0.0, %v3894
      %v3896 = vpop.f32.mrb[0].mxu0
      %v3897 = vpop.f32.mrb[0].mxu0
      %v3898 = vadd.f32 0.0, %v3897
      %v3899 = vpop.f32.mrb[0].mxu0
      %3900 = vmatprep.mubr.bf16.mxu0 0
      %3901 = vmatmul.mubr.bf16.gmra.mrb[0].mxu0 %v3688
      %v3902 = vpop.f32.mrb[0].mxu0
      %v3903 = vadd.f32 0.0, %v3902
      %v3904 = vpop.f32.mrb[0].mxu0
      %v3905 = vpop.f32.mrb[0].mxu0
      %v3906 = vadd.f32 0.0, %v3905
      %v3907 = vpop.f32.mrb[0].mxu0
      %3908 = vmatprep.mubr.bf16.mxu0 0
      %3909 = vmatmul.mubr.bf16.gmra.mrb[0].mxu0 %v3689
      %v3910 = vpop.f32.mrb[0].mxu0
      %v3911 = vadd.f32 0.0, %v3910
      %v3912 = vpop.f32.mrb[0].mxu0
      %v3913 = vpop.f32.mrb[0].mxu0
      %v3914 = vadd.f32 0.0, %v3913
      %v3915 = vpop.f32.mrb[0].mxu0
      %3916 = vmatprep.mubr.bf16.mxu0 0
      %3917 = vmatmul.mubr.bf16.gmra.mrb[0].mxu0 %v3690
      %v3918 = vpop.f32.mrb[0].mxu0
      %v3919 = vadd.f32 0.0, %v3918
      %v3920 = vpop.f32.mrb[0].mxu0
      %v3921 = vpop.f32.mrb[0].mxu0
      %v3922 = vadd.f32 0.0, %v3921
      %v3923 = vpop.f32.mrb[0].mxu0
      %3924 = vmatprep.mubr.bf16.mxu0 0
      %3925 = vmatmul.mubr.bf16.gmra.mrb[0].mxu0 %v3691
      %v3926 = vpop.f32.mrb[0].mxu0
      %v3927 = vadd.f32 0.0, %v3926
      %v3928 = vpop.f32.mrb[0].mxu0
      %v3929 = vpop.f32.mrb[0].mxu0
      %v3930 = vadd.f32 0.0, %v3929
      %v3931 = vpop.f32.mrb[0].mxu0
      %3932 = vmatprep.mubr.bf16.mxu0 0
      %3933 = vmatmul.mubr.bf16.gmra.mrb[0].mxu0 %v3692
      %v3934 = vpop.f32.mrb[0].mxu0
      %v3935 = vadd.f32 0.0, %v3934
      %v3936 = vpop.f32.mrb[0].mxu0
      %v3937 = vpop.f32.mrb[0].mxu0
      %v3938 = vadd.f32 0.0, %v3937
      %v3939 = vpop.f32.mrb[0].mxu0
      %3940 = vmatprep.mubr.bf16.mxu0 0
      %3941 = vmatmul.mubr.bf16.gmra.mrb[0].mxu0 %v3693
      %v3942 = vpop.f32.mrb[0].mxu0
      %v3943 = vadd.f32 0.0, %v3942
      %v3944 = vpop.f32.mrb[0].mxu0
      %v3945 = vpop.f32.mrb[0].mxu0
      %v3946 = vadd.f32 0.0, %v3945
      %v3947 = vpop.f32.mrb[0].mxu0
      %3948 = vmatprep.mubr.bf16.mxu0 0
      %3949 = vmatmul.mubr.bf16.gmra.mrb[0].mxu0 %v3694
      %v3950 = vpop.f32.mrb[0].mxu0
      %v3951 = vadd.f32 0.0, %v3950
      %v3952 = vpop.f32.mrb[0].mxu0
      %v3953 = vpop.f32.mrb[0].mxu0
      %v3954 = vadd.f32 0.0, %v3953
      %v3955 = vpop.f32.mrb[0].mxu0
      %3956 = vmatprep.mubr.bf16.mxu0 0
      %3957 = vmatmul.mubr.bf16.gmra.mrb[0].mxu0 %v3695
      %v3958 = vpop.f32.mrb[0].mxu0
      %v3959 = vadd.f32 0.0, %v3958
      %v3960 = vpop.f32.mrb[0].mxu0
      %v3961 = vpop.f32.mrb[0].mxu0
      %v3962 = vadd.f32 0.0, %v3961
      %v3963 = vpop.f32.mrb[0].mxu0
      %3964 = vmatprep.mubr.bf16.mxu0 0
      %3965 = vmatmul.mubr.bf16.gmra.mrb[0].mxu0 %v3696
      %v3966 = vpop.f32.mrb[0].mxu0
      %v3967 = vadd.f32 0.0, %v3966
      %v3968 = vpop.f32.mrb[0].mxu0
      %v3969 = vpop.f32.mrb[0].mxu0
      %v3970 = vadd.f32 0.0, %v3969
      %v3971 = vpop.f32.mrb[0].mxu0
      %3972 = vmatprep.mubr.bf16.mxu0 0
      %3973 = vmatmul.mubr.bf16.gmra.mrb[0].mxu0 %v3697
      %v3974 = vpop.f32.mrb[0].mxu0
      %v3975 = vadd.f32 0.0, %v3974
      %v3976 = vpop.f32.mrb[0].mxu0
      %v3977 = vpop.f32.mrb[0].mxu0
      %v3978 = vadd.f32 0.0, %v3977
      %v3979 = vpop.f32.mrb[0].mxu0
      %3980 = vmatprep.mubr.bf16.mxu0 0
      %3981 = vmatmul.mubr.bf16.gmra.mrb[0].mxu0 %v3698
      %v3982 = vpop.f32.mrb[0].mxu0
      %v3983 = vadd.f32 0.0, %v3982
      %v3984 = vpop.f32.mrb[0].mxu0
      %v3985 = vpop.f32.mrb[0].mxu0
      %v3986 = vadd.f32 0.0, %v3985
      %v3987 = vpop.f32.mrb[0].mxu0
      %3988 = vmatprep.mubr.bf16.mxu0 0
      %3989 = vmatmul.mubr.bf16.gmra.mrb[0].mxu0 %v3699
      %v3990 = vpop.f32.mrb[0].mxu0
      %v3991 = vadd.f32 0.0, %v3990
      %v3992 = vpop.f32.mrb[0].mxu0
      %v3993 = vpop.f32.mrb[0].mxu0
      %v3994 = vadd.f32 0.0, %v3993
      %v3995 = vpop.f32.mrb[0].mxu0
      %3996 = vdwg.mxu0
      %v3997 = vrot.slane %v3807, 7
      %v3998 = vrot.slane %v3810, 7
      %v3999 = vrot.slane %v3815, 7
      %v4000 = vrot.slane %v3818, 7
      %v4001 = vrot.slane %v3823, 7
      %v4002 = vrot.slane %v3826, 7
      %v4003 = vrot.slane %v3831, 7
      %v4004 = vrot.slane %v3834, 7
      %v4005 = vrot.slane %v3839, 7
      %v4006 = vrot.slane %v3842, 7
      %v4007 = vrot.slane %v3847, 7
      %v4008 = vrot.slane %v3850, 7
      %v4009 = vrot.slane %v3855, 7
      %v4010 = vrot.slane %v3858, 7
      %v4011 = vrot.slane %v3863, 7
      %v4012 = vrot.slane %v3866, 7
      %v4013 = vrot.slane %v3871, 7
      %v4014 = vrot.slane %v3874, 7
      %v4015 = vrot.slane %v3879, 7
      %v4016 = vrot.slane %v3882, 7
      %v4017 = vrot.slane %v3887, 7
      %v4018 = vrot.slane %v3890, 7
      %v4019 = vrot.slane %v3895, 7
      %v4020 = vrot.slane %v3898, 7
      %v4021 = vrot.slane %v3903, 7
      %v4022 = vrot.slane %v3906, 7
      %v4023 = vrot.slane %v3911, 7
      %v4024 = vrot.slane %v3914, 7
      %v4025 = vrot.slane %v3919, 7
      %v4026 = vrot.slane %v3922, 7
      %v4027 = vrot.slane %v3927, 7
      %v4028 = vrot.slane %v3930, 7
      %v4029 = vrot.slane %v3935, 7
      %v4030 = vrot.slane %v3938, 7
      %v4031 = vrot.slane %v3943, 7
      %v4032 = vrot.slane %v3946, 7
      %v4033 = vrot.slane %v3951, 7
      %v4034 = vrot.slane %v3954, 7
      %v4035 = vrot.slane %v3959, 7
      %v4036 = vrot.slane %v3962, 7
      %v4037 = vrot.slane %v3967, 7
      %v4038 = vrot.slane %v3970, 7
      %v4039 = vrot.slane %v3975, 7
      %v4040 = vrot.slane %v3978, 7
      %v4041 = vrot.slane %v3983, 7
      %v4042 = vrot.slane %v3986, 7
      %v4043 = vrot.slane %v3991, 7
      %v4044 = vrot.slane %v3994, 7
      %v4045 = vsel %vm765, %v4043, %v4044
      %v4046 = vsel %vm765, %v4042, %v4043
      %v4047 = vsel %vm765, %v4041, %v4042
      %v4048 = vsel %vm765, %v4040, %v4041
      %v4049 = vsel %vm765, %v4039, %v4040
      %v4050 = vsel %vm765, %v4038, %v4039
      %v4051 = vsel %vm765, %v4037, %v4038
      %v4052 = vsel %vm765, %v4036, %v4037
      %v4053 = vsel %vm765, %v4035, %v4036
      %v4054 = vsel %vm765, %v4034, %v4035
      %v4055 = vsel %vm765, %v4033, %v4034
      %v4056 = vsel %vm765, %v4032, %v4033
      %v4057 = vsel %vm765, %v4031, %v4032
      %v4058 = vsel %vm765, %v4030, %v4031
      %v4059 = vsel %vm765, %v4029, %v4030
      %v4060 = vsel %vm765, %v4028, %v4029
      %v4061 = vsel %vm765, %v4027, %v4028
      %v4062 = vsel %vm765, %v4026, %v4027
      %v4063 = vsel %vm765, %v4025, %v4026
      %v4064 = vsel %vm765, %v4024, %v4025
      %v4065 = vsel %vm765, %v4023, %v4024
      %v4066 = vsel %vm765, %v4022, %v4023
      %v4067 = vsel %vm765, %v4021, %v4022
      %v4068 = vsel %vm765, %v4020, %v4021
      %v4069 = vsel %vm765, %v4019, %v4020
      %v4070 = vsel %vm765, %v4018, %v4019
      %v4071 = vsel %vm765, %v4017, %v4018
      %v4072 = vsel %vm765, %v4016, %v4017
      %v4073 = vsel %vm765, %v4015, %v4016
      %v4074 = vsel %vm765, %v4014, %v4015
      %v4075 = vsel %vm765, %v4013, %v4014
      %v4076 = vsel %vm765, %v4012, %v4013
      %v4077 = vsel %vm765, %v4011, %v4012
      %v4078 = vsel %vm765, %v4010, %v4011
      %v4079 = vsel %vm765, %v4009, %v4010
      %v4080 = vsel %vm765, %v4008, %v4009
      %v4081 = vsel %vm765, %v4007, %v4008
      %v4082 = vsel %vm765, %v4006, %v4007
      %v4083 = vsel %vm765, %v4005, %v4006
      %v4084 = vsel %vm765, %v4004, %v4005
      %v4085 = vsel %vm765, %v4003, %v4004
      %v4086 = vsel %vm765, %v4002, %v4003
      %v4087 = vsel %vm765, %v4001, %v4002
      %v4088 = vsel %vm765, %v4000, %v4001
      %v4089 = vsel %vm765, %v3999, %v4000
      %v4090 = vsel %vm765, %v3998, %v3999
      %v4091 = vsel %vm765, %v3997, %v3998
      %v4092 = vsel %vm765, %v4044, %v3997
      %v4093 = vld [vmem:[#allocation2] sm:$0xff]
      %v4094 = vld [vmem:[#allocation2 + $0x8] sm:$0xff]
      %v4095 = vld [vmem:[#allocation2 + $0x10] sm:$0xff]
      %v4096 = vld [vmem:[#allocation2 + $0x18] sm:$0xff]
      %v4097 = vld [vmem:[#allocation2 + $0x20] sm:$0xff]
      %v4098 = vld [vmem:[#allocation2 + $0x28] sm:$0xff]
      %v4099 = vld [vmem:[#allocation2 + $0x30] sm:$0xff]
      %v4100 = vld [vmem:[#allocation2 + $0x38] sm:$0xff]
      %v4101 = vld [vmem:[#allocation2 + $0x40] sm:$0xff]
      %v4102 = vld [vmem:[#allocation2 + $0x48] sm:$0xff]
      %v4103 = vld [vmem:[#allocation2 + $0x50] sm:$0xff]
      %v4104 = vld [vmem:[#allocation2 + $0x58] sm:$0xff]
      %v4105 = vld [vmem:[#allocation2 + $0x60] sm:$0xff]
      %v4106 = vld [vmem:[#allocation2 + $0x68] sm:$0xff]
      %v4107 = vld [vmem:[#allocation2 + $0x70] sm:$0xff]
      %v4108 = vld [vmem:[#allocation2 + $0x78] sm:$0xff]
      %v4109 = vld [vmem:[#allocation2 + $0x80] sm:$0xff]
      %v4110 = vld [vmem:[#allocation2 + $0x88] sm:$0xff]
      %v4111 = vld [vmem:[#allocation2 + $0x90] sm:$0xff]
      %v4112 = vld [vmem:[#allocation2 + $0x98] sm:$0xff]
      %v4113 = vld [vmem:[#allocation2 + $0xa0] sm:$0xff]
      %v4114 = vld [vmem:[#allocation2 + $0xa8] sm:$0xff]
      %v4115 = vld [vmem:[#allocation2 + $0xb0] sm:$0xff]
      %v4116 = vld [vmem:[#allocation2 + $0xb8] sm:$0xff]
      %v4117 = vld [vmem:[#allocation2 + $0xc0] sm:$0xff]
      %v4118 = vld [vmem:[#allocation2 + $0xc8] sm:$0xff]
      %v4119 = vld [vmem:[#allocation2 + $0xd0] sm:$0xff]
      %v4120 = vld [vmem:[#allocation2 + $0xd8] sm:$0xff]
      %v4121 = vld [vmem:[#allocation2 + $0xe0] sm:$0xff]
      %v4122 = vld [vmem:[#allocation2 + $0xe8] sm:$0xff]
      %v4123 = vld [vmem:[#allocation2 + $0xf0] sm:$0xff]
      %v4124 = vld [vmem:[#allocation2 + $0xf8] sm:$0xff]
      %v4125 = vld [vmem:[#allocation2 + $0x100] sm:$0xff]
      %v4126 = vld [vmem:[#allocation2 + $0x108] sm:$0xff]
      %v4127 = vld [vmem:[#allocation2 + $0x110] sm:$0xff]
      %v4128 = vld [vmem:[#allocation2 + $0x118] sm:$0xff]
      %v4129 = vld [vmem:[#allocation2 + $0x120] sm:$0xff]
      %v4130 = vld [vmem:[#allocation2 + $0x128] sm:$0xff]
      %v4131 = vld [vmem:[#allocation2 + $0x130] sm:$0xff]
      %v4132 = vld [vmem:[#allocation2 + $0x138] sm:$0xff]
      %v4133 = vld [vmem:[#allocation2 + $0x140] sm:$0xff]
      %v4134 = vld [vmem:[#allocation2 + $0x148] sm:$0xff]
      %v4135 = vld [vmem:[#allocation2 + $0x150] sm:$0xff]
      %v4136 = vld [vmem:[#allocation2 + $0x158] sm:$0xff]
      %v4137 = vld [vmem:[#allocation2 + $0x160] sm:$0xff]
      %v4138 = vld [vmem:[#allocation2 + $0x168] sm:$0xff]
      %v4139 = vld [vmem:[#allocation2 + $0x170] sm:$0xff]
      %v4140 = vld [vmem:[#allocation2 + $0x178] sm:$0xff]
      %v4141 = vadd.f32 %v4093, %v4092
      %v4142 = vadd.f32 %v4094, %v4091
      %v4143 = vadd.f32 %v4095, %v4090
      %v4144 = vadd.f32 %v4096, %v4089
      %v4145 = vadd.f32 %v4097, %v4088
      %v4146 = vadd.f32 %v4098, %v4087
      %v4147 = vadd.f32 %v4099, %v4086
      %v4148 = vadd.f32 %v4100, %v4085
      %v4149 = vadd.f32 %v4101, %v4084
      %v4150 = vadd.f32 %v4102, %v4083
      %v4151 = vadd.f32 %v4103, %v4082
      %v4152 = vadd.f32 %v4104, %v4081
      %v4153 = vadd.f32 %v4105, %v4080
      %v4154 = vadd.f32 %v4106, %v4079
      %v4155 = vadd.f32 %v4107, %v4078
      %v4156 = vadd.f32 %v4108, %v4077
      %v4157 = vadd.f32 %v4109, %v4076
      %v4158 = vadd.f32 %v4110, %v4075
      %v4159 = vadd.f32 %v4111, %v4074
      %v4160 = vadd.f32 %v4112, %v4073
      %v4161 = vadd.f32 %v4113, %v4072
      %v4162 = vadd.f32 %v4114, %v4071
      %v4163 = vadd.f32 %v4115, %v4070
      %v4164 = vadd.f32 %v4116, %v4069
      %v4165 = vadd.f32 %v4117, %v4068
      %v4166 = vadd.f32 %v4118, %v4067
      %v4167 = vadd.f32 %v4119, %v4066
      %v4168 = vadd.f32 %v4120, %v4065
      %v4169 = vadd.f32 %v4121, %v4064
      %v4170 = vadd.f32 %v4122, %v4063
      %v4171 = vadd.f32 %v4123, %v4062
      %v4172 = vadd.f32 %v4124, %v4061
      %v4173 = vadd.f32 %v4125, %v4060
      %v4174 = vadd.f32 %v4126, %v4059
      %v4175 = vadd.f32 %v4127, %v4058
      %v4176 = vadd.f32 %v4128, %v4057
      %v4177 = vadd.f32 %v4129, %v4056
      %v4178 = vadd.f32 %v4130, %v4055
      %v4179 = vadd.f32 %v4131, %v4054
      %v4180 = vadd.f32 %v4132, %v4053
      %v4181 = vadd.f32 %v4133, %v4052
      %v4182 = vadd.f32 %v4134, %v4051
      %v4183 = vadd.f32 %v4135, %v4050
      %v4184 = vadd.f32 %v4136, %v4049
      %v4185 = vadd.f32 %v4137, %v4048
      %v4186 = vadd.f32 %v4138, %v4047
      %v4187 = vadd.f32 %v4139, %v4046
      %v4188 = vadd.f32 %v4140, %v4045
      %4189 = vst [vmem:[#allocation2] sm:$0xff] %v4141
      %4190 = vst [vmem:[#allocation2 + $0x8] sm:$0xff] %v4142
      %4191 = vst [vmem:[#allocation2 + $0x10] sm:$0xff] %v4143
      %4192 = vst [vmem:[#allocation2 + $0x18] sm:$0xff] %v4144
      %4193 = vst [vmem:[#allocation2 + $0x20] sm:$0xff] %v4145
      %4194 = vst [vmem:[#allocation2 + $0x28] sm:$0xff] %v4146
      %4195 = vst [vmem:[#allocation2 + $0x30] sm:$0xff] %v4147
      %4196 = vst [vmem:[#allocation2 + $0x38] sm:$0xff] %v4148
      %4197 = vst [vmem:[#allocation2 + $0x40] sm:$0xff] %v4149
      %4198 = vst [vmem:[#allocation2 + $0x48] sm:$0xff] %v4150
      %4199 = vst [vmem:[#allocation2 + $0x50] sm:$0xff] %v4151
      %4200 = vst [vmem:[#allocation2 + $0x58] sm:$0xff] %v4152
      %4201 = vst [vmem:[#allocation2 + $0x60] sm:$0xff] %v4153
      %4202 = vst [vmem:[#allocation2 + $0x68] sm:$0xff] %v4154
      %4203 = vst [vmem:[#allocation2 + $0x70] sm:$0xff] %v4155
      %4204 = vst [vmem:[#allocation2 + $0x78] sm:$0xff] %v4156
      %4205 = vst [vmem:[#allocation2 + $0x80] sm:$0xff] %v4157
      %4206 = vst [vmem:[#allocation2 + $0x88] sm:$0xff] %v4158
      %4207 = vst [vmem:[#allocation2 + $0x90] sm:$0xff] %v4159
      %4208 = vst [vmem:[#allocation2 + $0x98] sm:$0xff] %v4160
      %4209 = vst [vmem:[#allocation2 + $0xa0] sm:$0xff] %v4161
      %4210 = vst [vmem:[#allocation2 + $0xa8] sm:$0xff] %v4162
      %4211 = vst [vmem:[#allocation2 + $0xb0] sm:$0xff] %v4163
      %4212 = vst [vmem:[#allocation2 + $0xb8] sm:$0xff] %v4164
      %4213 = vst [vmem:[#allocation2 + $0xc0] sm:$0xff] %v4165
      %4214 = vst [vmem:[#allocation2 + $0xc8] sm:$0xff] %v4166
      %4215 = vst [vmem:[#allocation2 + $0xd0] sm:$0xff] %v4167
      %4216 = vst [vmem:[#allocation2 + $0xd8] sm:$0xff] %v4168
      %4217 = vst [vmem:[#allocation2 + $0xe0] sm:$0xff] %v4169
      %4218 = vst [vmem:[#allocation2 + $0xe8] sm:$0xff] %v4170
      %4219 = vst [vmem:[#allocation2 + $0xf0] sm:$0xff] %v4171
      %4220 = vst [vmem:[#allocation2 + $0xf8] sm:$0xff] %v4172
      %4221 = vst [vmem:[#allocation2 + $0x100] sm:$0xff] %v4173
      %4222 = vst [vmem:[#allocation2 + $0x108] sm:$0xff] %v4174
      %4223 = vst [vmem:[#allocation2 + $0x110] sm:$0xff] %v4175
      %4224 = vst [vmem:[#allocation2 + $0x118] sm:$0xff] %v4176
      %4225 = vst [vmem:[#allocation2 + $0x120] sm:$0xff] %v4177
      %4226 = vst [vmem:[#allocation2 + $0x128] sm:$0xff] %v4178
      %4227 = vst [vmem:[#allocation2 + $0x130] sm:$0xff] %v4179
      %4228 = vst [vmem:[#allocation2 + $0x138] sm:$0xff] %v4180
      %4229 = vst [vmem:[#allocation2 + $0x140] sm:$0xff] %v4181
      %4230 = vst [vmem:[#allocation2 + $0x148] sm:$0xff] %v4182
      %4231 = vst [vmem:[#allocation2 + $0x150] sm:$0xff] %v4183
      %4232 = vst [vmem:[#allocation2 + $0x158] sm:$0xff] %v4184
      %4233 = vst [vmem:[#allocation2 + $0x160] sm:$0xff] %v4185
      %4234 = vst [vmem:[#allocation2 + $0x168] sm:$0xff] %v4186
      %4235 = vst [vmem:[#allocation2 + $0x170] sm:$0xff] %v4187
      %4236 = vst [vmem:[#allocation2 + $0x178] sm:$0xff] %v4188
      %s4237 = scalar_lea.vmem %s1, 448
      %v4238 = vld [vmem:[%s4237] sm:$0xf]
      %v4239 = vld [vmem:[%s4237 + $0x4] sm:$0xf]
      %v4240 = vld [vmem:[%s4237 + $0x8] sm:$0xf]
      %v4241 = vld [vmem:[%s4237 + $0xc] sm:$0xf]
      %v4242 = vld [vmem:[%s4237 + $0x10] sm:$0xf]
      %v4243 = vld [vmem:[%s4237 + $0x14] sm:$0xf]
      %v4244 = vld [vmem:[%s4237 + $0x18] sm:$0xf]
      %v4245 = vld [vmem:[%s4237 + $0x1c] sm:$0xf]
      %v4246 = vld [vmem:[%s4237 + $0x20] sm:$0xf]
      %v4247 = vld [vmem:[%s4237 + $0x24] sm:$0xf]
      %v4248 = vld [vmem:[%s4237 + $0x28] sm:$0xf]
      %v4249 = vld [vmem:[%s4237 + $0x2c] sm:$0xf]
      %v4250 = vld [vmem:[%s4237 + $0x30] sm:$0xf]
      %v4251 = vld [vmem:[%s4237 + $0x34] sm:$0xf]
      %v4252 = vld [vmem:[%s4237 + $0x38] sm:$0xf]
      %v4253 = vld [vmem:[%s4237 + $0x3c] sm:$0xf]
      %v4270 = vunpack.c.l.b16 %v4238
      %v4271 = vunpack.c.l.b16 %v4239
      %v4272 = vunpack.c.l.b16 %v4240
      %v4273 = vunpack.c.l.b16 %v4241
      %v4274 = vunpack.c.l.b16 %v4242
      %v4275 = vunpack.c.l.b16 %v4243
      %v4276 = vunpack.c.l.b16 %v4244
      %v4277 = vunpack.c.l.b16 %v4245
      %v4278 = vunpack.c.l.b16 %v4246
      %v4279 = vunpack.c.l.b16 %v4247
      %v4280 = vunpack.c.l.b16 %v4248
      %v4281 = vunpack.c.l.b16 %v4249
      %v4282 = vunpack.c.l.b16 %v4250
      %v4283 = vunpack.c.l.b16 %v4251
      %v4284 = vunpack.c.l.b16 %v4252
      %v4285 = vunpack.c.l.b16 %v4253
      %v4286 = vpack.c.b16 %v4271, %v4270
      %v4287 = vpack.c.b16 %v4273, %v4272
      %v4288 = vpack.c.b16 %v4275, %v4274
      %v4289 = vpack.c.b16 %v4277, %v4276
      %v4290 = vpack.c.b16 %v4279, %v4278
      %v4291 = vpack.c.b16 %v4281, %v4280
      %v4292 = vpack.c.b16 %v4283, %v4282
      %v4293 = vpack.c.b16 %v4285, %v4284
      %4302 = vmatprep.subr.bf16.mxu0 0
      %4303 = vmatpush1.bf16.msra.mxu0 %v4286
      %4304 = vmatprep.subr.bf16.mxu0 0
      %4305 = vmatpush1.bf16.msra.mxu0 %v4287
      %4306 = vmatprep.subr.bf16.mxu0 0
      %4307 = vmatpush1.bf16.msra.mxu0 %v4288
      %4308 = vmatprep.subr.bf16.mxu0 0
      %4309 = vmatpush1.bf16.msra.mxu0 %v4289
      %4310 = vmatprep.subr.bf16.mxu0 0
      %4311 = vmatpush1.bf16.msra.mxu0 %v4290
      %4312 = vmatprep.subr.bf16.mxu0 0
      %4313 = vmatpush1.bf16.msra.mxu0 %v4291
      %4314 = vmatprep.subr.bf16.mxu0 0
      %4315 = vmatpush1.bf16.msra.mxu0 %v4292
      %4316 = vmatprep.subr.bf16.mxu0 0
      %4317 = vmatpush1.bf16.msra.mxu0 %v4293
      %4318 = vmatprep.subr.bf16.mxu0 0
      %4319 = vmatpush1.bf16.msra.mxu0 0
      %4320 = vmatprep.subr.bf16.mxu0 0
      %4321 = vmatpush1.bf16.msra.mxu0 0
      %4322 = vmatprep.subr.bf16.mxu0 0
      %4323 = vmatpush1.bf16.msra.mxu0 0
      %4324 = vmatprep.subr.bf16.mxu0 0
      %4325 = vmatpush1.bf16.msra.mxu0 0
      %4326 = vmatprep.subr.bf16.mxu0 0
      %4327 = vmatpush1.bf16.msra.mxu0 0
      %4328 = vmatprep.subr.bf16.mxu0 0
      %4329 = vmatpush1.bf16.msra.mxu0 0
      %4330 = vmatprep.subr.bf16.mxu0 0
      %4331 = vmatpush1.bf16.msra.mxu0 0
      %4332 = vmatprep.subr.bf16.mxu0 0
      %4333 = vmatpush1.bf16.msra.mxu0 0
      %4334 = vmatprep.mubr.bf16.mxu0 0
      %4335 = vmatmul.mubr.bf16.gmra.mrb[0].mxu0 %v3676
      %v4336 = vpop.f32.mrb[0].mxu0
      %v4337 = vadd.f32 0.0, %v4336
      %v4338 = vpop.f32.mrb[0].mxu0
      %v4339 = vpop.f32.mrb[0].mxu0
      %v4340 = vadd.f32 0.0, %v4339
      %v4341 = vpop.f32.mrb[0].mxu0
      %4342 = vmatprep.mubr.bf16.mxu0 0
      %4343 = vmatmul.mubr.bf16.gmra.mrb[0].mxu0 %v3677
      %v4344 = vpop.f32.mrb[0].mxu0
      %v4345 = vadd.f32 0.0, %v4344
      %v4346 = vpop.f32.mrb[0].mxu0
      %v4347 = vpop.f32.mrb[0].mxu0
      %v4348 = vadd.f32 0.0, %v4347
      %v4349 = vpop.f32.mrb[0].mxu0
      %4350 = vmatprep.mubr.bf16.mxu0 0
      %4351 = vmatmul.mubr.bf16.gmra.mrb[0].mxu0 %v3678
      %v4352 = vpop.f32.mrb[0].mxu0
      %v4353 = vadd.f32 0.0, %v4352
      %v4354 = vpop.f32.mrb[0].mxu0
      %v4355 = vpop.f32.mrb[0].mxu0
      %v4356 = vadd.f32 0.0, %v4355
      %v4357 = vpop.f32.mrb[0].mxu0
      %4358 = vmatprep.mubr.bf16.mxu0 0
      %4359 = vmatmul.mubr.bf16.gmra.mrb[0].mxu0 %v3679
      %v4360 = vpop.f32.mrb[0].mxu0
      %v4361 = vadd.f32 0.0, %v4360
      %v4362 = vpop.f32.mrb[0].mxu0
      %v4363 = vpop.f32.mrb[0].mxu0
      %v4364 = vadd.f32 0.0, %v4363
      %v4365 = vpop.f32.mrb[0].mxu0
      %4366 = vmatprep.mubr.bf16.mxu0 0
      %4367 = vmatmul.mubr.bf16.gmra.mrb[0].mxu0 %v3680
      %v4368 = vpop.f32.mrb[0].mxu0
      %v4369 = vadd.f32 0.0, %v4368
      %v4370 = vpop.f32.mrb[0].mxu0
      %v4371 = vpop.f32.mrb[0].mxu0
      %v4372 = vadd.f32 0.0, %v4371
      %v4373 = vpop.f32.mrb[0].mxu0
      %4374 = vmatprep.mubr.bf16.mxu0 0
      %4375 = vmatmul.mubr.bf16.gmra.mrb[0].mxu0 %v3681
      %v4376 = vpop.f32.mrb[0].mxu0
      %v4377 = vadd.f32 0.0, %v4376
      %v4378 = vpop.f32.mrb[0].mxu0
      %v4379 = vpop.f32.mrb[0].mxu0
      %v4380 = vadd.f32 0.0, %v4379
      %v4381 = vpop.f32.mrb[0].mxu0
      %4382 = vmatprep.mubr.bf16.mxu0 0
      %4383 = vmatmul.mubr.bf16.gmra.mrb[0].mxu0 %v3682
      %v4384 = vpop.f32.mrb[0].mxu0
      %v4385 = vadd.f32 0.0, %v4384
      %v4386 = vpop.f32.mrb[0].mxu0
      %v4387 = vpop.f32.mrb[0].mxu0
      %v4388 = vadd.f32 0.0, %v4387
      %v4389 = vpop.f32.mrb[0].mxu0
      %4390 = vmatprep.mubr.bf16.mxu0 0
      %4391 = vmatmul.mubr.bf16.gmra.mrb[0].mxu0 %v3683
      %v4392 = vpop.f32.mrb[0].mxu0
      %v4393 = vadd.f32 0.0, %v4392
      %v4394 = vpop.f32.mrb[0].mxu0
      %v4395 = vpop.f32.mrb[0].mxu0
      %v4396 = vadd.f32 0.0, %v4395
      %v4397 = vpop.f32.mrb[0].mxu0
      %4398 = vmatprep.mubr.bf16.mxu0 0
      %4399 = vmatmul.mubr.bf16.gmra.mrb[0].mxu0 %v3684
      %v4400 = vpop.f32.mrb[0].mxu0
      %v4401 = vadd.f32 0.0, %v4400
      %v4402 = vpop.f32.mrb[0].mxu0
      %v4403 = vpop.f32.mrb[0].mxu0
      %v4404 = vadd.f32 0.0, %v4403
      %v4405 = vpop.f32.mrb[0].mxu0
      %4406 = vmatprep.mubr.bf16.mxu0 0
      %4407 = vmatmul.mubr.bf16.gmra.mrb[0].mxu0 %v3685
      %v4408 = vpop.f32.mrb[0].mxu0
      %v4409 = vadd.f32 0.0, %v4408
      %v4410 = vpop.f32.mrb[0].mxu0
      %v4411 = vpop.f32.mrb[0].mxu0
      %v4412 = vadd.f32 0.0, %v4411
      %v4413 = vpop.f32.mrb[0].mxu0
      %4414 = vmatprep.mubr.bf16.mxu0 0
      %4415 = vmatmul.mubr.bf16.gmra.mrb[0].mxu0 %v3686
      %v4416 = vpop.f32.mrb[0].mxu0
      %v4417 = vadd.f32 0.0, %v4416
      %v4418 = vpop.f32.mrb[0].mxu0
      %v4419 = vpop.f32.mrb[0].mxu0
      %v4420 = vadd.f32 0.0, %v4419
      %v4421 = vpop.f32.mrb[0].mxu0
      %4422 = vmatprep.mubr.bf16.mxu0 0
      %4423 = vmatmul.mubr.bf16.gmra.mrb[0].mxu0 %v3687
      %v4424 = vpop.f32.mrb[0].mxu0
      %v4425 = vadd.f32 0.0, %v4424
      %v4426 = vpop.f32.mrb[0].mxu0
      %v4427 = vpop.f32.mrb[0].mxu0
      %v4428 = vadd.f32 0.0, %v4427
      %v4429 = vpop.f32.mrb[0].mxu0
      %4430 = vmatprep.mubr.bf16.mxu0 0
      %4431 = vmatmul.mubr.bf16.gmra.mrb[0].mxu0 %v3688
      %v4432 = vpop.f32.mrb[0].mxu0
      %v4433 = vadd.f32 0.0, %v4432
      %v4434 = vpop.f32.mrb[0].mxu0
      %v4435 = vpop.f32.mrb[0].mxu0
      %v4436 = vadd.f32 0.0, %v4435
      %v4437 = vpop.f32.mrb[0].mxu0
      %4438 = vmatprep.mubr.bf16.mxu0 0
      %4439 = vmatmul.mubr.bf16.gmra.mrb[0].mxu0 %v3689
      %v4440 = vpop.f32.mrb[0].mxu0
      %v4441 = vadd.f32 0.0, %v4440
      %v4442 = vpop.f32.mrb[0].mxu0
      %v4443 = vpop.f32.mrb[0].mxu0
      %v4444 = vadd.f32 0.0, %v4443
      %v4445 = vpop.f32.mrb[0].mxu0
      %4446 = vmatprep.mubr.bf16.mxu0 0
      %4447 = vmatmul.mubr.bf16.gmra.mrb[0].mxu0 %v3690
      %v4448 = vpop.f32.mrb[0].mxu0
      %v4449 = vadd.f32 0.0, %v4448
      %v4450 = vpop.f32.mrb[0].mxu0
      %v4451 = vpop.f32.mrb[0].mxu0
      %v4452 = vadd.f32 0.0, %v4451
      %v4453 = vpop.f32.mrb[0].mxu0
      %4454 = vmatprep.mubr.bf16.mxu0 0
      %4455 = vmatmul.mubr.bf16.gmra.mrb[0].mxu0 %v3691
      %v4456 = vpop.f32.mrb[0].mxu0
      %v4457 = vadd.f32 0.0, %v4456
      %v4458 = vpop.f32.mrb[0].mxu0
      %v4459 = vpop.f32.mrb[0].mxu0
      %v4460 = vadd.f32 0.0, %v4459
      %v4461 = vpop.f32.mrb[0].mxu0
      %4462 = vmatprep.mubr.bf16.mxu0 0
      %4463 = vmatmul.mubr.bf16.gmra.mrb[0].mxu0 %v3692
      %v4464 = vpop.f32.mrb[0].mxu0
      %v4465 = vadd.f32 0.0, %v4464
      %v4466 = vpop.f32.mrb[0].mxu0
      %v4467 = vpop.f32.mrb[0].mxu0
      %v4468 = vadd.f32 0.0, %v4467
      %v4469 = vpop.f32.mrb[0].mxu0
      %4470 = vmatprep.mubr.bf16.mxu0 0
      %4471 = vmatmul.mubr.bf16.gmra.mrb[0].mxu0 %v3693
      %v4472 = vpop.f32.mrb[0].mxu0
      %v4473 = vadd.f32 0.0, %v4472
      %v4474 = vpop.f32.mrb[0].mxu0
      %v4475 = vpop.f32.mrb[0].mxu0
      %v4476 = vadd.f32 0.0, %v4475
      %v4477 = vpop.f32.mrb[0].mxu0
      %4478 = vmatprep.mubr.bf16.mxu0 0
      %4479 = vmatmul.mubr.bf16.gmra.mrb[0].mxu0 %v3694
      %v4480 = vpop.f32.mrb[0].mxu0
      %v4481 = vadd.f32 0.0, %v4480
      %v4482 = vpop.f32.mrb[0].mxu0
      %v4483 = vpop.f32.mrb[0].mxu0
      %v4484 = vadd.f32 0.0, %v4483
      %v4485 = vpop.f32.mrb[0].mxu0
      %4486 = vmatprep.mubr.bf16.mxu0 0
      %4487 = vmatmul.mubr.bf16.gmra.mrb[0].mxu0 %v3695
      %v4488 = vpop.f32.mrb[0].mxu0
      %v4489 = vadd.f32 0.0, %v4488
      %v4490 = vpop.f32.mrb[0].mxu0
      %v4491 = vpop.f32.mrb[0].mxu0
      %v4492 = vadd.f32 0.0, %v4491
      %v4493 = vpop.f32.mrb[0].mxu0
      %4494 = vmatprep.mubr.bf16.mxu0 0
      %4495 = vmatmul.mubr.bf16.gmra.mrb[0].mxu0 %v3696
      %v4496 = vpop.f32.mrb[0].mxu0
      %v4497 = vadd.f32 0.0, %v4496
      %v4498 = vpop.f32.mrb[0].mxu0
      %v4499 = vpop.f32.mrb[0].mxu0
      %v4500 = vadd.f32 0.0, %v4499
      %v4501 = vpop.f32.mrb[0].mxu0
      %4502 = vmatprep.mubr.bf16.mxu0 0
      %4503 = vmatmul.mubr.bf16.gmra.mrb[0].mxu0 %v3697
      %v4504 = vpop.f32.mrb[0].mxu0
      %v4505 = vadd.f32 0.0, %v4504
      %v4506 = vpop.f32.mrb[0].mxu0
      %v4507 = vpop.f32.mrb[0].mxu0
      %v4508 = vadd.f32 0.0, %v4507
      %v4509 = vpop.f32.mrb[0].mxu0
      %4510 = vmatprep.mubr.bf16.mxu0 0
      %4511 = vmatmul.mubr.bf16.gmra.mrb[0].mxu0 %v3698
      %v4512 = vpop.f32.mrb[0].mxu0
      %v4513 = vadd.f32 0.0, %v4512
      %v4514 = vpop.f32.mrb[0].mxu0
      %v4515 = vpop.f32.mrb[0].mxu0
      %v4516 = vadd.f32 0.0, %v4515
      %v4517 = vpop.f32.mrb[0].mxu0
      %4518 = vmatprep.mubr.bf16.mxu0 0
      %4519 = vmatmul.mubr.bf16.gmra.mrb[0].mxu0 %v3699
      %v4520 = vpop.f32.mrb[0].mxu0
      %v4521 = vadd.f32 0.0, %v4520
      %v4522 = vpop.f32.mrb[0].mxu0
      %v4523 = vpop.f32.mrb[0].mxu0
      %v4524 = vadd.f32 0.0, %v4523
      %v4525 = vpop.f32.mrb[0].mxu0
      %4526 = vdwg.mxu0
      %v4527 = vld [vmem:[#allocation2] sm:$0xff]
      %v4528 = vld [vmem:[#allocation2 + $0x8] sm:$0xff]
      %v4529 = vld [vmem:[#allocation2 + $0x10] sm:$0xff]
      %v4530 = vld [vmem:[#allocation2 + $0x18] sm:$0xff]
      %v4531 = vld [vmem:[#allocation2 + $0x20] sm:$0xff]
      %v4532 = vld [vmem:[#allocation2 + $0x28] sm:$0xff]
      %v4533 = vld [vmem:[#allocation2 + $0x30] sm:$0xff]
      %v4534 = vld [vmem:[#allocation2 + $0x38] sm:$0xff]
      %v4535 = vld [vmem:[#allocation2 + $0x40] sm:$0xff]
      %v4536 = vld [vmem:[#allocation2 + $0x48] sm:$0xff]
      %v4537 = vld [vmem:[#allocation2 + $0x50] sm:$0xff]
      %v4538 = vld [vmem:[#allocation2 + $0x58] sm:$0xff]
      %v4539 = vld [vmem:[#allocation2 + $0x60] sm:$0xff]
      %v4540 = vld [vmem:[#allocation2 + $0x68] sm:$0xff]
      %v4541 = vld [vmem:[#allocation2 + $0x70] sm:$0xff]
      %v4542 = vld [vmem:[#allocation2 + $0x78] sm:$0xff]
      %v4543 = vld [vmem:[#allocation2 + $0x80] sm:$0xff]
      %v4544 = vld [vmem:[#allocation2 + $0x88] sm:$0xff]
      %v4545 = vld [vmem:[#allocation2 + $0x90] sm:$0xff]
      %v4546 = vld [vmem:[#allocation2 + $0x98] sm:$0xff]
      %v4547 = vld [vmem:[#allocation2 + $0xa0] sm:$0xff]
      %v4548 = vld [vmem:[#allocation2 + $0xa8] sm:$0xff]
      %v4549 = vld [vmem:[#allocation2 + $0xb0] sm:$0xff]
      %v4550 = vld [vmem:[#allocation2 + $0xb8] sm:$0xff]
      %v4551 = vld [vmem:[#allocation2 + $0xc0] sm:$0xff]
      %v4552 = vld [vmem:[#allocation2 + $0xc8] sm:$0xff]
      %v4553 = vld [vmem:[#allocation2 + $0xd0] sm:$0xff]
      %v4554 = vld [vmem:[#allocation2 + $0xd8] sm:$0xff]
      %v4555 = vld [vmem:[#allocation2 + $0xe0] sm:$0xff]
      %v4556 = vld [vmem:[#allocation2 + $0xe8] sm:$0xff]
      %v4557 = vld [vmem:[#allocation2 + $0xf0] sm:$0xff]
      %v4558 = vld [vmem:[#allocation2 + $0xf8] sm:$0xff]
      %v4559 = vld [vmem:[#allocation2 + $0x100] sm:$0xff]
      %v4560 = vld [vmem:[#allocation2 + $0x108] sm:$0xff]
      %v4561 = vld [vmem:[#allocation2 + $0x110] sm:$0xff]
      %v4562 = vld [vmem:[#allocation2 + $0x118] sm:$0xff]
      %v4563 = vld [vmem:[#allocation2 + $0x120] sm:$0xff]
      %v4564 = vld [vmem:[#allocation2 + $0x128] sm:$0xff]
      %v4565 = vld [vmem:[#allocation2 + $0x130] sm:$0xff]
      %v4566 = vld [vmem:[#allocation2 + $0x138] sm:$0xff]
      %v4567 = vld [vmem:[#allocation2 + $0x140] sm:$0xff]
      %v4568 = vld [vmem:[#allocation2 + $0x148] sm:$0xff]
      %v4569 = vld [vmem:[#allocation2 + $0x150] sm:$0xff]
      %v4570 = vld [vmem:[#allocation2 + $0x158] sm:$0xff]
      %v4571 = vld [vmem:[#allocation2 + $0x160] sm:$0xff]
      %v4572 = vld [vmem:[#allocation2 + $0x168] sm:$0xff]
      %v4573 = vld [vmem:[#allocation2 + $0x170] sm:$0xff]
      %v4574 = vld [vmem:[#allocation2 + $0x178] sm:$0xff]
      %v4575 = vadd.f32 %v4527, %v4337
      %v4576 = vadd.f32 %v4528, %v4340
      %v4577 = vadd.f32 %v4529, %v4345
      %v4578 = vadd.f32 %v4530, %v4348
      %v4579 = vadd.f32 %v4531, %v4353
      %v4580 = vadd.f32 %v4532, %v4356
      %v4581 = vadd.f32 %v4533, %v4361
      %v4582 = vadd.f32 %v4534, %v4364
      %v4583 = vadd.f32 %v4535, %v4369
      %v4584 = vadd.f32 %v4536, %v4372
      %v4585 = vadd.f32 %v4537, %v4377
      %v4586 = vadd.f32 %v4538, %v4380
      %v4587 = vadd.f32 %v4539, %v4385
      %v4588 = vadd.f32 %v4540, %v4388
      %v4589 = vadd.f32 %v4541, %v4393
      %v4590 = vadd.f32 %v4542, %v4396
      %v4591 = vadd.f32 %v4543, %v4401
      %v4592 = vadd.f32 %v4544, %v4404
      %v4593 = vadd.f32 %v4545, %v4409
      %v4594 = vadd.f32 %v4546, %v4412
      %v4595 = vadd.f32 %v4547, %v4417
      %v4596 = vadd.f32 %v4548, %v4420
      %v4597 = vadd.f32 %v4549, %v4425
      %v4598 = vadd.f32 %v4550, %v4428
      %v4599 = vadd.f32 %v4551, %v4433
      %v4600 = vadd.f32 %v4552, %v4436
      %v4601 = vadd.f32 %v4553, %v4441
      %v4602 = vadd.f32 %v4554, %v4444
      %v4603 = vadd.f32 %v4555, %v4449
      %v4604 = vadd.f32 %v4556, %v4452
      %v4605 = vadd.f32 %v4557, %v4457
      %v4606 = vadd.f32 %v4558, %v4460
      %v4607 = vadd.f32 %v4559, %v4465
      %v4608 = vadd.f32 %v4560, %v4468
      %v4609 = vadd.f32 %v4561, %v4473
      %v4610 = vadd.f32 %v4562, %v4476
      %v4611 = vadd.f32 %v4563, %v4481
      %v4612 = vadd.f32 %v4564, %v4484
      %v4613 = vadd.f32 %v4565, %v4489
      %v4614 = vadd.f32 %v4566, %v4492
      %v4615 = vadd.f32 %v4567, %v4497
      %v4616 = vadd.f32 %v4568, %v4500
      %v4617 = vadd.f32 %v4569, %v4505
      %v4618 = vadd.f32 %v4570, %v4508
      %v4619 = vadd.f32 %v4571, %v4513
      %v4620 = vadd.f32 %v4572, %v4516
      %v4621 = vadd.f32 %v4573, %v4521
      %v4622 = vadd.f32 %v4574, %v4524
      %4623 = vst [vmem:[#allocation2] sm:$0xff] %v4575
      %4624 = vst [vmem:[#allocation2 + $0x8] sm:$0xff] %v4576
      %4625 = vst [vmem:[#allocation2 + $0x10] sm:$0xff] %v4577
      %4626 = vst [vmem:[#allocation2 + $0x18] sm:$0xff] %v4578
      %4627 = vst [vmem:[#allocation2 + $0x20] sm:$0xff] %v4579
      %4628 = vst [vmem:[#allocation2 + $0x28] sm:$0xff] %v4580
      %4629 = vst [vmem:[#allocation2 + $0x30] sm:$0xff] %v4581
      %4630 = vst [vmem:[#allocation2 + $0x38] sm:$0xff] %v4582
      %4631 = vst [vmem:[#allocation2 + $0x40] sm:$0xff] %v4583
      %4632 = vst [vmem:[#allocation2 + $0x48] sm:$0xff] %v4584
      %4633 = vst [vmem:[#allocation2 + $0x50] sm:$0xff] %v4585
      %4634 = vst [vmem:[#allocation2 + $0x58] sm:$0xff] %v4586
      %4635 = vst [vmem:[#allocation2 + $0x60] sm:$0xff] %v4587
      %4636 = vst [vmem:[#allocation2 + $0x68] sm:$0xff] %v4588
      %4637 = vst [vmem:[#allocation2 + $0x70] sm:$0xff] %v4589
      %4638 = vst [vmem:[#allocation2 + $0x78] sm:$0xff] %v4590
      %4639 = vst [vmem:[#allocation2 + $0x80] sm:$0xff] %v4591
      %4640 = vst [vmem:[#allocation2 + $0x88] sm:$0xff] %v4592
      %4641 = vst [vmem:[#allocation2 + $0x90] sm:$0xff] %v4593
      %4642 = vst [vmem:[#allocation2 + $0x98] sm:$0xff] %v4594
      %4643 = vst [vmem:[#allocation2 + $0xa0] sm:$0xff] %v4595
      %4644 = vst [vmem:[#allocation2 + $0xa8] sm:$0xff] %v4596
      %4645 = vst [vmem:[#allocation2 + $0xb0] sm:$0xff] %v4597
      %4646 = vst [vmem:[#allocation2 + $0xb8] sm:$0xff] %v4598
      %4647 = vst [vmem:[#allocation2 + $0xc0] sm:$0xff] %v4599
      %4648 = vst [vmem:[#allocation2 + $0xc8] sm:$0xff] %v4600
      %4649 = vst [vmem:[#allocation2 + $0xd0] sm:$0xff] %v4601
      %4650 = vst [vmem:[#allocation2 + $0xd8] sm:$0xff] %v4602
      %4651 = vst [vmem:[#allocation2 + $0xe0] sm:$0xff] %v4603
      %4652 = vst [vmem:[#allocation2 + $0xe8] sm:$0xff] %v4604
      %4653 = vst [vmem:[#allocation2 + $0xf0] sm:$0xff] %v4605
      %4654 = vst [vmem:[#allocation2 + $0xf8] sm:$0xff] %v4606
      %4655 = vst [vmem:[#allocation2 + $0x100] sm:$0xff] %v4607
      %4656 = vst [vmem:[#allocation2 + $0x108] sm:$0xff] %v4608
      %4657 = vst [vmem:[#allocation2 + $0x110] sm:$0xff] %v4609
      %4658 = vst [vmem:[#allocation2 + $0x118] sm:$0xff] %v4610
      %4659 = vst [vmem:[#allocation2 + $0x120] sm:$0xff] %v4611
      %4660 = vst [vmem:[#allocation2 + $0x128] sm:$0xff] %v4612
      %4661 = vst [vmem:[#allocation2 + $0x130] sm:$0xff] %v4613
      %4662 = vst [vmem:[#allocation2 + $0x138] sm:$0xff] %v4614
      %4663 = vst [vmem:[#allocation2 + $0x140] sm:$0xff] %v4615
      %4664 = vst [vmem:[#allocation2 + $0x148] sm:$0xff] %v4616
      %4665 = vst [vmem:[#allocation2 + $0x150] sm:$0xff] %v4617
      %4666 = vst [vmem:[#allocation2 + $0x158] sm:$0xff] %v4618
      %4667 = vst [vmem:[#allocation2 + $0x160] sm:$0xff] %v4619
      %4668 = vst [vmem:[#allocation2 + $0x168] sm:$0xff] %v4620
      %4669 = vst [vmem:[#allocation2 + $0x170] sm:$0xff] %v4621
      %4670 = vst [vmem:[#allocation2 + $0x178] sm:$0xff] %v4622
      %s4671 = scalar_lea.vmem %s1, 512
      %v4672 = vld [vmem:[%s4671] sm:$0xf]
      %v4673 = vld [vmem:[%s4671 + $0x4] sm:$0xf]
      %v4674 = vld [vmem:[%s4671 + $0x8] sm:$0xf]
      %v4675 = vld [vmem:[%s4671 + $0xc] sm:$0xf]
      %v4676 = vld [vmem:[%s4671 + $0x10] sm:$0xf]
      %v4677 = vld [vmem:[%s4671 + $0x14] sm:$0xf]
      %v4678 = vld [vmem:[%s4671 + $0x18] sm:$0xf]
      %v4679 = vld [vmem:[%s4671 + $0x1c] sm:$0xf]
      %v4680 = vld [vmem:[%s4671 + $0x20] sm:$0xf]
      %v4681 = vld [vmem:[%s4671 + $0x24] sm:$0xf]
      %v4682 = vld [vmem:[%s4671 + $0x28] sm:$0xf]
      %v4683 = vld [vmem:[%s4671 + $0x2c] sm:$0xf]
      %v4684 = vld [vmem:[%s4671 + $0x30] sm:$0xf]
      %v4685 = vld [vmem:[%s4671 + $0x34] sm:$0xf]
      %v4686 = vld [vmem:[%s4671 + $0x38] sm:$0xf]
      %v4687 = vld [vmem:[%s4671 + $0x3c] sm:$0xf]
      %v4704 = vunpack.c.l.b16 %v4672
      %v4705 = vunpack.c.l.b16 %v4673
      %v4706 = vunpack.c.l.b16 %v4674
      %v4707 = vunpack.c.l.b16 %v4675
      %v4708 = vunpack.c.l.b16 %v4676
      %v4709 = vunpack.c.l.b16 %v4677
      %v4710 = vunpack.c.l.b16 %v4678
      %v4711 = vunpack.c.l.b16 %v4679
      %v4712 = vunpack.c.l.b16 %v4680
      %v4713 = vunpack.c.l.b16 %v4681
      %v4714 = vunpack.c.l.b16 %v4682
      %v4715 = vunpack.c.l.b16 %v4683
      %v4716 = vunpack.c.l.b16 %v4684
      %v4717 = vunpack.c.l.b16 %v4685
      %v4718 = vunpack.c.l.b16 %v4686
      %v4719 = vunpack.c.l.b16 %v4687
      %v4720 = vpack.c.b16 %v4705, %v4704
      %v4721 = vpack.c.b16 %v4707, %v4706
      %v4722 = vpack.c.b16 %v4709, %v4708
      %v4723 = vpack.c.b16 %v4711, %v4710
      %v4724 = vpack.c.b16 %v4713, %v4712
      %v4725 = vpack.c.b16 %v4715, %v4714
      %v4726 = vpack.c.b16 %v4717, %v4716
      %v4727 = vpack.c.b16 %v4719, %v4718
      %4736 = vmatprep.subr.bf16.mxu0 0
      %4737 = vmatpush1.bf16.msra.mxu0 %v4720
      %4738 = vmatprep.subr.bf16.mxu0 0
      %4739 = vmatpush1.bf16.msra.mxu0 %v4721
      %4740 = vmatprep.subr.bf16.mxu0 0
      %4741 = vmatpush1.bf16.msra.mxu0 %v4722
      %4742 = vmatprep.subr.bf16.mxu0 0
      %4743 = vmatpush1.bf16.msra.mxu0 %v4723
      %4744 = vmatprep.subr.bf16.mxu0 0
      %4745 = vmatpush1.bf16.msra.mxu0 %v4724
      %4746 = vmatprep.subr.bf16.mxu0 0
      %4747 = vmatpush1.bf16.msra.mxu0 %v4725
      %4748 = vmatprep.subr.bf16.mxu0 0
      %4749 = vmatpush1.bf16.msra.mxu0 %v4726
      %4750 = vmatprep.subr.bf16.mxu0 0
      %4751 = vmatpush1.bf16.msra.mxu0 %v4727
      %4752 = vmatprep.subr.bf16.mxu0 0
      %4753 = vmatpush1.bf16.msra.mxu0 0
      %4754 = vmatprep.subr.bf16.mxu0 0
      %4755 = vmatpush1.bf16.msra.mxu0 0
      %4756 = vmatprep.subr.bf16.mxu0 0
      %4757 = vmatpush1.bf16.msra.mxu0 0
      %4758 = vmatprep.subr.bf16.mxu0 0
      %4759 = vmatpush1.bf16.msra.mxu0 0
      %4760 = vmatprep.subr.bf16.mxu0 0
      %4761 = vmatpush1.bf16.msra.mxu0 0
      %4762 = vmatprep.subr.bf16.mxu0 0
      %4763 = vmatpush1.bf16.msra.mxu0 0
      %4764 = vmatprep.subr.bf16.mxu0 0
      %4765 = vmatpush1.bf16.msra.mxu0 0
      %4766 = vmatprep.subr.bf16.mxu0 0
      %4767 = vmatpush1.bf16.msra.mxu0 0
      %4768 = vmatprep.mubr.bf16.mxu0 0
      %4769 = vmatmul.mubr.bf16.gmra.mrb[0].mxu0 %v3676
      %v4770 = vpop.f32.mrb[0].mxu0
      %v4771 = vadd.f32 0.0, %v4770
      %v4772 = vpop.f32.mrb[0].mxu0
      %v4773 = vpop.f32.mrb[0].mxu0
      %v4774 = vadd.f32 0.0, %v4773
      %v4775 = vpop.f32.mrb[0].mxu0
      %4776 = vmatprep.mubr.bf16.mxu0 0
      %4777 = vmatmul.mubr.bf16.gmra.mrb[0].mxu0 %v3677
      %v4778 = vpop.f32.mrb[0].mxu0
      %v4779 = vadd.f32 0.0, %v4778
      %v4780 = vpop.f32.mrb[0].mxu0
      %v4781 = vpop.f32.mrb[0].mxu0
      %v4782 = vadd.f32 0.0, %v4781
      %v4783 = vpop.f32.mrb[0].mxu0
      %4784 = vmatprep.mubr.bf16.mxu0 0
      %4785 = vmatmul.mubr.bf16.gmra.mrb[0].mxu0 %v3678
      %v4786 = vpop.f32.mrb[0].mxu0
      %v4787 = vadd.f32 0.0, %v4786
      %v4788 = vpop.f32.mrb[0].mxu0
      %v4789 = vpop.f32.mrb[0].mxu0
      %v4790 = vadd.f32 0.0, %v4789
      %v4791 = vpop.f32.mrb[0].mxu0
      %4792 = vmatprep.mubr.bf16.mxu0 0
      %4793 = vmatmul.mubr.bf16.gmra.mrb[0].mxu0 %v3679
      %v4794 = vpop.f32.mrb[0].mxu0
      %v4795 = vadd.f32 0.0, %v4794
      %v4796 = vpop.f32.mrb[0].mxu0
      %v4797 = vpop.f32.mrb[0].mxu0
      %v4798 = vadd.f32 0.0, %v4797
      %v4799 = vpop.f32.mrb[0].mxu0
      %4800 = vmatprep.mubr.bf16.mxu0 0
      %4801 = vmatmul.mubr.bf16.gmra.mrb[0].mxu0 %v3680
      %v4802 = vpop.f32.mrb[0].mxu0
      %v4803 = vadd.f32 0.0, %v4802
      %v4804 = vpop.f32.mrb[0].mxu0
      %v4805 = vpop.f32.mrb[0].mxu0
      %v4806 = vadd.f32 0.0, %v4805
      %v4807 = vpop.f32.mrb[0].mxu0
      %4808 = vmatprep.mubr.bf16.mxu0 0
      %4809 = vmatmul.mubr.bf16.gmra.mrb[0].mxu0 %v3681
      %v4810 = vpop.f32.mrb[0].mxu0
      %v4811 = vadd.f32 0.0, %v4810
      %v4812 = vpop.f32.mrb[0].mxu0
      %v4813 = vpop.f32.mrb[0].mxu0
      %v4814 = vadd.f32 0.0, %v4813
      %v4815 = vpop.f32.mrb[0].mxu0
      %4816 = vmatprep.mubr.bf16.mxu0 0
      %4817 = vmatmul.mubr.bf16.gmra.mrb[0].mxu0 %v3682
      %v4818 = vpop.f32.mrb[0].mxu0
      %v4819 = vadd.f32 0.0, %v4818
      %v4820 = vpop.f32.mrb[0].mxu0
      %v4821 = vpop.f32.mrb[0].mxu0
      %v4822 = vadd.f32 0.0, %v4821
      %v4823 = vpop.f32.mrb[0].mxu0
      %4824 = vmatprep.mubr.bf16.mxu0 0
      %4825 = vmatmul.mubr.bf16.gmra.mrb[0].mxu0 %v3683
      %v4826 = vpop.f32.mrb[0].mxu0
      %v4827 = vadd.f32 0.0, %v4826
      %v4828 = vpop.f32.mrb[0].mxu0
      %v4829 = vpop.f32.mrb[0].mxu0
      %v4830 = vadd.f32 0.0, %v4829
      %v4831 = vpop.f32.mrb[0].mxu0
      %4832 = vmatprep.mubr.bf16.mxu0 0
      %4833 = vmatmul.mubr.bf16.gmra.mrb[0].mxu0 %v3684
      %v4834 = vpop.f32.mrb[0].mxu0
      %v4835 = vadd.f32 0.0, %v4834
      %v4836 = vpop.f32.mrb[0].mxu0
      %v4837 = vpop.f32.mrb[0].mxu0
      %v4838 = vadd.f32 0.0, %v4837
      %v4839 = vpop.f32.mrb[0].mxu0
      %4840 = vmatprep.mubr.bf16.mxu0 0
      %4841 = vmatmul.mubr.bf16.gmra.mrb[0].mxu0 %v3685
      %v4842 = vpop.f32.mrb[0].mxu0
      %v4843 = vadd.f32 0.0, %v4842
      %v4844 = vpop.f32.mrb[0].mxu0
      %v4845 = vpop.f32.mrb[0].mxu0
      %v4846 = vadd.f32 0.0, %v4845
      %v4847 = vpop.f32.mrb[0].mxu0
      %4848 = vmatprep.mubr.bf16.mxu0 0
      %4849 = vmatmul.mubr.bf16.gmra.mrb[0].mxu0 %v3686
      %v4850 = vpop.f32.mrb[0].mxu0
      %v4851 = vadd.f32 0.0, %v4850
      %v4852 = vpop.f32.mrb[0].mxu0
      %v4853 = vpop.f32.mrb[0].mxu0
      %v4854 = vadd.f32 0.0, %v4853
      %v4855 = vpop.f32.mrb[0].mxu0
      %4856 = vmatprep.mubr.bf16.mxu0 0
      %4857 = vmatmul.mubr.bf16.gmra.mrb[0].mxu0 %v3687
      %v4858 = vpop.f32.mrb[0].mxu0
      %v4859 = vadd.f32 0.0, %v4858
      %v4860 = vpop.f32.mrb[0].mxu0
      %v4861 = vpop.f32.mrb[0].mxu0
      %v4862 = vadd.f32 0.0, %v4861
      %v4863 = vpop.f32.mrb[0].mxu0
      %4864 = vmatprep.mubr.bf16.mxu0 0
      %4865 = vmatmul.mubr.bf16.gmra.mrb[0].mxu0 %v3688
      %v4866 = vpop.f32.mrb[0].mxu0
      %v4867 = vadd.f32 0.0, %v4866
      %v4868 = vpop.f32.mrb[0].mxu0
      %v4869 = vpop.f32.mrb[0].mxu0
      %v4870 = vadd.f32 0.0, %v4869
      %v4871 = vpop.f32.mrb[0].mxu0
      %4872 = vmatprep.mubr.bf16.mxu0 0
      %4873 = vmatmul.mubr.bf16.gmra.mrb[0].mxu0 %v3689
      %v4874 = vpop.f32.mrb[0].mxu0
      %v4875 = vadd.f32 0.0, %v4874
      %v4876 = vpop.f32.mrb[0].mxu0
      %v4877 = vpop.f32.mrb[0].mxu0
      %v4878 = vadd.f32 0.0, %v4877
      %v4879 = vpop.f32.mrb[0].mxu0
      %4880 = vmatprep.mubr.bf16.mxu0 0
      %4881 = vmatmul.mubr.bf16.gmra.mrb[0].mxu0 %v3690
      %v4882 = vpop.f32.mrb[0].mxu0
      %v4883 = vadd.f32 0.0, %v4882
      %v4884 = vpop.f32.mrb[0].mxu0
      %v4885 = vpop.f32.mrb[0].mxu0
      %v4886 = vadd.f32 0.0, %v4885
      %v4887 = vpop.f32.mrb[0].mxu0
      %4888 = vmatprep.mubr.bf16.mxu0 0
      %4889 = vmatmul.mubr.bf16.gmra.mrb[0].mxu0 %v3691
      %v4890 = vpop.f32.mrb[0].mxu0
      %v4891 = vadd.f32 0.0, %v4890
      %v4892 = vpop.f32.mrb[0].mxu0
      %v4893 = vpop.f32.mrb[0].mxu0
      %v4894 = vadd.f32 0.0, %v4893
      %v4895 = vpop.f32.mrb[0].mxu0
      %4896 = vmatprep.mubr.bf16.mxu0 0
      %4897 = vmatmul.mubr.bf16.gmra.mrb[0].mxu0 %v3692
      %v4898 = vpop.f32.mrb[0].mxu0
      %v4899 = vadd.f32 0.0, %v4898
      %v4900 = vpop.f32.mrb[0].mxu0
      %v4901 = vpop.f32.mrb[0].mxu0
      %v4902 = vadd.f32 0.0, %v4901
      %v4903 = vpop.f32.mrb[0].mxu0
      %4904 = vmatprep.mubr.bf16.mxu0 0
      %4905 = vmatmul.mubr.bf16.gmra.mrb[0].mxu0 %v3693
      %v4906 = vpop.f32.mrb[0].mxu0
      %v4907 = vadd.f32 0.0, %v4906
      %v4908 = vpop.f32.mrb[0].mxu0
      %v4909 = vpop.f32.mrb[0].mxu0
      %v4910 = vadd.f32 0.0, %v4909
      %v4911 = vpop.f32.mrb[0].mxu0
      %4912 = vmatprep.mubr.bf16.mxu0 0
      %4913 = vmatmul.mubr.bf16.gmra.mrb[0].mxu0 %v3694
      %v4914 = vpop.f32.mrb[0].mxu0
      %v4915 = vadd.f32 0.0, %v4914
      %v4916 = vpop.f32.mrb[0].mxu0
      %v4917 = vpop.f32.mrb[0].mxu0
      %v4918 = vadd.f32 0.0, %v4917
      %v4919 = vpop.f32.mrb[0].mxu0
      %4920 = vmatprep.mubr.bf16.mxu0 0
      %4921 = vmatmul.mubr.bf16.gmra.mrb[0].mxu0 %v3695
      %v4922 = vpop.f32.mrb[0].mxu0
      %v4923 = vadd.f32 0.0, %v4922
      %v4924 = vpop.f32.mrb[0].mxu0
      %v4925 = vpop.f32.mrb[0].mxu0
      %v4926 = vadd.f32 0.0, %v4925
      %v4927 = vpop.f32.mrb[0].mxu0
      %4928 = vmatprep.mubr.bf16.mxu0 0
      %4929 = vmatmul.mubr.bf16.gmra.mrb[0].mxu0 %v3696
      %v4930 = vpop.f32.mrb[0].mxu0
      %v4931 = vadd.f32 0.0, %v4930
      %v4932 = vpop.f32.mrb[0].mxu0
      %v4933 = vpop.f32.mrb[0].mxu0
      %v4934 = vadd.f32 0.0, %v4933
      %v4935 = vpop.f32.mrb[0].mxu0
      %4936 = vmatprep.mubr.bf16.mxu0 0
      %4937 = vmatmul.mubr.bf16.gmra.mrb[0].mxu0 %v3697
      %v4938 = vpop.f32.mrb[0].mxu0
      %v4939 = vadd.f32 0.0, %v4938
      %v4940 = vpop.f32.mrb[0].mxu0
      %v4941 = vpop.f32.mrb[0].mxu0
      %v4942 = vadd.f32 0.0, %v4941
      %v4943 = vpop.f32.mrb[0].mxu0
      %4944 = vmatprep.mubr.bf16.mxu0 0
      %4945 = vmatmul.mubr.bf16.gmra.mrb[0].mxu0 %v3698
      %v4946 = vpop.f32.mrb[0].mxu0
      %v4947 = vadd.f32 0.0, %v4946
      %v4948 = vpop.f32.mrb[0].mxu0
      %v4949 = vpop.f32.mrb[0].mxu0
      %v4950 = vadd.f32 0.0, %v4949
      %v4951 = vpop.f32.mrb[0].mxu0
      %4952 = vmatprep.mubr.bf16.mxu0 0
      %4953 = vmatmul.mubr.bf16.gmra.mrb[0].mxu0 %v3699
      %v4954 = vpop.f32.mrb[0].mxu0
      %v4955 = vadd.f32 0.0, %v4954
      %v4956 = vpop.f32.mrb[0].mxu0
      %v4957 = vpop.f32.mrb[0].mxu0
      %v4958 = vadd.f32 0.0, %v4957
      %v4959 = vpop.f32.mrb[0].mxu0
      %4960 = vdwg.mxu0
      %v4961 = vrot.slane %v4771, 1
      %v4962 = vrot.slane %v4774, 1
      %v4963 = vrot.slane %v4779, 1
      %v4964 = vrot.slane %v4782, 1
      %v4965 = vrot.slane %v4787, 1
      %v4966 = vrot.slane %v4790, 1
      %v4967 = vrot.slane %v4795, 1
      %v4968 = vrot.slane %v4798, 1
      %v4969 = vrot.slane %v4803, 1
      %v4970 = vrot.slane %v4806, 1
      %v4971 = vrot.slane %v4811, 1
      %v4972 = vrot.slane %v4814, 1
      %v4973 = vrot.slane %v4819, 1
      %v4974 = vrot.slane %v4822, 1
      %v4975 = vrot.slane %v4827, 1
      %v4976 = vrot.slane %v4830, 1
      %v4977 = vrot.slane %v4835, 1
      %v4978 = vrot.slane %v4838, 1
      %v4979 = vrot.slane %v4843, 1
      %v4980 = vrot.slane %v4846, 1
      %v4981 = vrot.slane %v4851, 1
      %v4982 = vrot.slane %v4854, 1
      %v4983 = vrot.slane %v4859, 1
      %v4984 = vrot.slane %v4862, 1
      %v4985 = vrot.slane %v4867, 1
      %v4986 = vrot.slane %v4870, 1
      %v4987 = vrot.slane %v4875, 1
      %v4988 = vrot.slane %v4878, 1
      %v4989 = vrot.slane %v4883, 1
      %v4990 = vrot.slane %v4886, 1
      %v4991 = vrot.slane %v4891, 1
      %v4992 = vrot.slane %v4894, 1
      %v4993 = vrot.slane %v4899, 1
      %v4994 = vrot.slane %v4902, 1
      %v4995 = vrot.slane %v4907, 1
      %v4996 = vrot.slane %v4910, 1
      %v4997 = vrot.slane %v4915, 1
      %v4998 = vrot.slane %v4918, 1
      %v4999 = vrot.slane %v4923, 1
      %v5000 = vrot.slane %v4926, 1
      %v5001 = vrot.slane %v4931, 1
      %v5002 = vrot.slane %v4934, 1
      %v5003 = vrot.slane %v4939, 1
      %v5004 = vrot.slane %v4942, 1
      %v5005 = vrot.slane %v4947, 1
      %v5006 = vrot.slane %v4950, 1
      %v5007 = vrot.slane %v4955, 1
      %v5008 = vrot.slane %v4958, 1
      %v5009 = vsel %vm1634, %v5007, %v5008
      %v5010 = vsel %vm1634, %v5006, %v5007
      %v5011 = vsel %vm1634, %v5005, %v5006
      %v5012 = vsel %vm1634, %v5004, %v5005
      %v5013 = vsel %vm1634, %v5003, %v5004
      %v5014 = vsel %vm1634, %v5002, %v5003
      %v5015 = vsel %vm1634, %v5001, %v5002
      %v5016 = vsel %vm1634, %v5000, %v5001
      %v5017 = vsel %vm1634, %v4999, %v5000
      %v5018 = vsel %vm1634, %v4998, %v4999
      %v5019 = vsel %vm1634, %v4997, %v4998
      %v5020 = vsel %vm1634, %v4996, %v4997
      %v5021 = vsel %vm1634, %v4995, %v4996
      %v5022 = vsel %vm1634, %v4994, %v4995
      %v5023 = vsel %vm1634, %v4993, %v4994
      %v5024 = vsel %vm1634, %v4992, %v4993
      %v5025 = vsel %vm1634, %v4991, %v4992
      %v5026 = vsel %vm1634, %v4990, %v4991
      %v5027 = vsel %vm1634, %v4989, %v4990
      %v5028 = vsel %vm1634, %v4988, %v4989
      %v5029 = vsel %vm1634, %v4987, %v4988
      %v5030 = vsel %vm1634, %v4986, %v4987
      %v5031 = vsel %vm1634, %v4985, %v4986
      %v5032 = vsel %vm1634, %v4984, %v4985
      %v5033 = vsel %vm1634, %v4983, %v4984
      %v5034 = vsel %vm1634, %v4982, %v4983
      %v5035 = vsel %vm1634, %v4981, %v4982
      %v5036 = vsel %vm1634, %v4980, %v4981
      %v5037 = vsel %vm1634, %v4979, %v4980
      %v5038 = vsel %vm1634, %v4978, %v4979
      %v5039 = vsel %vm1634, %v4977, %v4978
      %v5040 = vsel %vm1634, %v4976, %v4977
      %v5041 = vsel %vm1634, %v4975, %v4976
      %v5042 = vsel %vm1634, %v4974, %v4975
      %v5043 = vsel %vm1634, %v4973, %v4974
      %v5044 = vsel %vm1634, %v4972, %v4973
      %v5045 = vsel %vm1634, %v4971, %v4972
      %v5046 = vsel %vm1634, %v4970, %v4971
      %v5047 = vsel %vm1634, %v4969, %v4970
      %v5048 = vsel %vm1634, %v4968, %v4969
      %v5049 = vsel %vm1634, %v4967, %v4968
      %v5050 = vsel %vm1634, %v4966, %v4967
      %v5051 = vsel %vm1634, %v4965, %v4966
      %v5052 = vsel %vm1634, %v4964, %v4965
      %v5053 = vsel %vm1634, %v4963, %v4964
      %v5054 = vsel %vm1634, %v4962, %v4963
      %v5055 = vsel %vm1634, %v4961, %v4962
      %v5056 = vsel %vm1634, %v5008, %v4961
      %v5057 = vld [vmem:[#allocation2] sm:$0xff]
      %v5058 = vld [vmem:[#allocation2 + $0x8] sm:$0xff]
      %v5059 = vld [vmem:[#allocation2 + $0x10] sm:$0xff]
      %v5060 = vld [vmem:[#allocation2 + $0x18] sm:$0xff]
      %v5061 = vld [vmem:[#allocation2 + $0x20] sm:$0xff]
      %v5062 = vld [vmem:[#allocation2 + $0x28] sm:$0xff]
      %v5063 = vld [vmem:[#allocation2 + $0x30] sm:$0xff]
      %v5064 = vld [vmem:[#allocation2 + $0x38] sm:$0xff]
      %v5065 = vld [vmem:[#allocation2 + $0x40] sm:$0xff]
      %v5066 = vld [vmem:[#allocation2 + $0x48] sm:$0xff]
      %v5067 = vld [vmem:[#allocation2 + $0x50] sm:$0xff]
      %v5068 = vld [vmem:[#allocation2 + $0x58] sm:$0xff]
      %v5069 = vld [vmem:[#allocation2 + $0x60] sm:$0xff]
      %v5070 = vld [vmem:[#allocation2 + $0x68] sm:$0xff]
      %v5071 = vld [vmem:[#allocation2 + $0x70] sm:$0xff]
      %v5072 = vld [vmem:[#allocation2 + $0x78] sm:$0xff]
      %v5073 = vld [vmem:[#allocation2 + $0x80] sm:$0xff]
      %v5074 = vld [vmem:[#allocation2 + $0x88] sm:$0xff]
      %v5075 = vld [vmem:[#allocation2 + $0x90] sm:$0xff]
      %v5076 = vld [vmem:[#allocation2 + $0x98] sm:$0xff]
      %v5077 = vld [vmem:[#allocation2 + $0xa0] sm:$0xff]
      %v5078 = vld [vmem:[#allocation2 + $0xa8] sm:$0xff]
      %v5079 = vld [vmem:[#allocation2 + $0xb0] sm:$0xff]
      %v5080 = vld [vmem:[#allocation2 + $0xb8] sm:$0xff]
      %v5081 = vld [vmem:[#allocation2 + $0xc0] sm:$0xff]
      %v5082 = vld [vmem:[#allocation2 + $0xc8] sm:$0xff]
      %v5083 = vld [vmem:[#allocation2 + $0xd0] sm:$0xff]
      %v5084 = vld [vmem:[#allocation2 + $0xd8] sm:$0xff]
      %v5085 = vld [vmem:[#allocation2 + $0xe0] sm:$0xff]
      %v5086 = vld [vmem:[#allocation2 + $0xe8] sm:$0xff]
      %v5087 = vld [vmem:[#allocation2 + $0xf0] sm:$0xff]
      %v5088 = vld [vmem:[#allocation2 + $0xf8] sm:$0xff]
      %v5089 = vld [vmem:[#allocation2 + $0x100] sm:$0xff]
      %v5090 = vld [vmem:[#allocation2 + $0x108] sm:$0xff]
      %v5091 = vld [vmem:[#allocation2 + $0x110] sm:$0xff]
      %v5092 = vld [vmem:[#allocation2 + $0x118] sm:$0xff]
      %v5093 = vld [vmem:[#allocation2 + $0x120] sm:$0xff]
      %v5094 = vld [vmem:[#allocation2 + $0x128] sm:$0xff]
      %v5095 = vld [vmem:[#allocation2 + $0x130] sm:$0xff]
      %v5096 = vld [vmem:[#allocation2 + $0x138] sm:$0xff]
      %v5097 = vld [vmem:[#allocation2 + $0x140] sm:$0xff]
      %v5098 = vld [vmem:[#allocation2 + $0x148] sm:$0xff]
      %v5099 = vld [vmem:[#allocation2 + $0x150] sm:$0xff]
      %v5100 = vld [vmem:[#allocation2 + $0x158] sm:$0xff]
      %v5101 = vld [vmem:[#allocation2 + $0x160] sm:$0xff]
      %v5102 = vld [vmem:[#allocation2 + $0x168] sm:$0xff]
      %v5103 = vld [vmem:[#allocation2 + $0x170] sm:$0xff]
      %v5104 = vld [vmem:[#allocation2 + $0x178] sm:$0xff]
      %v5105 = vadd.f32 %v5057, %v5055
      %v5106 = vadd.f32 %v5058, %v5054
      %v5107 = vadd.f32 %v5059, %v5053
      %v5108 = vadd.f32 %v5060, %v5052
      %v5109 = vadd.f32 %v5061, %v5051
      %v5110 = vadd.f32 %v5062, %v5050
      %v5111 = vadd.f32 %v5063, %v5049
      %v5112 = vadd.f32 %v5064, %v5048
      %v5113 = vadd.f32 %v5065, %v5047
      %v5114 = vadd.f32 %v5066, %v5046
      %v5115 = vadd.f32 %v5067, %v5045
      %v5116 = vadd.f32 %v5068, %v5044
      %v5117 = vadd.f32 %v5069, %v5043
      %v5118 = vadd.f32 %v5070, %v5042
      %v5119 = vadd.f32 %v5071, %v5041
      %v5120 = vadd.f32 %v5072, %v5040
      %v5121 = vadd.f32 %v5073, %v5039
      %v5122 = vadd.f32 %v5074, %v5038
      %v5123 = vadd.f32 %v5075, %v5037
      %v5124 = vadd.f32 %v5076, %v5036
      %v5125 = vadd.f32 %v5077, %v5035
      %v5126 = vadd.f32 %v5078, %v5034
      %v5127 = vadd.f32 %v5079, %v5033
      %v5128 = vadd.f32 %v5080, %v5032
      %v5129 = vadd.f32 %v5081, %v5031
      %v5130 = vadd.f32 %v5082, %v5030
      %v5131 = vadd.f32 %v5083, %v5029
      %v5132 = vadd.f32 %v5084, %v5028
      %v5133 = vadd.f32 %v5085, %v5027
      %v5134 = vadd.f32 %v5086, %v5026
      %v5135 = vadd.f32 %v5087, %v5025
      %v5136 = vadd.f32 %v5088, %v5024
      %v5137 = vadd.f32 %v5089, %v5023
      %v5138 = vadd.f32 %v5090, %v5022
      %v5139 = vadd.f32 %v5091, %v5021
      %v5140 = vadd.f32 %v5092, %v5020
      %v5141 = vadd.f32 %v5093, %v5019
      %v5142 = vadd.f32 %v5094, %v5018
      %v5143 = vadd.f32 %v5095, %v5017
      %v5144 = vadd.f32 %v5096, %v5016
      %v5145 = vadd.f32 %v5097, %v5015
      %v5146 = vadd.f32 %v5098, %v5014
      %v5147 = vadd.f32 %v5099, %v5013
      %v5148 = vadd.f32 %v5100, %v5012
      %v5149 = vadd.f32 %v5101, %v5011
      %v5150 = vadd.f32 %v5102, %v5010
      %v5151 = vadd.f32 %v5103, %v5009
      %v5152 = vadd.f32 %v5104, %v5056
      %5153 = vst [vmem:[#allocation2] sm:$0xff] %v5105
      %5154 = vst [vmem:[#allocation2 + $0x8] sm:$0xff] %v5106
      %5155 = vst [vmem:[#allocation2 + $0x10] sm:$0xff] %v5107
      %5156 = vst [vmem:[#allocation2 + $0x18] sm:$0xff] %v5108
      %5157 = vst [vmem:[#allocation2 + $0x20] sm:$0xff] %v5109
      %5158 = vst [vmem:[#allocation2 + $0x28] sm:$0xff] %v5110
      %5159 = vst [vmem:[#allocation2 + $0x30] sm:$0xff] %v5111
      %5160 = vst [vmem:[#allocation2 + $0x38] sm:$0xff] %v5112
      %5161 = vst [vmem:[#allocation2 + $0x40] sm:$0xff] %v5113
      %5162 = vst [vmem:[#allocation2 + $0x48] sm:$0xff] %v5114
      %5163 = vst [vmem:[#allocation2 + $0x50] sm:$0xff] %v5115
      %5164 = vst [vmem:[#allocation2 + $0x58] sm:$0xff] %v5116
      %5165 = vst [vmem:[#allocation2 + $0x60] sm:$0xff] %v5117
      %5166 = vst [vmem:[#allocation2 + $0x68] sm:$0xff] %v5118
      %5167 = vst [vmem:[#allocation2 + $0x70] sm:$0xff] %v5119
      %5168 = vst [vmem:[#allocation2 + $0x78] sm:$0xff] %v5120
      %5169 = vst [vmem:[#allocation2 + $0x80] sm:$0xff] %v5121
      %5170 = vst [vmem:[#allocation2 + $0x88] sm:$0xff] %v5122
      %5171 = vst [vmem:[#allocation2 + $0x90] sm:$0xff] %v5123
      %5172 = vst [vmem:[#allocation2 + $0x98] sm:$0xff] %v5124
      %5173 = vst [vmem:[#allocation2 + $0xa0] sm:$0xff] %v5125
      %5174 = vst [vmem:[#allocation2 + $0xa8] sm:$0xff] %v5126
      %5175 = vst [vmem:[#allocation2 + $0xb0] sm:$0xff] %v5127
      %5176 = vst [vmem:[#allocation2 + $0xb8] sm:$0xff] %v5128
      %5177 = vst [vmem:[#allocation2 + $0xc0] sm:$0xff] %v5129
      %5178 = vst [vmem:[#allocation2 + $0xc8] sm:$0xff] %v5130
      %5179 = vst [vmem:[#allocation2 + $0xd0] sm:$0xff] %v5131
      %5180 = vst [vmem:[#allocation2 + $0xd8] sm:$0xff] %v5132
      %5181 = vst [vmem:[#allocation2 + $0xe0] sm:$0xff] %v5133
      %5182 = vst [vmem:[#allocation2 + $0xe8] sm:$0xff] %v5134
      %5183 = vst [vmem:[#allocation2 + $0xf0] sm:$0xff] %v5135
      %5184 = vst [vmem:[#allocation2 + $0xf8] sm:$0xff] %v5136
      %5185 = vst [vmem:[#allocation2 + $0x100] sm:$0xff] %v5137
      %5186 = vst [vmem:[#allocation2 + $0x108] sm:$0xff] %v5138
      %5187 = vst [vmem:[#allocation2 + $0x110] sm:$0xff] %v5139
      %5188 = vst [vmem:[#allocation2 + $0x118] sm:$0xff] %v5140
      %5189 = vst [vmem:[#allocation2 + $0x120] sm:$0xff] %v5141
      %5190 = vst [vmem:[#allocation2 + $0x128] sm:$0xff] %v5142
      %5191 = vst [vmem:[#allocation2 + $0x130] sm:$0xff] %v5143
      %5192 = vst [vmem:[#allocation2 + $0x138] sm:$0xff] %v5144
      %5193 = vst [vmem:[#allocation2 + $0x140] sm:$0xff] %v5145
      %5194 = vst [vmem:[#allocation2 + $0x148] sm:$0xff] %v5146
      %5195 = vst [vmem:[#allocation2 + $0x150] sm:$0xff] %v5147
      %5196 = vst [vmem:[#allocation2 + $0x158] sm:$0xff] %v5148
      %5197 = vst [vmem:[#allocation2 + $0x160] sm:$0xff] %v5149
      %5198 = vst [vmem:[#allocation2 + $0x168] sm:$0xff] %v5150
      %5199 = vst [vmem:[#allocation2 + $0x170] sm:$0xff] %v5151
      %5200 = vst [vmem:[#allocation2 + $0x178] sm:$0xff] %v5152
      %v5201 = vld [vmem:[#allocation2] sm:$0xff]
      %v5202 = vld [vmem:[#allocation2 + $0x8] sm:$0xff]
      %v5203 = vld [vmem:[#allocation2 + $0x10] sm:$0xff]
      %v5204 = vld [vmem:[#allocation2 + $0x18] sm:$0xff]
      %v5205 = vld [vmem:[#allocation2 + $0x20] sm:$0xff]
      %v5206 = vld [vmem:[#allocation2 + $0x28] sm:$0xff]
      %v5207 = vld [vmem:[#allocation2 + $0x30] sm:$0xff]
      %v5208 = vld [vmem:[#allocation2 + $0x38] sm:$0xff]
      %v5209 = vld [vmem:[#allocation2 + $0x40] sm:$0xff]
      %v5210 = vld [vmem:[#allocation2 + $0x48] sm:$0xff]
      %v5211 = vld [vmem:[#allocation2 + $0x50] sm:$0xff]
      %v5212 = vld [vmem:[#allocation2 + $0x58] sm:$0xff]
      %v5213 = vld [vmem:[#allocation2 + $0x60] sm:$0xff]
      %v5214 = vld [vmem:[#allocation2 + $0x68] sm:$0xff]
      %v5215 = vld [vmem:[#allocation2 + $0x70] sm:$0xff]
      %v5216 = vld [vmem:[#allocation2 + $0x78] sm:$0xff]
      %v5217 = vld [vmem:[#allocation2 + $0x80] sm:$0xff]
      %v5218 = vld [vmem:[#allocation2 + $0x88] sm:$0xff]
      %v5219 = vld [vmem:[#allocation2 + $0x90] sm:$0xff]
      %v5220 = vld [vmem:[#allocation2 + $0x98] sm:$0xff]
      %v5221 = vld [vmem:[#allocation2 + $0xa0] sm:$0xff]
      %v5222 = vld [vmem:[#allocation2 + $0xa8] sm:$0xff]
      %v5223 = vld [vmem:[#allocation2 + $0xb0] sm:$0xff]
      %v5224 = vld [vmem:[#allocation2 + $0xb8] sm:$0xff]
      %v5225 = vld [vmem:[#allocation2 + $0xc0] sm:$0xff]
      %v5226 = vld [vmem:[#allocation2 + $0xc8] sm:$0xff]
      %v5227 = vld [vmem:[#allocation2 + $0xd0] sm:$0xff]
      %v5228 = vld [vmem:[#allocation2 + $0xd8] sm:$0xff]
      %v5229 = vld [vmem:[#allocation2 + $0xe0] sm:$0xff]
      %v5230 = vld [vmem:[#allocation2 + $0xe8] sm:$0xff]
      %v5231 = vld [vmem:[#allocation2 + $0xf0] sm:$0xff]
      %v5232 = vld [vmem:[#allocation2 + $0xf8] sm:$0xff]
      %v5233 = vld [vmem:[#allocation2 + $0x100] sm:$0xff]
      %v5234 = vld [vmem:[#allocation2 + $0x108] sm:$0xff]
      %v5235 = vld [vmem:[#allocation2 + $0x110] sm:$0xff]
      %v5236 = vld [vmem:[#allocation2 + $0x118] sm:$0xff]
      %v5237 = vld [vmem:[#allocation2 + $0x120] sm:$0xff]
      %v5238 = vld [vmem:[#allocation2 + $0x128] sm:$0xff]
      %v5239 = vld [vmem:[#allocation2 + $0x130] sm:$0xff]
      %v5240 = vld [vmem:[#allocation2 + $0x138] sm:$0xff]
      %v5241 = vld [vmem:[#allocation2 + $0x140] sm:$0xff]
      %v5242 = vld [vmem:[#allocation2 + $0x148] sm:$0xff]
      %v5243 = vld [vmem:[#allocation2 + $0x150] sm:$0xff]
      %v5244 = vld [vmem:[#allocation2 + $0x158] sm:$0xff]
      %v5245 = vld [vmem:[#allocation2 + $0x160] sm:$0xff]
      %v5246 = vld [vmem:[#allocation2 + $0x168] sm:$0xff]
      %v5247 = vld [vmem:[#allocation2 + $0x170] sm:$0xff]
      %v5248 = vld [vmem:[#allocation2 + $0x178] sm:$0xff]
      %v5249 = vld [vmem:[%s2] sm:$0x1]
      %v5251 = vlaneseq
      %v5252 = vshrl.u32 %v5251, 7
      %v5253 = vsub.s32 0, %v5252
      %v5254 = vrot.slane %v5249, %v5253
      %v5256 = vadd.f32 %v5201, %v5254
      %v5257 = vadd.f32 %v5202, %v5254
      %v5258 = vadd.f32 %v5203, %v5254
      %v5259 = vadd.f32 %v5204, %v5254
      %v5260 = vadd.f32 %v5205, %v5254
      %v5261 = vadd.f32 %v5206, %v5254
      %v5262 = vadd.f32 %v5207, %v5254
      %v5263 = vadd.f32 %v5208, %v5254
      %v5264 = vadd.f32 %v5209, %v5254
      %v5265 = vadd.f32 %v5210, %v5254
      %v5266 = vadd.f32 %v5211, %v5254
      %v5267 = vadd.f32 %v5212, %v5254
      %v5268 = vadd.f32 %v5213, %v5254
      %v5269 = vadd.f32 %v5214, %v5254
      %v5270 = vadd.f32 %v5215, %v5254
      %v5271 = vadd.f32 %v5216, %v5254
      %v5272 = vadd.f32 %v5217, %v5254
      %v5273 = vadd.f32 %v5218, %v5254
      %v5274 = vadd.f32 %v5219, %v5254
      %v5275 = vadd.f32 %v5220, %v5254
      %v5276 = vadd.f32 %v5221, %v5254
      %v5277 = vadd.f32 %v5222, %v5254
      %v5278 = vadd.f32 %v5223, %v5254
      %v5279 = vadd.f32 %v5224, %v5254
      %v5280 = vadd.f32 %v5225, %v5254
      %v5281 = vadd.f32 %v5226, %v5254
      %v5282 = vadd.f32 %v5227, %v5254
      %v5283 = vadd.f32 %v5228, %v5254
      %v5284 = vadd.f32 %v5229, %v5254
      %v5285 = vadd.f32 %v5230, %v5254
      %v5286 = vadd.f32 %v5231, %v5254
      %v5287 = vadd.f32 %v5232, %v5254
      %v5288 = vadd.f32 %v5233, %v5254
      %v5289 = vadd.f32 %v5234, %v5254
      %v5290 = vadd.f32 %v5235, %v5254
      %v5291 = vadd.f32 %v5236, %v5254
      %v5292 = vadd.f32 %v5237, %v5254
      %v5293 = vadd.f32 %v5238, %v5254
      %v5294 = vadd.f32 %v5239, %v5254
      %v5295 = vadd.f32 %v5240, %v5254
      %v5296 = vadd.f32 %v5241, %v5254
      %v5297 = vadd.f32 %v5242, %v5254
      %v5298 = vadd.f32 %v5243, %v5254
      %v5299 = vadd.f32 %v5244, %v5254
      %v5300 = vadd.f32 %v5245, %v5254
      %v5301 = vadd.f32 %v5246, %v5254
      %v5302 = vadd.f32 %v5247, %v5254
      %v5303 = vadd.f32 %v5248, %v5254
      %v5304 = vmax.f32 %v5256, 0.0
      %v5305 = vmax.f32 %v5257, 0.0
      %v5306 = vmax.f32 %v5258, 0.0
      %v5307 = vmax.f32 %v5259, 0.0
      %v5308 = vmax.f32 %v5260, 0.0
      %v5309 = vmax.f32 %v5261, 0.0
      %v5310 = vmax.f32 %v5262, 0.0
      %v5311 = vmax.f32 %v5263, 0.0
      %v5312 = vmax.f32 %v5264, 0.0
      %v5313 = vmax.f32 %v5265, 0.0
      %v5314 = vmax.f32 %v5266, 0.0
      %v5315 = vmax.f32 %v5267, 0.0
      %v5316 = vmax.f32 %v5268, 0.0
      %v5317 = vmax.f32 %v5269, 0.0
      %v5318 = vmax.f32 %v5270, 0.0
      %v5319 = vmax.f32 %v5271, 0.0
      %v5320 = vmax.f32 %v5272, 0.0
      %v5321 = vmax.f32 %v5273, 0.0
      %v5322 = vmax.f32 %v5274, 0.0
      %v5323 = vmax.f32 %v5275, 0.0
      %v5324 = vmax.f32 %v5276, 0.0
      %v5325 = vmax.f32 %v5277, 0.0
      %v5326 = vmax.f32 %v5278, 0.0
      %v5327 = vmax.f32 %v5279, 0.0
      %v5328 = vmax.f32 %v5280, 0.0
      %v5329 = vmax.f32 %v5281, 0.0
      %v5330 = vmax.f32 %v5282, 0.0
      %v5331 = vmax.f32 %v5283, 0.0
      %v5332 = vmax.f32 %v5284, 0.0
      %v5333 = vmax.f32 %v5285, 0.0
      %v5334 = vmax.f32 %v5286, 0.0
      %v5335 = vmax.f32 %v5287, 0.0
      %v5336 = vmax.f32 %v5288, 0.0
      %v5337 = vmax.f32 %v5289, 0.0
      %v5338 = vmax.f32 %v5290, 0.0
      %v5339 = vmax.f32 %v5291, 0.0
      %v5340 = vmax.f32 %v5292, 0.0
      %v5341 = vmax.f32 %v5293, 0.0
      %v5342 = vmax.f32 %v5294, 0.0
      %v5343 = vmax.f32 %v5295, 0.0
      %v5344 = vmax.f32 %v5296, 0.0
      %v5345 = vmax.f32 %v5297, 0.0
      %v5346 = vmax.f32 %v5298, 0.0
      %v5347 = vmax.f32 %v5299, 0.0
      %v5348 = vmax.f32 %v5300, 0.0
      %v5349 = vmax.f32 %v5301, 0.0
      %v5350 = vmax.f32 %v5302, 0.0
      %v5351 = vmax.f32 %v5303, 0.0
      %v5352 = vadd.s32 %v764, 8
      %v5353 = vadd.s32 %v764, 16
      %vm5354 = vcmp.ge.s32.totalorder %v764, 1
      %vm5355 = vcmp.ge.s32.totalorder %v5352, 1
      %vm5356 = vcmp.ge.s32.totalorder %v5353, 1
      %vm5357 = vcmp.le.s32.totalorder %v764, 16
      %vm5358 = vcmp.le.s32.totalorder %v5352, 16
      %vm5359 = vcmp.le.s32.totalorder %v5353, 16
      %vm5360 = vmand %vm5354, %vm5357
      %vm5361 = vmand %vm5355, %vm5358
      %vm5362 = vmand %vm5356, %vm5359
      %v5363 = vsel %vm5360, 1, 0
      %v5364 = vsel %vm5361, 1, 0
      %v5365 = vsel %vm5362, 1, 0
      %vm5366 = vcmp.eq.s32.totalorder %v5363, 1
      %vm5367 = vcmp.eq.s32.totalorder %v5364, 1
      %vm5368 = vcmp.eq.s32.totalorder %v5365, 1
      %v5369 = vsel %vm5366, %v5304, 0.0
      %v5370 = vsel %vm5367, %v5305, 0.0
      %v5371 = vsel %vm5368, %v5306, 0.0
      %v5372 = vsel %vm5366, %v5307, 0.0
      %v5373 = vsel %vm5367, %v5308, 0.0
      %v5374 = vsel %vm5368, %v5309, 0.0
      %v5375 = vsel %vm5366, %v5310, 0.0
      %v5376 = vsel %vm5367, %v5311, 0.0
      %v5377 = vsel %vm5368, %v5312, 0.0
      %v5378 = vsel %vm5366, %v5313, 0.0
      %v5379 = vsel %vm5367, %v5314, 0.0
      %v5380 = vsel %vm5368, %v5315, 0.0
      %v5381 = vsel %vm5366, %v5316, 0.0
      %v5382 = vsel %vm5367, %v5317, 0.0
      %v5383 = vsel %vm5368, %v5318, 0.0
      %v5384 = vsel %vm5366, %v5319, 0.0
      %v5385 = vsel %vm5367, %v5320, 0.0
      %v5386 = vsel %vm5368, %v5321, 0.0
      %v5387 = vsel %vm5366, %v5322, 0.0
      %v5388 = vsel %vm5367, %v5323, 0.0
      %v5389 = vsel %vm5368, %v5324, 0.0
      %v5390 = vsel %vm5366, %v5325, 0.0
      %v5391 = vsel %vm5367, %v5326, 0.0
      %v5392 = vsel %vm5368, %v5327, 0.0
      %v5393 = vsel %vm5366, %v5328, 0.0
      %v5394 = vsel %vm5367, %v5329, 0.0
      %v5395 = vsel %vm5368, %v5330, 0.0
      %v5396 = vsel %vm5366, %v5331, 0.0
      %v5397 = vsel %vm5367, %v5332, 0.0
      %v5398 = vsel %vm5368, %v5333, 0.0
      %v5399 = vsel %vm5366, %v5334, 0.0
      %v5400 = vsel %vm5367, %v5335, 0.0
      %v5401 = vsel %vm5368, %v5336, 0.0
      %v5402 = vsel %vm5366, %v5337, 0.0
      %v5403 = vsel %vm5367, %v5338, 0.0
      %v5404 = vsel %vm5368, %v5339, 0.0
      %v5405 = vsel %vm5366, %v5340, 0.0
      %v5406 = vsel %vm5367, %v5341, 0.0
      %v5407 = vsel %vm5368, %v5342, 0.0
      %v5408 = vsel %vm5366, %v5343, 0.0
      %v5409 = vsel %vm5367, %v5344, 0.0
      %v5410 = vsel %vm5368, %v5345, 0.0
      %v5411 = vsel %vm5366, %v5346, 0.0
      %v5412 = vsel %vm5367, %v5347, 0.0
      %v5413 = vsel %vm5368, %v5348, 0.0
      %v5414 = vsel %vm5366, %v5349, 0.0
      %v5415 = vsel %vm5367, %v5350, 0.0
      %v5416 = vsel %vm5368, %v5351, 0.0
      %v5417 = vpack.c.bf16 %v5370, %v5369
      %v5418 = vpack.c.bf16 %v5371, %v5371
      %v5419 = vpack.c.bf16 %v5373, %v5372
      %v5420 = vpack.c.bf16 %v5374, %v5374
      %v5421 = vpack.c.bf16 %v5376, %v5375
      %v5422 = vpack.c.bf16 %v5377, %v5377
      %v5423 = vpack.c.bf16 %v5379, %v5378
      %v5424 = vpack.c.bf16 %v5380, %v5380
      %v5425 = vpack.c.bf16 %v5382, %v5381
      %v5426 = vpack.c.bf16 %v5383, %v5383
      %v5427 = vpack.c.bf16 %v5385, %v5384
      %v5428 = vpack.c.bf16 %v5386, %v5386
      %v5429 = vpack.c.bf16 %v5388, %v5387
      %v5430 = vpack.c.bf16 %v5389, %v5389
      %v5431 = vpack.c.bf16 %v5391, %v5390
      %v5432 = vpack.c.bf16 %v5392, %v5392
      %v5433 = vpack.c.bf16 %v5394, %v5393
      %v5434 = vpack.c.bf16 %v5395, %v5395
      %v5435 = vpack.c.bf16 %v5397, %v5396
      %v5436 = vpack.c.bf16 %v5398, %v5398
      %v5437 = vpack.c.bf16 %v5400, %v5399
      %v5438 = vpack.c.bf16 %v5401, %v5401
      %v5439 = vpack.c.bf16 %v5403, %v5402
      %v5440 = vpack.c.bf16 %v5404, %v5404
      %v5441 = vpack.c.bf16 %v5406, %v5405
      %v5442 = vpack.c.bf16 %v5407, %v5407
      %v5443 = vpack.c.bf16 %v5409, %v5408
      %v5444 = vpack.c.bf16 %v5410, %v5410
      %v5445 = vpack.c.bf16 %v5412, %v5411
      %v5446 = vpack.c.bf16 %v5413, %v5413
      %v5447 = vpack.c.bf16 %v5415, %v5414
      %v5448 = vpack.c.bf16 %v5416, %v5416
      %v5481 = vunpack.c.l.b16 %v5417
      %v5482 = vunpack.c.h.b16 %v5417
      %v5483 = vunpack.c.l.b16 %v5418
      %v5484 = vunpack.c.l.b16 %v5419
      %v5485 = vunpack.c.h.b16 %v5419
      %v5486 = vunpack.c.l.b16 %v5420
      %v5487 = vunpack.c.l.b16 %v5421
      %v5488 = vunpack.c.h.b16 %v5421
      %v5489 = vunpack.c.l.b16 %v5422
      %v5490 = vunpack.c.l.b16 %v5423
      %v5491 = vunpack.c.h.b16 %v5423
      %v5492 = vunpack.c.l.b16 %v5424
      %v5493 = vunpack.c.l.b16 %v5425
      %v5494 = vunpack.c.h.b16 %v5425
      %v5495 = vunpack.c.l.b16 %v5426
      %v5496 = vunpack.c.l.b16 %v5427
      %v5497 = vunpack.c.h.b16 %v5427
      %v5498 = vunpack.c.l.b16 %v5428
      %v5499 = vunpack.c.l.b16 %v5429
      %v5500 = vunpack.c.h.b16 %v5429
      %v5501 = vunpack.c.l.b16 %v5430
      %v5502 = vunpack.c.l.b16 %v5431
      %v5503 = vunpack.c.h.b16 %v5431
      %v5504 = vunpack.c.l.b16 %v5432
      %v5505 = vunpack.c.l.b16 %v5433
      %v5506 = vunpack.c.h.b16 %v5433
      %v5507 = vunpack.c.l.b16 %v5434
      %v5508 = vunpack.c.l.b16 %v5435
      %v5509 = vunpack.c.h.b16 %v5435
      %v5510 = vunpack.c.l.b16 %v5436
      %v5511 = vunpack.c.l.b16 %v5437
      %v5512 = vunpack.c.h.b16 %v5437
      %v5513 = vunpack.c.l.b16 %v5438
      %v5514 = vunpack.c.l.b16 %v5439
      %v5515 = vunpack.c.h.b16 %v5439
      %v5516 = vunpack.c.l.b16 %v5440
      %v5517 = vunpack.c.l.b16 %v5441
      %v5518 = vunpack.c.h.b16 %v5441
      %v5519 = vunpack.c.l.b16 %v5442
      %v5520 = vunpack.c.l.b16 %v5443
      %v5521 = vunpack.c.h.b16 %v5443
      %v5522 = vunpack.c.l.b16 %v5444
      %v5523 = vunpack.c.l.b16 %v5445
      %v5524 = vunpack.c.h.b16 %v5445
      %v5525 = vunpack.c.l.b16 %v5446
      %v5526 = vunpack.c.l.b16 %v5447
      %v5527 = vunpack.c.h.b16 %v5447
      %v5528 = vunpack.c.l.b16 %v5448
      %v5529 = vpack.c.b16 %v5481, %v5481
      %v5530 = vpack.c.b16 %v5482, %v5482
      %v5531 = vpack.c.b16 %v5483, %v5483
      %v5532 = vpack.c.b16 %v5484, %v5484
      %v5533 = vpack.c.b16 %v5485, %v5485
      %v5534 = vpack.c.b16 %v5486, %v5486
      %v5535 = vpack.c.b16 %v5487, %v5487
      %v5536 = vpack.c.b16 %v5488, %v5488
      %v5537 = vpack.c.b16 %v5489, %v5489
      %v5538 = vpack.c.b16 %v5490, %v5490
      %v5539 = vpack.c.b16 %v5491, %v5491
      %v5540 = vpack.c.b16 %v5492, %v5492
      %v5541 = vpack.c.b16 %v5493, %v5493
      %v5542 = vpack.c.b16 %v5494, %v5494
      %v5543 = vpack.c.b16 %v5495, %v5495
      %v5544 = vpack.c.b16 %v5496, %v5496
      %v5545 = vpack.c.b16 %v5497, %v5497
      %v5546 = vpack.c.b16 %v5498, %v5498
      %v5547 = vpack.c.b16 %v5499, %v5499
      %v5548 = vpack.c.b16 %v5500, %v5500
      %v5549 = vpack.c.b16 %v5501, %v5501
      %v5550 = vpack.c.b16 %v5502, %v5502
      %v5551 = vpack.c.b16 %v5503, %v5503
      %v5552 = vpack.c.b16 %v5504, %v5504
      %v5553 = vpack.c.b16 %v5505, %v5505
      %v5554 = vpack.c.b16 %v5506, %v5506
      %v5555 = vpack.c.b16 %v5507, %v5507
      %v5556 = vpack.c.b16 %v5508, %v5508
      %v5557 = vpack.c.b16 %v5509, %v5509
      %v5558 = vpack.c.b16 %v5510, %v5510
      %v5559 = vpack.c.b16 %v5511, %v5511
      %v5560 = vpack.c.b16 %v5512, %v5512
      %v5561 = vpack.c.b16 %v5513, %v5513
      %v5562 = vpack.c.b16 %v5514, %v5514
      %v5563 = vpack.c.b16 %v5515, %v5515
      %v5564 = vpack.c.b16 %v5516, %v5516
      %v5565 = vpack.c.b16 %v5517, %v5517
      %v5566 = vpack.c.b16 %v5518, %v5518
      %v5567 = vpack.c.b16 %v5519, %v5519
      %v5568 = vpack.c.b16 %v5520, %v5520
      %v5569 = vpack.c.b16 %v5521, %v5521
      %v5570 = vpack.c.b16 %v5522, %v5522
      %v5571 = vpack.c.b16 %v5523, %v5523
      %v5572 = vpack.c.b16 %v5524, %v5524
      %v5573 = vpack.c.b16 %v5525, %v5525
      %v5574 = vpack.c.b16 %v5526, %v5526
      %v5575 = vpack.c.b16 %v5527, %v5527
      %v5576 = vpack.c.b16 %v5528, %v5528
      %s5625 = scalar_lea.vmem [#allocation3], 12
      %5626 = vst [vmem:[%s5625] sm:$0xf] %v5529
      %5627 = vst [vmem:[%s5625 + $0x4] sm:$0xf] %v5530
      %5628 = vst [vmem:[%s5625 + $0x8] sm:$0xf] %v5531
      %5629 = vst [vmem:[%s5625 + $0xc] sm:$0xf] %v5532
      %5630 = vst [vmem:[%s5625 + $0x10] sm:$0xf] %v5533
      %5631 = vst [vmem:[%s5625 + $0x14] sm:$0xf] %v5534
      %5632 = vst [vmem:[%s5625 + $0x18] sm:$0xf] %v5535
      %5633 = vst [vmem:[%s5625 + $0x1c] sm:$0xf] %v5536
      %5634 = vst [vmem:[%s5625 + $0x20] sm:$0xf] %v5537
      %5635 = vst [vmem:[%s5625 + $0x24] sm:$0xf] %v5538
      %5636 = vst [vmem:[%s5625 + $0x28] sm:$0xf] %v5539
      %5637 = vst [vmem:[%s5625 + $0x2c] sm:$0xf] %v5540
      %5638 = vst [vmem:[%s5625 + $0x30] sm:$0xf] %v5541
      %5639 = vst [vmem:[%s5625 + $0x34] sm:$0xf] %v5542
      %5640 = vst [vmem:[%s5625 + $0x38] sm:$0xf] %v5543
      %5641 = vst [vmem:[%s5625 + $0x3c] sm:$0xf] %v5544
      %5642 = vst [vmem:[%s5625 + $0x40] sm:$0xf] %v5545
      %5643 = vst [vmem:[%s5625 + $0x44] sm:$0xf] %v5546
      %5644 = vst [vmem:[%s5625 + $0x48] sm:$0xf] %v5547
      %5645 = vst [vmem:[%s5625 + $0x4c] sm:$0xf] %v5548
      %5646 = vst [vmem:[%s5625 + $0x50] sm:$0xf] %v5549
      %5647 = vst [vmem:[%s5625 + $0x54] sm:$0xf] %v5550
      %5648 = vst [vmem:[%s5625 + $0x58] sm:$0xf] %v5551
      %5649 = vst [vmem:[%s5625 + $0x5c] sm:$0xf] %v5552
      %5650 = vst [vmem:[%s5625 + $0x60] sm:$0xf] %v5553
      %5651 = vst [vmem:[%s5625 + $0x64] sm:$0xf] %v5554
      %5652 = vst [vmem:[%s5625 + $0x68] sm:$0xf] %v5555
      %5653 = vst [vmem:[%s5625 + $0x6c] sm:$0xf] %v5556
      %5654 = vst [vmem:[%s5625 + $0x70] sm:$0xf] %v5557
      %5655 = vst [vmem:[%s5625 + $0x74] sm:$0xf] %v5558
      %5656 = vst [vmem:[%s5625 + $0x78] sm:$0xf] %v5559
      %5657 = vst [vmem:[%s5625 + $0x7c] sm:$0xf] %v5560
      %5658 = vst [vmem:[%s5625 + $0x80] sm:$0xf] %v5561
      %5659 = vst [vmem:[%s5625 + $0x84] sm:$0xf] %v5562
      %5660 = vst [vmem:[%s5625 + $0x88] sm:$0xf] %v5563
      %5661 = vst [vmem:[%s5625 + $0x8c] sm:$0xf] %v5564
      %5662 = vst [vmem:[%s5625 + $0x90] sm:$0xf] %v5565
      %5663 = vst [vmem:[%s5625 + $0x94] sm:$0xf] %v5566
      %5664 = vst [vmem:[%s5625 + $0x98] sm:$0xf] %v5567
      %5665 = vst [vmem:[%s5625 + $0x9c] sm:$0xf] %v5568
      %5666 = vst [vmem:[%s5625 + $0xa0] sm:$0xf] %v5569
      %5667 = vst [vmem:[%s5625 + $0xa4] sm:$0xf] %v5570
      %5668 = vst [vmem:[%s5625 + $0xa8] sm:$0xf] %v5571
      %5669 = vst [vmem:[%s5625 + $0xac] sm:$0xf] %v5572
      %5670 = vst [vmem:[%s5625 + $0xb0] sm:$0xf] %v5573
      %5671 = vst [vmem:[%s5625 + $0xb4] sm:$0xf] %v5574
      %5672 = vst [vmem:[%s5625 + $0xb8] sm:$0xf] %v5575
      %5673 = vst [vmem:[%s5625 + $0xbc] sm:$0xf] %v5576
      %5674 = vst [vmem:[#allocation3] sm:$0xf] 0
      %5675 = vst [vmem:[#allocation3 + $0x4] sm:$0xf] 0
      %5676 = vst [vmem:[#allocation3 + $0x8] sm:$0xf] 0
      %s5677 = scalar_lea.vmem [#allocation3], 204
      %5678 = vst [vmem:[%s5677] sm:$0xf] 0
      %5679 = vst [vmem:[%s5677 + $0x4] sm:$0xf] 0
      %5680 = vst [vmem:[%s5677 + $0x8] sm:$0xf] 0
      %v5681 = vld [vmem:[#allocation3] sm:$0xf]
      %v5682 = vld [vmem:[#allocation3 + $0x4] sm:$0xf]
      %v5683 = vld [vmem:[#allocation3 + $0x8] sm:$0xf]
      %v5684 = vld [vmem:[#allocation3 + $0xc] sm:$0xf]
      %v5685 = vld [vmem:[#allocation3 + $0x10] sm:$0xf]
      %v5686 = vld [vmem:[#allocation3 + $0x14] sm:$0xf]
      %v5687 = vld [vmem:[#allocation3 + $0x18] sm:$0xf]
      %v5688 = vld [vmem:[#allocation3 + $0x1c] sm:$0xf]
      %v5689 = vld [vmem:[#allocation3 + $0x20] sm:$0xf]
      %v5690 = vld [vmem:[#allocation3 + $0x24] sm:$0xf]
      %v5691 = vld [vmem:[#allocation3 + $0x28] sm:$0xf]
      %v5692 = vld [vmem:[#allocation3 + $0x2c] sm:$0xf]
      %v5693 = vld [vmem:[#allocation3 + $0x30] sm:$0xf]
      %v5694 = vld [vmem:[#allocation3 + $0x34] sm:$0xf]
      %v5695 = vld [vmem:[#allocation3 + $0x38] sm:$0xf]
      %v5696 = vld [vmem:[#allocation3 + $0x3c] sm:$0xf]
      %v5697 = vld [vmem:[#allocation3 + $0x40] sm:$0xf]
      %v5698 = vld [vmem:[#allocation3 + $0x44] sm:$0xf]
      %v5699 = vld [vmem:[#allocation3 + $0x48] sm:$0xf]
      %v5700 = vld [vmem:[#allocation3 + $0x4c] sm:$0xf]
      %v5701 = vld [vmem:[#allocation3 + $0x50] sm:$0xf]
      %v5702 = vld [vmem:[#allocation3 + $0x54] sm:$0xf]
      %v5703 = vld [vmem:[#allocation3 + $0x58] sm:$0xf]
      %v5704 = vld [vmem:[#allocation3 + $0x5c] sm:$0xf]
      %v5705 = vld [vmem:[#allocation3 + $0x60] sm:$0xf]
      %v5706 = vld [vmem:[#allocation3 + $0x64] sm:$0xf]
      %v5707 = vld [vmem:[#allocation3 + $0x68] sm:$0xf]
      %v5708 = vld [vmem:[#allocation3 + $0x6c] sm:$0xf]
      %v5709 = vld [vmem:[#allocation3 + $0x70] sm:$0xf]
      %v5710 = vld [vmem:[#allocation3 + $0x74] sm:$0xf]
      %v5711 = vld [vmem:[#allocation3 + $0x78] sm:$0xf]
      %v5712 = vld [vmem:[#allocation3 + $0x7c] sm:$0xf]
      %v5713 = vld [vmem:[#allocation3 + $0x80] sm:$0xf]
      %v5714 = vld [vmem:[#allocation3 + $0x84] sm:$0xf]
      %v5715 = vld [vmem:[#allocation3 + $0x88] sm:$0xf]
      %v5716 = vld [vmem:[#allocation3 + $0x8c] sm:$0xf]
      %v5717 = vld [vmem:[#allocation3 + $0x90] sm:$0xf]
      %v5718 = vld [vmem:[#allocation3 + $0x94] sm:$0xf]
      %v5719 = vld [vmem:[#allocation3 + $0x98] sm:$0xf]
      %v5720 = vld [vmem:[#allocation3 + $0x9c] sm:$0xf]
      %v5721 = vld [vmem:[#allocation3 + $0xa0] sm:$0xf]
      %v5722 = vld [vmem:[#allocation3 + $0xa4] sm:$0xf]
      %v5723 = vld [vmem:[#allocation3 + $0xa8] sm:$0xf]
      %v5724 = vld [vmem:[#allocation3 + $0xac] sm:$0xf]
      %v5725 = vld [vmem:[#allocation3 + $0xb0] sm:$0xf]
      %v5726 = vld [vmem:[#allocation3 + $0xb4] sm:$0xf]
      %v5727 = vld [vmem:[#allocation3 + $0xb8] sm:$0xf]
      %v5728 = vld [vmem:[#allocation3 + $0xbc] sm:$0xf]
      %v5729 = vld [vmem:[%s3] sm:$0xf]
      %v5730 = vld [vmem:[%s3 + $0x4] sm:$0xf]
      %v5731 = vld [vmem:[%s3 + $0x8] sm:$0xf]
      %v5732 = vld [vmem:[%s3 + $0xc] sm:$0xf]
      %v5733 = vld [vmem:[%s3 + $0x10] sm:$0xf]
      %v5734 = vld [vmem:[%s3 + $0x14] sm:$0xf]
      %v5735 = vld [vmem:[%s3 + $0x18] sm:$0xf]
      %v5736 = vld [vmem:[%s3 + $0x1c] sm:$0xf]
      %v5737 = vld [vmem:[%s3 + $0x20] sm:$0xf]
      %v5738 = vld [vmem:[%s3 + $0x24] sm:$0xf]
      %v5739 = vld [vmem:[%s3 + $0x28] sm:$0xf]
      %v5740 = vld [vmem:[%s3 + $0x2c] sm:$0xf]
      %v5741 = vld [vmem:[%s3 + $0x30] sm:$0xf]
      %v5742 = vld [vmem:[%s3 + $0x34] sm:$0xf]
      %v5743 = vld [vmem:[%s3 + $0x38] sm:$0xf]
      %v5744 = vld [vmem:[%s3 + $0x3c] sm:$0xf]
      %v5793 = vunpack.c.l.b16 %v5681
      %v5794 = vunpack.c.l.b16 %v5682
      %v5795 = vunpack.c.l.b16 %v5683
      %v5796 = vunpack.c.l.b16 %v5684
      %v5797 = vunpack.c.l.b16 %v5685
      %v5798 = vunpack.c.l.b16 %v5686
      %v5799 = vunpack.c.l.b16 %v5687
      %v5800 = vunpack.c.l.b16 %v5688
      %v5801 = vunpack.c.l.b16 %v5689
      %v5802 = vunpack.c.l.b16 %v5690
      %v5803 = vunpack.c.l.b16 %v5691
      %v5804 = vunpack.c.l.b16 %v5692
      %v5805 = vunpack.c.l.b16 %v5693
      %v5806 = vunpack.c.l.b16 %v5694
      %v5807 = vunpack.c.l.b16 %v5695
      %v5808 = vunpack.c.l.b16 %v5696
      %v5809 = vunpack.c.l.b16 %v5697
      %v5810 = vunpack.c.l.b16 %v5698
      %v5811 = vunpack.c.l.b16 %v5699
      %v5812 = vunpack.c.l.b16 %v5700
      %v5813 = vunpack.c.l.b16 %v5701
      %v5814 = vunpack.c.l.b16 %v5702
      %v5815 = vunpack.c.l.b16 %v5703
      %v5816 = vunpack.c.l.b16 %v5704
      %v5817 = vunpack.c.l.b16 %v5705
      %v5818 = vunpack.c.l.b16 %v5706
      %v5819 = vunpack.c.l.b16 %v5707
      %v5820 = vunpack.c.l.b16 %v5708
      %v5821 = vunpack.c.l.b16 %v5709
      %v5822 = vunpack.c.l.b16 %v5710
      %v5823 = vunpack.c.l.b16 %v5711
      %v5824 = vunpack.c.l.b16 %v5712
      %v5825 = vunpack.c.l.b16 %v5713
      %v5826 = vunpack.c.l.b16 %v5714
      %v5827 = vunpack.c.l.b16 %v5715
      %v5828 = vunpack.c.l.b16 %v5716
      %v5829 = vunpack.c.l.b16 %v5717
      %v5830 = vunpack.c.l.b16 %v5718
      %v5831 = vunpack.c.l.b16 %v5719
      %v5832 = vunpack.c.l.b16 %v5720
      %v5833 = vunpack.c.l.b16 %v5721
      %v5834 = vunpack.c.l.b16 %v5722
      %v5835 = vunpack.c.l.b16 %v5723
      %v5836 = vunpack.c.l.b16 %v5724
      %v5837 = vunpack.c.l.b16 %v5725
      %v5838 = vunpack.c.l.b16 %v5726
      %v5839 = vunpack.c.l.b16 %v5727
      %v5840 = vunpack.c.l.b16 %v5728
      %v5841 = vpack.c.b16 %v5794, %v5793
      %v5842 = vpack.c.b16 %v5796, %v5795
      %v5843 = vpack.c.b16 %v5798, %v5797
      %v5844 = vpack.c.b16 %v5800, %v5799
      %v5845 = vpack.c.b16 %v5802, %v5801
      %v5846 = vpack.c.b16 %v5804, %v5803
      %v5847 = vpack.c.b16 %v5806, %v5805
      %v5848 = vpack.c.b16 %v5808, %v5807
      %v5849 = vpack.c.b16 %v5810, %v5809
      %v5850 = vpack.c.b16 %v5812, %v5811
      %v5851 = vpack.c.b16 %v5814, %v5813
      %v5852 = vpack.c.b16 %v5816, %v5815
      %v5853 = vpack.c.b16 %v5818, %v5817
      %v5854 = vpack.c.b16 %v5820, %v5819
      %v5855 = vpack.c.b16 %v5822, %v5821
      %v5856 = vpack.c.b16 %v5824, %v5823
      %v5857 = vpack.c.b16 %v5826, %v5825
      %v5858 = vpack.c.b16 %v5828, %v5827
      %v5859 = vpack.c.b16 %v5830, %v5829
      %v5860 = vpack.c.b16 %v5832, %v5831
      %v5861 = vpack.c.b16 %v5834, %v5833
      %v5862 = vpack.c.b16 %v5836, %v5835
      %v5863 = vpack.c.b16 %v5838, %v5837
      %v5864 = vpack.c.b16 %v5840, %v5839
      %v5905 = vunpack.c.l.b16 %v5729
      %v5906 = vunpack.c.l.b16 %v5730
      %v5907 = vunpack.c.l.b16 %v5731
      %v5908 = vunpack.c.l.b16 %v5732
      %v5909 = vunpack.c.l.b16 %v5733
      %v5910 = vunpack.c.l.b16 %v5734
      %v5911 = vunpack.c.l.b16 %v5735
      %v5912 = vunpack.c.l.b16 %v5736
      %v5913 = vunpack.c.l.b16 %v5737
      %v5914 = vunpack.c.l.b16 %v5738
      %v5915 = vunpack.c.l.b16 %v5739
      %v5916 = vunpack.c.l.b16 %v5740
      %v5917 = vunpack.c.l.b16 %v5741
      %v5918 = vunpack.c.l.b16 %v5742
      %v5919 = vunpack.c.l.b16 %v5743
      %v5920 = vunpack.c.l.b16 %v5744
      %v5921 = vpack.c.b16 %v5906, %v5905
      %v5922 = vpack.c.b16 %v5908, %v5907
      %v5923 = vpack.c.b16 %v5910, %v5909
      %v5924 = vpack.c.b16 %v5912, %v5911
      %v5925 = vpack.c.b16 %v5914, %v5913
      %v5926 = vpack.c.b16 %v5916, %v5915
      %v5927 = vpack.c.b16 %v5918, %v5917
      %v5928 = vpack.c.b16 %v5920, %v5919
      %5937 = vmatprep.subr.bf16.mxu0 0
      %5938 = vmatpush1.bf16.msra.mxu0 %v5921
      %5939 = vmatprep.subr.bf16.mxu0 0
      %5940 = vmatpush1.bf16.msra.mxu0 %v5922
      %5941 = vmatprep.subr.bf16.mxu0 0
      %5942 = vmatpush1.bf16.msra.mxu0 %v5923
      %5943 = vmatprep.subr.bf16.mxu0 0
      %5944 = vmatpush1.bf16.msra.mxu0 %v5924
      %5945 = vmatprep.subr.bf16.mxu0 0
      %5946 = vmatpush1.bf16.msra.mxu0 %v5925
      %5947 = vmatprep.subr.bf16.mxu0 0
      %5948 = vmatpush1.bf16.msra.mxu0 %v5926
      %5949 = vmatprep.subr.bf16.mxu0 0
      %5950 = vmatpush1.bf16.msra.mxu0 %v5927
      %5951 = vmatprep.subr.bf16.mxu0 0
      %5952 = vmatpush1.bf16.msra.mxu0 %v5928
      %5953 = vmatprep.subr.bf16.mxu0 0
      %5954 = vmatpush1.bf16.msra.mxu0 0
      %5955 = vmatprep.subr.bf16.mxu0 0
      %5956 = vmatpush1.bf16.msra.mxu0 0
      %5957 = vmatprep.subr.bf16.mxu0 0
      %5958 = vmatpush1.bf16.msra.mxu0 0
      %5959 = vmatprep.subr.bf16.mxu0 0
      %5960 = vmatpush1.bf16.msra.mxu0 0
      %5961 = vmatprep.subr.bf16.mxu0 0
      %5962 = vmatpush1.bf16.msra.mxu0 0
      %5963 = vmatprep.subr.bf16.mxu0 0
      %5964 = vmatpush1.bf16.msra.mxu0 0
      %5965 = vmatprep.subr.bf16.mxu0 0
      %5966 = vmatpush1.bf16.msra.mxu0 0
      %5967 = vmatprep.subr.bf16.mxu0 0
      %5968 = vmatpush1.bf16.msra.mxu0 0
      %5969 = vmatprep.mubr.bf16.mxu0 0
      %5970 = vmatmul.mubr.bf16.gmra.mrb[0].mxu0 %v5841
      %v5971 = vpop.f32.mrb[0].mxu0
      %v5972 = vadd.f32 0.0, %v5971
      %v5973 = vpop.f32.mrb[0].mxu0
      %v5974 = vpop.f32.mrb[0].mxu0
      %v5975 = vadd.f32 0.0, %v5974
      %v5976 = vpop.f32.mrb[0].mxu0
      %5977 = vmatprep.mubr.bf16.mxu0 0
      %5978 = vmatmul.mubr.bf16.gmra.mrb[0].mxu0 %v5842
      %v5979 = vpop.f32.mrb[0].mxu0
      %v5980 = vadd.f32 0.0, %v5979
      %v5981 = vpop.f32.mrb[0].mxu0
      %v5982 = vpop.f32.mrb[0].mxu0
      %v5983 = vadd.f32 0.0, %v5982
      %v5984 = vpop.f32.mrb[0].mxu0
      %5985 = vmatprep.mubr.bf16.mxu0 0
      %5986 = vmatmul.mubr.bf16.gmra.mrb[0].mxu0 %v5843
      %v5987 = vpop.f32.mrb[0].mxu0
      %v5988 = vadd.f32 0.0, %v5987
      %v5989 = vpop.f32.mrb[0].mxu0
      %v5990 = vpop.f32.mrb[0].mxu0
      %v5991 = vadd.f32 0.0, %v5990
      %v5992 = vpop.f32.mrb[0].mxu0
      %5993 = vmatprep.mubr.bf16.mxu0 0
      %5994 = vmatmul.mubr.bf16.gmra.mrb[0].mxu0 %v5844
      %v5995 = vpop.f32.mrb[0].mxu0
      %v5996 = vadd.f32 0.0, %v5995
      %v5997 = vpop.f32.mrb[0].mxu0
      %v5998 = vpop.f32.mrb[0].mxu0
      %v5999 = vadd.f32 0.0, %v5998
      %v6000 = vpop.f32.mrb[0].mxu0
      %6001 = vmatprep.mubr.bf16.mxu0 0
      %6002 = vmatmul.mubr.bf16.gmra.mrb[0].mxu0 %v5845
      %v6003 = vpop.f32.mrb[0].mxu0
      %v6004 = vadd.f32 0.0, %v6003
      %v6005 = vpop.f32.mrb[0].mxu0
      %v6006 = vpop.f32.mrb[0].mxu0
      %v6007 = vadd.f32 0.0, %v6006
      %v6008 = vpop.f32.mrb[0].mxu0
      %6009 = vmatprep.mubr.bf16.mxu0 0
      %6010 = vmatmul.mubr.bf16.gmra.mrb[0].mxu0 %v5846
      %v6011 = vpop.f32.mrb[0].mxu0
      %v6012 = vadd.f32 0.0, %v6011
      %v6013 = vpop.f32.mrb[0].mxu0
      %v6014 = vpop.f32.mrb[0].mxu0
      %v6015 = vadd.f32 0.0, %v6014
      %v6016 = vpop.f32.mrb[0].mxu0
      %6017 = vmatprep.mubr.bf16.mxu0 0
      %6018 = vmatmul.mubr.bf16.gmra.mrb[0].mxu0 %v5847
      %v6019 = vpop.f32.mrb[0].mxu0
      %v6020 = vadd.f32 0.0, %v6019
      %v6021 = vpop.f32.mrb[0].mxu0
      %v6022 = vpop.f32.mrb[0].mxu0
      %v6023 = vadd.f32 0.0, %v6022
      %v6024 = vpop.f32.mrb[0].mxu0
      %6025 = vmatprep.mubr.bf16.mxu0 0
      %6026 = vmatmul.mubr.bf16.gmra.mrb[0].mxu0 %v5848
      %v6027 = vpop.f32.mrb[0].mxu0
      %v6028 = vadd.f32 0.0, %v6027
      %v6029 = vpop.f32.mrb[0].mxu0
      %v6030 = vpop.f32.mrb[0].mxu0
      %v6031 = vadd.f32 0.0, %v6030
      %v6032 = vpop.f32.mrb[0].mxu0
      %6033 = vmatprep.mubr.bf16.mxu0 0
      %6034 = vmatmul.mubr.bf16.gmra.mrb[0].mxu0 %v5849
      %v6035 = vpop.f32.mrb[0].mxu0
      %v6036 = vadd.f32 0.0, %v6035
      %v6037 = vpop.f32.mrb[0].mxu0
      %v6038 = vpop.f32.mrb[0].mxu0
      %v6039 = vadd.f32 0.0, %v6038
      %v6040 = vpop.f32.mrb[0].mxu0
      %6041 = vmatprep.mubr.bf16.mxu0 0
      %6042 = vmatmul.mubr.bf16.gmra.mrb[0].mxu0 %v5850
      %v6043 = vpop.f32.mrb[0].mxu0
      %v6044 = vadd.f32 0.0, %v6043
      %v6045 = vpop.f32.mrb[0].mxu0
      %v6046 = vpop.f32.mrb[0].mxu0
      %v6047 = vadd.f32 0.0, %v6046
      %v6048 = vpop.f32.mrb[0].mxu0
      %6049 = vmatprep.mubr.bf16.mxu0 0
      %6050 = vmatmul.mubr.bf16.gmra.mrb[0].mxu0 %v5851
      %v6051 = vpop.f32.mrb[0].mxu0
      %v6052 = vadd.f32 0.0, %v6051
      %v6053 = vpop.f32.mrb[0].mxu0
      %v6054 = vpop.f32.mrb[0].mxu0
      %v6055 = vadd.f32 0.0, %v6054
      %v6056 = vpop.f32.mrb[0].mxu0
      %6057 = vmatprep.mubr.bf16.mxu0 0
      %6058 = vmatmul.mubr.bf16.gmra.mrb[0].mxu0 %v5852
      %v6059 = vpop.f32.mrb[0].mxu0
      %v6060 = vadd.f32 0.0, %v6059
      %v6061 = vpop.f32.mrb[0].mxu0
      %v6062 = vpop.f32.mrb[0].mxu0
      %v6063 = vadd.f32 0.0, %v6062
      %v6064 = vpop.f32.mrb[0].mxu0
      %6065 = vmatprep.mubr.bf16.mxu0 0
      %6066 = vmatmul.mubr.bf16.gmra.mrb[0].mxu0 %v5853
      %v6067 = vpop.f32.mrb[0].mxu0
      %v6068 = vadd.f32 0.0, %v6067
      %v6069 = vpop.f32.mrb[0].mxu0
      %v6070 = vpop.f32.mrb[0].mxu0
      %v6071 = vadd.f32 0.0, %v6070
      %v6072 = vpop.f32.mrb[0].mxu0
      %6073 = vmatprep.mubr.bf16.mxu0 0
      %6074 = vmatmul.mubr.bf16.gmra.mrb[0].mxu0 %v5854
      %v6075 = vpop.f32.mrb[0].mxu0
      %v6076 = vadd.f32 0.0, %v6075
      %v6077 = vpop.f32.mrb[0].mxu0
      %v6078 = vpop.f32.mrb[0].mxu0
      %v6079 = vadd.f32 0.0, %v6078
      %v6080 = vpop.f32.mrb[0].mxu0
      %6081 = vmatprep.mubr.bf16.mxu0 0
      %6082 = vmatmul.mubr.bf16.gmra.mrb[0].mxu0 %v5855
      %v6083 = vpop.f32.mrb[0].mxu0
      %v6084 = vadd.f32 0.0, %v6083
      %v6085 = vpop.f32.mrb[0].mxu0
      %v6086 = vpop.f32.mrb[0].mxu0
      %v6087 = vadd.f32 0.0, %v6086
      %v6088 = vpop.f32.mrb[0].mxu0
      %6089 = vmatprep.mubr.bf16.mxu0 0
      %6090 = vmatmul.mubr.bf16.gmra.mrb[0].mxu0 %v5856
      %v6091 = vpop.f32.mrb[0].mxu0
      %v6092 = vadd.f32 0.0, %v6091
      %v6093 = vpop.f32.mrb[0].mxu0
      %v6094 = vpop.f32.mrb[0].mxu0
      %v6095 = vadd.f32 0.0, %v6094
      %v6096 = vpop.f32.mrb[0].mxu0
      %6097 = vmatprep.mubr.bf16.mxu0 0
      %6098 = vmatmul.mubr.bf16.gmra.mrb[0].mxu0 %v5857
      %v6099 = vpop.f32.mrb[0].mxu0
      %v6100 = vadd.f32 0.0, %v6099
      %v6101 = vpop.f32.mrb[0].mxu0
      %v6102 = vpop.f32.mrb[0].mxu0
      %v6103 = vadd.f32 0.0, %v6102
      %v6104 = vpop.f32.mrb[0].mxu0
      %6105 = vmatprep.mubr.bf16.mxu0 0
      %6106 = vmatmul.mubr.bf16.gmra.mrb[0].mxu0 %v5858
      %v6107 = vpop.f32.mrb[0].mxu0
      %v6108 = vadd.f32 0.0, %v6107
      %v6109 = vpop.f32.mrb[0].mxu0
      %v6110 = vpop.f32.mrb[0].mxu0
      %v6111 = vadd.f32 0.0, %v6110
      %v6112 = vpop.f32.mrb[0].mxu0
      %6113 = vmatprep.mubr.bf16.mxu0 0
      %6114 = vmatmul.mubr.bf16.gmra.mrb[0].mxu0 %v5859
      %v6115 = vpop.f32.mrb[0].mxu0
      %v6116 = vadd.f32 0.0, %v6115
      %v6117 = vpop.f32.mrb[0].mxu0
      %v6118 = vpop.f32.mrb[0].mxu0
      %v6119 = vadd.f32 0.0, %v6118
      %v6120 = vpop.f32.mrb[0].mxu0
      %6121 = vmatprep.mubr.bf16.mxu0 0
      %6122 = vmatmul.mubr.bf16.gmra.mrb[0].mxu0 %v5860
      %v6123 = vpop.f32.mrb[0].mxu0
      %v6124 = vadd.f32 0.0, %v6123
      %v6125 = vpop.f32.mrb[0].mxu0
      %v6126 = vpop.f32.mrb[0].mxu0
      %v6127 = vadd.f32 0.0, %v6126
      %v6128 = vpop.f32.mrb[0].mxu0
      %6129 = vmatprep.mubr.bf16.mxu0 0
      %6130 = vmatmul.mubr.bf16.gmra.mrb[0].mxu0 %v5861
      %v6131 = vpop.f32.mrb[0].mxu0
      %v6132 = vadd.f32 0.0, %v6131
      %v6133 = vpop.f32.mrb[0].mxu0
      %v6134 = vpop.f32.mrb[0].mxu0
      %v6135 = vadd.f32 0.0, %v6134
      %v6136 = vpop.f32.mrb[0].mxu0
      %6137 = vmatprep.mubr.bf16.mxu0 0
      %6138 = vmatmul.mubr.bf16.gmra.mrb[0].mxu0 %v5862
      %v6139 = vpop.f32.mrb[0].mxu0
      %v6140 = vadd.f32 0.0, %v6139
      %v6141 = vpop.f32.mrb[0].mxu0
      %v6142 = vpop.f32.mrb[0].mxu0
      %v6143 = vadd.f32 0.0, %v6142
      %v6144 = vpop.f32.mrb[0].mxu0
      %6145 = vmatprep.mubr.bf16.mxu0 0
      %6146 = vmatmul.mubr.bf16.gmra.mrb[0].mxu0 %v5863
      %v6147 = vpop.f32.mrb[0].mxu0
      %v6148 = vadd.f32 0.0, %v6147
      %v6149 = vpop.f32.mrb[0].mxu0
      %v6150 = vpop.f32.mrb[0].mxu0
      %v6151 = vadd.f32 0.0, %v6150
      %v6152 = vpop.f32.mrb[0].mxu0
      %6153 = vmatprep.mubr.bf16.mxu0 0
      %6154 = vmatmul.mubr.bf16.gmra.mrb[0].mxu0 %v5864
      %v6155 = vpop.f32.mrb[0].mxu0
      %v6156 = vadd.f32 0.0, %v6155
      %v6157 = vpop.f32.mrb[0].mxu0
      %v6158 = vpop.f32.mrb[0].mxu0
      %v6159 = vadd.f32 0.0, %v6158
      %v6160 = vpop.f32.mrb[0].mxu0
      %6161 = vdwg.mxu0
      %6162 = vst [vmem:[#allocation2] sm:$0xff] %v5972
      %6163 = vst [vmem:[#allocation2 + $0x8] sm:$0xff] %v5975
      %6164 = vst [vmem:[#allocation2 + $0x10] sm:$0xff] %v5980
      %6165 = vst [vmem:[#allocation2 + $0x18] sm:$0xff] %v5983
      %6166 = vst [vmem:[#allocation2 + $0x20] sm:$0xff] %v5988
      %6167 = vst [vmem:[#allocation2 + $0x28] sm:$0xff] %v5991
      %6168 = vst [vmem:[#allocation2 + $0x30] sm:$0xff] %v5996
      %6169 = vst [vmem:[#allocation2 + $0x38] sm:$0xff] %v5999
      %6170 = vst [vmem:[#allocation2 + $0x40] sm:$0xff] %v6004
      %6171 = vst [vmem:[#allocation2 + $0x48] sm:$0xff] %v6007
      %6172 = vst [vmem:[#allocation2 + $0x50] sm:$0xff] %v6012
      %6173 = vst [vmem:[#allocation2 + $0x58] sm:$0xff] %v6015
      %6174 = vst [vmem:[#allocation2 + $0x60] sm:$0xff] %v6020
      %6175 = vst [vmem:[#allocation2 + $0x68] sm:$0xff] %v6023
      %6176 = vst [vmem:[#allocation2 + $0x70] sm:$0xff] %v6028
      %6177 = vst [vmem:[#allocation2 + $0x78] sm:$0xff] %v6031
      %6178 = vst [vmem:[#allocation2 + $0x80] sm:$0xff] %v6036
      %6179 = vst [vmem:[#allocation2 + $0x88] sm:$0xff] %v6039
      %6180 = vst [vmem:[#allocation2 + $0x90] sm:$0xff] %v6044
      %6181 = vst [vmem:[#allocation2 + $0x98] sm:$0xff] %v6047
      %6182 = vst [vmem:[#allocation2 + $0xa0] sm:$0xff] %v6052
      %6183 = vst [vmem:[#allocation2 + $0xa8] sm:$0xff] %v6055
      %6184 = vst [vmem:[#allocation2 + $0xb0] sm:$0xff] %v6060
      %6185 = vst [vmem:[#allocation2 + $0xb8] sm:$0xff] %v6063
      %6186 = vst [vmem:[#allocation2 + $0xc0] sm:$0xff] %v6068
      %6187 = vst [vmem:[#allocation2 + $0xc8] sm:$0xff] %v6071
      %6188 = vst [vmem:[#allocation2 + $0xd0] sm:$0xff] %v6076
      %6189 = vst [vmem:[#allocation2 + $0xd8] sm:$0xff] %v6079
      %6190 = vst [vmem:[#allocation2 + $0xe0] sm:$0xff] %v6084
      %6191 = vst [vmem:[#allocation2 + $0xe8] sm:$0xff] %v6087
      %6192 = vst [vmem:[#allocation2 + $0xf0] sm:$0xff] %v6092
      %6193 = vst [vmem:[#allocation2 + $0xf8] sm:$0xff] %v6095
      %6194 = vst [vmem:[#allocation2 + $0x100] sm:$0xff] %v6100
      %6195 = vst [vmem:[#allocation2 + $0x108] sm:$0xff] %v6103
      %6196 = vst [vmem:[#allocation2 + $0x110] sm:$0xff] %v6108
      %6197 = vst [vmem:[#allocation2 + $0x118] sm:$0xff] %v6111
      %6198 = vst [vmem:[#allocation2 + $0x120] sm:$0xff] %v6116
      %6199 = vst [vmem:[#allocation2 + $0x128] sm:$0xff] %v6119
      %6200 = vst [vmem:[#allocation2 + $0x130] sm:$0xff] %v6124
      %6201 = vst [vmem:[#allocation2 + $0x138] sm:$0xff] %v6127
      %6202 = vst [vmem:[#allocation2 + $0x140] sm:$0xff] %v6132
      %6203 = vst [vmem:[#allocation2 + $0x148] sm:$0xff] %v6135
      %6204 = vst [vmem:[#allocation2 + $0x150] sm:$0xff] %v6140
      %6205 = vst [vmem:[#allocation2 + $0x158] sm:$0xff] %v6143
      %6206 = vst [vmem:[#allocation2 + $0x160] sm:$0xff] %v6148
      %6207 = vst [vmem:[#allocation2 + $0x168] sm:$0xff] %v6151
      %6208 = vst [vmem:[#allocation2 + $0x170] sm:$0xff] %v6156
      %6209 = vst [vmem:[#allocation2 + $0x178] sm:$0xff] %v6159
      %s6210 = scalar_lea.vmem %s3, 64
      %v6211 = vld [vmem:[%s6210] sm:$0xf]
      %v6212 = vld [vmem:[%s6210 + $0x4] sm:$0xf]
      %v6213 = vld [vmem:[%s6210 + $0x8] sm:$0xf]
      %v6214 = vld [vmem:[%s6210 + $0xc] sm:$0xf]
      %v6215 = vld [vmem:[%s6210 + $0x10] sm:$0xf]
      %v6216 = vld [vmem:[%s6210 + $0x14] sm:$0xf]
      %v6217 = vld [vmem:[%s6210 + $0x18] sm:$0xf]
      %v6218 = vld [vmem:[%s6210 + $0x1c] sm:$0xf]
      %v6219 = vld [vmem:[%s6210 + $0x20] sm:$0xf]
      %v6220 = vld [vmem:[%s6210 + $0x24] sm:$0xf]
      %v6221 = vld [vmem:[%s6210 + $0x28] sm:$0xf]
      %v6222 = vld [vmem:[%s6210 + $0x2c] sm:$0xf]
      %v6223 = vld [vmem:[%s6210 + $0x30] sm:$0xf]
      %v6224 = vld [vmem:[%s6210 + $0x34] sm:$0xf]
      %v6225 = vld [vmem:[%s6210 + $0x38] sm:$0xf]
      %v6226 = vld [vmem:[%s6210 + $0x3c] sm:$0xf]
      %v6243 = vunpack.c.l.b16 %v6211
      %v6244 = vunpack.c.l.b16 %v6212
      %v6245 = vunpack.c.l.b16 %v6213
      %v6246 = vunpack.c.l.b16 %v6214
      %v6247 = vunpack.c.l.b16 %v6215
      %v6248 = vunpack.c.l.b16 %v6216
      %v6249 = vunpack.c.l.b16 %v6217
      %v6250 = vunpack.c.l.b16 %v6218
      %v6251 = vunpack.c.l.b16 %v6219
      %v6252 = vunpack.c.l.b16 %v6220
      %v6253 = vunpack.c.l.b16 %v6221
      %v6254 = vunpack.c.l.b16 %v6222
      %v6255 = vunpack.c.l.b16 %v6223
      %v6256 = vunpack.c.l.b16 %v6224
      %v6257 = vunpack.c.l.b16 %v6225
      %v6258 = vunpack.c.l.b16 %v6226
      %v6259 = vpack.c.b16 %v6244, %v6243
      %v6260 = vpack.c.b16 %v6246, %v6245
      %v6261 = vpack.c.b16 %v6248, %v6247
      %v6262 = vpack.c.b16 %v6250, %v6249
      %v6263 = vpack.c.b16 %v6252, %v6251
      %v6264 = vpack.c.b16 %v6254, %v6253
      %v6265 = vpack.c.b16 %v6256, %v6255
      %v6266 = vpack.c.b16 %v6258, %v6257
      %6275 = vmatprep.subr.bf16.mxu0 0
      %6276 = vmatpush1.bf16.msra.mxu0 %v6259
      %6277 = vmatprep.subr.bf16.mxu0 0
      %6278 = vmatpush1.bf16.msra.mxu0 %v6260
      %6279 = vmatprep.subr.bf16.mxu0 0
      %6280 = vmatpush1.bf16.msra.mxu0 %v6261
      %6281 = vmatprep.subr.bf16.mxu0 0
      %6282 = vmatpush1.bf16.msra.mxu0 %v6262
      %6283 = vmatprep.subr.bf16.mxu0 0
      %6284 = vmatpush1.bf16.msra.mxu0 %v6263
      %6285 = vmatprep.subr.bf16.mxu0 0
      %6286 = vmatpush1.bf16.msra.mxu0 %v6264
      %6287 = vmatprep.subr.bf16.mxu0 0
      %6288 = vmatpush1.bf16.msra.mxu0 %v6265
      %6289 = vmatprep.subr.bf16.mxu0 0
      %6290 = vmatpush1.bf16.msra.mxu0 %v6266
      %6291 = vmatprep.subr.bf16.mxu0 0
      %6292 = vmatpush1.bf16.msra.mxu0 0
      %6293 = vmatprep.subr.bf16.mxu0 0
      %6294 = vmatpush1.bf16.msra.mxu0 0
      %6295 = vmatprep.subr.bf16.mxu0 0
      %6296 = vmatpush1.bf16.msra.mxu0 0
      %6297 = vmatprep.subr.bf16.mxu0 0
      %6298 = vmatpush1.bf16.msra.mxu0 0
      %6299 = vmatprep.subr.bf16.mxu0 0
      %6300 = vmatpush1.bf16.msra.mxu0 0
      %6301 = vmatprep.subr.bf16.mxu0 0
      %6302 = vmatpush1.bf16.msra.mxu0 0
      %6303 = vmatprep.subr.bf16.mxu0 0
      %6304 = vmatpush1.bf16.msra.mxu0 0
      %6305 = vmatprep.subr.bf16.mxu0 0
      %6306 = vmatpush1.bf16.msra.mxu0 0
      %6307 = vmatprep.mubr.bf16.mxu0 0
      %6308 = vmatmul.mubr.bf16.gmra.mrb[0].mxu0 %v5841
      %v6309 = vpop.f32.mrb[0].mxu0
      %v6310 = vadd.f32 0.0, %v6309
      %v6311 = vpop.f32.mrb[0].mxu0
      %v6312 = vpop.f32.mrb[0].mxu0
      %v6313 = vadd.f32 0.0, %v6312
      %v6314 = vpop.f32.mrb[0].mxu0
      %6315 = vmatprep.mubr.bf16.mxu0 0
      %6316 = vmatmul.mubr.bf16.gmra.mrb[0].mxu0 %v5842
      %v6317 = vpop.f32.mrb[0].mxu0
      %v6318 = vadd.f32 0.0, %v6317
      %v6319 = vpop.f32.mrb[0].mxu0
      %v6320 = vpop.f32.mrb[0].mxu0
      %v6321 = vadd.f32 0.0, %v6320
      %v6322 = vpop.f32.mrb[0].mxu0
      %6323 = vmatprep.mubr.bf16.mxu0 0
      %6324 = vmatmul.mubr.bf16.gmra.mrb[0].mxu0 %v5843
      %v6325 = vpop.f32.mrb[0].mxu0
      %v6326 = vadd.f32 0.0, %v6325
      %v6327 = vpop.f32.mrb[0].mxu0
      %v6328 = vpop.f32.mrb[0].mxu0
      %v6329 = vadd.f32 0.0, %v6328
      %v6330 = vpop.f32.mrb[0].mxu0
      %6331 = vmatprep.mubr.bf16.mxu0 0
      %6332 = vmatmul.mubr.bf16.gmra.mrb[0].mxu0 %v5844
      %v6333 = vpop.f32.mrb[0].mxu0
      %v6334 = vadd.f32 0.0, %v6333
      %v6335 = vpop.f32.mrb[0].mxu0
      %v6336 = vpop.f32.mrb[0].mxu0
      %v6337 = vadd.f32 0.0, %v6336
      %v6338 = vpop.f32.mrb[0].mxu0
      %6339 = vmatprep.mubr.bf16.mxu0 0
      %6340 = vmatmul.mubr.bf16.gmra.mrb[0].mxu0 %v5845
      %v6341 = vpop.f32.mrb[0].mxu0
      %v6342 = vadd.f32 0.0, %v6341
      %v6343 = vpop.f32.mrb[0].mxu0
      %v6344 = vpop.f32.mrb[0].mxu0
      %v6345 = vadd.f32 0.0, %v6344
      %v6346 = vpop.f32.mrb[0].mxu0
      %6347 = vmatprep.mubr.bf16.mxu0 0
      %6348 = vmatmul.mubr.bf16.gmra.mrb[0].mxu0 %v5846
      %v6349 = vpop.f32.mrb[0].mxu0
      %v6350 = vadd.f32 0.0, %v6349
      %v6351 = vpop.f32.mrb[0].mxu0
      %v6352 = vpop.f32.mrb[0].mxu0
      %v6353 = vadd.f32 0.0, %v6352
      %v6354 = vpop.f32.mrb[0].mxu0
      %6355 = vmatprep.mubr.bf16.mxu0 0
      %6356 = vmatmul.mubr.bf16.gmra.mrb[0].mxu0 %v5847
      %v6357 = vpop.f32.mrb[0].mxu0
      %v6358 = vadd.f32 0.0, %v6357
      %v6359 = vpop.f32.mrb[0].mxu0
      %v6360 = vpop.f32.mrb[0].mxu0
      %v6361 = vadd.f32 0.0, %v6360
      %v6362 = vpop.f32.mrb[0].mxu0
      %6363 = vmatprep.mubr.bf16.mxu0 0
      %6364 = vmatmul.mubr.bf16.gmra.mrb[0].mxu0 %v5848
      %v6365 = vpop.f32.mrb[0].mxu0
      %v6366 = vadd.f32 0.0, %v6365
      %v6367 = vpop.f32.mrb[0].mxu0
      %v6368 = vpop.f32.mrb[0].mxu0
      %v6369 = vadd.f32 0.0, %v6368
      %v6370 = vpop.f32.mrb[0].mxu0
      %6371 = vmatprep.mubr.bf16.mxu0 0
      %6372 = vmatmul.mubr.bf16.gmra.mrb[0].mxu0 %v5849
      %v6373 = vpop.f32.mrb[0].mxu0
      %v6374 = vadd.f32 0.0, %v6373
      %v6375 = vpop.f32.mrb[0].mxu0
      %v6376 = vpop.f32.mrb[0].mxu0
      %v6377 = vadd.f32 0.0, %v6376
      %v6378 = vpop.f32.mrb[0].mxu0
      %6379 = vmatprep.mubr.bf16.mxu0 0
      %6380 = vmatmul.mubr.bf16.gmra.mrb[0].mxu0 %v5850
      %v6381 = vpop.f32.mrb[0].mxu0
      %v6382 = vadd.f32 0.0, %v6381
      %v6383 = vpop.f32.mrb[0].mxu0
      %v6384 = vpop.f32.mrb[0].mxu0
      %v6385 = vadd.f32 0.0, %v6384
      %v6386 = vpop.f32.mrb[0].mxu0
      %6387 = vmatprep.mubr.bf16.mxu0 0
      %6388 = vmatmul.mubr.bf16.gmra.mrb[0].mxu0 %v5851
      %v6389 = vpop.f32.mrb[0].mxu0
      %v6390 = vadd.f32 0.0, %v6389
      %v6391 = vpop.f32.mrb[0].mxu0
      %v6392 = vpop.f32.mrb[0].mxu0
      %v6393 = vadd.f32 0.0, %v6392
      %v6394 = vpop.f32.mrb[0].mxu0
      %6395 = vmatprep.mubr.bf16.mxu0 0
      %6396 = vmatmul.mubr.bf16.gmra.mrb[0].mxu0 %v5852
      %v6397 = vpop.f32.mrb[0].mxu0
      %v6398 = vadd.f32 0.0, %v6397
      %v6399 = vpop.f32.mrb[0].mxu0
      %v6400 = vpop.f32.mrb[0].mxu0
      %v6401 = vadd.f32 0.0, %v6400
      %v6402 = vpop.f32.mrb[0].mxu0
      %6403 = vmatprep.mubr.bf16.mxu0 0
      %6404 = vmatmul.mubr.bf16.gmra.mrb[0].mxu0 %v5853
      %v6405 = vpop.f32.mrb[0].mxu0
      %v6406 = vadd.f32 0.0, %v6405
      %v6407 = vpop.f32.mrb[0].mxu0
      %v6408 = vpop.f32.mrb[0].mxu0
      %v6409 = vadd.f32 0.0, %v6408
      %v6410 = vpop.f32.mrb[0].mxu0
      %6411 = vmatprep.mubr.bf16.mxu0 0
      %6412 = vmatmul.mubr.bf16.gmra.mrb[0].mxu0 %v5854
      %v6413 = vpop.f32.mrb[0].mxu0
      %v6414 = vadd.f32 0.0, %v6413
      %v6415 = vpop.f32.mrb[0].mxu0
      %v6416 = vpop.f32.mrb[0].mxu0
      %v6417 = vadd.f32 0.0, %v6416
      %v6418 = vpop.f32.mrb[0].mxu0
      %6419 = vmatprep.mubr.bf16.mxu0 0
      %6420 = vmatmul.mubr.bf16.gmra.mrb[0].mxu0 %v5855
      %v6421 = vpop.f32.mrb[0].mxu0
      %v6422 = vadd.f32 0.0, %v6421
      %v6423 = vpop.f32.mrb[0].mxu0
      %v6424 = vpop.f32.mrb[0].mxu0
      %v6425 = vadd.f32 0.0, %v6424
      %v6426 = vpop.f32.mrb[0].mxu0
      %6427 = vmatprep.mubr.bf16.mxu0 0
      %6428 = vmatmul.mubr.bf16.gmra.mrb[0].mxu0 %v5856
      %v6429 = vpop.f32.mrb[0].mxu0
      %v6430 = vadd.f32 0.0, %v6429
      %v6431 = vpop.f32.mrb[0].mxu0
      %v6432 = vpop.f32.mrb[0].mxu0
      %v6433 = vadd.f32 0.0, %v6432
      %v6434 = vpop.f32.mrb[0].mxu0
      %6435 = vmatprep.mubr.bf16.mxu0 0
      %6436 = vmatmul.mubr.bf16.gmra.mrb[0].mxu0 %v5857
      %v6437 = vpop.f32.mrb[0].mxu0
      %v6438 = vadd.f32 0.0, %v6437
      %v6439 = vpop.f32.mrb[0].mxu0
      %v6440 = vpop.f32.mrb[0].mxu0
      %v6441 = vadd.f32 0.0, %v6440
      %v6442 = vpop.f32.mrb[0].mxu0
      %6443 = vmatprep.mubr.bf16.mxu0 0
      %6444 = vmatmul.mubr.bf16.gmra.mrb[0].mxu0 %v5858
      %v6445 = vpop.f32.mrb[0].mxu0
      %v6446 = vadd.f32 0.0, %v6445
      %v6447 = vpop.f32.mrb[0].mxu0
      %v6448 = vpop.f32.mrb[0].mxu0
      %v6449 = vadd.f32 0.0, %v6448
      %v6450 = vpop.f32.mrb[0].mxu0
      %6451 = vmatprep.mubr.bf16.mxu0 0
      %6452 = vmatmul.mubr.bf16.gmra.mrb[0].mxu0 %v5859
      %v6453 = vpop.f32.mrb[0].mxu0
      %v6454 = vadd.f32 0.0, %v6453
      %v6455 = vpop.f32.mrb[0].mxu0
      %v6456 = vpop.f32.mrb[0].mxu0
      %v6457 = vadd.f32 0.0, %v6456
      %v6458 = vpop.f32.mrb[0].mxu0
      %6459 = vmatprep.mubr.bf16.mxu0 0
      %6460 = vmatmul.mubr.bf16.gmra.mrb[0].mxu0 %v5860
      %v6461 = vpop.f32.mrb[0].mxu0
      %v6462 = vadd.f32 0.0, %v6461
      %v6463 = vpop.f32.mrb[0].mxu0
      %v6464 = vpop.f32.mrb[0].mxu0
      %v6465 = vadd.f32 0.0, %v6464
      %v6466 = vpop.f32.mrb[0].mxu0
      %6467 = vmatprep.mubr.bf16.mxu0 0
      %6468 = vmatmul.mubr.bf16.gmra.mrb[0].mxu0 %v5861
      %v6469 = vpop.f32.mrb[0].mxu0
      %v6470 = vadd.f32 0.0, %v6469
      %v6471 = vpop.f32.mrb[0].mxu0
      %v6472 = vpop.f32.mrb[0].mxu0
      %v6473 = vadd.f32 0.0, %v6472
      %v6474 = vpop.f32.mrb[0].mxu0
      %6475 = vmatprep.mubr.bf16.mxu0 0
      %6476 = vmatmul.mubr.bf16.gmra.mrb[0].mxu0 %v5862
      %v6477 = vpop.f32.mrb[0].mxu0
      %v6478 = vadd.f32 0.0, %v6477
      %v6479 = vpop.f32.mrb[0].mxu0
      %v6480 = vpop.f32.mrb[0].mxu0
      %v6481 = vadd.f32 0.0, %v6480
      %v6482 = vpop.f32.mrb[0].mxu0
      %6483 = vmatprep.mubr.bf16.mxu0 0
      %6484 = vmatmul.mubr.bf16.gmra.mrb[0].mxu0 %v5863
      %v6485 = vpop.f32.mrb[0].mxu0
      %v6486 = vadd.f32 0.0, %v6485
      %v6487 = vpop.f32.mrb[0].mxu0
      %v6488 = vpop.f32.mrb[0].mxu0
      %v6489 = vadd.f32 0.0, %v6488
      %v6490 = vpop.f32.mrb[0].mxu0
      %6491 = vmatprep.mubr.bf16.mxu0 0
      %6492 = vmatmul.mubr.bf16.gmra.mrb[0].mxu0 %v5864
      %v6493 = vpop.f32.mrb[0].mxu0
      %v6494 = vadd.f32 0.0, %v6493
      %v6495 = vpop.f32.mrb[0].mxu0
      %v6496 = vpop.f32.mrb[0].mxu0
      %v6497 = vadd.f32 0.0, %v6496
      %v6498 = vpop.f32.mrb[0].mxu0
      %6499 = vdwg.mxu0
      %v6500 = vrot.slane %v6310, 1
      %v6501 = vrot.slane %v6313, 1
      %v6502 = vrot.slane %v6318, 1
      %v6503 = vrot.slane %v6321, 1
      %v6504 = vrot.slane %v6326, 1
      %v6505 = vrot.slane %v6329, 1
      %v6506 = vrot.slane %v6334, 1
      %v6507 = vrot.slane %v6337, 1
      %v6508 = vrot.slane %v6342, 1
      %v6509 = vrot.slane %v6345, 1
      %v6510 = vrot.slane %v6350, 1
      %v6511 = vrot.slane %v6353, 1
      %v6512 = vrot.slane %v6358, 1
      %v6513 = vrot.slane %v6361, 1
      %v6514 = vrot.slane %v6366, 1
      %v6515 = vrot.slane %v6369, 1
      %v6516 = vrot.slane %v6374, 1
      %v6517 = vrot.slane %v6377, 1
      %v6518 = vrot.slane %v6382, 1
      %v6519 = vrot.slane %v6385, 1
      %v6520 = vrot.slane %v6390, 1
      %v6521 = vrot.slane %v6393, 1
      %v6522 = vrot.slane %v6398, 1
      %v6523 = vrot.slane %v6401, 1
      %v6524 = vrot.slane %v6406, 1
      %v6525 = vrot.slane %v6409, 1
      %v6526 = vrot.slane %v6414, 1
      %v6527 = vrot.slane %v6417, 1
      %v6528 = vrot.slane %v6422, 1
      %v6529 = vrot.slane %v6425, 1
      %v6530 = vrot.slane %v6430, 1
      %v6531 = vrot.slane %v6433, 1
      %v6532 = vrot.slane %v6438, 1
      %v6533 = vrot.slane %v6441, 1
      %v6534 = vrot.slane %v6446, 1
      %v6535 = vrot.slane %v6449, 1
      %v6536 = vrot.slane %v6454, 1
      %v6537 = vrot.slane %v6457, 1
      %v6538 = vrot.slane %v6462, 1
      %v6539 = vrot.slane %v6465, 1
      %v6540 = vrot.slane %v6470, 1
      %v6541 = vrot.slane %v6473, 1
      %v6542 = vrot.slane %v6478, 1
      %v6543 = vrot.slane %v6481, 1
      %v6544 = vrot.slane %v6486, 1
      %v6545 = vrot.slane %v6489, 1
      %v6546 = vrot.slane %v6494, 1
      %v6547 = vrot.slane %v6497, 1
      %v6548 = vsel %vm1634, %v6546, %v6547
      %v6549 = vsel %vm1634, %v6545, %v6546
      %v6550 = vsel %vm1634, %v6544, %v6545
      %v6551 = vsel %vm1634, %v6543, %v6544
      %v6552 = vsel %vm1634, %v6542, %v6543
      %v6553 = vsel %vm1634, %v6541, %v6542
      %v6554 = vsel %vm1634, %v6540, %v6541
      %v6555 = vsel %vm1634, %v6539, %v6540
      %v6556 = vsel %vm1634, %v6538, %v6539
      %v6557 = vsel %vm1634, %v6537, %v6538
      %v6558 = vsel %vm1634, %v6536, %v6537
      %v6559 = vsel %vm1634, %v6535, %v6536
      %v6560 = vsel %vm1634, %v6534, %v6535
      %v6561 = vsel %vm1634, %v6533, %v6534
      %v6562 = vsel %vm1634, %v6532, %v6533
      %v6563 = vsel %vm1634, %v6531, %v6532
      %v6564 = vsel %vm1634, %v6530, %v6531
      %v6565 = vsel %vm1634, %v6529, %v6530
      %v6566 = vsel %vm1634, %v6528, %v6529
      %v6567 = vsel %vm1634, %v6527, %v6528
      %v6568 = vsel %vm1634, %v6526, %v6527
      %v6569 = vsel %vm1634, %v6525, %v6526
      %v6570 = vsel %vm1634, %v6524, %v6525
      %v6571 = vsel %vm1634, %v6523, %v6524
      %v6572 = vsel %vm1634, %v6522, %v6523
      %v6573 = vsel %vm1634, %v6521, %v6522
      %v6574 = vsel %vm1634, %v6520, %v6521
      %v6575 = vsel %vm1634, %v6519, %v6520
      %v6576 = vsel %vm1634, %v6518, %v6519
      %v6577 = vsel %vm1634, %v6517, %v6518
      %v6578 = vsel %vm1634, %v6516, %v6517
      %v6579 = vsel %vm1634, %v6515, %v6516
      %v6580 = vsel %vm1634, %v6514, %v6515
      %v6581 = vsel %vm1634, %v6513, %v6514
      %v6582 = vsel %vm1634, %v6512, %v6513
      %v6583 = vsel %vm1634, %v6511, %v6512
      %v6584 = vsel %vm1634, %v6510, %v6511
      %v6585 = vsel %vm1634, %v6509, %v6510
      %v6586 = vsel %vm1634, %v6508, %v6509
      %v6587 = vsel %vm1634, %v6507, %v6508
      %v6588 = vsel %vm1634, %v6506, %v6507
      %v6589 = vsel %vm1634, %v6505, %v6506
      %v6590 = vsel %vm1634, %v6504, %v6505
      %v6591 = vsel %vm1634, %v6503, %v6504
      %v6592 = vsel %vm1634, %v6502, %v6503
      %v6593 = vsel %vm1634, %v6501, %v6502
      %v6594 = vsel %vm1634, %v6500, %v6501
      %v6595 = vsel %vm1634, %v6547, %v6500
      %v6596 = vld [vmem:[#allocation2] sm:$0xff]
      %v6597 = vld [vmem:[#allocation2 + $0x8] sm:$0xff]
      %v6598 = vld [vmem:[#allocation2 + $0x10] sm:$0xff]
      %v6599 = vld [vmem:[#allocation2 + $0x18] sm:$0xff]
      %v6600 = vld [vmem:[#allocation2 + $0x20] sm:$0xff]
      %v6601 = vld [vmem:[#allocation2 + $0x28] sm:$0xff]
      %v6602 = vld [vmem:[#allocation2 + $0x30] sm:$0xff]
      %v6603 = vld [vmem:[#allocation2 + $0x38] sm:$0xff]
      %v6604 = vld [vmem:[#allocation2 + $0x40] sm:$0xff]
      %v6605 = vld [vmem:[#allocation2 + $0x48] sm:$0xff]
      %v6606 = vld [vmem:[#allocation2 + $0x50] sm:$0xff]
      %v6607 = vld [vmem:[#allocation2 + $0x58] sm:$0xff]
      %v6608 = vld [vmem:[#allocation2 + $0x60] sm:$0xff]
      %v6609 = vld [vmem:[#allocation2 + $0x68] sm:$0xff]
      %v6610 = vld [vmem:[#allocation2 + $0x70] sm:$0xff]
      %v6611 = vld [vmem:[#allocation2 + $0x78] sm:$0xff]
      %v6612 = vld [vmem:[#allocation2 + $0x80] sm:$0xff]
      %v6613 = vld [vmem:[#allocation2 + $0x88] sm:$0xff]
      %v6614 = vld [vmem:[#allocation2 + $0x90] sm:$0xff]
      %v6615 = vld [vmem:[#allocation2 + $0x98] sm:$0xff]
      %v6616 = vld [vmem:[#allocation2 + $0xa0] sm:$0xff]
      %v6617 = vld [vmem:[#allocation2 + $0xa8] sm:$0xff]
      %v6618 = vld [vmem:[#allocation2 + $0xb0] sm:$0xff]
      %v6619 = vld [vmem:[#allocation2 + $0xb8] sm:$0xff]
      %v6620 = vld [vmem:[#allocation2 + $0xc0] sm:$0xff]
      %v6621 = vld [vmem:[#allocation2 + $0xc8] sm:$0xff]
      %v6622 = vld [vmem:[#allocation2 + $0xd0] sm:$0xff]
      %v6623 = vld [vmem:[#allocation2 + $0xd8] sm:$0xff]
      %v6624 = vld [vmem:[#allocation2 + $0xe0] sm:$0xff]
      %v6625 = vld [vmem:[#allocation2 + $0xe8] sm:$0xff]
      %v6626 = vld [vmem:[#allocation2 + $0xf0] sm:$0xff]
      %v6627 = vld [vmem:[#allocation2 + $0xf8] sm:$0xff]
      %v6628 = vld [vmem:[#allocation2 + $0x100] sm:$0xff]
      %v6629 = vld [vmem:[#allocation2 + $0x108] sm:$0xff]
      %v6630 = vld [vmem:[#allocation2 + $0x110] sm:$0xff]
      %v6631 = vld [vmem:[#allocation2 + $0x118] sm:$0xff]
      %v6632 = vld [vmem:[#allocation2 + $0x120] sm:$0xff]
      %v6633 = vld [vmem:[#allocation2 + $0x128] sm:$0xff]
      %v6634 = vld [vmem:[#allocation2 + $0x130] sm:$0xff]
      %v6635 = vld [vmem:[#allocation2 + $0x138] sm:$0xff]
      %v6636 = vld [vmem:[#allocation2 + $0x140] sm:$0xff]
      %v6637 = vld [vmem:[#allocation2 + $0x148] sm:$0xff]
      %v6638 = vld [vmem:[#allocation2 + $0x150] sm:$0xff]
      %v6639 = vld [vmem:[#allocation2 + $0x158] sm:$0xff]
      %v6640 = vld [vmem:[#allocation2 + $0x160] sm:$0xff]
      %v6641 = vld [vmem:[#allocation2 + $0x168] sm:$0xff]
      %v6642 = vld [vmem:[#allocation2 + $0x170] sm:$0xff]
      %v6643 = vld [vmem:[#allocation2 + $0x178] sm:$0xff]
      %v6644 = vadd.f32 %v6596, %v6594
      %v6645 = vadd.f32 %v6597, %v6593
      %v6646 = vadd.f32 %v6598, %v6592
      %v6647 = vadd.f32 %v6599, %v6591
      %v6648 = vadd.f32 %v6600, %v6590
      %v6649 = vadd.f32 %v6601, %v6589
      %v6650 = vadd.f32 %v6602, %v6588
      %v6651 = vadd.f32 %v6603, %v6587
      %v6652 = vadd.f32 %v6604, %v6586
      %v6653 = vadd.f32 %v6605, %v6585
      %v6654 = vadd.f32 %v6606, %v6584
      %v6655 = vadd.f32 %v6607, %v6583
      %v6656 = vadd.f32 %v6608, %v6582
      %v6657 = vadd.f32 %v6609, %v6581
      %v6658 = vadd.f32 %v6610, %v6580
      %v6659 = vadd.f32 %v6611, %v6579
      %v6660 = vadd.f32 %v6612, %v6578
      %v6661 = vadd.f32 %v6613, %v6577
      %v6662 = vadd.f32 %v6614, %v6576
      %v6663 = vadd.f32 %v6615, %v6575
      %v6664 = vadd.f32 %v6616, %v6574
      %v6665 = vadd.f32 %v6617, %v6573
      %v6666 = vadd.f32 %v6618, %v6572
      %v6667 = vadd.f32 %v6619, %v6571
      %v6668 = vadd.f32 %v6620, %v6570
      %v6669 = vadd.f32 %v6621, %v6569
      %v6670 = vadd.f32 %v6622, %v6568
      %v6671 = vadd.f32 %v6623, %v6567
      %v6672 = vadd.f32 %v6624, %v6566
      %v6673 = vadd.f32 %v6625, %v6565
      %v6674 = vadd.f32 %v6626, %v6564
      %v6675 = vadd.f32 %v6627, %v6563
      %v6676 = vadd.f32 %v6628, %v6562
      %v6677 = vadd.f32 %v6629, %v6561
      %v6678 = vadd.f32 %v6630, %v6560
      %v6679 = vadd.f32 %v6631, %v6559
      %v6680 = vadd.f32 %v6632, %v6558
      %v6681 = vadd.f32 %v6633, %v6557
      %v6682 = vadd.f32 %v6634, %v6556
      %v6683 = vadd.f32 %v6635, %v6555
      %v6684 = vadd.f32 %v6636, %v6554
      %v6685 = vadd.f32 %v6637, %v6553
      %v6686 = vadd.f32 %v6638, %v6552
      %v6687 = vadd.f32 %v6639, %v6551
      %v6688 = vadd.f32 %v6640, %v6550
      %v6689 = vadd.f32 %v6641, %v6549
      %v6690 = vadd.f32 %v6642, %v6548
      %v6691 = vadd.f32 %v6643, %v6595
      %6692 = vst [vmem:[#allocation2] sm:$0xff] %v6644
      %6693 = vst [vmem:[#allocation2 + $0x8] sm:$0xff] %v6645
      %6694 = vst [vmem:[#allocation2 + $0x10] sm:$0xff] %v6646
      %6695 = vst [vmem:[#allocation2 + $0x18] sm:$0xff] %v6647
      %6696 = vst [vmem:[#allocation2 + $0x20] sm:$0xff] %v6648
      %6697 = vst [vmem:[#allocation2 + $0x28] sm:$0xff] %v6649
      %6698 = vst [vmem:[#allocation2 + $0x30] sm:$0xff] %v6650
      %6699 = vst [vmem:[#allocation2 + $0x38] sm:$0xff] %v6651
      %6700 = vst [vmem:[#allocation2 + $0x40] sm:$0xff] %v6652
      %6701 = vst [vmem:[#allocation2 + $0x48] sm:$0xff] %v6653
      %6702 = vst [vmem:[#allocation2 + $0x50] sm:$0xff] %v6654
      %6703 = vst [vmem:[#allocation2 + $0x58] sm:$0xff] %v6655
      %6704 = vst [vmem:[#allocation2 + $0x60] sm:$0xff] %v6656
      %6705 = vst [vmem:[#allocation2 + $0x68] sm:$0xff] %v6657
      %6706 = vst [vmem:[#allocation2 + $0x70] sm:$0xff] %v6658
      %6707 = vst [vmem:[#allocation2 + $0x78] sm:$0xff] %v6659
      %6708 = vst [vmem:[#allocation2 + $0x80] sm:$0xff] %v6660
      %6709 = vst [vmem:[#allocation2 + $0x88] sm:$0xff] %v6661
      %6710 = vst [vmem:[#allocation2 + $0x90] sm:$0xff] %v6662
      %6711 = vst [vmem:[#allocation2 + $0x98] sm:$0xff] %v6663
      %6712 = vst [vmem:[#allocation2 + $0xa0] sm:$0xff] %v6664
      %6713 = vst [vmem:[#allocation2 + $0xa8] sm:$0xff] %v6665
      %6714 = vst [vmem:[#allocation2 + $0xb0] sm:$0xff] %v6666
      %6715 = vst [vmem:[#allocation2 + $0xb8] sm:$0xff] %v6667
      %6716 = vst [vmem:[#allocation2 + $0xc0] sm:$0xff] %v6668
      %6717 = vst [vmem:[#allocation2 + $0xc8] sm:$0xff] %v6669
      %6718 = vst [vmem:[#allocation2 + $0xd0] sm:$0xff] %v6670
      %6719 = vst [vmem:[#allocation2 + $0xd8] sm:$0xff] %v6671
      %6720 = vst [vmem:[#allocation2 + $0xe0] sm:$0xff] %v6672
      %6721 = vst [vmem:[#allocation2 + $0xe8] sm:$0xff] %v6673
      %6722 = vst [vmem:[#allocation2 + $0xf0] sm:$0xff] %v6674
      %6723 = vst [vmem:[#allocation2 + $0xf8] sm:$0xff] %v6675
      %6724 = vst [vmem:[#allocation2 + $0x100] sm:$0xff] %v6676
      %6725 = vst [vmem:[#allocation2 + $0x108] sm:$0xff] %v6677
      %6726 = vst [vmem:[#allocation2 + $0x110] sm:$0xff] %v6678
      %6727 = vst [vmem:[#allocation2 + $0x118] sm:$0xff] %v6679
      %6728 = vst [vmem:[#allocation2 + $0x120] sm:$0xff] %v6680
      %6729 = vst [vmem:[#allocation2 + $0x128] sm:$0xff] %v6681
      %6730 = vst [vmem:[#allocation2 + $0x130] sm:$0xff] %v6682
      %6731 = vst [vmem:[#allocation2 + $0x138] sm:$0xff] %v6683
      %6732 = vst [vmem:[#allocation2 + $0x140] sm:$0xff] %v6684
      %6733 = vst [vmem:[#allocation2 + $0x148] sm:$0xff] %v6685
      %6734 = vst [vmem:[#allocation2 + $0x150] sm:$0xff] %v6686
      %6735 = vst [vmem:[#allocation2 + $0x158] sm:$0xff] %v6687
      %6736 = vst [vmem:[#allocation2 + $0x160] sm:$0xff] %v6688
      %6737 = vst [vmem:[#allocation2 + $0x168] sm:$0xff] %v6689
      %6738 = vst [vmem:[#allocation2 + $0x170] sm:$0xff] %v6690
      %6739 = vst [vmem:[#allocation2 + $0x178] sm:$0xff] %v6691
      %s6740 = scalar_lea.vmem %s3, 128
      %v6741 = vld [vmem:[%s6740] sm:$0xf]
      %v6742 = vld [vmem:[%s6740 + $0x4] sm:$0xf]
      %v6743 = vld [vmem:[%s6740 + $0x8] sm:$0xf]
      %v6744 = vld [vmem:[%s6740 + $0xc] sm:$0xf]
      %v6745 = vld [vmem:[%s6740 + $0x10] sm:$0xf]
      %v6746 = vld [vmem:[%s6740 + $0x14] sm:$0xf]
      %v6747 = vld [vmem:[%s6740 + $0x18] sm:$0xf]
      %v6748 = vld [vmem:[%s6740 + $0x1c] sm:$0xf]
      %v6749 = vld [vmem:[%s6740 + $0x20] sm:$0xf]
      %v6750 = vld [vmem:[%s6740 + $0x24] sm:$0xf]
      %v6751 = vld [vmem:[%s6740 + $0x28] sm:$0xf]
      %v6752 = vld [vmem:[%s6740 + $0x2c] sm:$0xf]
      %v6753 = vld [vmem:[%s6740 + $0x30] sm:$0xf]
      %v6754 = vld [vmem:[%s6740 + $0x34] sm:$0xf]
      %v6755 = vld [vmem:[%s6740 + $0x38] sm:$0xf]
      %v6756 = vld [vmem:[%s6740 + $0x3c] sm:$0xf]
      %v6773 = vunpack.c.l.b16 %v6741
      %v6774 = vunpack.c.l.b16 %v6742
      %v6775 = vunpack.c.l.b16 %v6743
      %v6776 = vunpack.c.l.b16 %v6744
      %v6777 = vunpack.c.l.b16 %v6745
      %v6778 = vunpack.c.l.b16 %v6746
      %v6779 = vunpack.c.l.b16 %v6747
      %v6780 = vunpack.c.l.b16 %v6748
      %v6781 = vunpack.c.l.b16 %v6749
      %v6782 = vunpack.c.l.b16 %v6750
      %v6783 = vunpack.c.l.b16 %v6751
      %v6784 = vunpack.c.l.b16 %v6752
      %v6785 = vunpack.c.l.b16 %v6753
      %v6786 = vunpack.c.l.b16 %v6754
      %v6787 = vunpack.c.l.b16 %v6755
      %v6788 = vunpack.c.l.b16 %v6756
      %v6789 = vpack.c.b16 %v6774, %v6773
      %v6790 = vpack.c.b16 %v6776, %v6775
      %v6791 = vpack.c.b16 %v6778, %v6777
      %v6792 = vpack.c.b16 %v6780, %v6779
      %v6793 = vpack.c.b16 %v6782, %v6781
      %v6794 = vpack.c.b16 %v6784, %v6783
      %v6795 = vpack.c.b16 %v6786, %v6785
      %v6796 = vpack.c.b16 %v6788, %v6787
      %6805 = vmatprep.subr.bf16.mxu0 0
      %6806 = vmatpush1.bf16.msra.mxu0 %v6789
      %6807 = vmatprep.subr.bf16.mxu0 0
      %6808 = vmatpush1.bf16.msra.mxu0 %v6790
      %6809 = vmatprep.subr.bf16.mxu0 0
      %6810 = vmatpush1.bf16.msra.mxu0 %v6791
      %6811 = vmatprep.subr.bf16.mxu0 0
      %6812 = vmatpush1.bf16.msra.mxu0 %v6792
      %6813 = vmatprep.subr.bf16.mxu0 0
      %6814 = vmatpush1.bf16.msra.mxu0 %v6793
      %6815 = vmatprep.subr.bf16.mxu0 0
      %6816 = vmatpush1.bf16.msra.mxu0 %v6794
      %6817 = vmatprep.subr.bf16.mxu0 0
      %6818 = vmatpush1.bf16.msra.mxu0 %v6795
      %6819 = vmatprep.subr.bf16.mxu0 0
      %6820 = vmatpush1.bf16.msra.mxu0 %v6796
      %6821 = vmatprep.subr.bf16.mxu0 0
      %6822 = vmatpush1.bf16.msra.mxu0 0
      %6823 = vmatprep.subr.bf16.mxu0 0
      %6824 = vmatpush1.bf16.msra.mxu0 0
      %6825 = vmatprep.subr.bf16.mxu0 0
      %6826 = vmatpush1.bf16.msra.mxu0 0
      %6827 = vmatprep.subr.bf16.mxu0 0
      %6828 = vmatpush1.bf16.msra.mxu0 0
      %6829 = vmatprep.subr.bf16.mxu0 0
      %6830 = vmatpush1.bf16.msra.mxu0 0
      %6831 = vmatprep.subr.bf16.mxu0 0
      %6832 = vmatpush1.bf16.msra.mxu0 0
      %6833 = vmatprep.subr.bf16.mxu0 0
      %6834 = vmatpush1.bf16.msra.mxu0 0
      %6835 = vmatprep.subr.bf16.mxu0 0
      %6836 = vmatpush1.bf16.msra.mxu0 0
      %6837 = vmatprep.mubr.bf16.mxu0 0
      %6838 = vmatmul.mubr.bf16.gmra.mrb[0].mxu0 %v5841
      %v6839 = vpop.f32.mrb[0].mxu0
      %v6840 = vadd.f32 0.0, %v6839
      %v6841 = vpop.f32.mrb[0].mxu0
      %v6842 = vpop.f32.mrb[0].mxu0
      %v6843 = vadd.f32 0.0, %v6842
      %v6844 = vpop.f32.mrb[0].mxu0
      %6845 = vmatprep.mubr.bf16.mxu0 0
      %6846 = vmatmul.mubr.bf16.gmra.mrb[0].mxu0 %v5842
      %v6847 = vpop.f32.mrb[0].mxu0
      %v6848 = vadd.f32 0.0, %v6847
      %v6849 = vpop.f32.mrb[0].mxu0
      %v6850 = vpop.f32.mrb[0].mxu0
      %v6851 = vadd.f32 0.0, %v6850
      %v6852 = vpop.f32.mrb[0].mxu0
      %6853 = vmatprep.mubr.bf16.mxu0 0
      %6854 = vmatmul.mubr.bf16.gmra.mrb[0].mxu0 %v5843
      %v6855 = vpop.f32.mrb[0].mxu0
      %v6856 = vadd.f32 0.0, %v6855
      %v6857 = vpop.f32.mrb[0].mxu0
      %v6858 = vpop.f32.mrb[0].mxu0
      %v6859 = vadd.f32 0.0, %v6858
      %v6860 = vpop.f32.mrb[0].mxu0
      %6861 = vmatprep.mubr.bf16.mxu0 0
      %6862 = vmatmul.mubr.bf16.gmra.mrb[0].mxu0 %v5844
      %v6863 = vpop.f32.mrb[0].mxu0
      %v6864 = vadd.f32 0.0, %v6863
      %v6865 = vpop.f32.mrb[0].mxu0
      %v6866 = vpop.f32.mrb[0].mxu0
      %v6867 = vadd.f32 0.0, %v6866
      %v6868 = vpop.f32.mrb[0].mxu0
      %6869 = vmatprep.mubr.bf16.mxu0 0
      %6870 = vmatmul.mubr.bf16.gmra.mrb[0].mxu0 %v5845
      %v6871 = vpop.f32.mrb[0].mxu0
      %v6872 = vadd.f32 0.0, %v6871
      %v6873 = vpop.f32.mrb[0].mxu0
      %v6874 = vpop.f32.mrb[0].mxu0
      %v6875 = vadd.f32 0.0, %v6874
      %v6876 = vpop.f32.mrb[0].mxu0
      %6877 = vmatprep.mubr.bf16.mxu0 0
      %6878 = vmatmul.mubr.bf16.gmra.mrb[0].mxu0 %v5846
      %v6879 = vpop.f32.mrb[0].mxu0
      %v6880 = vadd.f32 0.0, %v6879
      %v6881 = vpop.f32.mrb[0].mxu0
      %v6882 = vpop.f32.mrb[0].mxu0
      %v6883 = vadd.f32 0.0, %v6882
      %v6884 = vpop.f32.mrb[0].mxu0
      %6885 = vmatprep.mubr.bf16.mxu0 0
      %6886 = vmatmul.mubr.bf16.gmra.mrb[0].mxu0 %v5847
      %v6887 = vpop.f32.mrb[0].mxu0
      %v6888 = vadd.f32 0.0, %v6887
      %v6889 = vpop.f32.mrb[0].mxu0
      %v6890 = vpop.f32.mrb[0].mxu0
      %v6891 = vadd.f32 0.0, %v6890
      %v6892 = vpop.f32.mrb[0].mxu0
      %6893 = vmatprep.mubr.bf16.mxu0 0
      %6894 = vmatmul.mubr.bf16.gmra.mrb[0].mxu0 %v5848
      %v6895 = vpop.f32.mrb[0].mxu0
      %v6896 = vadd.f32 0.0, %v6895
      %v6897 = vpop.f32.mrb[0].mxu0
      %v6898 = vpop.f32.mrb[0].mxu0
      %v6899 = vadd.f32 0.0, %v6898
      %v6900 = vpop.f32.mrb[0].mxu0
      %6901 = vmatprep.mubr.bf16.mxu0 0
      %6902 = vmatmul.mubr.bf16.gmra.mrb[0].mxu0 %v5849
      %v6903 = vpop.f32.mrb[0].mxu0
      %v6904 = vadd.f32 0.0, %v6903
      %v6905 = vpop.f32.mrb[0].mxu0
      %v6906 = vpop.f32.mrb[0].mxu0
      %v6907 = vadd.f32 0.0, %v6906
      %v6908 = vpop.f32.mrb[0].mxu0
      %6909 = vmatprep.mubr.bf16.mxu0 0
      %6910 = vmatmul.mubr.bf16.gmra.mrb[0].mxu0 %v5850
      %v6911 = vpop.f32.mrb[0].mxu0
      %v6912 = vadd.f32 0.0, %v6911
      %v6913 = vpop.f32.mrb[0].mxu0
      %v6914 = vpop.f32.mrb[0].mxu0
      %v6915 = vadd.f32 0.0, %v6914
      %v6916 = vpop.f32.mrb[0].mxu0
      %6917 = vmatprep.mubr.bf16.mxu0 0
      %6918 = vmatmul.mubr.bf16.gmra.mrb[0].mxu0 %v5851
      %v6919 = vpop.f32.mrb[0].mxu0
      %v6920 = vadd.f32 0.0, %v6919
      %v6921 = vpop.f32.mrb[0].mxu0
      %v6922 = vpop.f32.mrb[0].mxu0
      %v6923 = vadd.f32 0.0, %v6922
      %v6924 = vpop.f32.mrb[0].mxu0
      %6925 = vmatprep.mubr.bf16.mxu0 0
      %6926 = vmatmul.mubr.bf16.gmra.mrb[0].mxu0 %v5852
      %v6927 = vpop.f32.mrb[0].mxu0
      %v6928 = vadd.f32 0.0, %v6927
      %v6929 = vpop.f32.mrb[0].mxu0
      %v6930 = vpop.f32.mrb[0].mxu0
      %v6931 = vadd.f32 0.0, %v6930
      %v6932 = vpop.f32.mrb[0].mxu0
      %6933 = vmatprep.mubr.bf16.mxu0 0
      %6934 = vmatmul.mubr.bf16.gmra.mrb[0].mxu0 %v5853
      %v6935 = vpop.f32.mrb[0].mxu0
      %v6936 = vadd.f32 0.0, %v6935
      %v6937 = vpop.f32.mrb[0].mxu0
      %v6938 = vpop.f32.mrb[0].mxu0
      %v6939 = vadd.f32 0.0, %v6938
      %v6940 = vpop.f32.mrb[0].mxu0
      %6941 = vmatprep.mubr.bf16.mxu0 0
      %6942 = vmatmul.mubr.bf16.gmra.mrb[0].mxu0 %v5854
      %v6943 = vpop.f32.mrb[0].mxu0
      %v6944 = vadd.f32 0.0, %v6943
      %v6945 = vpop.f32.mrb[0].mxu0
      %v6946 = vpop.f32.mrb[0].mxu0
      %v6947 = vadd.f32 0.0, %v6946
      %v6948 = vpop.f32.mrb[0].mxu0
      %6949 = vmatprep.mubr.bf16.mxu0 0
      %6950 = vmatmul.mubr.bf16.gmra.mrb[0].mxu0 %v5855
      %v6951 = vpop.f32.mrb[0].mxu0
      %v6952 = vadd.f32 0.0, %v6951
      %v6953 = vpop.f32.mrb[0].mxu0
      %v6954 = vpop.f32.mrb[0].mxu0
      %v6955 = vadd.f32 0.0, %v6954
      %v6956 = vpop.f32.mrb[0].mxu0
      %6957 = vmatprep.mubr.bf16.mxu0 0
      %6958 = vmatmul.mubr.bf16.gmra.mrb[0].mxu0 %v5856
      %v6959 = vpop.f32.mrb[0].mxu0
      %v6960 = vadd.f32 0.0, %v6959
      %v6961 = vpop.f32.mrb[0].mxu0
      %v6962 = vpop.f32.mrb[0].mxu0
      %v6963 = vadd.f32 0.0, %v6962
      %v6964 = vpop.f32.mrb[0].mxu0
      %6965 = vmatprep.mubr.bf16.mxu0 0
      %6966 = vmatmul.mubr.bf16.gmra.mrb[0].mxu0 %v5857
      %v6967 = vpop.f32.mrb[0].mxu0
      %v6968 = vadd.f32 0.0, %v6967
      %v6969 = vpop.f32.mrb[0].mxu0
      %v6970 = vpop.f32.mrb[0].mxu0
      %v6971 = vadd.f32 0.0, %v6970
      %v6972 = vpop.f32.mrb[0].mxu0
      %6973 = vmatprep.mubr.bf16.mxu0 0
      %6974 = vmatmul.mubr.bf16.gmra.mrb[0].mxu0 %v5858
      %v6975 = vpop.f32.mrb[0].mxu0
      %v6976 = vadd.f32 0.0, %v6975
      %v6977 = vpop.f32.mrb[0].mxu0
      %v6978 = vpop.f32.mrb[0].mxu0
      %v6979 = vadd.f32 0.0, %v6978
      %v6980 = vpop.f32.mrb[0].mxu0
      %6981 = vmatprep.mubr.bf16.mxu0 0
      %6982 = vmatmul.mubr.bf16.gmra.mrb[0].mxu0 %v5859
      %v6983 = vpop.f32.mrb[0].mxu0
      %v6984 = vadd.f32 0.0, %v6983
      %v6985 = vpop.f32.mrb[0].mxu0
      %v6986 = vpop.f32.mrb[0].mxu0
      %v6987 = vadd.f32 0.0, %v6986
      %v6988 = vpop.f32.mrb[0].mxu0
      %6989 = vmatprep.mubr.bf16.mxu0 0
      %6990 = vmatmul.mubr.bf16.gmra.mrb[0].mxu0 %v5860
      %v6991 = vpop.f32.mrb[0].mxu0
      %v6992 = vadd.f32 0.0, %v6991
      %v6993 = vpop.f32.mrb[0].mxu0
      %v6994 = vpop.f32.mrb[0].mxu0
      %v6995 = vadd.f32 0.0, %v6994
      %v6996 = vpop.f32.mrb[0].mxu0
      %6997 = vmatprep.mubr.bf16.mxu0 0
      %6998 = vmatmul.mubr.bf16.gmra.mrb[0].mxu0 %v5861
      %v6999 = vpop.f32.mrb[0].mxu0
      %v7000 = vadd.f32 0.0, %v6999
      %v7001 = vpop.f32.mrb[0].mxu0
      %v7002 = vpop.f32.mrb[0].mxu0
      %v7003 = vadd.f32 0.0, %v7002
      %v7004 = vpop.f32.mrb[0].mxu0
      %7005 = vmatprep.mubr.bf16.mxu0 0
      %7006 = vmatmul.mubr.bf16.gmra.mrb[0].mxu0 %v5862
      %v7007 = vpop.f32.mrb[0].mxu0
      %v7008 = vadd.f32 0.0, %v7007
      %v7009 = vpop.f32.mrb[0].mxu0
      %v7010 = vpop.f32.mrb[0].mxu0
      %v7011 = vadd.f32 0.0, %v7010
      %v7012 = vpop.f32.mrb[0].mxu0
      %7013 = vmatprep.mubr.bf16.mxu0 0
      %7014 = vmatmul.mubr.bf16.gmra.mrb[0].mxu0 %v5863
      %v7015 = vpop.f32.mrb[0].mxu0
      %v7016 = vadd.f32 0.0, %v7015
      %v7017 = vpop.f32.mrb[0].mxu0
      %v7018 = vpop.f32.mrb[0].mxu0
      %v7019 = vadd.f32 0.0, %v7018
      %v7020 = vpop.f32.mrb[0].mxu0
      %7021 = vmatprep.mubr.bf16.mxu0 0
      %7022 = vmatmul.mubr.bf16.gmra.mrb[0].mxu0 %v5864
      %v7023 = vpop.f32.mrb[0].mxu0
      %v7024 = vadd.f32 0.0, %v7023
      %v7025 = vpop.f32.mrb[0].mxu0
      %v7026 = vpop.f32.mrb[0].mxu0
      %v7027 = vadd.f32 0.0, %v7026
      %v7028 = vpop.f32.mrb[0].mxu0
      %7029 = vdwg.mxu0
      %v7030 = vrot.slane %v6840, 2
      %v7031 = vrot.slane %v6843, 2
      %v7032 = vrot.slane %v6848, 2
      %v7033 = vrot.slane %v6851, 2
      %v7034 = vrot.slane %v6856, 2
      %v7035 = vrot.slane %v6859, 2
      %v7036 = vrot.slane %v6864, 2
      %v7037 = vrot.slane %v6867, 2
      %v7038 = vrot.slane %v6872, 2
      %v7039 = vrot.slane %v6875, 2
      %v7040 = vrot.slane %v6880, 2
      %v7041 = vrot.slane %v6883, 2
      %v7042 = vrot.slane %v6888, 2
      %v7043 = vrot.slane %v6891, 2
      %v7044 = vrot.slane %v6896, 2
      %v7045 = vrot.slane %v6899, 2
      %v7046 = vrot.slane %v6904, 2
      %v7047 = vrot.slane %v6907, 2
      %v7048 = vrot.slane %v6912, 2
      %v7049 = vrot.slane %v6915, 2
      %v7050 = vrot.slane %v6920, 2
      %v7051 = vrot.slane %v6923, 2
      %v7052 = vrot.slane %v6928, 2
      %v7053 = vrot.slane %v6931, 2
      %v7054 = vrot.slane %v6936, 2
      %v7055 = vrot.slane %v6939, 2
      %v7056 = vrot.slane %v6944, 2
      %v7057 = vrot.slane %v6947, 2
      %v7058 = vrot.slane %v6952, 2
      %v7059 = vrot.slane %v6955, 2
      %v7060 = vrot.slane %v6960, 2
      %v7061 = vrot.slane %v6963, 2
      %v7062 = vrot.slane %v6968, 2
      %v7063 = vrot.slane %v6971, 2
      %v7064 = vrot.slane %v6976, 2
      %v7065 = vrot.slane %v6979, 2
      %v7066 = vrot.slane %v6984, 2
      %v7067 = vrot.slane %v6987, 2
      %v7068 = vrot.slane %v6992, 2
      %v7069 = vrot.slane %v6995, 2
      %v7070 = vrot.slane %v7000, 2
      %v7071 = vrot.slane %v7003, 2
      %v7072 = vrot.slane %v7008, 2
      %v7073 = vrot.slane %v7011, 2
      %v7074 = vrot.slane %v7016, 2
      %v7075 = vrot.slane %v7019, 2
      %v7076 = vrot.slane %v7024, 2
      %v7077 = vrot.slane %v7027, 2
      %vm7078 = vcmp.lt.s32.totalorder %v764, 6
      %v7079 = vsel %vm7078, %v7076, %v7077
      %v7080 = vsel %vm7078, %v7075, %v7076
      %v7081 = vsel %vm7078, %v7074, %v7075
      %v7082 = vsel %vm7078, %v7073, %v7074
      %v7083 = vsel %vm7078, %v7072, %v7073
      %v7084 = vsel %vm7078, %v7071, %v7072
      %v7085 = vsel %vm7078, %v7070, %v7071
      %v7086 = vsel %vm7078, %v7069, %v7070
      %v7087 = vsel %vm7078, %v7068, %v7069
      %v7088 = vsel %vm7078, %v7067, %v7068
      %v7089 = vsel %vm7078, %v7066, %v7067
      %v7090 = vsel %vm7078, %v7065, %v7066
      %v7091 = vsel %vm7078, %v7064, %v7065
      %v7092 = vsel %vm7078, %v7063, %v7064
      %v7093 = vsel %vm7078, %v7062, %v7063
      %v7094 = vsel %vm7078, %v7061, %v7062
      %v7095 = vsel %vm7078, %v7060, %v7061
      %v7096 = vsel %vm7078, %v7059, %v7060
      %v7097 = vsel %vm7078, %v7058, %v7059
      %v7098 = vsel %vm7078, %v7057, %v7058
      %v7099 = vsel %vm7078, %v7056, %v7057
      %v7100 = vsel %vm7078, %v7055, %v7056
      %v7101 = vsel %vm7078, %v7054, %v7055
      %v7102 = vsel %vm7078, %v7053, %v7054
      %v7103 = vsel %vm7078, %v7052, %v7053
      %v7104 = vsel %vm7078, %v7051, %v7052
      %v7105 = vsel %vm7078, %v7050, %v7051
      %v7106 = vsel %vm7078, %v7049, %v7050
      %v7107 = vsel %vm7078, %v7048, %v7049
      %v7108 = vsel %vm7078, %v7047, %v7048
      %v7109 = vsel %vm7078, %v7046, %v7047
      %v7110 = vsel %vm7078, %v7045, %v7046
      %v7111 = vsel %vm7078, %v7044, %v7045
      %v7112 = vsel %vm7078, %v7043, %v7044
      %v7113 = vsel %vm7078, %v7042, %v7043
      %v7114 = vsel %vm7078, %v7041, %v7042
      %v7115 = vsel %vm7078, %v7040, %v7041
      %v7116 = vsel %vm7078, %v7039, %v7040
      %v7117 = vsel %vm7078, %v7038, %v7039
      %v7118 = vsel %vm7078, %v7037, %v7038
      %v7119 = vsel %vm7078, %v7036, %v7037
      %v7120 = vsel %vm7078, %v7035, %v7036
      %v7121 = vsel %vm7078, %v7034, %v7035
      %v7122 = vsel %vm7078, %v7033, %v7034
      %v7123 = vsel %vm7078, %v7032, %v7033
      %v7124 = vsel %vm7078, %v7031, %v7032
      %v7125 = vsel %vm7078, %v7030, %v7031
      %v7126 = vsel %vm7078, %v7077, %v7030
      %v7127 = vld [vmem:[#allocation2] sm:$0xff]
      %v7128 = vld [vmem:[#allocation2 + $0x8] sm:$0xff]
      %v7129 = vld [vmem:[#allocation2 + $0x10] sm:$0xff]
      %v7130 = vld [vmem:[#allocation2 + $0x18] sm:$0xff]
      %v7131 = vld [vmem:[#allocation2 + $0x20] sm:$0xff]
      %v7132 = vld [vmem:[#allocation2 + $0x28] sm:$0xff]
      %v7133 = vld [vmem:[#allocation2 + $0x30] sm:$0xff]
      %v7134 = vld [vmem:[#allocation2 + $0x38] sm:$0xff]
      %v7135 = vld [vmem:[#allocation2 + $0x40] sm:$0xff]
      %v7136 = vld [vmem:[#allocation2 + $0x48] sm:$0xff]
      %v7137 = vld [vmem:[#allocation2 + $0x50] sm:$0xff]
      %v7138 = vld [vmem:[#allocation2 + $0x58] sm:$0xff]
      %v7139 = vld [vmem:[#allocation2 + $0x60] sm:$0xff]
      %v7140 = vld [vmem:[#allocation2 + $0x68] sm:$0xff]
      %v7141 = vld [vmem:[#allocation2 + $0x70] sm:$0xff]
      %v7142 = vld [vmem:[#allocation2 + $0x78] sm:$0xff]
      %v7143 = vld [vmem:[#allocation2 + $0x80] sm:$0xff]
      %v7144 = vld [vmem:[#allocation2 + $0x88] sm:$0xff]
      %v7145 = vld [vmem:[#allocation2 + $0x90] sm:$0xff]
      %v7146 = vld [vmem:[#allocation2 + $0x98] sm:$0xff]
      %v7147 = vld [vmem:[#allocation2 + $0xa0] sm:$0xff]
      %v7148 = vld [vmem:[#allocation2 + $0xa8] sm:$0xff]
      %v7149 = vld [vmem:[#allocation2 + $0xb0] sm:$0xff]
      %v7150 = vld [vmem:[#allocation2 + $0xb8] sm:$0xff]
      %v7151 = vld [vmem:[#allocation2 + $0xc0] sm:$0xff]
      %v7152 = vld [vmem:[#allocation2 + $0xc8] sm:$0xff]
      %v7153 = vld [vmem:[#allocation2 + $0xd0] sm:$0xff]
      %v7154 = vld [vmem:[#allocation2 + $0xd8] sm:$0xff]
      %v7155 = vld [vmem:[#allocation2 + $0xe0] sm:$0xff]
      %v7156 = vld [vmem:[#allocation2 + $0xe8] sm:$0xff]
      %v7157 = vld [vmem:[#allocation2 + $0xf0] sm:$0xff]
      %v7158 = vld [vmem:[#allocation2 + $0xf8] sm:$0xff]
      %v7159 = vld [vmem:[#allocation2 + $0x100] sm:$0xff]
      %v7160 = vld [vmem:[#allocation2 + $0x108] sm:$0xff]
      %v7161 = vld [vmem:[#allocation2 + $0x110] sm:$0xff]
      %v7162 = vld [vmem:[#allocation2 + $0x118] sm:$0xff]
      %v7163 = vld [vmem:[#allocation2 + $0x120] sm:$0xff]
      %v7164 = vld [vmem:[#allocation2 + $0x128] sm:$0xff]
      %v7165 = vld [vmem:[#allocation2 + $0x130] sm:$0xff]
      %v7166 = vld [vmem:[#allocation2 + $0x138] sm:$0xff]
      %v7167 = vld [vmem:[#allocation2 + $0x140] sm:$0xff]
      %v7168 = vld [vmem:[#allocation2 + $0x148] sm:$0xff]
      %v7169 = vld [vmem:[#allocation2 + $0x150] sm:$0xff]
      %v7170 = vld [vmem:[#allocation2 + $0x158] sm:$0xff]
      %v7171 = vld [vmem:[#allocation2 + $0x160] sm:$0xff]
      %v7172 = vld [vmem:[#allocation2 + $0x168] sm:$0xff]
      %v7173 = vld [vmem:[#allocation2 + $0x170] sm:$0xff]
      %v7174 = vld [vmem:[#allocation2 + $0x178] sm:$0xff]
      %v7175 = vadd.f32 %v7127, %v7125
      %v7176 = vadd.f32 %v7128, %v7124
      %v7177 = vadd.f32 %v7129, %v7123
      %v7178 = vadd.f32 %v7130, %v7122
      %v7179 = vadd.f32 %v7131, %v7121
      %v7180 = vadd.f32 %v7132, %v7120
      %v7181 = vadd.f32 %v7133, %v7119
      %v7182 = vadd.f32 %v7134, %v7118
      %v7183 = vadd.f32 %v7135, %v7117
      %v7184 = vadd.f32 %v7136, %v7116
      %v7185 = vadd.f32 %v7137, %v7115
      %v7186 = vadd.f32 %v7138, %v7114
      %v7187 = vadd.f32 %v7139, %v7113
      %v7188 = vadd.f32 %v7140, %v7112
      %v7189 = vadd.f32 %v7141, %v7111
      %v7190 = vadd.f32 %v7142, %v7110
      %v7191 = vadd.f32 %v7143, %v7109
      %v7192 = vadd.f32 %v7144, %v7108
      %v7193 = vadd.f32 %v7145, %v7107
      %v7194 = vadd.f32 %v7146, %v7106
      %v7195 = vadd.f32 %v7147, %v7105
      %v7196 = vadd.f32 %v7148, %v7104
      %v7197 = vadd.f32 %v7149, %v7103
      %v7198 = vadd.f32 %v7150, %v7102
      %v7199 = vadd.f32 %v7151, %v7101
      %v7200 = vadd.f32 %v7152, %v7100
      %v7201 = vadd.f32 %v7153, %v7099
      %v7202 = vadd.f32 %v7154, %v7098
      %v7203 = vadd.f32 %v7155, %v7097
      %v7204 = vadd.f32 %v7156, %v7096
      %v7205 = vadd.f32 %v7157, %v7095
      %v7206 = vadd.f32 %v7158, %v7094
      %v7207 = vadd.f32 %v7159, %v7093
      %v7208 = vadd.f32 %v7160, %v7092
      %v7209 = vadd.f32 %v7161, %v7091
      %v7210 = vadd.f32 %v7162, %v7090
      %v7211 = vadd.f32 %v7163, %v7089
      %v7212 = vadd.f32 %v7164, %v7088
      %v7213 = vadd.f32 %v7165, %v7087
      %v7214 = vadd.f32 %v7166, %v7086
      %v7215 = vadd.f32 %v7167, %v7085
      %v7216 = vadd.f32 %v7168, %v7084
      %v7217 = vadd.f32 %v7169, %v7083
      %v7218 = vadd.f32 %v7170, %v7082
      %v7219 = vadd.f32 %v7171, %v7081
      %v7220 = vadd.f32 %v7172, %v7080
      %v7221 = vadd.f32 %v7173, %v7079
      %v7222 = vadd.f32 %v7174, %v7126
      %7223 = vst [vmem:[#allocation2] sm:$0xff] %v7175
      %7224 = vst [vmem:[#allocation2 + $0x8] sm:$0xff] %v7176
      %7225 = vst [vmem:[#allocation2 + $0x10] sm:$0xff] %v7177
      %7226 = vst [vmem:[#allocation2 + $0x18] sm:$0xff] %v7178
      %7227 = vst [vmem:[#allocation2 + $0x20] sm:$0xff] %v7179
      %7228 = vst [vmem:[#allocation2 + $0x28] sm:$0xff] %v7180
      %7229 = vst [vmem:[#allocation2 + $0x30] sm:$0xff] %v7181
      %7230 = vst [vmem:[#allocation2 + $0x38] sm:$0xff] %v7182
      %7231 = vst [vmem:[#allocation2 + $0x40] sm:$0xff] %v7183
      %7232 = vst [vmem:[#allocation2 + $0x48] sm:$0xff] %v7184
      %7233 = vst [vmem:[#allocation2 + $0x50] sm:$0xff] %v7185
      %7234 = vst [vmem:[#allocation2 + $0x58] sm:$0xff] %v7186
      %7235 = vst [vmem:[#allocation2 + $0x60] sm:$0xff] %v7187
      %7236 = vst [vmem:[#allocation2 + $0x68] sm:$0xff] %v7188
      %7237 = vst [vmem:[#allocation2 + $0x70] sm:$0xff] %v7189
      %7238 = vst [vmem:[#allocation2 + $0x78] sm:$0xff] %v7190
      %7239 = vst [vmem:[#allocation2 + $0x80] sm:$0xff] %v7191
      %7240 = vst [vmem:[#allocation2 + $0x88] sm:$0xff] %v7192
      %7241 = vst [vmem:[#allocation2 + $0x90] sm:$0xff] %v7193
      %7242 = vst [vmem:[#allocation2 + $0x98] sm:$0xff] %v7194
      %7243 = vst [vmem:[#allocation2 + $0xa0] sm:$0xff] %v7195
      %7244 = vst [vmem:[#allocation2 + $0xa8] sm:$0xff] %v7196
      %7245 = vst [vmem:[#allocation2 + $0xb0] sm:$0xff] %v7197
      %7246 = vst [vmem:[#allocation2 + $0xb8] sm:$0xff] %v7198
      %7247 = vst [vmem:[#allocation2 + $0xc0] sm:$0xff] %v7199
      %7248 = vst [vmem:[#allocation2 + $0xc8] sm:$0xff] %v7200
      %7249 = vst [vmem:[#allocation2 + $0xd0] sm:$0xff] %v7201
      %7250 = vst [vmem:[#allocation2 + $0xd8] sm:$0xff] %v7202
      %7251 = vst [vmem:[#allocation2 + $0xe0] sm:$0xff] %v7203
      %7252 = vst [vmem:[#allocation2 + $0xe8] sm:$0xff] %v7204
      %7253 = vst [vmem:[#allocation2 + $0xf0] sm:$0xff] %v7205
      %7254 = vst [vmem:[#allocation2 + $0xf8] sm:$0xff] %v7206
      %7255 = vst [vmem:[#allocation2 + $0x100] sm:$0xff] %v7207
      %7256 = vst [vmem:[#allocation2 + $0x108] sm:$0xff] %v7208
      %7257 = vst [vmem:[#allocation2 + $0x110] sm:$0xff] %v7209
      %7258 = vst [vmem:[#allocation2 + $0x118] sm:$0xff] %v7210
      %7259 = vst [vmem:[#allocation2 + $0x120] sm:$0xff] %v7211
      %7260 = vst [vmem:[#allocation2 + $0x128] sm:$0xff] %v7212
      %7261 = vst [vmem:[#allocation2 + $0x130] sm:$0xff] %v7213
      %7262 = vst [vmem:[#allocation2 + $0x138] sm:$0xff] %v7214
      %7263 = vst [vmem:[#allocation2 + $0x140] sm:$0xff] %v7215
      %7264 = vst [vmem:[#allocation2 + $0x148] sm:$0xff] %v7216
      %7265 = vst [vmem:[#allocation2 + $0x150] sm:$0xff] %v7217
      %7266 = vst [vmem:[#allocation2 + $0x158] sm:$0xff] %v7218
      %7267 = vst [vmem:[#allocation2 + $0x160] sm:$0xff] %v7219
      %7268 = vst [vmem:[#allocation2 + $0x168] sm:$0xff] %v7220
      %7269 = vst [vmem:[#allocation2 + $0x170] sm:$0xff] %v7221
      %7270 = vst [vmem:[#allocation2 + $0x178] sm:$0xff] %v7222
      %v7271 = vld [vmem:[%s5625] sm:$0xf]
      %v7272 = vld [vmem:[%s5625 + $0x4] sm:$0xf]
      %v7273 = vld [vmem:[%s5625 + $0x8] sm:$0xf]
      %v7274 = vld [vmem:[%s5625 + $0xc] sm:$0xf]
      %v7275 = vld [vmem:[%s5625 + $0x10] sm:$0xf]
      %v7276 = vld [vmem:[%s5625 + $0x14] sm:$0xf]
      %v7277 = vld [vmem:[%s5625 + $0x18] sm:$0xf]
      %v7278 = vld [vmem:[%s5625 + $0x1c] sm:$0xf]
      %v7279 = vld [vmem:[%s5625 + $0x20] sm:$0xf]
      %v7280 = vld [vmem:[%s5625 + $0x24] sm:$0xf]
      %v7281 = vld [vmem:[%s5625 + $0x28] sm:$0xf]
      %v7282 = vld [vmem:[%s5625 + $0x2c] sm:$0xf]
      %v7283 = vld [vmem:[%s5625 + $0x30] sm:$0xf]
      %v7284 = vld [vmem:[%s5625 + $0x34] sm:$0xf]
      %v7285 = vld [vmem:[%s5625 + $0x38] sm:$0xf]
      %v7286 = vld [vmem:[%s5625 + $0x3c] sm:$0xf]
      %v7287 = vld [vmem:[%s5625 + $0x40] sm:$0xf]
      %v7288 = vld [vmem:[%s5625 + $0x44] sm:$0xf]
      %v7289 = vld [vmem:[%s5625 + $0x48] sm:$0xf]
      %v7290 = vld [vmem:[%s5625 + $0x4c] sm:$0xf]
      %v7291 = vld [vmem:[%s5625 + $0x50] sm:$0xf]
      %v7292 = vld [vmem:[%s5625 + $0x54] sm:$0xf]
      %v7293 = vld [vmem:[%s5625 + $0x58] sm:$0xf]
      %v7294 = vld [vmem:[%s5625 + $0x5c] sm:$0xf]
      %v7295 = vld [vmem:[%s5625 + $0x60] sm:$0xf]
      %v7296 = vld [vmem:[%s5625 + $0x64] sm:$0xf]
      %v7297 = vld [vmem:[%s5625 + $0x68] sm:$0xf]
      %v7298 = vld [vmem:[%s5625 + $0x6c] sm:$0xf]
      %v7299 = vld [vmem:[%s5625 + $0x70] sm:$0xf]
      %v7300 = vld [vmem:[%s5625 + $0x74] sm:$0xf]
      %v7301 = vld [vmem:[%s5625 + $0x78] sm:$0xf]
      %v7302 = vld [vmem:[%s5625 + $0x7c] sm:$0xf]
      %v7303 = vld [vmem:[%s5625 + $0x80] sm:$0xf]
      %v7304 = vld [vmem:[%s5625 + $0x84] sm:$0xf]
      %v7305 = vld [vmem:[%s5625 + $0x88] sm:$0xf]
      %v7306 = vld [vmem:[%s5625 + $0x8c] sm:$0xf]
      %v7307 = vld [vmem:[%s5625 + $0x90] sm:$0xf]
      %v7308 = vld [vmem:[%s5625 + $0x94] sm:$0xf]
      %v7309 = vld [vmem:[%s5625 + $0x98] sm:$0xf]
      %v7310 = vld [vmem:[%s5625 + $0x9c] sm:$0xf]
      %v7311 = vld [vmem:[%s5625 + $0xa0] sm:$0xf]
      %v7312 = vld [vmem:[%s5625 + $0xa4] sm:$0xf]
      %v7313 = vld [vmem:[%s5625 + $0xa8] sm:$0xf]
      %v7314 = vld [vmem:[%s5625 + $0xac] sm:$0xf]
      %v7315 = vld [vmem:[%s5625 + $0xb0] sm:$0xf]
      %v7316 = vld [vmem:[%s5625 + $0xb4] sm:$0xf]
      %v7317 = vld [vmem:[%s5625 + $0xb8] sm:$0xf]
      %v7318 = vld [vmem:[%s5625 + $0xbc] sm:$0xf]
      %s7319 = scalar_lea.vmem %s3, 192
      %v7320 = vld [vmem:[%s7319] sm:$0xf]
      %v7321 = vld [vmem:[%s7319 + $0x4] sm:$0xf]
      %v7322 = vld [vmem:[%s7319 + $0x8] sm:$0xf]
      %v7323 = vld [vmem:[%s7319 + $0xc] sm:$0xf]
      %v7324 = vld [vmem:[%s7319 + $0x10] sm:$0xf]
      %v7325 = vld [vmem:[%s7319 + $0x14] sm:$0xf]
      %v7326 = vld [vmem:[%s7319 + $0x18] sm:$0xf]
      %v7327 = vld [vmem:[%s7319 + $0x1c] sm:$0xf]
      %v7328 = vld [vmem:[%s7319 + $0x20] sm:$0xf]
      %v7329 = vld [vmem:[%s7319 + $0x24] sm:$0xf]
      %v7330 = vld [vmem:[%s7319 + $0x28] sm:$0xf]
      %v7331 = vld [vmem:[%s7319 + $0x2c] sm:$0xf]
      %v7332 = vld [vmem:[%s7319 + $0x30] sm:$0xf]
      %v7333 = vld [vmem:[%s7319 + $0x34] sm:$0xf]
      %v7334 = vld [vmem:[%s7319 + $0x38] sm:$0xf]
      %v7335 = vld [vmem:[%s7319 + $0x3c] sm:$0xf]
      %v7384 = vunpack.c.l.b16 %v7271
      %v7385 = vunpack.c.l.b16 %v7272
      %v7386 = vunpack.c.l.b16 %v7273
      %v7387 = vunpack.c.l.b16 %v7274
      %v7388 = vunpack.c.l.b16 %v7275
      %v7389 = vunpack.c.l.b16 %v7276
      %v7390 = vunpack.c.l.b16 %v7277
      %v7391 = vunpack.c.l.b16 %v7278
      %v7392 = vunpack.c.l.b16 %v7279
      %v7393 = vunpack.c.l.b16 %v7280
      %v7394 = vunpack.c.l.b16 %v7281
      %v7395 = vunpack.c.l.b16 %v7282
      %v7396 = vunpack.c.l.b16 %v7283
      %v7397 = vunpack.c.l.b16 %v7284
      %v7398 = vunpack.c.l.b16 %v7285
      %v7399 = vunpack.c.l.b16 %v7286
      %v7400 = vunpack.c.l.b16 %v7287
      %v7401 = vunpack.c.l.b16 %v7288
      %v7402 = vunpack.c.l.b16 %v7289
      %v7403 = vunpack.c.l.b16 %v7290
      %v7404 = vunpack.c.l.b16 %v7291
      %v7405 = vunpack.c.l.b16 %v7292
      %v7406 = vunpack.c.l.b16 %v7293
      %v7407 = vunpack.c.l.b16 %v7294
      %v7408 = vunpack.c.l.b16 %v7295
      %v7409 = vunpack.c.l.b16 %v7296
      %v7410 = vunpack.c.l.b16 %v7297
      %v7411 = vunpack.c.l.b16 %v7298
      %v7412 = vunpack.c.l.b16 %v7299
      %v7413 = vunpack.c.l.b16 %v7300
      %v7414 = vunpack.c.l.b16 %v7301
      %v7415 = vunpack.c.l.b16 %v7302
      %v7416 = vunpack.c.l.b16 %v7303
      %v7417 = vunpack.c.l.b16 %v7304
      %v7418 = vunpack.c.l.b16 %v7305
      %v7419 = vunpack.c.l.b16 %v7306
      %v7420 = vunpack.c.l.b16 %v7307
      %v7421 = vunpack.c.l.b16 %v7308
      %v7422 = vunpack.c.l.b16 %v7309
      %v7423 = vunpack.c.l.b16 %v7310
      %v7424 = vunpack.c.l.b16 %v7311
      %v7425 = vunpack.c.l.b16 %v7312
      %v7426 = vunpack.c.l.b16 %v7313
      %v7427 = vunpack.c.l.b16 %v7314
      %v7428 = vunpack.c.l.b16 %v7315
      %v7429 = vunpack.c.l.b16 %v7316
      %v7430 = vunpack.c.l.b16 %v7317
      %v7431 = vunpack.c.l.b16 %v7318
      %v7432 = vpack.c.b16 %v7385, %v7384
      %v7433 = vpack.c.b16 %v7387, %v7386
      %v7434 = vpack.c.b16 %v7389, %v7388
      %v7435 = vpack.c.b16 %v7391, %v7390
      %v7436 = vpack.c.b16 %v7393, %v7392
      %v7437 = vpack.c.b16 %v7395, %v7394
      %v7438 = vpack.c.b16 %v7397, %v7396
      %v7439 = vpack.c.b16 %v7399, %v7398
      %v7440 = vpack.c.b16 %v7401, %v7400
      %v7441 = vpack.c.b16 %v7403, %v7402
      %v7442 = vpack.c.b16 %v7405, %v7404
      %v7443 = vpack.c.b16 %v7407, %v7406
      %v7444 = vpack.c.b16 %v7409, %v7408
      %v7445 = vpack.c.b16 %v7411, %v7410
      %v7446 = vpack.c.b16 %v7413, %v7412
      %v7447 = vpack.c.b16 %v7415, %v7414
      %v7448 = vpack.c.b16 %v7417, %v7416
      %v7449 = vpack.c.b16 %v7419, %v7418
      %v7450 = vpack.c.b16 %v7421, %v7420
      %v7451 = vpack.c.b16 %v7423, %v7422
      %v7452 = vpack.c.b16 %v7425, %v7424
      %v7453 = vpack.c.b16 %v7427, %v7426
      %v7454 = vpack.c.b16 %v7429, %v7428
      %v7455 = vpack.c.b16 %v7431, %v7430
      %v7496 = vunpack.c.l.b16 %v7320
      %v7497 = vunpack.c.l.b16 %v7321
      %v7498 = vunpack.c.l.b16 %v7322
      %v7499 = vunpack.c.l.b16 %v7323
      %v7500 = vunpack.c.l.b16 %v7324
      %v7501 = vunpack.c.l.b16 %v7325
      %v7502 = vunpack.c.l.b16 %v7326
      %v7503 = vunpack.c.l.b16 %v7327
      %v7504 = vunpack.c.l.b16 %v7328
      %v7505 = vunpack.c.l.b16 %v7329
      %v7506 = vunpack.c.l.b16 %v7330
      %v7507 = vunpack.c.l.b16 %v7331
      %v7508 = vunpack.c.l.b16 %v7332
      %v7509 = vunpack.c.l.b16 %v7333
      %v7510 = vunpack.c.l.b16 %v7334
      %v7511 = vunpack.c.l.b16 %v7335
      %v7512 = vpack.c.b16 %v7497, %v7496
      %v7513 = vpack.c.b16 %v7499, %v7498
      %v7514 = vpack.c.b16 %v7501, %v7500
      %v7515 = vpack.c.b16 %v7503, %v7502
      %v7516 = vpack.c.b16 %v7505, %v7504
      %v7517 = vpack.c.b16 %v7507, %v7506
      %v7518 = vpack.c.b16 %v7509, %v7508
      %v7519 = vpack.c.b16 %v7511, %v7510
      %7528 = vmatprep.subr.bf16.mxu0 0
      %7529 = vmatpush1.bf16.msra.mxu0 %v7512
      %7530 = vmatprep.subr.bf16.mxu0 0
      %7531 = vmatpush1.bf16.msra.mxu0 %v7513
      %7532 = vmatprep.subr.bf16.mxu0 0
      %7533 = vmatpush1.bf16.msra.mxu0 %v7514
      %7534 = vmatprep.subr.bf16.mxu0 0
      %7535 = vmatpush1.bf16.msra.mxu0 %v7515
      %7536 = vmatprep.subr.bf16.mxu0 0
      %7537 = vmatpush1.bf16.msra.mxu0 %v7516
      %7538 = vmatprep.subr.bf16.mxu0 0
      %7539 = vmatpush1.bf16.msra.mxu0 %v7517
      %7540 = vmatprep.subr.bf16.mxu0 0
      %7541 = vmatpush1.bf16.msra.mxu0 %v7518
      %7542 = vmatprep.subr.bf16.mxu0 0
      %7543 = vmatpush1.bf16.msra.mxu0 %v7519
      %7544 = vmatprep.subr.bf16.mxu0 0
      %7545 = vmatpush1.bf16.msra.mxu0 0
      %7546 = vmatprep.subr.bf16.mxu0 0
      %7547 = vmatpush1.bf16.msra.mxu0 0
      %7548 = vmatprep.subr.bf16.mxu0 0
      %7549 = vmatpush1.bf16.msra.mxu0 0
      %7550 = vmatprep.subr.bf16.mxu0 0
      %7551 = vmatpush1.bf16.msra.mxu0 0
      %7552 = vmatprep.subr.bf16.mxu0 0
      %7553 = vmatpush1.bf16.msra.mxu0 0
      %7554 = vmatprep.subr.bf16.mxu0 0
      %7555 = vmatpush1.bf16.msra.mxu0 0
      %7556 = vmatprep.subr.bf16.mxu0 0
      %7557 = vmatpush1.bf16.msra.mxu0 0
      %7558 = vmatprep.subr.bf16.mxu0 0
      %7559 = vmatpush1.bf16.msra.mxu0 0
      %7560 = vmatprep.mubr.bf16.mxu0 0
      %7561 = vmatmul.mubr.bf16.gmra.mrb[0].mxu0 %v7432
      %v7562 = vpop.f32.mrb[0].mxu0
      %v7563 = vadd.f32 0.0, %v7562
      %v7564 = vpop.f32.mrb[0].mxu0
      %v7565 = vpop.f32.mrb[0].mxu0
      %v7566 = vadd.f32 0.0, %v7565
      %v7567 = vpop.f32.mrb[0].mxu0
      %7568 = vmatprep.mubr.bf16.mxu0 0
      %7569 = vmatmul.mubr.bf16.gmra.mrb[0].mxu0 %v7433
      %v7570 = vpop.f32.mrb[0].mxu0
      %v7571 = vadd.f32 0.0, %v7570
      %v7572 = vpop.f32.mrb[0].mxu0
      %v7573 = vpop.f32.mrb[0].mxu0
      %v7574 = vadd.f32 0.0, %v7573
      %v7575 = vpop.f32.mrb[0].mxu0
      %7576 = vmatprep.mubr.bf16.mxu0 0
      %7577 = vmatmul.mubr.bf16.gmra.mrb[0].mxu0 %v7434
      %v7578 = vpop.f32.mrb[0].mxu0
      %v7579 = vadd.f32 0.0, %v7578
      %v7580 = vpop.f32.mrb[0].mxu0
      %v7581 = vpop.f32.mrb[0].mxu0
      %v7582 = vadd.f32 0.0, %v7581
      %v7583 = vpop.f32.mrb[0].mxu0
      %7584 = vmatprep.mubr.bf16.mxu0 0
      %7585 = vmatmul.mubr.bf16.gmra.mrb[0].mxu0 %v7435
      %v7586 = vpop.f32.mrb[0].mxu0
      %v7587 = vadd.f32 0.0, %v7586
      %v7588 = vpop.f32.mrb[0].mxu0
      %v7589 = vpop.f32.mrb[0].mxu0
      %v7590 = vadd.f32 0.0, %v7589
      %v7591 = vpop.f32.mrb[0].mxu0
      %7592 = vmatprep.mubr.bf16.mxu0 0
      %7593 = vmatmul.mubr.bf16.gmra.mrb[0].mxu0 %v7436
      %v7594 = vpop.f32.mrb[0].mxu0
      %v7595 = vadd.f32 0.0, %v7594
      %v7596 = vpop.f32.mrb[0].mxu0
      %v7597 = vpop.f32.mrb[0].mxu0
      %v7598 = vadd.f32 0.0, %v7597
      %v7599 = vpop.f32.mrb[0].mxu0
      %7600 = vmatprep.mubr.bf16.mxu0 0
      %7601 = vmatmul.mubr.bf16.gmra.mrb[0].mxu0 %v7437
      %v7602 = vpop.f32.mrb[0].mxu0
      %v7603 = vadd.f32 0.0, %v7602
      %v7604 = vpop.f32.mrb[0].mxu0
      %v7605 = vpop.f32.mrb[0].mxu0
      %v7606 = vadd.f32 0.0, %v7605
      %v7607 = vpop.f32.mrb[0].mxu0
      %7608 = vmatprep.mubr.bf16.mxu0 0
      %7609 = vmatmul.mubr.bf16.gmra.mrb[0].mxu0 %v7438
      %v7610 = vpop.f32.mrb[0].mxu0
      %v7611 = vadd.f32 0.0, %v7610
      %v7612 = vpop.f32.mrb[0].mxu0
      %v7613 = vpop.f32.mrb[0].mxu0
      %v7614 = vadd.f32 0.0, %v7613
      %v7615 = vpop.f32.mrb[0].mxu0
      %7616 = vmatprep.mubr.bf16.mxu0 0
      %7617 = vmatmul.mubr.bf16.gmra.mrb[0].mxu0 %v7439
      %v7618 = vpop.f32.mrb[0].mxu0
      %v7619 = vadd.f32 0.0, %v7618
      %v7620 = vpop.f32.mrb[0].mxu0
      %v7621 = vpop.f32.mrb[0].mxu0
      %v7622 = vadd.f32 0.0, %v7621
      %v7623 = vpop.f32.mrb[0].mxu0
      %7624 = vmatprep.mubr.bf16.mxu0 0
      %7625 = vmatmul.mubr.bf16.gmra.mrb[0].mxu0 %v7440
      %v7626 = vpop.f32.mrb[0].mxu0
      %v7627 = vadd.f32 0.0, %v7626
      %v7628 = vpop.f32.mrb[0].mxu0
      %v7629 = vpop.f32.mrb[0].mxu0
      %v7630 = vadd.f32 0.0, %v7629
      %v7631 = vpop.f32.mrb[0].mxu0
      %7632 = vmatprep.mubr.bf16.mxu0 0
      %7633 = vmatmul.mubr.bf16.gmra.mrb[0].mxu0 %v7441
      %v7634 = vpop.f32.mrb[0].mxu0
      %v7635 = vadd.f32 0.0, %v7634
      %v7636 = vpop.f32.mrb[0].mxu0
      %v7637 = vpop.f32.mrb[0].mxu0
      %v7638 = vadd.f32 0.0, %v7637
      %v7639 = vpop.f32.mrb[0].mxu0
      %7640 = vmatprep.mubr.bf16.mxu0 0
      %7641 = vmatmul.mubr.bf16.gmra.mrb[0].mxu0 %v7442
      %v7642 = vpop.f32.mrb[0].mxu0
      %v7643 = vadd.f32 0.0, %v7642
      %v7644 = vpop.f32.mrb[0].mxu0
      %v7645 = vpop.f32.mrb[0].mxu0
      %v7646 = vadd.f32 0.0, %v7645
      %v7647 = vpop.f32.mrb[0].mxu0
      %7648 = vmatprep.mubr.bf16.mxu0 0
      %7649 = vmatmul.mubr.bf16.gmra.mrb[0].mxu0 %v7443
      %v7650 = vpop.f32.mrb[0].mxu0
      %v7651 = vadd.f32 0.0, %v7650
      %v7652 = vpop.f32.mrb[0].mxu0
      %v7653 = vpop.f32.mrb[0].mxu0
      %v7654 = vadd.f32 0.0, %v7653
      %v7655 = vpop.f32.mrb[0].mxu0
      %7656 = vmatprep.mubr.bf16.mxu0 0
      %7657 = vmatmul.mubr.bf16.gmra.mrb[0].mxu0 %v7444
      %v7658 = vpop.f32.mrb[0].mxu0
      %v7659 = vadd.f32 0.0, %v7658
      %v7660 = vpop.f32.mrb[0].mxu0
      %v7661 = vpop.f32.mrb[0].mxu0
      %v7662 = vadd.f32 0.0, %v7661
      %v7663 = vpop.f32.mrb[0].mxu0
      %7664 = vmatprep.mubr.bf16.mxu0 0
      %7665 = vmatmul.mubr.bf16.gmra.mrb[0].mxu0 %v7445
      %v7666 = vpop.f32.mrb[0].mxu0
      %v7667 = vadd.f32 0.0, %v7666
      %v7668 = vpop.f32.mrb[0].mxu0
      %v7669 = vpop.f32.mrb[0].mxu0
      %v7670 = vadd.f32 0.0, %v7669
      %v7671 = vpop.f32.mrb[0].mxu0
      %7672 = vmatprep.mubr.bf16.mxu0 0
      %7673 = vmatmul.mubr.bf16.gmra.mrb[0].mxu0 %v7446
      %v7674 = vpop.f32.mrb[0].mxu0
      %v7675 = vadd.f32 0.0, %v7674
      %v7676 = vpop.f32.mrb[0].mxu0
      %v7677 = vpop.f32.mrb[0].mxu0
      %v7678 = vadd.f32 0.0, %v7677
      %v7679 = vpop.f32.mrb[0].mxu0
      %7680 = vmatprep.mubr.bf16.mxu0 0
      %7681 = vmatmul.mubr.bf16.gmra.mrb[0].mxu0 %v7447
      %v7682 = vpop.f32.mrb[0].mxu0
      %v7683 = vadd.f32 0.0, %v7682
      %v7684 = vpop.f32.mrb[0].mxu0
      %v7685 = vpop.f32.mrb[0].mxu0
      %v7686 = vadd.f32 0.0, %v7685
      %v7687 = vpop.f32.mrb[0].mxu0
      %7688 = vmatprep.mubr.bf16.mxu0 0
      %7689 = vmatmul.mubr.bf16.gmra.mrb[0].mxu0 %v7448
      %v7690 = vpop.f32.mrb[0].mxu0
      %v7691 = vadd.f32 0.0, %v7690
      %v7692 = vpop.f32.mrb[0].mxu0
      %v7693 = vpop.f32.mrb[0].mxu0
      %v7694 = vadd.f32 0.0, %v7693
      %v7695 = vpop.f32.mrb[0].mxu0
      %7696 = vmatprep.mubr.bf16.mxu0 0
      %7697 = vmatmul.mubr.bf16.gmra.mrb[0].mxu0 %v7449
      %v7698 = vpop.f32.mrb[0].mxu0
      %v7699 = vadd.f32 0.0, %v7698
      %v7700 = vpop.f32.mrb[0].mxu0
      %v7701 = vpop.f32.mrb[0].mxu0
      %v7702 = vadd.f32 0.0, %v7701
      %v7703 = vpop.f32.mrb[0].mxu0
      %7704 = vmatprep.mubr.bf16.mxu0 0
      %7705 = vmatmul.mubr.bf16.gmra.mrb[0].mxu0 %v7450
      %v7706 = vpop.f32.mrb[0].mxu0
      %v7707 = vadd.f32 0.0, %v7706
      %v7708 = vpop.f32.mrb[0].mxu0
      %v7709 = vpop.f32.mrb[0].mxu0
      %v7710 = vadd.f32 0.0, %v7709
      %v7711 = vpop.f32.mrb[0].mxu0
      %7712 = vmatprep.mubr.bf16.mxu0 0
      %7713 = vmatmul.mubr.bf16.gmra.mrb[0].mxu0 %v7451
      %v7714 = vpop.f32.mrb[0].mxu0
      %v7715 = vadd.f32 0.0, %v7714
      %v7716 = vpop.f32.mrb[0].mxu0
      %v7717 = vpop.f32.mrb[0].mxu0
      %v7718 = vadd.f32 0.0, %v7717
      %v7719 = vpop.f32.mrb[0].mxu0
      %7720 = vmatprep.mubr.bf16.mxu0 0
      %7721 = vmatmul.mubr.bf16.gmra.mrb[0].mxu0 %v7452
      %v7722 = vpop.f32.mrb[0].mxu0
      %v7723 = vadd.f32 0.0, %v7722
      %v7724 = vpop.f32.mrb[0].mxu0
      %v7725 = vpop.f32.mrb[0].mxu0
      %v7726 = vadd.f32 0.0, %v7725
      %v7727 = vpop.f32.mrb[0].mxu0
      %7728 = vmatprep.mubr.bf16.mxu0 0
      %7729 = vmatmul.mubr.bf16.gmra.mrb[0].mxu0 %v7453
      %v7730 = vpop.f32.mrb[0].mxu0
      %v7731 = vadd.f32 0.0, %v7730
      %v7732 = vpop.f32.mrb[0].mxu0
      %v7733 = vpop.f32.mrb[0].mxu0
      %v7734 = vadd.f32 0.0, %v7733
      %v7735 = vpop.f32.mrb[0].mxu0
      %7736 = vmatprep.mubr.bf16.mxu0 0
      %7737 = vmatmul.mubr.bf16.gmra.mrb[0].mxu0 %v7454
      %v7738 = vpop.f32.mrb[0].mxu0
      %v7739 = vadd.f32 0.0, %v7738
      %v7740 = vpop.f32.mrb[0].mxu0
      %v7741 = vpop.f32.mrb[0].mxu0
      %v7742 = vadd.f32 0.0, %v7741
      %v7743 = vpop.f32.mrb[0].mxu0
      %7744 = vmatprep.mubr.bf16.mxu0 0
      %7745 = vmatmul.mubr.bf16.gmra.mrb[0].mxu0 %v7455
      %v7746 = vpop.f32.mrb[0].mxu0
      %v7747 = vadd.f32 0.0, %v7746
      %v7748 = vpop.f32.mrb[0].mxu0
      %v7749 = vpop.f32.mrb[0].mxu0
      %v7750 = vadd.f32 0.0, %v7749
      %v7751 = vpop.f32.mrb[0].mxu0
      %7752 = vdwg.mxu0
      %v7753 = vld [vmem:[#allocation2] sm:$0xff]
      %v7754 = vld [vmem:[#allocation2 + $0x8] sm:$0xff]
      %v7755 = vld [vmem:[#allocation2 + $0x10] sm:$0xff]
      %v7756 = vld [vmem:[#allocation2 + $0x18] sm:$0xff]
      %v7757 = vld [vmem:[#allocation2 + $0x20] sm:$0xff]
      %v7758 = vld [vmem:[#allocation2 + $0x28] sm:$0xff]
      %v7759 = vld [vmem:[#allocation2 + $0x30] sm:$0xff]
      %v7760 = vld [vmem:[#allocation2 + $0x38] sm:$0xff]
      %v7761 = vld [vmem:[#allocation2 + $0x40] sm:$0xff]
      %v7762 = vld [vmem:[#allocation2 + $0x48] sm:$0xff]
      %v7763 = vld [vmem:[#allocation2 + $0x50] sm:$0xff]
      %v7764 = vld [vmem:[#allocation2 + $0x58] sm:$0xff]
      %v7765 = vld [vmem:[#allocation2 + $0x60] sm:$0xff]
      %v7766 = vld [vmem:[#allocation2 + $0x68] sm:$0xff]
      %v7767 = vld [vmem:[#allocation2 + $0x70] sm:$0xff]
      %v7768 = vld [vmem:[#allocation2 + $0x78] sm:$0xff]
      %v7769 = vld [vmem:[#allocation2 + $0x80] sm:$0xff]
      %v7770 = vld [vmem:[#allocation2 + $0x88] sm:$0xff]
      %v7771 = vld [vmem:[#allocation2 + $0x90] sm:$0xff]
      %v7772 = vld [vmem:[#allocation2 + $0x98] sm:$0xff]
      %v7773 = vld [vmem:[#allocation2 + $0xa0] sm:$0xff]
      %v7774 = vld [vmem:[#allocation2 + $0xa8] sm:$0xff]
      %v7775 = vld [vmem:[#allocation2 + $0xb0] sm:$0xff]
      %v7776 = vld [vmem:[#allocation2 + $0xb8] sm:$0xff]
      %v7777 = vld [vmem:[#allocation2 + $0xc0] sm:$0xff]
      %v7778 = vld [vmem:[#allocation2 + $0xc8] sm:$0xff]
      %v7779 = vld [vmem:[#allocation2 + $0xd0] sm:$0xff]
      %v7780 = vld [vmem:[#allocation2 + $0xd8] sm:$0xff]
      %v7781 = vld [vmem:[#allocation2 + $0xe0] sm:$0xff]
      %v7782 = vld [vmem:[#allocation2 + $0xe8] sm:$0xff]
      %v7783 = vld [vmem:[#allocation2 + $0xf0] sm:$0xff]
      %v7784 = vld [vmem:[#allocation2 + $0xf8] sm:$0xff]
      %v7785 = vld [vmem:[#allocation2 + $0x100] sm:$0xff]
      %v7786 = vld [vmem:[#allocation2 + $0x108] sm:$0xff]
      %v7787 = vld [vmem:[#allocation2 + $0x110] sm:$0xff]
      %v7788 = vld [vmem:[#allocation2 + $0x118] sm:$0xff]
      %v7789 = vld [vmem:[#allocation2 + $0x120] sm:$0xff]
      %v7790 = vld [vmem:[#allocation2 + $0x128] sm:$0xff]
      %v7791 = vld [vmem:[#allocation2 + $0x130] sm:$0xff]
      %v7792 = vld [vmem:[#allocation2 + $0x138] sm:$0xff]
      %v7793 = vld [vmem:[#allocation2 + $0x140] sm:$0xff]
      %v7794 = vld [vmem:[#allocation2 + $0x148] sm:$0xff]
      %v7795 = vld [vmem:[#allocation2 + $0x150] sm:$0xff]
      %v7796 = vld [vmem:[#allocation2 + $0x158] sm:$0xff]
      %v7797 = vld [vmem:[#allocation2 + $0x160] sm:$0xff]
      %v7798 = vld [vmem:[#allocation2 + $0x168] sm:$0xff]
      %v7799 = vld [vmem:[#allocation2 + $0x170] sm:$0xff]
      %v7800 = vld [vmem:[#allocation2 + $0x178] sm:$0xff]
      %v7801 = vadd.f32 %v7753, %v7563
      %v7802 = vadd.f32 %v7754, %v7566
      %v7803 = vadd.f32 %v7755, %v7571
      %v7804 = vadd.f32 %v7756, %v7574
      %v7805 = vadd.f32 %v7757, %v7579
      %v7806 = vadd.f32 %v7758, %v7582
      %v7807 = vadd.f32 %v7759, %v7587
      %v7808 = vadd.f32 %v7760, %v7590
      %v7809 = vadd.f32 %v7761, %v7595
      %v7810 = vadd.f32 %v7762, %v7598
      %v7811 = vadd.f32 %v7763, %v7603
      %v7812 = vadd.f32 %v7764, %v7606
      %v7813 = vadd.f32 %v7765, %v7611
      %v7814 = vadd.f32 %v7766, %v7614
      %v7815 = vadd.f32 %v7767, %v7619
      %v7816 = vadd.f32 %v7768, %v7622
      %v7817 = vadd.f32 %v7769, %v7627
      %v7818 = vadd.f32 %v7770, %v7630
      %v7819 = vadd.f32 %v7771, %v7635
      %v7820 = vadd.f32 %v7772, %v7638
      %v7821 = vadd.f32 %v7773, %v7643
      %v7822 = vadd.f32 %v7774, %v7646
      %v7823 = vadd.f32 %v7775, %v7651
      %v7824 = vadd.f32 %v7776, %v7654
      %v7825 = vadd.f32 %v7777, %v7659
      %v7826 = vadd.f32 %v7778, %v7662
      %v7827 = vadd.f32 %v7779, %v7667
      %v7828 = vadd.f32 %v7780, %v7670
      %v7829 = vadd.f32 %v7781, %v7675
      %v7830 = vadd.f32 %v7782, %v7678
      %v7831 = vadd.f32 %v7783, %v7683
      %v7832 = vadd.f32 %v7784, %v7686
      %v7833 = vadd.f32 %v7785, %v7691
      %v7834 = vadd.f32 %v7786, %v7694
      %v7835 = vadd.f32 %v7787, %v7699
      %v7836 = vadd.f32 %v7788, %v7702
      %v7837 = vadd.f32 %v7789, %v7707
      %v7838 = vadd.f32 %v7790, %v7710
      %v7839 = vadd.f32 %v7791, %v7715
      %v7840 = vadd.f32 %v7792, %v7718
      %v7841 = vadd.f32 %v7793, %v7723
      %v7842 = vadd.f32 %v7794, %v7726
      %v7843 = vadd.f32 %v7795, %v7731
      %v7844 = vadd.f32 %v7796, %v7734
      %v7845 = vadd.f32 %v7797, %v7739
      %v7846 = vadd.f32 %v7798, %v7742
      %v7847 = vadd.f32 %v7799, %v7747
      %v7848 = vadd.f32 %v7800, %v7750
      %7849 = vst [vmem:[#allocation2] sm:$0xff] %v7801
      %7850 = vst [vmem:[#allocation2 + $0x8] sm:$0xff] %v7802
      %7851 = vst [vmem:[#allocation2 + $0x10] sm:$0xff] %v7803
      %7852 = vst [vmem:[#allocation2 + $0x18] sm:$0xff] %v7804
      %7853 = vst [vmem:[#allocation2 + $0x20] sm:$0xff] %v7805
      %7854 = vst [vmem:[#allocation2 + $0x28] sm:$0xff] %v7806
      %7855 = vst [vmem:[#allocation2 + $0x30] sm:$0xff] %v7807
      %7856 = vst [vmem:[#allocation2 + $0x38] sm:$0xff] %v7808
      %7857 = vst [vmem:[#allocation2 + $0x40] sm:$0xff] %v7809
      %7858 = vst [vmem:[#allocation2 + $0x48] sm:$0xff] %v7810
      %7859 = vst [vmem:[#allocation2 + $0x50] sm:$0xff] %v7811
      %7860 = vst [vmem:[#allocation2 + $0x58] sm:$0xff] %v7812
      %7861 = vst [vmem:[#allocation2 + $0x60] sm:$0xff] %v7813
      %7862 = vst [vmem:[#allocation2 + $0x68] sm:$0xff] %v7814
      %7863 = vst [vmem:[#allocation2 + $0x70] sm:$0xff] %v7815
      %7864 = vst [vmem:[#allocation2 + $0x78] sm:$0xff] %v7816
      %7865 = vst [vmem:[#allocation2 + $0x80] sm:$0xff] %v7817
      %7866 = vst [vmem:[#allocation2 + $0x88] sm:$0xff] %v7818
      %7867 = vst [vmem:[#allocation2 + $0x90] sm:$0xff] %v7819
      %7868 = vst [vmem:[#allocation2 + $0x98] sm:$0xff] %v7820
      %7869 = vst [vmem:[#allocation2 + $0xa0] sm:$0xff] %v7821
      %7870 = vst [vmem:[#allocation2 + $0xa8] sm:$0xff] %v7822
      %7871 = vst [vmem:[#allocation2 + $0xb0] sm:$0xff] %v7823
      %7872 = vst [vmem:[#allocation2 + $0xb8] sm:$0xff] %v7824
      %7873 = vst [vmem:[#allocation2 + $0xc0] sm:$0xff] %v7825
      %7874 = vst [vmem:[#allocation2 + $0xc8] sm:$0xff] %v7826
      %7875 = vst [vmem:[#allocation2 + $0xd0] sm:$0xff] %v7827
      %7876 = vst [vmem:[#allocation2 + $0xd8] sm:$0xff] %v7828
      %7877 = vst [vmem:[#allocation2 + $0xe0] sm:$0xff] %v7829
      %7878 = vst [vmem:[#allocation2 + $0xe8] sm:$0xff] %v7830
      %7879 = vst [vmem:[#allocation2 + $0xf0] sm:$0xff] %v7831
      %7880 = vst [vmem:[#allocation2 + $0xf8] sm:$0xff] %v7832
      %7881 = vst [vmem:[#allocation2 + $0x100] sm:$0xff] %v7833
      %7882 = vst [vmem:[#allocation2 + $0x108] sm:$0xff] %v7834
      %7883 = vst [vmem:[#allocation2 + $0x110] sm:$0xff] %v7835
      %7884 = vst [vmem:[#allocation2 + $0x118] sm:$0xff] %v7836
      %7885 = vst [vmem:[#allocation2 + $0x120] sm:$0xff] %v7837
      %7886 = vst [vmem:[#allocation2 + $0x128] sm:$0xff] %v7838
      %7887 = vst [vmem:[#allocation2 + $0x130] sm:$0xff] %v7839
      %7888 = vst [vmem:[#allocation2 + $0x138] sm:$0xff] %v7840
      %7889 = vst [vmem:[#allocation2 + $0x140] sm:$0xff] %v7841
      %7890 = vst [vmem:[#allocation2 + $0x148] sm:$0xff] %v7842
      %7891 = vst [vmem:[#allocation2 + $0x150] sm:$0xff] %v7843
      %7892 = vst [vmem:[#allocation2 + $0x158] sm:$0xff] %v7844
      %7893 = vst [vmem:[#allocation2 + $0x160] sm:$0xff] %v7845
      %7894 = vst [vmem:[#allocation2 + $0x168] sm:$0xff] %v7846
      %7895 = vst [vmem:[#allocation2 + $0x170] sm:$0xff] %v7847
      %7896 = vst [vmem:[#allocation2 + $0x178] sm:$0xff] %v7848
      %s7897 = scalar_lea.vmem %s3, 256
      %v7898 = vld [vmem:[%s7897] sm:$0xf]
      %v7899 = vld [vmem:[%s7897 + $0x4] sm:$0xf]
      %v7900 = vld [vmem:[%s7897 + $0x8] sm:$0xf]
      %v7901 = vld [vmem:[%s7897 + $0xc] sm:$0xf]
      %v7902 = vld [vmem:[%s7897 + $0x10] sm:$0xf]
      %v7903 = vld [vmem:[%s7897 + $0x14] sm:$0xf]
      %v7904 = vld [vmem:[%s7897 + $0x18] sm:$0xf]
      %v7905 = vld [vmem:[%s7897 + $0x1c] sm:$0xf]
      %v7906 = vld [vmem:[%s7897 + $0x20] sm:$0xf]
      %v7907 = vld [vmem:[%s7897 + $0x24] sm:$0xf]
      %v7908 = vld [vmem:[%s7897 + $0x28] sm:$0xf]
      %v7909 = vld [vmem:[%s7897 + $0x2c] sm:$0xf]
      %v7910 = vld [vmem:[%s7897 + $0x30] sm:$0xf]
      %v7911 = vld [vmem:[%s7897 + $0x34] sm:$0xf]
      %v7912 = vld [vmem:[%s7897 + $0x38] sm:$0xf]
      %v7913 = vld [vmem:[%s7897 + $0x3c] sm:$0xf]
      %v7930 = vunpack.c.l.b16 %v7898
      %v7931 = vunpack.c.l.b16 %v7899
      %v7932 = vunpack.c.l.b16 %v7900
      %v7933 = vunpack.c.l.b16 %v7901
      %v7934 = vunpack.c.l.b16 %v7902
      %v7935 = vunpack.c.l.b16 %v7903
      %v7936 = vunpack.c.l.b16 %v7904
      %v7937 = vunpack.c.l.b16 %v7905
      %v7938 = vunpack.c.l.b16 %v7906
      %v7939 = vunpack.c.l.b16 %v7907
      %v7940 = vunpack.c.l.b16 %v7908
      %v7941 = vunpack.c.l.b16 %v7909
      %v7942 = vunpack.c.l.b16 %v7910
      %v7943 = vunpack.c.l.b16 %v7911
      %v7944 = vunpack.c.l.b16 %v7912
      %v7945 = vunpack.c.l.b16 %v7913
      %v7946 = vpack.c.b16 %v7931, %v7930
      %v7947 = vpack.c.b16 %v7933, %v7932
      %v7948 = vpack.c.b16 %v7935, %v7934
      %v7949 = vpack.c.b16 %v7937, %v7936
      %v7950 = vpack.c.b16 %v7939, %v7938
      %v7951 = vpack.c.b16 %v7941, %v7940
      %v7952 = vpack.c.b16 %v7943, %v7942
      %v7953 = vpack.c.b16 %v7945, %v7944
      %7962 = vmatprep.subr.bf16.mxu0 0
      %7963 = vmatpush1.bf16.msra.mxu0 %v7946
      %7964 = vmatprep.subr.bf16.mxu0 0
      %7965 = vmatpush1.bf16.msra.mxu0 %v7947
      %7966 = vmatprep.subr.bf16.mxu0 0
      %7967 = vmatpush1.bf16.msra.mxu0 %v7948
      %7968 = vmatprep.subr.bf16.mxu0 0
      %7969 = vmatpush1.bf16.msra.mxu0 %v7949
      %7970 = vmatprep.subr.bf16.mxu0 0
      %7971 = vmatpush1.bf16.msra.mxu0 %v7950
      %7972 = vmatprep.subr.bf16.mxu0 0
      %7973 = vmatpush1.bf16.msra.mxu0 %v7951
      %7974 = vmatprep.subr.bf16.mxu0 0
      %7975 = vmatpush1.bf16.msra.mxu0 %v7952
      %7976 = vmatprep.subr.bf16.mxu0 0
      %7977 = vmatpush1.bf16.msra.mxu0 %v7953
      %7978 = vmatprep.subr.bf16.mxu0 0
      %7979 = vmatpush1.bf16.msra.mxu0 0
      %7980 = vmatprep.subr.bf16.mxu0 0
      %7981 = vmatpush1.bf16.msra.mxu0 0
      %7982 = vmatprep.subr.bf16.mxu0 0
      %7983 = vmatpush1.bf16.msra.mxu0 0
      %7984 = vmatprep.subr.bf16.mxu0 0
      %7985 = vmatpush1.bf16.msra.mxu0 0
      %7986 = vmatprep.subr.bf16.mxu0 0
      %7987 = vmatpush1.bf16.msra.mxu0 0
      %7988 = vmatprep.subr.bf16.mxu0 0
      %7989 = vmatpush1.bf16.msra.mxu0 0
      %7990 = vmatprep.subr.bf16.mxu0 0
      %7991 = vmatpush1.bf16.msra.mxu0 0
      %7992 = vmatprep.subr.bf16.mxu0 0
      %7993 = vmatpush1.bf16.msra.mxu0 0
      %7994 = vmatprep.mubr.bf16.mxu0 0
      %7995 = vmatmul.mubr.bf16.gmra.mrb[0].mxu0 %v7432
      %v7996 = vpop.f32.mrb[0].mxu0
      %v7997 = vadd.f32 0.0, %v7996
      %v7998 = vpop.f32.mrb[0].mxu0
      %v7999 = vpop.f32.mrb[0].mxu0
      %v8000 = vadd.f32 0.0, %v7999
      %v8001 = vpop.f32.mrb[0].mxu0
      %8002 = vmatprep.mubr.bf16.mxu0 0
      %8003 = vmatmul.mubr.bf16.gmra.mrb[0].mxu0 %v7433
      %v8004 = vpop.f32.mrb[0].mxu0
      %v8005 = vadd.f32 0.0, %v8004
      %v8006 = vpop.f32.mrb[0].mxu0
      %v8007 = vpop.f32.mrb[0].mxu0
      %v8008 = vadd.f32 0.0, %v8007
      %v8009 = vpop.f32.mrb[0].mxu0
      %8010 = vmatprep.mubr.bf16.mxu0 0
      %8011 = vmatmul.mubr.bf16.gmra.mrb[0].mxu0 %v7434
      %v8012 = vpop.f32.mrb[0].mxu0
      %v8013 = vadd.f32 0.0, %v8012
      %v8014 = vpop.f32.mrb[0].mxu0
      %v8015 = vpop.f32.mrb[0].mxu0
      %v8016 = vadd.f32 0.0, %v8015
      %v8017 = vpop.f32.mrb[0].mxu0
      %8018 = vmatprep.mubr.bf16.mxu0 0
      %8019 = vmatmul.mubr.bf16.gmra.mrb[0].mxu0 %v7435
      %v8020 = vpop.f32.mrb[0].mxu0
      %v8021 = vadd.f32 0.0, %v8020
      %v8022 = vpop.f32.mrb[0].mxu0
      %v8023 = vpop.f32.mrb[0].mxu0
      %v8024 = vadd.f32 0.0, %v8023
      %v8025 = vpop.f32.mrb[0].mxu0
      %8026 = vmatprep.mubr.bf16.mxu0 0
      %8027 = vmatmul.mubr.bf16.gmra.mrb[0].mxu0 %v7436
      %v8028 = vpop.f32.mrb[0].mxu0
      %v8029 = vadd.f32 0.0, %v8028
      %v8030 = vpop.f32.mrb[0].mxu0
      %v8031 = vpop.f32.mrb[0].mxu0
      %v8032 = vadd.f32 0.0, %v8031
      %v8033 = vpop.f32.mrb[0].mxu0
      %8034 = vmatprep.mubr.bf16.mxu0 0
      %8035 = vmatmul.mubr.bf16.gmra.mrb[0].mxu0 %v7437
      %v8036 = vpop.f32.mrb[0].mxu0
      %v8037 = vadd.f32 0.0, %v8036
      %v8038 = vpop.f32.mrb[0].mxu0
      %v8039 = vpop.f32.mrb[0].mxu0
      %v8040 = vadd.f32 0.0, %v8039
      %v8041 = vpop.f32.mrb[0].mxu0
      %8042 = vmatprep.mubr.bf16.mxu0 0
      %8043 = vmatmul.mubr.bf16.gmra.mrb[0].mxu0 %v7438
      %v8044 = vpop.f32.mrb[0].mxu0
      %v8045 = vadd.f32 0.0, %v8044
      %v8046 = vpop.f32.mrb[0].mxu0
      %v8047 = vpop.f32.mrb[0].mxu0
      %v8048 = vadd.f32 0.0, %v8047
      %v8049 = vpop.f32.mrb[0].mxu0
      %8050 = vmatprep.mubr.bf16.mxu0 0
      %8051 = vmatmul.mubr.bf16.gmra.mrb[0].mxu0 %v7439
      %v8052 = vpop.f32.mrb[0].mxu0
      %v8053 = vadd.f32 0.0, %v8052
      %v8054 = vpop.f32.mrb[0].mxu0
      %v8055 = vpop.f32.mrb[0].mxu0
      %v8056 = vadd.f32 0.0, %v8055
      %v8057 = vpop.f32.mrb[0].mxu0
      %8058 = vmatprep.mubr.bf16.mxu0 0
      %8059 = vmatmul.mubr.bf16.gmra.mrb[0].mxu0 %v7440
      %v8060 = vpop.f32.mrb[0].mxu0
      %v8061 = vadd.f32 0.0, %v8060
      %v8062 = vpop.f32.mrb[0].mxu0
      %v8063 = vpop.f32.mrb[0].mxu0
      %v8064 = vadd.f32 0.0, %v8063
      %v8065 = vpop.f32.mrb[0].mxu0
      %8066 = vmatprep.mubr.bf16.mxu0 0
      %8067 = vmatmul.mubr.bf16.gmra.mrb[0].mxu0 %v7441
      %v8068 = vpop.f32.mrb[0].mxu0
      %v8069 = vadd.f32 0.0, %v8068
      %v8070 = vpop.f32.mrb[0].mxu0
      %v8071 = vpop.f32.mrb[0].mxu0
      %v8072 = vadd.f32 0.0, %v8071
      %v8073 = vpop.f32.mrb[0].mxu0
      %8074 = vmatprep.mubr.bf16.mxu0 0
      %8075 = vmatmul.mubr.bf16.gmra.mrb[0].mxu0 %v7442
      %v8076 = vpop.f32.mrb[0].mxu0
      %v8077 = vadd.f32 0.0, %v8076
      %v8078 = vpop.f32.mrb[0].mxu0
      %v8079 = vpop.f32.mrb[0].mxu0
      %v8080 = vadd.f32 0.0, %v8079
      %v8081 = vpop.f32.mrb[0].mxu0
      %8082 = vmatprep.mubr.bf16.mxu0 0
      %8083 = vmatmul.mubr.bf16.gmra.mrb[0].mxu0 %v7443
      %v8084 = vpop.f32.mrb[0].mxu0
      %v8085 = vadd.f32 0.0, %v8084
      %v8086 = vpop.f32.mrb[0].mxu0
      %v8087 = vpop.f32.mrb[0].mxu0
      %v8088 = vadd.f32 0.0, %v8087
      %v8089 = vpop.f32.mrb[0].mxu0
      %8090 = vmatprep.mubr.bf16.mxu0 0
      %8091 = vmatmul.mubr.bf16.gmra.mrb[0].mxu0 %v7444
      %v8092 = vpop.f32.mrb[0].mxu0
      %v8093 = vadd.f32 0.0, %v8092
      %v8094 = vpop.f32.mrb[0].mxu0
      %v8095 = vpop.f32.mrb[0].mxu0
      %v8096 = vadd.f32 0.0, %v8095
      %v8097 = vpop.f32.mrb[0].mxu0
      %8098 = vmatprep.mubr.bf16.mxu0 0
      %8099 = vmatmul.mubr.bf16.gmra.mrb[0].mxu0 %v7445
      %v8100 = vpop.f32.mrb[0].mxu0
      %v8101 = vadd.f32 0.0, %v8100
      %v8102 = vpop.f32.mrb[0].mxu0
      %v8103 = vpop.f32.mrb[0].mxu0
      %v8104 = vadd.f32 0.0, %v8103
      %v8105 = vpop.f32.mrb[0].mxu0
      %8106 = vmatprep.mubr.bf16.mxu0 0
      %8107 = vmatmul.mubr.bf16.gmra.mrb[0].mxu0 %v7446
      %v8108 = vpop.f32.mrb[0].mxu0
      %v8109 = vadd.f32 0.0, %v8108
      %v8110 = vpop.f32.mrb[0].mxu0
      %v8111 = vpop.f32.mrb[0].mxu0
      %v8112 = vadd.f32 0.0, %v8111
      %v8113 = vpop.f32.mrb[0].mxu0
      %8114 = vmatprep.mubr.bf16.mxu0 0
      %8115 = vmatmul.mubr.bf16.gmra.mrb[0].mxu0 %v7447
      %v8116 = vpop.f32.mrb[0].mxu0
      %v8117 = vadd.f32 0.0, %v8116
      %v8118 = vpop.f32.mrb[0].mxu0
      %v8119 = vpop.f32.mrb[0].mxu0
      %v8120 = vadd.f32 0.0, %v8119
      %v8121 = vpop.f32.mrb[0].mxu0
      %8122 = vmatprep.mubr.bf16.mxu0 0
      %8123 = vmatmul.mubr.bf16.gmra.mrb[0].mxu0 %v7448
      %v8124 = vpop.f32.mrb[0].mxu0
      %v8125 = vadd.f32 0.0, %v8124
      %v8126 = vpop.f32.mrb[0].mxu0
      %v8127 = vpop.f32.mrb[0].mxu0
      %v8128 = vadd.f32 0.0, %v8127
      %v8129 = vpop.f32.mrb[0].mxu0
      %8130 = vmatprep.mubr.bf16.mxu0 0
      %8131 = vmatmul.mubr.bf16.gmra.mrb[0].mxu0 %v7449
      %v8132 = vpop.f32.mrb[0].mxu0
      %v8133 = vadd.f32 0.0, %v8132
      %v8134 = vpop.f32.mrb[0].mxu0
      %v8135 = vpop.f32.mrb[0].mxu0
      %v8136 = vadd.f32 0.0, %v8135
      %v8137 = vpop.f32.mrb[0].mxu0
      %8138 = vmatprep.mubr.bf16.mxu0 0
      %8139 = vmatmul.mubr.bf16.gmra.mrb[0].mxu0 %v7450
      %v8140 = vpop.f32.mrb[0].mxu0
      %v8141 = vadd.f32 0.0, %v8140
      %v8142 = vpop.f32.mrb[0].mxu0
      %v8143 = vpop.f32.mrb[0].mxu0
      %v8144 = vadd.f32 0.0, %v8143
      %v8145 = vpop.f32.mrb[0].mxu0
      %8146 = vmatprep.mubr.bf16.mxu0 0
      %8147 = vmatmul.mubr.bf16.gmra.mrb[0].mxu0 %v7451
      %v8148 = vpop.f32.mrb[0].mxu0
      %v8149 = vadd.f32 0.0, %v8148
      %v8150 = vpop.f32.mrb[0].mxu0
      %v8151 = vpop.f32.mrb[0].mxu0
      %v8152 = vadd.f32 0.0, %v8151
      %v8153 = vpop.f32.mrb[0].mxu0
      %8154 = vmatprep.mubr.bf16.mxu0 0
      %8155 = vmatmul.mubr.bf16.gmra.mrb[0].mxu0 %v7452
      %v8156 = vpop.f32.mrb[0].mxu0
      %v8157 = vadd.f32 0.0, %v8156
      %v8158 = vpop.f32.mrb[0].mxu0
      %v8159 = vpop.f32.mrb[0].mxu0
      %v8160 = vadd.f32 0.0, %v8159
      %v8161 = vpop.f32.mrb[0].mxu0
      %8162 = vmatprep.mubr.bf16.mxu0 0
      %8163 = vmatmul.mubr.bf16.gmra.mrb[0].mxu0 %v7453
      %v8164 = vpop.f32.mrb[0].mxu0
      %v8165 = vadd.f32 0.0, %v8164
      %v8166 = vpop.f32.mrb[0].mxu0
      %v8167 = vpop.f32.mrb[0].mxu0
      %v8168 = vadd.f32 0.0, %v8167
      %v8169 = vpop.f32.mrb[0].mxu0
      %8170 = vmatprep.mubr.bf16.mxu0 0
      %8171 = vmatmul.mubr.bf16.gmra.mrb[0].mxu0 %v7454
      %v8172 = vpop.f32.mrb[0].mxu0
      %v8173 = vadd.f32 0.0, %v8172
      %v8174 = vpop.f32.mrb[0].mxu0
      %v8175 = vpop.f32.mrb[0].mxu0
      %v8176 = vadd.f32 0.0, %v8175
      %v8177 = vpop.f32.mrb[0].mxu0
      %8178 = vmatprep.mubr.bf16.mxu0 0
      %8179 = vmatmul.mubr.bf16.gmra.mrb[0].mxu0 %v7455
      %v8180 = vpop.f32.mrb[0].mxu0
      %v8181 = vadd.f32 0.0, %v8180
      %v8182 = vpop.f32.mrb[0].mxu0
      %v8183 = vpop.f32.mrb[0].mxu0
      %v8184 = vadd.f32 0.0, %v8183
      %v8185 = vpop.f32.mrb[0].mxu0
      %8186 = vdwg.mxu0
      %v8187 = vrot.slane %v7997, 1
      %v8188 = vrot.slane %v8000, 1
      %v8189 = vrot.slane %v8005, 1
      %v8190 = vrot.slane %v8008, 1
      %v8191 = vrot.slane %v8013, 1
      %v8192 = vrot.slane %v8016, 1
      %v8193 = vrot.slane %v8021, 1
      %v8194 = vrot.slane %v8024, 1
      %v8195 = vrot.slane %v8029, 1
      %v8196 = vrot.slane %v8032, 1
      %v8197 = vrot.slane %v8037, 1
      %v8198 = vrot.slane %v8040, 1
      %v8199 = vrot.slane %v8045, 1
      %v8200 = vrot.slane %v8048, 1
      %v8201 = vrot.slane %v8053, 1
      %v8202 = vrot.slane %v8056, 1
      %v8203 = vrot.slane %v8061, 1
      %v8204 = vrot.slane %v8064, 1
      %v8205 = vrot.slane %v8069, 1
      %v8206 = vrot.slane %v8072, 1
      %v8207 = vrot.slane %v8077, 1
      %v8208 = vrot.slane %v8080, 1
      %v8209 = vrot.slane %v8085, 1
      %v8210 = vrot.slane %v8088, 1
      %v8211 = vrot.slane %v8093, 1
      %v8212 = vrot.slane %v8096, 1
      %v8213 = vrot.slane %v8101, 1
      %v8214 = vrot.slane %v8104, 1
      %v8215 = vrot.slane %v8109, 1
      %v8216 = vrot.slane %v8112, 1
      %v8217 = vrot.slane %v8117, 1
      %v8218 = vrot.slane %v8120, 1
      %v8219 = vrot.slane %v8125, 1
      %v8220 = vrot.slane %v8128, 1
      %v8221 = vrot.slane %v8133, 1
      %v8222 = vrot.slane %v8136, 1
      %v8223 = vrot.slane %v8141, 1
      %v8224 = vrot.slane %v8144, 1
      %v8225 = vrot.slane %v8149, 1
      %v8226 = vrot.slane %v8152, 1
      %v8227 = vrot.slane %v8157, 1
      %v8228 = vrot.slane %v8160, 1
      %v8229 = vrot.slane %v8165, 1
      %v8230 = vrot.slane %v8168, 1
      %v8231 = vrot.slane %v8173, 1
      %v8232 = vrot.slane %v8176, 1
      %v8233 = vrot.slane %v8181, 1
      %v8234 = vrot.slane %v8184, 1
      %v8235 = vsel %vm1634, %v8233, %v8234
      %v8236 = vsel %vm1634, %v8232, %v8233
      %v8237 = vsel %vm1634, %v8231, %v8232
      %v8238 = vsel %vm1634, %v8230, %v8231
      %v8239 = vsel %vm1634, %v8229, %v8230
      %v8240 = vsel %vm1634, %v8228, %v8229
      %v8241 = vsel %vm1634, %v8227, %v8228
      %v8242 = vsel %vm1634, %v8226, %v8227
      %v8243 = vsel %vm1634, %v8225, %v8226
      %v8244 = vsel %vm1634, %v8224, %v8225
      %v8245 = vsel %vm1634, %v8223, %v8224
      %v8246 = vsel %vm1634, %v8222, %v8223
      %v8247 = vsel %vm1634, %v8221, %v8222
      %v8248 = vsel %vm1634, %v8220, %v8221
      %v8249 = vsel %vm1634, %v8219, %v8220
      %v8250 = vsel %vm1634, %v8218, %v8219
      %v8251 = vsel %vm1634, %v8217, %v8218
      %v8252 = vsel %vm1634, %v8216, %v8217
      %v8253 = vsel %vm1634, %v8215, %v8216
      %v8254 = vsel %vm1634, %v8214, %v8215
      %v8255 = vsel %vm1634, %v8213, %v8214
      %v8256 = vsel %vm1634, %v8212, %v8213
      %v8257 = vsel %vm1634, %v8211, %v8212
      %v8258 = vsel %vm1634, %v8210, %v8211
      %v8259 = vsel %vm1634, %v8209, %v8210
      %v8260 = vsel %vm1634, %v8208, %v8209
      %v8261 = vsel %vm1634, %v8207, %v8208
      %v8262 = vsel %vm1634, %v8206, %v8207
      %v8263 = vsel %vm1634, %v8205, %v8206
      %v8264 = vsel %vm1634, %v8204, %v8205
      %v8265 = vsel %vm1634, %v8203, %v8204
      %v8266 = vsel %vm1634, %v8202, %v8203
      %v8267 = vsel %vm1634, %v8201, %v8202
      %v8268 = vsel %vm1634, %v8200, %v8201
      %v8269 = vsel %vm1634, %v8199, %v8200
      %v8270 = vsel %vm1634, %v8198, %v8199
      %v8271 = vsel %vm1634, %v8197, %v8198
      %v8272 = vsel %vm1634, %v8196, %v8197
      %v8273 = vsel %vm1634, %v8195, %v8196
      %v8274 = vsel %vm1634, %v8194, %v8195
      %v8275 = vsel %vm1634, %v8193, %v8194
      %v8276 = vsel %vm1634, %v8192, %v8193
      %v8277 = vsel %vm1634, %v8191, %v8192
      %v8278 = vsel %vm1634, %v8190, %v8191
      %v8279 = vsel %vm1634, %v8189, %v8190
      %v8280 = vsel %vm1634, %v8188, %v8189
      %v8281 = vsel %vm1634, %v8187, %v8188
      %v8282 = vsel %vm1634, %v8234, %v8187
      %v8283 = vld [vmem:[#allocation2] sm:$0xff]
      %v8284 = vld [vmem:[#allocation2 + $0x8] sm:$0xff]
      %v8285 = vld [vmem:[#allocation2 + $0x10] sm:$0xff]
      %v8286 = vld [vmem:[#allocation2 + $0x18] sm:$0xff]
      %v8287 = vld [vmem:[#allocation2 + $0x20] sm:$0xff]
      %v8288 = vld [vmem:[#allocation2 + $0x28] sm:$0xff]
      %v8289 = vld [vmem:[#allocation2 + $0x30] sm:$0xff]
      %v8290 = vld [vmem:[#allocation2 + $0x38] sm:$0xff]
      %v8291 = vld [vmem:[#allocation2 + $0x40] sm:$0xff]
      %v8292 = vld [vmem:[#allocation2 + $0x48] sm:$0xff]
      %v8293 = vld [vmem:[#allocation2 + $0x50] sm:$0xff]
      %v8294 = vld [vmem:[#allocation2 + $0x58] sm:$0xff]
      %v8295 = vld [vmem:[#allocation2 + $0x60] sm:$0xff]
      %v8296 = vld [vmem:[#allocation2 + $0x68] sm:$0xff]
      %v8297 = vld [vmem:[#allocation2 + $0x70] sm:$0xff]
      %v8298 = vld [vmem:[#allocation2 + $0x78] sm:$0xff]
      %v8299 = vld [vmem:[#allocation2 + $0x80] sm:$0xff]
      %v8300 = vld [vmem:[#allocation2 + $0x88] sm:$0xff]
      %v8301 = vld [vmem:[#allocation2 + $0x90] sm:$0xff]
      %v8302 = vld [vmem:[#allocation2 + $0x98] sm:$0xff]
      %v8303 = vld [vmem:[#allocation2 + $0xa0] sm:$0xff]
      %v8304 = vld [vmem:[#allocation2 + $0xa8] sm:$0xff]
      %v8305 = vld [vmem:[#allocation2 + $0xb0] sm:$0xff]
      %v8306 = vld [vmem:[#allocation2 + $0xb8] sm:$0xff]
      %v8307 = vld [vmem:[#allocation2 + $0xc0] sm:$0xff]
      %v8308 = vld [vmem:[#allocation2 + $0xc8] sm:$0xff]
      %v8309 = vld [vmem:[#allocation2 + $0xd0] sm:$0xff]
      %v8310 = vld [vmem:[#allocation2 + $0xd8] sm:$0xff]
      %v8311 = vld [vmem:[#allocation2 + $0xe0] sm:$0xff]
      %v8312 = vld [vmem:[#allocation2 + $0xe8] sm:$0xff]
      %v8313 = vld [vmem:[#allocation2 + $0xf0] sm:$0xff]
      %v8314 = vld [vmem:[#allocation2 + $0xf8] sm:$0xff]
      %v8315 = vld [vmem:[#allocation2 + $0x100] sm:$0xff]
      %v8316 = vld [vmem:[#allocation2 + $0x108] sm:$0xff]
      %v8317 = vld [vmem:[#allocation2 + $0x110] sm:$0xff]
      %v8318 = vld [vmem:[#allocation2 + $0x118] sm:$0xff]
      %v8319 = vld [vmem:[#allocation2 + $0x120] sm:$0xff]
      %v8320 = vld [vmem:[#allocation2 + $0x128] sm:$0xff]
      %v8321 = vld [vmem:[#allocation2 + $0x130] sm:$0xff]
      %v8322 = vld [vmem:[#allocation2 + $0x138] sm:$0xff]
      %v8323 = vld [vmem:[#allocation2 + $0x140] sm:$0xff]
      %v8324 = vld [vmem:[#allocation2 + $0x148] sm:$0xff]
      %v8325 = vld [vmem:[#allocation2 + $0x150] sm:$0xff]
      %v8326 = vld [vmem:[#allocation2 + $0x158] sm:$0xff]
      %v8327 = vld [vmem:[#allocation2 + $0x160] sm:$0xff]
      %v8328 = vld [vmem:[#allocation2 + $0x168] sm:$0xff]
      %v8329 = vld [vmem:[#allocation2 + $0x170] sm:$0xff]
      %v8330 = vld [vmem:[#allocation2 + $0x178] sm:$0xff]
      %v8331 = vadd.f32 %v8283, %v8281
      %v8332 = vadd.f32 %v8284, %v8280
      %v8333 = vadd.f32 %v8285, %v8279
      %v8334 = vadd.f32 %v8286, %v8278
      %v8335 = vadd.f32 %v8287, %v8277
      %v8336 = vadd.f32 %v8288, %v8276
      %v8337 = vadd.f32 %v8289, %v8275
      %v8338 = vadd.f32 %v8290, %v8274
      %v8339 = vadd.f32 %v8291, %v8273
      %v8340 = vadd.f32 %v8292, %v8272
      %v8341 = vadd.f32 %v8293, %v8271
      %v8342 = vadd.f32 %v8294, %v8270
      %v8343 = vadd.f32 %v8295, %v8269
      %v8344 = vadd.f32 %v8296, %v8268
      %v8345 = vadd.f32 %v8297, %v8267
      %v8346 = vadd.f32 %v8298, %v8266
      %v8347 = vadd.f32 %v8299, %v8265
      %v8348 = vadd.f32 %v8300, %v8264
      %v8349 = vadd.f32 %v8301, %v8263
      %v8350 = vadd.f32 %v8302, %v8262
      %v8351 = vadd.f32 %v8303, %v8261
      %v8352 = vadd.f32 %v8304, %v8260
      %v8353 = vadd.f32 %v8305, %v8259
      %v8354 = vadd.f32 %v8306, %v8258
      %v8355 = vadd.f32 %v8307, %v8257
      %v8356 = vadd.f32 %v8308, %v8256
      %v8357 = vadd.f32 %v8309, %v8255
      %v8358 = vadd.f32 %v8310, %v8254
      %v8359 = vadd.f32 %v8311, %v8253
      %v8360 = vadd.f32 %v8312, %v8252
      %v8361 = vadd.f32 %v8313, %v8251
      %v8362 = vadd.f32 %v8314, %v8250
      %v8363 = vadd.f32 %v8315, %v8249
      %v8364 = vadd.f32 %v8316, %v8248
      %v8365 = vadd.f32 %v8317, %v8247
      %v8366 = vadd.f32 %v8318, %v8246
      %v8367 = vadd.f32 %v8319, %v8245
      %v8368 = vadd.f32 %v8320, %v8244
      %v8369 = vadd.f32 %v8321, %v8243
      %v8370 = vadd.f32 %v8322, %v8242
      %v8371 = vadd.f32 %v8323, %v8241
      %v8372 = vadd.f32 %v8324, %v8240
      %v8373 = vadd.f32 %v8325, %v8239
      %v8374 = vadd.f32 %v8326, %v8238
      %v8375 = vadd.f32 %v8327, %v8237
      %v8376 = vadd.f32 %v8328, %v8236
      %v8377 = vadd.f32 %v8329, %v8235
      %v8378 = vadd.f32 %v8330, %v8282
      %8379 = vst [vmem:[#allocation2] sm:$0xff] %v8331
      %8380 = vst [vmem:[#allocation2 + $0x8] sm:$0xff] %v8332
      %8381 = vst [vmem:[#allocation2 + $0x10] sm:$0xff] %v8333
      %8382 = vst [vmem:[#allocation2 + $0x18] sm:$0xff] %v8334
      %8383 = vst [vmem:[#allocation2 + $0x20] sm:$0xff] %v8335
      %8384 = vst [vmem:[#allocation2 + $0x28] sm:$0xff] %v8336
      %8385 = vst [vmem:[#allocation2 + $0x30] sm:$0xff] %v8337
      %8386 = vst [vmem:[#allocation2 + $0x38] sm:$0xff] %v8338
      %8387 = vst [vmem:[#allocation2 + $0x40] sm:$0xff] %v8339
      %8388 = vst [vmem:[#allocation2 + $0x48] sm:$0xff] %v8340
      %8389 = vst [vmem:[#allocation2 + $0x50] sm:$0xff] %v8341
      %8390 = vst [vmem:[#allocation2 + $0x58] sm:$0xff] %v8342
      %8391 = vst [vmem:[#allocation2 + $0x60] sm:$0xff] %v8343
      %8392 = vst [vmem:[#allocation2 + $0x68] sm:$0xff] %v8344
      %8393 = vst [vmem:[#allocation2 + $0x70] sm:$0xff] %v8345
      %8394 = vst [vmem:[#allocation2 + $0x78] sm:$0xff] %v8346
      %8395 = vst [vmem:[#allocation2 + $0x80] sm:$0xff] %v8347
      %8396 = vst [vmem:[#allocation2 + $0x88] sm:$0xff] %v8348
      %8397 = vst [vmem:[#allocation2 + $0x90] sm:$0xff] %v8349
      %8398 = vst [vmem:[#allocation2 + $0x98] sm:$0xff] %v8350
      %8399 = vst [vmem:[#allocation2 + $0xa0] sm:$0xff] %v8351
      %8400 = vst [vmem:[#allocation2 + $0xa8] sm:$0xff] %v8352
      %8401 = vst [vmem:[#allocation2 + $0xb0] sm:$0xff] %v8353
      %8402 = vst [vmem:[#allocation2 + $0xb8] sm:$0xff] %v8354
      %8403 = vst [vmem:[#allocation2 + $0xc0] sm:$0xff] %v8355
      %8404 = vst [vmem:[#allocation2 + $0xc8] sm:$0xff] %v8356
      %8405 = vst [vmem:[#allocation2 + $0xd0] sm:$0xff] %v8357
      %8406 = vst [vmem:[#allocation2 + $0xd8] sm:$0xff] %v8358
      %8407 = vst [vmem:[#allocation2 + $0xe0] sm:$0xff] %v8359
      %8408 = vst [vmem:[#allocation2 + $0xe8] sm:$0xff] %v8360
      %8409 = vst [vmem:[#allocation2 + $0xf0] sm:$0xff] %v8361
      %8410 = vst [vmem:[#allocation2 + $0xf8] sm:$0xff] %v8362
      %8411 = vst [vmem:[#allocation2 + $0x100] sm:$0xff] %v8363
      %8412 = vst [vmem:[#allocation2 + $0x108] sm:$0xff] %v8364
      %8413 = vst [vmem:[#allocation2 + $0x110] sm:$0xff] %v8365
      %8414 = vst [vmem:[#allocation2 + $0x118] sm:$0xff] %v8366
      %8415 = vst [vmem:[#allocation2 + $0x120] sm:$0xff] %v8367
      %8416 = vst [vmem:[#allocation2 + $0x128] sm:$0xff] %v8368
      %8417 = vst [vmem:[#allocation2 + $0x130] sm:$0xff] %v8369
      %8418 = vst [vmem:[#allocation2 + $0x138] sm:$0xff] %v8370
      %8419 = vst [vmem:[#allocation2 + $0x140] sm:$0xff] %v8371
      %8420 = vst [vmem:[#allocation2 + $0x148] sm:$0xff] %v8372
      %8421 = vst [vmem:[#allocation2 + $0x150] sm:$0xff] %v8373
      %8422 = vst [vmem:[#allocation2 + $0x158] sm:$0xff] %v8374
      %8423 = vst [vmem:[#allocation2 + $0x160] sm:$0xff] %v8375
      %8424 = vst [vmem:[#allocation2 + $0x168] sm:$0xff] %v8376
      %8425 = vst [vmem:[#allocation2 + $0x170] sm:$0xff] %v8377
      %8426 = vst [vmem:[#allocation2 + $0x178] sm:$0xff] %v8378
      %s8427 = scalar_lea.vmem %s3, 320
      %v8428 = vld [vmem:[%s8427] sm:$0xf]
      %v8429 = vld [vmem:[%s8427 + $0x4] sm:$0xf]
      %v8430 = vld [vmem:[%s8427 + $0x8] sm:$0xf]
      %v8431 = vld [vmem:[%s8427 + $0xc] sm:$0xf]
      %v8432 = vld [vmem:[%s8427 + $0x10] sm:$0xf]
      %v8433 = vld [vmem:[%s8427 + $0x14] sm:$0xf]
      %v8434 = vld [vmem:[%s8427 + $0x18] sm:$0xf]
      %v8435 = vld [vmem:[%s8427 + $0x1c] sm:$0xf]
      %v8436 = vld [vmem:[%s8427 + $0x20] sm:$0xf]
      %v8437 = vld [vmem:[%s8427 + $0x24] sm:$0xf]
      %v8438 = vld [vmem:[%s8427 + $0x28] sm:$0xf]
      %v8439 = vld [vmem:[%s8427 + $0x2c] sm:$0xf]
      %v8440 = vld [vmem:[%s8427 + $0x30] sm:$0xf]
      %v8441 = vld [vmem:[%s8427 + $0x34] sm:$0xf]
      %v8442 = vld [vmem:[%s8427 + $0x38] sm:$0xf]
      %v8443 = vld [vmem:[%s8427 + $0x3c] sm:$0xf]
      %v8460 = vunpack.c.l.b16 %v8428
      %v8461 = vunpack.c.l.b16 %v8429
      %v8462 = vunpack.c.l.b16 %v8430
      %v8463 = vunpack.c.l.b16 %v8431
      %v8464 = vunpack.c.l.b16 %v8432
      %v8465 = vunpack.c.l.b16 %v8433
      %v8466 = vunpack.c.l.b16 %v8434
      %v8467 = vunpack.c.l.b16 %v8435
      %v8468 = vunpack.c.l.b16 %v8436
      %v8469 = vunpack.c.l.b16 %v8437
      %v8470 = vunpack.c.l.b16 %v8438
      %v8471 = vunpack.c.l.b16 %v8439
      %v8472 = vunpack.c.l.b16 %v8440
      %v8473 = vunpack.c.l.b16 %v8441
      %v8474 = vunpack.c.l.b16 %v8442
      %v8475 = vunpack.c.l.b16 %v8443
      %v8476 = vpack.c.b16 %v8461, %v8460
      %v8477 = vpack.c.b16 %v8463, %v8462
      %v8478 = vpack.c.b16 %v8465, %v8464
      %v8479 = vpack.c.b16 %v8467, %v8466
      %v8480 = vpack.c.b16 %v8469, %v8468
      %v8481 = vpack.c.b16 %v8471, %v8470
      %v8482 = vpack.c.b16 %v8473, %v8472
      %v8483 = vpack.c.b16 %v8475, %v8474
      %8492 = vmatprep.subr.bf16.mxu0 0
      %8493 = vmatpush1.bf16.msra.mxu0 %v8476
      %8494 = vmatprep.subr.bf16.mxu0 0
      %8495 = vmatpush1.bf16.msra.mxu0 %v8477
      %8496 = vmatprep.subr.bf16.mxu0 0
      %8497 = vmatpush1.bf16.msra.mxu0 %v8478
      %8498 = vmatprep.subr.bf16.mxu0 0
      %8499 = vmatpush1.bf16.msra.mxu0 %v8479
      %8500 = vmatprep.subr.bf16.mxu0 0
      %8501 = vmatpush1.bf16.msra.mxu0 %v8480
      %8502 = vmatprep.subr.bf16.mxu0 0
      %8503 = vmatpush1.bf16.msra.mxu0 %v8481
      %8504 = vmatprep.subr.bf16.mxu0 0
      %8505 = vmatpush1.bf16.msra.mxu0 %v8482
      %8506 = vmatprep.subr.bf16.mxu0 0
      %8507 = vmatpush1.bf16.msra.mxu0 %v8483
      %8508 = vmatprep.subr.bf16.mxu0 0
      %8509 = vmatpush1.bf16.msra.mxu0 0
      %8510 = vmatprep.subr.bf16.mxu0 0
      %8511 = vmatpush1.bf16.msra.mxu0 0
      %8512 = vmatprep.subr.bf16.mxu0 0
      %8513 = vmatpush1.bf16.msra.mxu0 0
      %8514 = vmatprep.subr.bf16.mxu0 0
      %8515 = vmatpush1.bf16.msra.mxu0 0
      %8516 = vmatprep.subr.bf16.mxu0 0
      %8517 = vmatpush1.bf16.msra.mxu0 0
      %8518 = vmatprep.subr.bf16.mxu0 0
      %8519 = vmatpush1.bf16.msra.mxu0 0
      %8520 = vmatprep.subr.bf16.mxu0 0
      %8521 = vmatpush1.bf16.msra.mxu0 0
      %8522 = vmatprep.subr.bf16.mxu0 0
      %8523 = vmatpush1.bf16.msra.mxu0 0
      %8524 = vmatprep.mubr.bf16.mxu0 0
      %8525 = vmatmul.mubr.bf16.gmra.mrb[0].mxu0 %v7432
      %v8526 = vpop.f32.mrb[0].mxu0
      %v8527 = vadd.f32 0.0, %v8526
      %v8528 = vpop.f32.mrb[0].mxu0
      %v8529 = vpop.f32.mrb[0].mxu0
      %v8530 = vadd.f32 0.0, %v8529
      %v8531 = vpop.f32.mrb[0].mxu0
      %8532 = vmatprep.mubr.bf16.mxu0 0
      %8533 = vmatmul.mubr.bf16.gmra.mrb[0].mxu0 %v7433
      %v8534 = vpop.f32.mrb[0].mxu0
      %v8535 = vadd.f32 0.0, %v8534
      %v8536 = vpop.f32.mrb[0].mxu0
      %v8537 = vpop.f32.mrb[0].mxu0
      %v8538 = vadd.f32 0.0, %v8537
      %v8539 = vpop.f32.mrb[0].mxu0
      %8540 = vmatprep.mubr.bf16.mxu0 0
      %8541 = vmatmul.mubr.bf16.gmra.mrb[0].mxu0 %v7434
      %v8542 = vpop.f32.mrb[0].mxu0
      %v8543 = vadd.f32 0.0, %v8542
      %v8544 = vpop.f32.mrb[0].mxu0
      %v8545 = vpop.f32.mrb[0].mxu0
      %v8546 = vadd.f32 0.0, %v8545
      %v8547 = vpop.f32.mrb[0].mxu0
      %8548 = vmatprep.mubr.bf16.mxu0 0
      %8549 = vmatmul.mubr.bf16.gmra.mrb[0].mxu0 %v7435
      %v8550 = vpop.f32.mrb[0].mxu0
      %v8551 = vadd.f32 0.0, %v8550
      %v8552 = vpop.f32.mrb[0].mxu0
      %v8553 = vpop.f32.mrb[0].mxu0
      %v8554 = vadd.f32 0.0, %v8553
      %v8555 = vpop.f32.mrb[0].mxu0
      %8556 = vmatprep.mubr.bf16.mxu0 0
      %8557 = vmatmul.mubr.bf16.gmra.mrb[0].mxu0 %v7436
      %v8558 = vpop.f32.mrb[0].mxu0
      %v8559 = vadd.f32 0.0, %v8558
      %v8560 = vpop.f32.mrb[0].mxu0
      %v8561 = vpop.f32.mrb[0].mxu0
      %v8562 = vadd.f32 0.0, %v8561
      %v8563 = vpop.f32.mrb[0].mxu0
      %8564 = vmatprep.mubr.bf16.mxu0 0
      %8565 = vmatmul.mubr.bf16.gmra.mrb[0].mxu0 %v7437
      %v8566 = vpop.f32.mrb[0].mxu0
      %v8567 = vadd.f32 0.0, %v8566
      %v8568 = vpop.f32.mrb[0].mxu0
      %v8569 = vpop.f32.mrb[0].mxu0
      %v8570 = vadd.f32 0.0, %v8569
      %v8571 = vpop.f32.mrb[0].mxu0
      %8572 = vmatprep.mubr.bf16.mxu0 0
      %8573 = vmatmul.mubr.bf16.gmra.mrb[0].mxu0 %v7438
      %v8574 = vpop.f32.mrb[0].mxu0
      %v8575 = vadd.f32 0.0, %v8574
      %v8576 = vpop.f32.mrb[0].mxu0
      %v8577 = vpop.f32.mrb[0].mxu0
      %v8578 = vadd.f32 0.0, %v8577
      %v8579 = vpop.f32.mrb[0].mxu0
      %8580 = vmatprep.mubr.bf16.mxu0 0
      %8581 = vmatmul.mubr.bf16.gmra.mrb[0].mxu0 %v7439
      %v8582 = vpop.f32.mrb[0].mxu0
      %v8583 = vadd.f32 0.0, %v8582
      %v8584 = vpop.f32.mrb[0].mxu0
      %v8585 = vpop.f32.mrb[0].mxu0
      %v8586 = vadd.f32 0.0, %v8585
      %v8587 = vpop.f32.mrb[0].mxu0
      %8588 = vmatprep.mubr.bf16.mxu0 0
      %8589 = vmatmul.mubr.bf16.gmra.mrb[0].mxu0 %v7440
      %v8590 = vpop.f32.mrb[0].mxu0
      %v8591 = vadd.f32 0.0, %v8590
      %v8592 = vpop.f32.mrb[0].mxu0
      %v8593 = vpop.f32.mrb[0].mxu0
      %v8594 = vadd.f32 0.0, %v8593
      %v8595 = vpop.f32.mrb[0].mxu0
      %8596 = vmatprep.mubr.bf16.mxu0 0
      %8597 = vmatmul.mubr.bf16.gmra.mrb[0].mxu0 %v7441
      %v8598 = vpop.f32.mrb[0].mxu0
      %v8599 = vadd.f32 0.0, %v8598
      %v8600 = vpop.f32.mrb[0].mxu0
      %v8601 = vpop.f32.mrb[0].mxu0
      %v8602 = vadd.f32 0.0, %v8601
      %v8603 = vpop.f32.mrb[0].mxu0
      %8604 = vmatprep.mubr.bf16.mxu0 0
      %8605 = vmatmul.mubr.bf16.gmra.mrb[0].mxu0 %v7442
      %v8606 = vpop.f32.mrb[0].mxu0
      %v8607 = vadd.f32 0.0, %v8606
      %v8608 = vpop.f32.mrb[0].mxu0
      %v8609 = vpop.f32.mrb[0].mxu0
      %v8610 = vadd.f32 0.0, %v8609
      %v8611 = vpop.f32.mrb[0].mxu0
      %8612 = vmatprep.mubr.bf16.mxu0 0
      %8613 = vmatmul.mubr.bf16.gmra.mrb[0].mxu0 %v7443
      %v8614 = vpop.f32.mrb[0].mxu0
      %v8615 = vadd.f32 0.0, %v8614
      %v8616 = vpop.f32.mrb[0].mxu0
      %v8617 = vpop.f32.mrb[0].mxu0
      %v8618 = vadd.f32 0.0, %v8617
      %v8619 = vpop.f32.mrb[0].mxu0
      %8620 = vmatprep.mubr.bf16.mxu0 0
      %8621 = vmatmul.mubr.bf16.gmra.mrb[0].mxu0 %v7444
      %v8622 = vpop.f32.mrb[0].mxu0
      %v8623 = vadd.f32 0.0, %v8622
      %v8624 = vpop.f32.mrb[0].mxu0
      %v8625 = vpop.f32.mrb[0].mxu0
      %v8626 = vadd.f32 0.0, %v8625
      %v8627 = vpop.f32.mrb[0].mxu0
      %8628 = vmatprep.mubr.bf16.mxu0 0
      %8629 = vmatmul.mubr.bf16.gmra.mrb[0].mxu0 %v7445
      %v8630 = vpop.f32.mrb[0].mxu0
      %v8631 = vadd.f32 0.0, %v8630
      %v8632 = vpop.f32.mrb[0].mxu0
      %v8633 = vpop.f32.mrb[0].mxu0
      %v8634 = vadd.f32 0.0, %v8633
      %v8635 = vpop.f32.mrb[0].mxu0
      %8636 = vmatprep.mubr.bf16.mxu0 0
      %8637 = vmatmul.mubr.bf16.gmra.mrb[0].mxu0 %v7446
      %v8638 = vpop.f32.mrb[0].mxu0
      %v8639 = vadd.f32 0.0, %v8638
      %v8640 = vpop.f32.mrb[0].mxu0
      %v8641 = vpop.f32.mrb[0].mxu0
      %v8642 = vadd.f32 0.0, %v8641
      %v8643 = vpop.f32.mrb[0].mxu0
      %8644 = vmatprep.mubr.bf16.mxu0 0
      %8645 = vmatmul.mubr.bf16.gmra.mrb[0].mxu0 %v7447
      %v8646 = vpop.f32.mrb[0].mxu0
      %v8647 = vadd.f32 0.0, %v8646
      %v8648 = vpop.f32.mrb[0].mxu0
      %v8649 = vpop.f32.mrb[0].mxu0
      %v8650 = vadd.f32 0.0, %v8649
      %v8651 = vpop.f32.mrb[0].mxu0
      %8652 = vmatprep.mubr.bf16.mxu0 0
      %8653 = vmatmul.mubr.bf16.gmra.mrb[0].mxu0 %v7448
      %v8654 = vpop.f32.mrb[0].mxu0
      %v8655 = vadd.f32 0.0, %v8654
      %v8656 = vpop.f32.mrb[0].mxu0
      %v8657 = vpop.f32.mrb[0].mxu0
      %v8658 = vadd.f32 0.0, %v8657
      %v8659 = vpop.f32.mrb[0].mxu0
      %8660 = vmatprep.mubr.bf16.mxu0 0
      %8661 = vmatmul.mubr.bf16.gmra.mrb[0].mxu0 %v7449
      %v8662 = vpop.f32.mrb[0].mxu0
      %v8663 = vadd.f32 0.0, %v8662
      %v8664 = vpop.f32.mrb[0].mxu0
      %v8665 = vpop.f32.mrb[0].mxu0
      %v8666 = vadd.f32 0.0, %v8665
      %v8667 = vpop.f32.mrb[0].mxu0
      %8668 = vmatprep.mubr.bf16.mxu0 0
      %8669 = vmatmul.mubr.bf16.gmra.mrb[0].mxu0 %v7450
      %v8670 = vpop.f32.mrb[0].mxu0
      %v8671 = vadd.f32 0.0, %v8670
      %v8672 = vpop.f32.mrb[0].mxu0
      %v8673 = vpop.f32.mrb[0].mxu0
      %v8674 = vadd.f32 0.0, %v8673
      %v8675 = vpop.f32.mrb[0].mxu0
      %8676 = vmatprep.mubr.bf16.mxu0 0
      %8677 = vmatmul.mubr.bf16.gmra.mrb[0].mxu0 %v7451
      %v8678 = vpop.f32.mrb[0].mxu0
      %v8679 = vadd.f32 0.0, %v8678
      %v8680 = vpop.f32.mrb[0].mxu0
      %v8681 = vpop.f32.mrb[0].mxu0
      %v8682 = vadd.f32 0.0, %v8681
      %v8683 = vpop.f32.mrb[0].mxu0
      %8684 = vmatprep.mubr.bf16.mxu0 0
      %8685 = vmatmul.mubr.bf16.gmra.mrb[0].mxu0 %v7452
      %v8686 = vpop.f32.mrb[0].mxu0
      %v8687 = vadd.f32 0.0, %v8686
      %v8688 = vpop.f32.mrb[0].mxu0
      %v8689 = vpop.f32.mrb[0].mxu0
      %v8690 = vadd.f32 0.0, %v8689
      %v8691 = vpop.f32.mrb[0].mxu0
      %8692 = vmatprep.mubr.bf16.mxu0 0
      %8693 = vmatmul.mubr.bf16.gmra.mrb[0].mxu0 %v7453
      %v8694 = vpop.f32.mrb[0].mxu0
      %v8695 = vadd.f32 0.0, %v8694
      %v8696 = vpop.f32.mrb[0].mxu0
      %v8697 = vpop.f32.mrb[0].mxu0
      %v8698 = vadd.f32 0.0, %v8697
      %v8699 = vpop.f32.mrb[0].mxu0
      %8700 = vmatprep.mubr.bf16.mxu0 0
      %8701 = vmatmul.mubr.bf16.gmra.mrb[0].mxu0 %v7454
      %v8702 = vpop.f32.mrb[0].mxu0
      %v8703 = vadd.f32 0.0, %v8702
      %v8704 = vpop.f32.mrb[0].mxu0
      %v8705 = vpop.f32.mrb[0].mxu0
      %v8706 = vadd.f32 0.0, %v8705
      %v8707 = vpop.f32.mrb[0].mxu0
      %8708 = vmatprep.mubr.bf16.mxu0 0
      %8709 = vmatmul.mubr.bf16.gmra.mrb[0].mxu0 %v7455
      %v8710 = vpop.f32.mrb[0].mxu0
      %v8711 = vadd.f32 0.0, %v8710
      %v8712 = vpop.f32.mrb[0].mxu0
      %v8713 = vpop.f32.mrb[0].mxu0
      %v8714 = vadd.f32 0.0, %v8713
      %v8715 = vpop.f32.mrb[0].mxu0
      %8716 = vdwg.mxu0
      %v8717 = vrot.slane %v8527, 2
      %v8718 = vrot.slane %v8530, 2
      %v8719 = vrot.slane %v8535, 2
      %v8720 = vrot.slane %v8538, 2
      %v8721 = vrot.slane %v8543, 2
      %v8722 = vrot.slane %v8546, 2
      %v8723 = vrot.slane %v8551, 2
      %v8724 = vrot.slane %v8554, 2
      %v8725 = vrot.slane %v8559, 2
      %v8726 = vrot.slane %v8562, 2
      %v8727 = vrot.slane %v8567, 2
      %v8728 = vrot.slane %v8570, 2
      %v8729 = vrot.slane %v8575, 2
      %v8730 = vrot.slane %v8578, 2
      %v8731 = vrot.slane %v8583, 2
      %v8732 = vrot.slane %v8586, 2
      %v8733 = vrot.slane %v8591, 2
      %v8734 = vrot.slane %v8594, 2
      %v8735 = vrot.slane %v8599, 2
      %v8736 = vrot.slane %v8602, 2
      %v8737 = vrot.slane %v8607, 2
      %v8738 = vrot.slane %v8610, 2
      %v8739 = vrot.slane %v8615, 2
      %v8740 = vrot.slane %v8618, 2
      %v8741 = vrot.slane %v8623, 2
      %v8742 = vrot.slane %v8626, 2
      %v8743 = vrot.slane %v8631, 2
      %v8744 = vrot.slane %v8634, 2
      %v8745 = vrot.slane %v8639, 2
      %v8746 = vrot.slane %v8642, 2
      %v8747 = vrot.slane %v8647, 2
      %v8748 = vrot.slane %v8650, 2
      %v8749 = vrot.slane %v8655, 2
      %v8750 = vrot.slane %v8658, 2
      %v8751 = vrot.slane %v8663, 2
      %v8752 = vrot.slane %v8666, 2
      %v8753 = vrot.slane %v8671, 2
      %v8754 = vrot.slane %v8674, 2
      %v8755 = vrot.slane %v8679, 2
      %v8756 = vrot.slane %v8682, 2
      %v8757 = vrot.slane %v8687, 2
      %v8758 = vrot.slane %v8690, 2
      %v8759 = vrot.slane %v8695, 2
      %v8760 = vrot.slane %v8698, 2
      %v8761 = vrot.slane %v8703, 2
      %v8762 = vrot.slane %v8706, 2
      %v8763 = vrot.slane %v8711, 2
      %v8764 = vrot.slane %v8714, 2
      %v8765 = vsel %vm7078, %v8763, %v8764
      %v8766 = vsel %vm7078, %v8762, %v8763
      %v8767 = vsel %vm7078, %v8761, %v8762
      %v8768 = vsel %vm7078, %v8760, %v8761
      %v8769 = vsel %vm7078, %v8759, %v8760
      %v8770 = vsel %vm7078, %v8758, %v8759
      %v8771 = vsel %vm7078, %v8757, %v8758
      %v8772 = vsel %vm7078, %v8756, %v8757
      %v8773 = vsel %vm7078, %v8755, %v8756
      %v8774 = vsel %vm7078, %v8754, %v8755
      %v8775 = vsel %vm7078, %v8753, %v8754
      %v8776 = vsel %vm7078, %v8752, %v8753
      %v8777 = vsel %vm7078, %v8751, %v8752
      %v8778 = vsel %vm7078, %v8750, %v8751
      %v8779 = vsel %vm7078, %v8749, %v8750
      %v8780 = vsel %vm7078, %v8748, %v8749
      %v8781 = vsel %vm7078, %v8747, %v8748
      %v8782 = vsel %vm7078, %v8746, %v8747
      %v8783 = vsel %vm7078, %v8745, %v8746
      %v8784 = vsel %vm7078, %v8744, %v8745
      %v8785 = vsel %vm7078, %v8743, %v8744
      %v8786 = vsel %vm7078, %v8742, %v8743
      %v8787 = vsel %vm7078, %v8741, %v8742
      %v8788 = vsel %vm7078, %v8740, %v8741
      %v8789 = vsel %vm7078, %v8739, %v8740
      %v8790 = vsel %vm7078, %v8738, %v8739
      %v8791 = vsel %vm7078, %v8737, %v8738
      %v8792 = vsel %vm7078, %v8736, %v8737
      %v8793 = vsel %vm7078, %v8735, %v8736
      %v8794 = vsel %vm7078, %v8734, %v8735
      %v8795 = vsel %vm7078, %v8733, %v8734
      %v8796 = vsel %vm7078, %v8732, %v8733
      %v8797 = vsel %vm7078, %v8731, %v8732
      %v8798 = vsel %vm7078, %v8730, %v8731
      %v8799 = vsel %vm7078, %v8729, %v8730
      %v8800 = vsel %vm7078, %v8728, %v8729
      %v8801 = vsel %vm7078, %v8727, %v8728
      %v8802 = vsel %vm7078, %v8726, %v8727
      %v8803 = vsel %vm7078, %v8725, %v8726
      %v8804 = vsel %vm7078, %v8724, %v8725
      %v8805 = vsel %vm7078, %v8723, %v8724
      %v8806 = vsel %vm7078, %v8722, %v8723
      %v8807 = vsel %vm7078, %v8721, %v8722
      %v8808 = vsel %vm7078, %v8720, %v8721
      %v8809 = vsel %vm7078, %v8719, %v8720
      %v8810 = vsel %vm7078, %v8718, %v8719
      %v8811 = vsel %vm7078, %v8717, %v8718
      %v8812 = vsel %vm7078, %v8764, %v8717
      %v8813 = vld [vmem:[#allocation2] sm:$0xff]
      %v8814 = vld [vmem:[#allocation2 + $0x8] sm:$0xff]
      %v8815 = vld [vmem:[#allocation2 + $0x10] sm:$0xff]
      %v8816 = vld [vmem:[#allocation2 + $0x18] sm:$0xff]
      %v8817 = vld [vmem:[#allocation2 + $0x20] sm:$0xff]
      %v8818 = vld [vmem:[#allocation2 + $0x28] sm:$0xff]
      %v8819 = vld [vmem:[#allocation2 + $0x30] sm:$0xff]
      %v8820 = vld [vmem:[#allocation2 + $0x38] sm:$0xff]
      %v8821 = vld [vmem:[#allocation2 + $0x40] sm:$0xff]
      %v8822 = vld [vmem:[#allocation2 + $0x48] sm:$0xff]
      %v8823 = vld [vmem:[#allocation2 + $0x50] sm:$0xff]
      %v8824 = vld [vmem:[#allocation2 + $0x58] sm:$0xff]
      %v8825 = vld [vmem:[#allocation2 + $0x60] sm:$0xff]
      %v8826 = vld [vmem:[#allocation2 + $0x68] sm:$0xff]
      %v8827 = vld [vmem:[#allocation2 + $0x70] sm:$0xff]
      %v8828 = vld [vmem:[#allocation2 + $0x78] sm:$0xff]
      %v8829 = vld [vmem:[#allocation2 + $0x80] sm:$0xff]
      %v8830 = vld [vmem:[#allocation2 + $0x88] sm:$0xff]
      %v8831 = vld [vmem:[#allocation2 + $0x90] sm:$0xff]
      %v8832 = vld [vmem:[#allocation2 + $0x98] sm:$0xff]
      %v8833 = vld [vmem:[#allocation2 + $0xa0] sm:$0xff]
      %v8834 = vld [vmem:[#allocation2 + $0xa8] sm:$0xff]
      %v8835 = vld [vmem:[#allocation2 + $0xb0] sm:$0xff]
      %v8836 = vld [vmem:[#allocation2 + $0xb8] sm:$0xff]
      %v8837 = vld [vmem:[#allocation2 + $0xc0] sm:$0xff]
      %v8838 = vld [vmem:[#allocation2 + $0xc8] sm:$0xff]
      %v8839 = vld [vmem:[#allocation2 + $0xd0] sm:$0xff]
      %v8840 = vld [vmem:[#allocation2 + $0xd8] sm:$0xff]
      %v8841 = vld [vmem:[#allocation2 + $0xe0] sm:$0xff]
      %v8842 = vld [vmem:[#allocation2 + $0xe8] sm:$0xff]
      %v8843 = vld [vmem:[#allocation2 + $0xf0] sm:$0xff]
      %v8844 = vld [vmem:[#allocation2 + $0xf8] sm:$0xff]
      %v8845 = vld [vmem:[#allocation2 + $0x100] sm:$0xff]
      %v8846 = vld [vmem:[#allocation2 + $0x108] sm:$0xff]
      %v8847 = vld [vmem:[#allocation2 + $0x110] sm:$0xff]
      %v8848 = vld [vmem:[#allocation2 + $0x118] sm:$0xff]
      %v8849 = vld [vmem:[#allocation2 + $0x120] sm:$0xff]
      %v8850 = vld [vmem:[#allocation2 + $0x128] sm:$0xff]
      %v8851 = vld [vmem:[#allocation2 + $0x130] sm:$0xff]
      %v8852 = vld [vmem:[#allocation2 + $0x138] sm:$0xff]
      %v8853 = vld [vmem:[#allocation2 + $0x140] sm:$0xff]
      %v8854 = vld [vmem:[#allocation2 + $0x148] sm:$0xff]
      %v8855 = vld [vmem:[#allocation2 + $0x150] sm:$0xff]
      %v8856 = vld [vmem:[#allocation2 + $0x158] sm:$0xff]
      %v8857 = vld [vmem:[#allocation2 + $0x160] sm:$0xff]
      %v8858 = vld [vmem:[#allocation2 + $0x168] sm:$0xff]
      %v8859 = vld [vmem:[#allocation2 + $0x170] sm:$0xff]
      %v8860 = vld [vmem:[#allocation2 + $0x178] sm:$0xff]
      %v8861 = vadd.f32 %v8813, %v8811
      %v8862 = vadd.f32 %v8814, %v8810
      %v8863 = vadd.f32 %v8815, %v8809
      %v8864 = vadd.f32 %v8816, %v8808
      %v8865 = vadd.f32 %v8817, %v8807
      %v8866 = vadd.f32 %v8818, %v8806
      %v8867 = vadd.f32 %v8819, %v8805
      %v8868 = vadd.f32 %v8820, %v8804
      %v8869 = vadd.f32 %v8821, %v8803
      %v8870 = vadd.f32 %v8822, %v8802
      %v8871 = vadd.f32 %v8823, %v8801
      %v8872 = vadd.f32 %v8824, %v8800
      %v8873 = vadd.f32 %v8825, %v8799
      %v8874 = vadd.f32 %v8826, %v8798
      %v8875 = vadd.f32 %v8827, %v8797
      %v8876 = vadd.f32 %v8828, %v8796
      %v8877 = vadd.f32 %v8829, %v8795
      %v8878 = vadd.f32 %v8830, %v8794
      %v8879 = vadd.f32 %v8831, %v8793
      %v8880 = vadd.f32 %v8832, %v8792
      %v8881 = vadd.f32 %v8833, %v8791
      %v8882 = vadd.f32 %v8834, %v8790
      %v8883 = vadd.f32 %v8835, %v8789
      %v8884 = vadd.f32 %v8836, %v8788
      %v8885 = vadd.f32 %v8837, %v8787
      %v8886 = vadd.f32 %v8838, %v8786
      %v8887 = vadd.f32 %v8839, %v8785
      %v8888 = vadd.f32 %v8840, %v8784
      %v8889 = vadd.f32 %v8841, %v8783
      %v8890 = vadd.f32 %v8842, %v8782
      %v8891 = vadd.f32 %v8843, %v8781
      %v8892 = vadd.f32 %v8844, %v8780
      %v8893 = vadd.f32 %v8845, %v8779
      %v8894 = vadd.f32 %v8846, %v8778
      %v8895 = vadd.f32 %v8847, %v8777
      %v8896 = vadd.f32 %v8848, %v8776
      %v8897 = vadd.f32 %v8849, %v8775
      %v8898 = vadd.f32 %v8850, %v8774
      %v8899 = vadd.f32 %v8851, %v8773
      %v8900 = vadd.f32 %v8852, %v8772
      %v8901 = vadd.f32 %v8853, %v8771
      %v8902 = vadd.f32 %v8854, %v8770
      %v8903 = vadd.f32 %v8855, %v8769
      %v8904 = vadd.f32 %v8856, %v8768
      %v8905 = vadd.f32 %v8857, %v8767
      %v8906 = vadd.f32 %v8858, %v8766
      %v8907 = vadd.f32 %v8859, %v8765
      %v8908 = vadd.f32 %v8860, %v8812
      %8909 = vst [vmem:[#allocation2] sm:$0xff] %v8861
      %8910 = vst [vmem:[#allocation2 + $0x8] sm:$0xff] %v8862
      %8911 = vst [vmem:[#allocation2 + $0x10] sm:$0xff] %v8863
      %8912 = vst [vmem:[#allocation2 + $0x18] sm:$0xff] %v8864
      %8913 = vst [vmem:[#allocation2 + $0x20] sm:$0xff] %v8865
      %8914 = vst [vmem:[#allocation2 + $0x28] sm:$0xff] %v8866
      %8915 = vst [vmem:[#allocation2 + $0x30] sm:$0xff] %v8867
      %8916 = vst [vmem:[#allocation2 + $0x38] sm:$0xff] %v8868
      %8917 = vst [vmem:[#allocation2 + $0x40] sm:$0xff] %v8869
      %8918 = vst [vmem:[#allocation2 + $0x48] sm:$0xff] %v8870
      %8919 = vst [vmem:[#allocation2 + $0x50] sm:$0xff] %v8871
      %8920 = vst [vmem:[#allocation2 + $0x58] sm:$0xff] %v8872
      %8921 = vst [vmem:[#allocation2 + $0x60] sm:$0xff] %v8873
      %8922 = vst [vmem:[#allocation2 + $0x68] sm:$0xff] %v8874
      %8923 = vst [vmem:[#allocation2 + $0x70] sm:$0xff] %v8875
      %8924 = vst [vmem:[#allocation2 + $0x78] sm:$0xff] %v8876
      %8925 = vst [vmem:[#allocation2 + $0x80] sm:$0xff] %v8877
      %8926 = vst [vmem:[#allocation2 + $0x88] sm:$0xff] %v8878
      %8927 = vst [vmem:[#allocation2 + $0x90] sm:$0xff] %v8879
      %8928 = vst [vmem:[#allocation2 + $0x98] sm:$0xff] %v8880
      %8929 = vst [vmem:[#allocation2 + $0xa0] sm:$0xff] %v8881
      %8930 = vst [vmem:[#allocation2 + $0xa8] sm:$0xff] %v8882
      %8931 = vst [vmem:[#allocation2 + $0xb0] sm:$0xff] %v8883
      %8932 = vst [vmem:[#allocation2 + $0xb8] sm:$0xff] %v8884
      %8933 = vst [vmem:[#allocation2 + $0xc0] sm:$0xff] %v8885
      %8934 = vst [vmem:[#allocation2 + $0xc8] sm:$0xff] %v8886
      %8935 = vst [vmem:[#allocation2 + $0xd0] sm:$0xff] %v8887
      %8936 = vst [vmem:[#allocation2 + $0xd8] sm:$0xff] %v8888
      %8937 = vst [vmem:[#allocation2 + $0xe0] sm:$0xff] %v8889
      %8938 = vst [vmem:[#allocation2 + $0xe8] sm:$0xff] %v8890
      %8939 = vst [vmem:[#allocation2 + $0xf0] sm:$0xff] %v8891
      %8940 = vst [vmem:[#allocation2 + $0xf8] sm:$0xff] %v8892
      %8941 = vst [vmem:[#allocation2 + $0x100] sm:$0xff] %v8893
      %8942 = vst [vmem:[#allocation2 + $0x108] sm:$0xff] %v8894
      %8943 = vst [vmem:[#allocation2 + $0x110] sm:$0xff] %v8895
      %8944 = vst [vmem:[#allocation2 + $0x118] sm:$0xff] %v8896
      %8945 = vst [vmem:[#allocation2 + $0x120] sm:$0xff] %v8897
      %8946 = vst [vmem:[#allocation2 + $0x128] sm:$0xff] %v8898
      %8947 = vst [vmem:[#allocation2 + $0x130] sm:$0xff] %v8899
      %8948 = vst [vmem:[#allocation2 + $0x138] sm:$0xff] %v8900
      %8949 = vst [vmem:[#allocation2 + $0x140] sm:$0xff] %v8901
      %8950 = vst [vmem:[#allocation2 + $0x148] sm:$0xff] %v8902
      %8951 = vst [vmem:[#allocation2 + $0x150] sm:$0xff] %v8903
      %8952 = vst [vmem:[#allocation2 + $0x158] sm:$0xff] %v8904
      %8953 = vst [vmem:[#allocation2 + $0x160] sm:$0xff] %v8905
      %8954 = vst [vmem:[#allocation2 + $0x168] sm:$0xff] %v8906
      %8955 = vst [vmem:[#allocation2 + $0x170] sm:$0xff] %v8907
      %8956 = vst [vmem:[#allocation2 + $0x178] sm:$0xff] %v8908
      %s8957 = scalar_lea.vmem [#allocation3], 24
      %v8958 = vld [vmem:[%s8957] sm:$0xf]
      %v8959 = vld [vmem:[%s8957 + $0x4] sm:$0xf]
      %v8960 = vld [vmem:[%s8957 + $0x8] sm:$0xf]
      %v8961 = vld [vmem:[%s8957 + $0xc] sm:$0xf]
      %v8962 = vld [vmem:[%s8957 + $0x10] sm:$0xf]
      %v8963 = vld [vmem:[%s8957 + $0x14] sm:$0xf]
      %v8964 = vld [vmem:[%s8957 + $0x18] sm:$0xf]
      %v8965 = vld [vmem:[%s8957 + $0x1c] sm:$0xf]
      %v8966 = vld [vmem:[%s8957 + $0x20] sm:$0xf]
      %v8967 = vld [vmem:[%s8957 + $0x24] sm:$0xf]
      %v8968 = vld [vmem:[%s8957 + $0x28] sm:$0xf]
      %v8969 = vld [vmem:[%s8957 + $0x2c] sm:$0xf]
      %v8970 = vld [vmem:[%s8957 + $0x30] sm:$0xf]
      %v8971 = vld [vmem:[%s8957 + $0x34] sm:$0xf]
      %v8972 = vld [vmem:[%s8957 + $0x38] sm:$0xf]
      %v8973 = vld [vmem:[%s8957 + $0x3c] sm:$0xf]
      %v8974 = vld [vmem:[%s8957 + $0x40] sm:$0xf]
      %v8975 = vld [vmem:[%s8957 + $0x44] sm:$0xf]
      %v8976 = vld [vmem:[%s8957 + $0x48] sm:$0xf]
      %v8977 = vld [vmem:[%s8957 + $0x4c] sm:$0xf]
      %v8978 = vld [vmem:[%s8957 + $0x50] sm:$0xf]
      %v8979 = vld [vmem:[%s8957 + $0x54] sm:$0xf]
      %v8980 = vld [vmem:[%s8957 + $0x58] sm:$0xf]
      %v8981 = vld [vmem:[%s8957 + $0x5c] sm:$0xf]
      %v8982 = vld [vmem:[%s8957 + $0x60] sm:$0xf]
      %v8983 = vld [vmem:[%s8957 + $0x64] sm:$0xf]
      %v8984 = vld [vmem:[%s8957 + $0x68] sm:$0xf]
      %v8985 = vld [vmem:[%s8957 + $0x6c] sm:$0xf]
      %v8986 = vld [vmem:[%s8957 + $0x70] sm:$0xf]
      %v8987 = vld [vmem:[%s8957 + $0x74] sm:$0xf]
      %v8988 = vld [vmem:[%s8957 + $0x78] sm:$0xf]
      %v8989 = vld [vmem:[%s8957 + $0x7c] sm:$0xf]
      %v8990 = vld [vmem:[%s8957 + $0x80] sm:$0xf]
      %v8991 = vld [vmem:[%s8957 + $0x84] sm:$0xf]
      %v8992 = vld [vmem:[%s8957 + $0x88] sm:$0xf]
      %v8993 = vld [vmem:[%s8957 + $0x8c] sm:$0xf]
      %v8994 = vld [vmem:[%s8957 + $0x90] sm:$0xf]
      %v8995 = vld [vmem:[%s8957 + $0x94] sm:$0xf]
      %v8996 = vld [vmem:[%s8957 + $0x98] sm:$0xf]
      %v8997 = vld [vmem:[%s8957 + $0x9c] sm:$0xf]
      %v8998 = vld [vmem:[%s8957 + $0xa0] sm:$0xf]
      %v8999 = vld [vmem:[%s8957 + $0xa4] sm:$0xf]
      %v9000 = vld [vmem:[%s8957 + $0xa8] sm:$0xf]
      %v9001 = vld [vmem:[%s8957 + $0xac] sm:$0xf]
      %v9002 = vld [vmem:[%s8957 + $0xb0] sm:$0xf]
      %v9003 = vld [vmem:[%s8957 + $0xb4] sm:$0xf]
      %v9004 = vld [vmem:[%s8957 + $0xb8] sm:$0xf]
      %v9005 = vld [vmem:[%s8957 + $0xbc] sm:$0xf]
      %s9006 = scalar_lea.vmem %s3, 384
      %v9007 = vld [vmem:[%s9006] sm:$0xf]
      %v9008 = vld [vmem:[%s9006 + $0x4] sm:$0xf]
      %v9009 = vld [vmem:[%s9006 + $0x8] sm:$0xf]
      %v9010 = vld [vmem:[%s9006 + $0xc] sm:$0xf]
      %v9011 = vld [vmem:[%s9006 + $0x10] sm:$0xf]
      %v9012 = vld [vmem:[%s9006 + $0x14] sm:$0xf]
      %v9013 = vld [vmem:[%s9006 + $0x18] sm:$0xf]
      %v9014 = vld [vmem:[%s9006 + $0x1c] sm:$0xf]
      %v9015 = vld [vmem:[%s9006 + $0x20] sm:$0xf]
      %v9016 = vld [vmem:[%s9006 + $0x24] sm:$0xf]
      %v9017 = vld [vmem:[%s9006 + $0x28] sm:$0xf]
      %v9018 = vld [vmem:[%s9006 + $0x2c] sm:$0xf]
      %v9019 = vld [vmem:[%s9006 + $0x30] sm:$0xf]
      %v9020 = vld [vmem:[%s9006 + $0x34] sm:$0xf]
      %v9021 = vld [vmem:[%s9006 + $0x38] sm:$0xf]
      %v9022 = vld [vmem:[%s9006 + $0x3c] sm:$0xf]
      %v9071 = vunpack.c.l.b16 %v8958
      %v9072 = vunpack.c.l.b16 %v8959
      %v9073 = vunpack.c.l.b16 %v8960
      %v9074 = vunpack.c.l.b16 %v8961
      %v9075 = vunpack.c.l.b16 %v8962
      %v9076 = vunpack.c.l.b16 %v8963
      %v9077 = vunpack.c.l.b16 %v8964
      %v9078 = vunpack.c.l.b16 %v8965
      %v9079 = vunpack.c.l.b16 %v8966
      %v9080 = vunpack.c.l.b16 %v8967
      %v9081 = vunpack.c.l.b16 %v8968
      %v9082 = vunpack.c.l.b16 %v8969
      %v9083 = vunpack.c.l.b16 %v8970
      %v9084 = vunpack.c.l.b16 %v8971
      %v9085 = vunpack.c.l.b16 %v8972
      %v9086 = vunpack.c.l.b16 %v8973
      %v9087 = vunpack.c.l.b16 %v8974
      %v9088 = vunpack.c.l.b16 %v8975
      %v9089 = vunpack.c.l.b16 %v8976
      %v9090 = vunpack.c.l.b16 %v8977
      %v9091 = vunpack.c.l.b16 %v8978
      %v9092 = vunpack.c.l.b16 %v8979
      %v9093 = vunpack.c.l.b16 %v8980
      %v9094 = vunpack.c.l.b16 %v8981
      %v9095 = vunpack.c.l.b16 %v8982
      %v9096 = vunpack.c.l.b16 %v8983
      %v9097 = vunpack.c.l.b16 %v8984
      %v9098 = vunpack.c.l.b16 %v8985
      %v9099 = vunpack.c.l.b16 %v8986
      %v9100 = vunpack.c.l.b16 %v8987
      %v9101 = vunpack.c.l.b16 %v8988
      %v9102 = vunpack.c.l.b16 %v8989
      %v9103 = vunpack.c.l.b16 %v8990
      %v9104 = vunpack.c.l.b16 %v8991
      %v9105 = vunpack.c.l.b16 %v8992
      %v9106 = vunpack.c.l.b16 %v8993
      %v9107 = vunpack.c.l.b16 %v8994
      %v9108 = vunpack.c.l.b16 %v8995
      %v9109 = vunpack.c.l.b16 %v8996
      %v9110 = vunpack.c.l.b16 %v8997
      %v9111 = vunpack.c.l.b16 %v8998
      %v9112 = vunpack.c.l.b16 %v8999
      %v9113 = vunpack.c.l.b16 %v9000
      %v9114 = vunpack.c.l.b16 %v9001
      %v9115 = vunpack.c.l.b16 %v9002
      %v9116 = vunpack.c.l.b16 %v9003
      %v9117 = vunpack.c.l.b16 %v9004
      %v9118 = vunpack.c.l.b16 %v9005
      %v9119 = vpack.c.b16 %v9072, %v9071
      %v9120 = vpack.c.b16 %v9074, %v9073
      %v9121 = vpack.c.b16 %v9076, %v9075
      %v9122 = vpack.c.b16 %v9078, %v9077
      %v9123 = vpack.c.b16 %v9080, %v9079
      %v9124 = vpack.c.b16 %v9082, %v9081
      %v9125 = vpack.c.b16 %v9084, %v9083
      %v9126 = vpack.c.b16 %v9086, %v9085
      %v9127 = vpack.c.b16 %v9088, %v9087
      %v9128 = vpack.c.b16 %v9090, %v9089
      %v9129 = vpack.c.b16 %v9092, %v9091
      %v9130 = vpack.c.b16 %v9094, %v9093
      %v9131 = vpack.c.b16 %v9096, %v9095
      %v9132 = vpack.c.b16 %v9098, %v9097
      %v9133 = vpack.c.b16 %v9100, %v9099
      %v9134 = vpack.c.b16 %v9102, %v9101
      %v9135 = vpack.c.b16 %v9104, %v9103
      %v9136 = vpack.c.b16 %v9106, %v9105
      %v9137 = vpack.c.b16 %v9108, %v9107
      %v9138 = vpack.c.b16 %v9110, %v9109
      %v9139 = vpack.c.b16 %v9112, %v9111
      %v9140 = vpack.c.b16 %v9114, %v9113
      %v9141 = vpack.c.b16 %v9116, %v9115
      %v9142 = vpack.c.b16 %v9118, %v9117
      %v9183 = vunpack.c.l.b16 %v9007
      %v9184 = vunpack.c.l.b16 %v9008
      %v9185 = vunpack.c.l.b16 %v9009
      %v9186 = vunpack.c.l.b16 %v9010
      %v9187 = vunpack.c.l.b16 %v9011
      %v9188 = vunpack.c.l.b16 %v9012
      %v9189 = vunpack.c.l.b16 %v9013
      %v9190 = vunpack.c.l.b16 %v9014
      %v9191 = vunpack.c.l.b16 %v9015
      %v9192 = vunpack.c.l.b16 %v9016
      %v9193 = vunpack.c.l.b16 %v9017
      %v9194 = vunpack.c.l.b16 %v9018
      %v9195 = vunpack.c.l.b16 %v9019
      %v9196 = vunpack.c.l.b16 %v9020
      %v9197 = vunpack.c.l.b16 %v9021
      %v9198 = vunpack.c.l.b16 %v9022
      %v9199 = vpack.c.b16 %v9184, %v9183
      %v9200 = vpack.c.b16 %v9186, %v9185
      %v9201 = vpack.c.b16 %v9188, %v9187
      %v9202 = vpack.c.b16 %v9190, %v9189
      %v9203 = vpack.c.b16 %v9192, %v9191
      %v9204 = vpack.c.b16 %v9194, %v9193
      %v9205 = vpack.c.b16 %v9196, %v9195
      %v9206 = vpack.c.b16 %v9198, %v9197
      %9215 = vmatprep.subr.bf16.mxu0 0
      %9216 = vmatpush1.bf16.msra.mxu0 %v9199
      %9217 = vmatprep.subr.bf16.mxu0 0
      %9218 = vmatpush1.bf16.msra.mxu0 %v9200
      %9219 = vmatprep.subr.bf16.mxu0 0
      %9220 = vmatpush1.bf16.msra.mxu0 %v9201
      %9221 = vmatprep.subr.bf16.mxu0 0
      %9222 = vmatpush1.bf16.msra.mxu0 %v9202
      %9223 = vmatprep.subr.bf16.mxu0 0
      %9224 = vmatpush1.bf16.msra.mxu0 %v9203
      %9225 = vmatprep.subr.bf16.mxu0 0
      %9226 = vmatpush1.bf16.msra.mxu0 %v9204
      %9227 = vmatprep.subr.bf16.mxu0 0
      %9228 = vmatpush1.bf16.msra.mxu0 %v9205
      %9229 = vmatprep.subr.bf16.mxu0 0
      %9230 = vmatpush1.bf16.msra.mxu0 %v9206
      %9231 = vmatprep.subr.bf16.mxu0 0
      %9232 = vmatpush1.bf16.msra.mxu0 0
      %9233 = vmatprep.subr.bf16.mxu0 0
      %9234 = vmatpush1.bf16.msra.mxu0 0
      %9235 = vmatprep.subr.bf16.mxu0 0
      %9236 = vmatpush1.bf16.msra.mxu0 0
      %9237 = vmatprep.subr.bf16.mxu0 0
      %9238 = vmatpush1.bf16.msra.mxu0 0
      %9239 = vmatprep.subr.bf16.mxu0 0
      %9240 = vmatpush1.bf16.msra.mxu0 0
      %9241 = vmatprep.subr.bf16.mxu0 0
      %9242 = vmatpush1.bf16.msra.mxu0 0
      %9243 = vmatprep.subr.bf16.mxu0 0
      %9244 = vmatpush1.bf16.msra.mxu0 0
      %9245 = vmatprep.subr.bf16.mxu0 0
      %9246 = vmatpush1.bf16.msra.mxu0 0
      %9247 = vmatprep.mubr.bf16.mxu0 0
      %9248 = vmatmul.mubr.bf16.gmra.mrb[0].mxu0 %v9119
      %v9249 = vpop.f32.mrb[0].mxu0
      %v9250 = vadd.f32 0.0, %v9249
      %v9251 = vpop.f32.mrb[0].mxu0
      %v9252 = vpop.f32.mrb[0].mxu0
      %v9253 = vadd.f32 0.0, %v9252
      %v9254 = vpop.f32.mrb[0].mxu0
      %9255 = vmatprep.mubr.bf16.mxu0 0
      %9256 = vmatmul.mubr.bf16.gmra.mrb[0].mxu0 %v9120
      %v9257 = vpop.f32.mrb[0].mxu0
      %v9258 = vadd.f32 0.0, %v9257
      %v9259 = vpop.f32.mrb[0].mxu0
      %v9260 = vpop.f32.mrb[0].mxu0
      %v9261 = vadd.f32 0.0, %v9260
      %v9262 = vpop.f32.mrb[0].mxu0
      %9263 = vmatprep.mubr.bf16.mxu0 0
      %9264 = vmatmul.mubr.bf16.gmra.mrb[0].mxu0 %v9121
      %v9265 = vpop.f32.mrb[0].mxu0
      %v9266 = vadd.f32 0.0, %v9265
      %v9267 = vpop.f32.mrb[0].mxu0
      %v9268 = vpop.f32.mrb[0].mxu0
      %v9269 = vadd.f32 0.0, %v9268
      %v9270 = vpop.f32.mrb[0].mxu0
      %9271 = vmatprep.mubr.bf16.mxu0 0
      %9272 = vmatmul.mubr.bf16.gmra.mrb[0].mxu0 %v9122
      %v9273 = vpop.f32.mrb[0].mxu0
      %v9274 = vadd.f32 0.0, %v9273
      %v9275 = vpop.f32.mrb[0].mxu0
      %v9276 = vpop.f32.mrb[0].mxu0
      %v9277 = vadd.f32 0.0, %v9276
      %v9278 = vpop.f32.mrb[0].mxu0
      %9279 = vmatprep.mubr.bf16.mxu0 0
      %9280 = vmatmul.mubr.bf16.gmra.mrb[0].mxu0 %v9123
      %v9281 = vpop.f32.mrb[0].mxu0
      %v9282 = vadd.f32 0.0, %v9281
      %v9283 = vpop.f32.mrb[0].mxu0
      %v9284 = vpop.f32.mrb[0].mxu0
      %v9285 = vadd.f32 0.0, %v9284
      %v9286 = vpop.f32.mrb[0].mxu0
      %9287 = vmatprep.mubr.bf16.mxu0 0
      %9288 = vmatmul.mubr.bf16.gmra.mrb[0].mxu0 %v9124
      %v9289 = vpop.f32.mrb[0].mxu0
      %v9290 = vadd.f32 0.0, %v9289
      %v9291 = vpop.f32.mrb[0].mxu0
      %v9292 = vpop.f32.mrb[0].mxu0
      %v9293 = vadd.f32 0.0, %v9292
      %v9294 = vpop.f32.mrb[0].mxu0
      %9295 = vmatprep.mubr.bf16.mxu0 0
      %9296 = vmatmul.mubr.bf16.gmra.mrb[0].mxu0 %v9125
      %v9297 = vpop.f32.mrb[0].mxu0
      %v9298 = vadd.f32 0.0, %v9297
      %v9299 = vpop.f32.mrb[0].mxu0
      %v9300 = vpop.f32.mrb[0].mxu0
      %v9301 = vadd.f32 0.0, %v9300
      %v9302 = vpop.f32.mrb[0].mxu0
      %9303 = vmatprep.mubr.bf16.mxu0 0
      %9304 = vmatmul.mubr.bf16.gmra.mrb[0].mxu0 %v9126
      %v9305 = vpop.f32.mrb[0].mxu0
      %v9306 = vadd.f32 0.0, %v9305
      %v9307 = vpop.f32.mrb[0].mxu0
      %v9308 = vpop.f32.mrb[0].mxu0
      %v9309 = vadd.f32 0.0, %v9308
      %v9310 = vpop.f32.mrb[0].mxu0
      %9311 = vmatprep.mubr.bf16.mxu0 0
      %9312 = vmatmul.mubr.bf16.gmra.mrb[0].mxu0 %v9127
      %v9313 = vpop.f32.mrb[0].mxu0
      %v9314 = vadd.f32 0.0, %v9313
      %v9315 = vpop.f32.mrb[0].mxu0
      %v9316 = vpop.f32.mrb[0].mxu0
      %v9317 = vadd.f32 0.0, %v9316
      %v9318 = vpop.f32.mrb[0].mxu0
      %9319 = vmatprep.mubr.bf16.mxu0 0
      %9320 = vmatmul.mubr.bf16.gmra.mrb[0].mxu0 %v9128
      %v9321 = vpop.f32.mrb[0].mxu0
      %v9322 = vadd.f32 0.0, %v9321
      %v9323 = vpop.f32.mrb[0].mxu0
      %v9324 = vpop.f32.mrb[0].mxu0
      %v9325 = vadd.f32 0.0, %v9324
      %v9326 = vpop.f32.mrb[0].mxu0
      %9327 = vmatprep.mubr.bf16.mxu0 0
      %9328 = vmatmul.mubr.bf16.gmra.mrb[0].mxu0 %v9129
      %v9329 = vpop.f32.mrb[0].mxu0
      %v9330 = vadd.f32 0.0, %v9329
      %v9331 = vpop.f32.mrb[0].mxu0
      %v9332 = vpop.f32.mrb[0].mxu0
      %v9333 = vadd.f32 0.0, %v9332
      %v9334 = vpop.f32.mrb[0].mxu0
      %9335 = vmatprep.mubr.bf16.mxu0 0
      %9336 = vmatmul.mubr.bf16.gmra.mrb[0].mxu0 %v9130
      %v9337 = vpop.f32.mrb[0].mxu0
      %v9338 = vadd.f32 0.0, %v9337
      %v9339 = vpop.f32.mrb[0].mxu0
      %v9340 = vpop.f32.mrb[0].mxu0
      %v9341 = vadd.f32 0.0, %v9340
      %v9342 = vpop.f32.mrb[0].mxu0
      %9343 = vmatprep.mubr.bf16.mxu0 0
      %9344 = vmatmul.mubr.bf16.gmra.mrb[0].mxu0 %v9131
      %v9345 = vpop.f32.mrb[0].mxu0
      %v9346 = vadd.f32 0.0, %v9345
      %v9347 = vpop.f32.mrb[0].mxu0
      %v9348 = vpop.f32.mrb[0].mxu0
      %v9349 = vadd.f32 0.0, %v9348
      %v9350 = vpop.f32.mrb[0].mxu0
      %9351 = vmatprep.mubr.bf16.mxu0 0
      %9352 = vmatmul.mubr.bf16.gmra.mrb[0].mxu0 %v9132
      %v9353 = vpop.f32.mrb[0].mxu0
      %v9354 = vadd.f32 0.0, %v9353
      %v9355 = vpop.f32.mrb[0].mxu0
      %v9356 = vpop.f32.mrb[0].mxu0
      %v9357 = vadd.f32 0.0, %v9356
      %v9358 = vpop.f32.mrb[0].mxu0
      %9359 = vmatprep.mubr.bf16.mxu0 0
      %9360 = vmatmul.mubr.bf16.gmra.mrb[0].mxu0 %v9133
      %v9361 = vpop.f32.mrb[0].mxu0
      %v9362 = vadd.f32 0.0, %v9361
      %v9363 = vpop.f32.mrb[0].mxu0
      %v9364 = vpop.f32.mrb[0].mxu0
      %v9365 = vadd.f32 0.0, %v9364
      %v9366 = vpop.f32.mrb[0].mxu0
      %9367 = vmatprep.mubr.bf16.mxu0 0
      %9368 = vmatmul.mubr.bf16.gmra.mrb[0].mxu0 %v9134
      %v9369 = vpop.f32.mrb[0].mxu0
      %v9370 = vadd.f32 0.0, %v9369
      %v9371 = vpop.f32.mrb[0].mxu0
      %v9372 = vpop.f32.mrb[0].mxu0
      %v9373 = vadd.f32 0.0, %v9372
      %v9374 = vpop.f32.mrb[0].mxu0
      %9375 = vmatprep.mubr.bf16.mxu0 0
      %9376 = vmatmul.mubr.bf16.gmra.mrb[0].mxu0 %v9135
      %v9377 = vpop.f32.mrb[0].mxu0
      %v9378 = vadd.f32 0.0, %v9377
      %v9379 = vpop.f32.mrb[0].mxu0
      %v9380 = vpop.f32.mrb[0].mxu0
      %v9381 = vadd.f32 0.0, %v9380
      %v9382 = vpop.f32.mrb[0].mxu0
      %9383 = vmatprep.mubr.bf16.mxu0 0
      %9384 = vmatmul.mubr.bf16.gmra.mrb[0].mxu0 %v9136
      %v9385 = vpop.f32.mrb[0].mxu0
      %v9386 = vadd.f32 0.0, %v9385
      %v9387 = vpop.f32.mrb[0].mxu0
      %v9388 = vpop.f32.mrb[0].mxu0
      %v9389 = vadd.f32 0.0, %v9388
      %v9390 = vpop.f32.mrb[0].mxu0
      %9391 = vmatprep.mubr.bf16.mxu0 0
      %9392 = vmatmul.mubr.bf16.gmra.mrb[0].mxu0 %v9137
      %v9393 = vpop.f32.mrb[0].mxu0
      %v9394 = vadd.f32 0.0, %v9393
      %v9395 = vpop.f32.mrb[0].mxu0
      %v9396 = vpop.f32.mrb[0].mxu0
      %v9397 = vadd.f32 0.0, %v9396
      %v9398 = vpop.f32.mrb[0].mxu0
      %9399 = vmatprep.mubr.bf16.mxu0 0
      %9400 = vmatmul.mubr.bf16.gmra.mrb[0].mxu0 %v9138
      %v9401 = vpop.f32.mrb[0].mxu0
      %v9402 = vadd.f32 0.0, %v9401
      %v9403 = vpop.f32.mrb[0].mxu0
      %v9404 = vpop.f32.mrb[0].mxu0
      %v9405 = vadd.f32 0.0, %v9404
      %v9406 = vpop.f32.mrb[0].mxu0
      %9407 = vmatprep.mubr.bf16.mxu0 0
      %9408 = vmatmul.mubr.bf16.gmra.mrb[0].mxu0 %v9139
      %v9409 = vpop.f32.mrb[0].mxu0
      %v9410 = vadd.f32 0.0, %v9409
      %v9411 = vpop.f32.mrb[0].mxu0
      %v9412 = vpop.f32.mrb[0].mxu0
      %v9413 = vadd.f32 0.0, %v9412
      %v9414 = vpop.f32.mrb[0].mxu0
      %9415 = vmatprep.mubr.bf16.mxu0 0
      %9416 = vmatmul.mubr.bf16.gmra.mrb[0].mxu0 %v9140
      %v9417 = vpop.f32.mrb[0].mxu0
      %v9418 = vadd.f32 0.0, %v9417
      %v9419 = vpop.f32.mrb[0].mxu0
      %v9420 = vpop.f32.mrb[0].mxu0
      %v9421 = vadd.f32 0.0, %v9420
      %v9422 = vpop.f32.mrb[0].mxu0
      %9423 = vmatprep.mubr.bf16.mxu0 0
      %9424 = vmatmul.mubr.bf16.gmra.mrb[0].mxu0 %v9141
      %v9425 = vpop.f32.mrb[0].mxu0
      %v9426 = vadd.f32 0.0, %v9425
      %v9427 = vpop.f32.mrb[0].mxu0
      %v9428 = vpop.f32.mrb[0].mxu0
      %v9429 = vadd.f32 0.0, %v9428
      %v9430 = vpop.f32.mrb[0].mxu0
      %9431 = vmatprep.mubr.bf16.mxu0 0
      %9432 = vmatmul.mubr.bf16.gmra.mrb[0].mxu0 %v9142
      %v9433 = vpop.f32.mrb[0].mxu0
      %v9434 = vadd.f32 0.0, %v9433
      %v9435 = vpop.f32.mrb[0].mxu0
      %v9436 = vpop.f32.mrb[0].mxu0
      %v9437 = vadd.f32 0.0, %v9436
      %v9438 = vpop.f32.mrb[0].mxu0
      %9439 = vdwg.mxu0
      %v9440 = vld [vmem:[#allocation2] sm:$0xff]
      %v9441 = vld [vmem:[#allocation2 + $0x8] sm:$0xff]
      %v9442 = vld [vmem:[#allocation2 + $0x10] sm:$0xff]
      %v9443 = vld [vmem:[#allocation2 + $0x18] sm:$0xff]
      %v9444 = vld [vmem:[#allocation2 + $0x20] sm:$0xff]
      %v9445 = vld [vmem:[#allocation2 + $0x28] sm:$0xff]
      %v9446 = vld [vmem:[#allocation2 + $0x30] sm:$0xff]
      %v9447 = vld [vmem:[#allocation2 + $0x38] sm:$0xff]
      %v9448 = vld [vmem:[#allocation2 + $0x40] sm:$0xff]
      %v9449 = vld [vmem:[#allocation2 + $0x48] sm:$0xff]
      %v9450 = vld [vmem:[#allocation2 + $0x50] sm:$0xff]
      %v9451 = vld [vmem:[#allocation2 + $0x58] sm:$0xff]
      %v9452 = vld [vmem:[#allocation2 + $0x60] sm:$0xff]
      %v9453 = vld [vmem:[#allocation2 + $0x68] sm:$0xff]
      %v9454 = vld [vmem:[#allocation2 + $0x70] sm:$0xff]
      %v9455 = vld [vmem:[#allocation2 + $0x78] sm:$0xff]
      %v9456 = vld [vmem:[#allocation2 + $0x80] sm:$0xff]
      %v9457 = vld [vmem:[#allocation2 + $0x88] sm:$0xff]
      %v9458 = vld [vmem:[#allocation2 + $0x90] sm:$0xff]
      %v9459 = vld [vmem:[#allocation2 + $0x98] sm:$0xff]
      %v9460 = vld [vmem:[#allocation2 + $0xa0] sm:$0xff]
      %v9461 = vld [vmem:[#allocation2 + $0xa8] sm:$0xff]
      %v9462 = vld [vmem:[#allocation2 + $0xb0] sm:$0xff]
      %v9463 = vld [vmem:[#allocation2 + $0xb8] sm:$0xff]
      %v9464 = vld [vmem:[#allocation2 + $0xc0] sm:$0xff]
      %v9465 = vld [vmem:[#allocation2 + $0xc8] sm:$0xff]
      %v9466 = vld [vmem:[#allocation2 + $0xd0] sm:$0xff]
      %v9467 = vld [vmem:[#allocation2 + $0xd8] sm:$0xff]
      %v9468 = vld [vmem:[#allocation2 + $0xe0] sm:$0xff]
      %v9469 = vld [vmem:[#allocation2 + $0xe8] sm:$0xff]
      %v9470 = vld [vmem:[#allocation2 + $0xf0] sm:$0xff]
      %v9471 = vld [vmem:[#allocation2 + $0xf8] sm:$0xff]
      %v9472 = vld [vmem:[#allocation2 + $0x100] sm:$0xff]
      %v9473 = vld [vmem:[#allocation2 + $0x108] sm:$0xff]
      %v9474 = vld [vmem:[#allocation2 + $0x110] sm:$0xff]
      %v9475 = vld [vmem:[#allocation2 + $0x118] sm:$0xff]
      %v9476 = vld [vmem:[#allocation2 + $0x120] sm:$0xff]
      %v9477 = vld [vmem:[#allocation2 + $0x128] sm:$0xff]
      %v9478 = vld [vmem:[#allocation2 + $0x130] sm:$0xff]
      %v9479 = vld [vmem:[#allocation2 + $0x138] sm:$0xff]
      %v9480 = vld [vmem:[#allocation2 + $0x140] sm:$0xff]
      %v9481 = vld [vmem:[#allocation2 + $0x148] sm:$0xff]
      %v9482 = vld [vmem:[#allocation2 + $0x150] sm:$0xff]
      %v9483 = vld [vmem:[#allocation2 + $0x158] sm:$0xff]
      %v9484 = vld [vmem:[#allocation2 + $0x160] sm:$0xff]
      %v9485 = vld [vmem:[#allocation2 + $0x168] sm:$0xff]
      %v9486 = vld [vmem:[#allocation2 + $0x170] sm:$0xff]
      %v9487 = vld [vmem:[#allocation2 + $0x178] sm:$0xff]
      %v9488 = vadd.f32 %v9440, %v9250
      %v9489 = vadd.f32 %v9441, %v9253
      %v9490 = vadd.f32 %v9442, %v9258
      %v9491 = vadd.f32 %v9443, %v9261
      %v9492 = vadd.f32 %v9444, %v9266
      %v9493 = vadd.f32 %v9445, %v9269
      %v9494 = vadd.f32 %v9446, %v9274
      %v9495 = vadd.f32 %v9447, %v9277
      %v9496 = vadd.f32 %v9448, %v9282
      %v9497 = vadd.f32 %v9449, %v9285
      %v9498 = vadd.f32 %v9450, %v9290
      %v9499 = vadd.f32 %v9451, %v9293
      %v9500 = vadd.f32 %v9452, %v9298
      %v9501 = vadd.f32 %v9453, %v9301
      %v9502 = vadd.f32 %v9454, %v9306
      %v9503 = vadd.f32 %v9455, %v9309
      %v9504 = vadd.f32 %v9456, %v9314
      %v9505 = vadd.f32 %v9457, %v9317
      %v9506 = vadd.f32 %v9458, %v9322
      %v9507 = vadd.f32 %v9459, %v9325
      %v9508 = vadd.f32 %v9460, %v9330
      %v9509 = vadd.f32 %v9461, %v9333
      %v9510 = vadd.f32 %v9462, %v9338
      %v9511 = vadd.f32 %v9463, %v9341
      %v9512 = vadd.f32 %v9464, %v9346
      %v9513 = vadd.f32 %v9465, %v9349
      %v9514 = vadd.f32 %v9466, %v9354
      %v9515 = vadd.f32 %v9467, %v9357
      %v9516 = vadd.f32 %v9468, %v9362
      %v9517 = vadd.f32 %v9469, %v9365
      %v9518 = vadd.f32 %v9470, %v9370
      %v9519 = vadd.f32 %v9471, %v9373
      %v9520 = vadd.f32 %v9472, %v9378
      %v9521 = vadd.f32 %v9473, %v9381
      %v9522 = vadd.f32 %v9474, %v9386
      %v9523 = vadd.f32 %v9475, %v9389
      %v9524 = vadd.f32 %v9476, %v9394
      %v9525 = vadd.f32 %v9477, %v9397
      %v9526 = vadd.f32 %v9478, %v9402
      %v9527 = vadd.f32 %v9479, %v9405
      %v9528 = vadd.f32 %v9480, %v9410
      %v9529 = vadd.f32 %v9481, %v9413
      %v9530 = vadd.f32 %v9482, %v9418
      %v9531 = vadd.f32 %v9483, %v9421
      %v9532 = vadd.f32 %v9484, %v9426
      %v9533 = vadd.f32 %v9485, %v9429
      %v9534 = vadd.f32 %v9486, %v9434
      %v9535 = vadd.f32 %v9487, %v9437
      %9536 = vst [vmem:[#allocation2] sm:$0xff] %v9488
      %9537 = vst [vmem:[#allocation2 + $0x8] sm:$0xff] %v9489
      %9538 = vst [vmem:[#allocation2 + $0x10] sm:$0xff] %v9490
      %9539 = vst [vmem:[#allocation2 + $0x18] sm:$0xff] %v9491
      %9540 = vst [vmem:[#allocation2 + $0x20] sm:$0xff] %v9492
      %9541 = vst [vmem:[#allocation2 + $0x28] sm:$0xff] %v9493
      %9542 = vst [vmem:[#allocation2 + $0x30] sm:$0xff] %v9494
      %9543 = vst [vmem:[#allocation2 + $0x38] sm:$0xff] %v9495
      %9544 = vst [vmem:[#allocation2 + $0x40] sm:$0xff] %v9496
      %9545 = vst [vmem:[#allocation2 + $0x48] sm:$0xff] %v9497
      %9546 = vst [vmem:[#allocation2 + $0x50] sm:$0xff] %v9498
      %9547 = vst [vmem:[#allocation2 + $0x58] sm:$0xff] %v9499
      %9548 = vst [vmem:[#allocation2 + $0x60] sm:$0xff] %v9500
      %9549 = vst [vmem:[#allocation2 + $0x68] sm:$0xff] %v9501
      %9550 = vst [vmem:[#allocation2 + $0x70] sm:$0xff] %v9502
      %9551 = vst [vmem:[#allocation2 + $0x78] sm:$0xff] %v9503
      %9552 = vst [vmem:[#allocation2 + $0x80] sm:$0xff] %v9504
      %9553 = vst [vmem:[#allocation2 + $0x88] sm:$0xff] %v9505
      %9554 = vst [vmem:[#allocation2 + $0x90] sm:$0xff] %v9506
      %9555 = vst [vmem:[#allocation2 + $0x98] sm:$0xff] %v9507
      %9556 = vst [vmem:[#allocation2 + $0xa0] sm:$0xff] %v9508
      %9557 = vst [vmem:[#allocation2 + $0xa8] sm:$0xff] %v9509
      %9558 = vst [vmem:[#allocation2 + $0xb0] sm:$0xff] %v9510
      %9559 = vst [vmem:[#allocation2 + $0xb8] sm:$0xff] %v9511
      %9560 = vst [vmem:[#allocation2 + $0xc0] sm:$0xff] %v9512
      %9561 = vst [vmem:[#allocation2 + $0xc8] sm:$0xff] %v9513
      %9562 = vst [vmem:[#allocation2 + $0xd0] sm:$0xff] %v9514
      %9563 = vst [vmem:[#allocation2 + $0xd8] sm:$0xff] %v9515
      %9564 = vst [vmem:[#allocation2 + $0xe0] sm:$0xff] %v9516
      %9565 = vst [vmem:[#allocation2 + $0xe8] sm:$0xff] %v9517
      %9566 = vst [vmem:[#allocation2 + $0xf0] sm:$0xff] %v9518
      %9567 = vst [vmem:[#allocation2 + $0xf8] sm:$0xff] %v9519
      %9568 = vst [vmem:[#allocation2 + $0x100] sm:$0xff] %v9520
      %9569 = vst [vmem:[#allocation2 + $0x108] sm:$0xff] %v9521
      %9570 = vst [vmem:[#allocation2 + $0x110] sm:$0xff] %v9522
      %9571 = vst [vmem:[#allocation2 + $0x118] sm:$0xff] %v9523
      %9572 = vst [vmem:[#allocation2 + $0x120] sm:$0xff] %v9524
      %9573 = vst [vmem:[#allocation2 + $0x128] sm:$0xff] %v9525
      %9574 = vst [vmem:[#allocation2 + $0x130] sm:$0xff] %v9526
      %9575 = vst [vmem:[#allocation2 + $0x138] sm:$0xff] %v9527
      %9576 = vst [vmem:[#allocation2 + $0x140] sm:$0xff] %v9528
      %9577 = vst [vmem:[#allocation2 + $0x148] sm:$0xff] %v9529
      %9578 = vst [vmem:[#allocation2 + $0x150] sm:$0xff] %v9530
      %9579 = vst [vmem:[#allocation2 + $0x158] sm:$0xff] %v9531
      %9580 = vst [vmem:[#allocation2 + $0x160] sm:$0xff] %v9532
      %9581 = vst [vmem:[#allocation2 + $0x168] sm:$0xff] %v9533
      %9582 = vst [vmem:[#allocation2 + $0x170] sm:$0xff] %v9534
      %9583 = vst [vmem:[#allocation2 + $0x178] sm:$0xff] %v9535
      %s9584 = scalar_lea.vmem %s3, 448
      %v9585 = vld [vmem:[%s9584] sm:$0xf]
      %v9586 = vld [vmem:[%s9584 + $0x4] sm:$0xf]
      %v9587 = vld [vmem:[%s9584 + $0x8] sm:$0xf]
      %v9588 = vld [vmem:[%s9584 + $0xc] sm:$0xf]
      %v9589 = vld [vmem:[%s9584 + $0x10] sm:$0xf]
      %v9590 = vld [vmem:[%s9584 + $0x14] sm:$0xf]
      %v9591 = vld [vmem:[%s9584 + $0x18] sm:$0xf]
      %v9592 = vld [vmem:[%s9584 + $0x1c] sm:$0xf]
      %v9593 = vld [vmem:[%s9584 + $0x20] sm:$0xf]
      %v9594 = vld [vmem:[%s9584 + $0x24] sm:$0xf]
      %v9595 = vld [vmem:[%s9584 + $0x28] sm:$0xf]
      %v9596 = vld [vmem:[%s9584 + $0x2c] sm:$0xf]
      %v9597 = vld [vmem:[%s9584 + $0x30] sm:$0xf]
      %v9598 = vld [vmem:[%s9584 + $0x34] sm:$0xf]
      %v9599 = vld [vmem:[%s9584 + $0x38] sm:$0xf]
      %v9600 = vld [vmem:[%s9584 + $0x3c] sm:$0xf]
      %v9617 = vunpack.c.l.b16 %v9585
      %v9618 = vunpack.c.l.b16 %v9586
      %v9619 = vunpack.c.l.b16 %v9587
      %v9620 = vunpack.c.l.b16 %v9588
      %v9621 = vunpack.c.l.b16 %v9589
      %v9622 = vunpack.c.l.b16 %v9590
      %v9623 = vunpack.c.l.b16 %v9591
      %v9624 = vunpack.c.l.b16 %v9592
      %v9625 = vunpack.c.l.b16 %v9593
      %v9626 = vunpack.c.l.b16 %v9594
      %v9627 = vunpack.c.l.b16 %v9595
      %v9628 = vunpack.c.l.b16 %v9596
      %v9629 = vunpack.c.l.b16 %v9597
      %v9630 = vunpack.c.l.b16 %v9598
      %v9631 = vunpack.c.l.b16 %v9599
      %v9632 = vunpack.c.l.b16 %v9600
      %v9633 = vpack.c.b16 %v9618, %v9617
      %v9634 = vpack.c.b16 %v9620, %v9619
      %v9635 = vpack.c.b16 %v9622, %v9621
      %v9636 = vpack.c.b16 %v9624, %v9623
      %v9637 = vpack.c.b16 %v9626, %v9625
      %v9638 = vpack.c.b16 %v9628, %v9627
      %v9639 = vpack.c.b16 %v9630, %v9629
      %v9640 = vpack.c.b16 %v9632, %v9631
      %9649 = vmatprep.subr.bf16.mxu0 0
      %9650 = vmatpush1.bf16.msra.mxu0 %v9633
      %9651 = vmatprep.subr.bf16.mxu0 0
      %9652 = vmatpush1.bf16.msra.mxu0 %v9634
      %9653 = vmatprep.subr.bf16.mxu0 0
      %9654 = vmatpush1.bf16.msra.mxu0 %v9635
      %9655 = vmatprep.subr.bf16.mxu0 0
      %9656 = vmatpush1.bf16.msra.mxu0 %v9636
      %9657 = vmatprep.subr.bf16.mxu0 0
      %9658 = vmatpush1.bf16.msra.mxu0 %v9637
      %9659 = vmatprep.subr.bf16.mxu0 0
      %9660 = vmatpush1.bf16.msra.mxu0 %v9638
      %9661 = vmatprep.subr.bf16.mxu0 0
      %9662 = vmatpush1.bf16.msra.mxu0 %v9639
      %9663 = vmatprep.subr.bf16.mxu0 0
      %9664 = vmatpush1.bf16.msra.mxu0 %v9640
      %9665 = vmatprep.subr.bf16.mxu0 0
      %9666 = vmatpush1.bf16.msra.mxu0 0
      %9667 = vmatprep.subr.bf16.mxu0 0
      %9668 = vmatpush1.bf16.msra.mxu0 0
      %9669 = vmatprep.subr.bf16.mxu0 0
      %9670 = vmatpush1.bf16.msra.mxu0 0
      %9671 = vmatprep.subr.bf16.mxu0 0
      %9672 = vmatpush1.bf16.msra.mxu0 0
      %9673 = vmatprep.subr.bf16.mxu0 0
      %9674 = vmatpush1.bf16.msra.mxu0 0
      %9675 = vmatprep.subr.bf16.mxu0 0
      %9676 = vmatpush1.bf16.msra.mxu0 0
      %9677 = vmatprep.subr.bf16.mxu0 0
      %9678 = vmatpush1.bf16.msra.mxu0 0
      %9679 = vmatprep.subr.bf16.mxu0 0
      %9680 = vmatpush1.bf16.msra.mxu0 0
      %9681 = vmatprep.mubr.bf16.mxu0 0
      %9682 = vmatmul.mubr.bf16.gmra.mrb[0].mxu0 %v9119
      %v9683 = vpop.f32.mrb[0].mxu0
      %v9684 = vadd.f32 0.0, %v9683
      %v9685 = vpop.f32.mrb[0].mxu0
      %v9686 = vpop.f32.mrb[0].mxu0
      %v9687 = vadd.f32 0.0, %v9686
      %v9688 = vpop.f32.mrb[0].mxu0
      %9689 = vmatprep.mubr.bf16.mxu0 0
      %9690 = vmatmul.mubr.bf16.gmra.mrb[0].mxu0 %v9120
      %v9691 = vpop.f32.mrb[0].mxu0
      %v9692 = vadd.f32 0.0, %v9691
      %v9693 = vpop.f32.mrb[0].mxu0
      %v9694 = vpop.f32.mrb[0].mxu0
      %v9695 = vadd.f32 0.0, %v9694
      %v9696 = vpop.f32.mrb[0].mxu0
      %9697 = vmatprep.mubr.bf16.mxu0 0
      %9698 = vmatmul.mubr.bf16.gmra.mrb[0].mxu0 %v9121
      %v9699 = vpop.f32.mrb[0].mxu0
      %v9700 = vadd.f32 0.0, %v9699
      %v9701 = vpop.f32.mrb[0].mxu0
      %v9702 = vpop.f32.mrb[0].mxu0
      %v9703 = vadd.f32 0.0, %v9702
      %v9704 = vpop.f32.mrb[0].mxu0
      %9705 = vmatprep.mubr.bf16.mxu0 0
      %9706 = vmatmul.mubr.bf16.gmra.mrb[0].mxu0 %v9122
      %v9707 = vpop.f32.mrb[0].mxu0
      %v9708 = vadd.f32 0.0, %v9707
      %v9709 = vpop.f32.mrb[0].mxu0
      %v9710 = vpop.f32.mrb[0].mxu0
      %v9711 = vadd.f32 0.0, %v9710
      %v9712 = vpop.f32.mrb[0].mxu0
      %9713 = vmatprep.mubr.bf16.mxu0 0
      %9714 = vmatmul.mubr.bf16.gmra.mrb[0].mxu0 %v9123
      %v9715 = vpop.f32.mrb[0].mxu0
      %v9716 = vadd.f32 0.0, %v9715
      %v9717 = vpop.f32.mrb[0].mxu0
      %v9718 = vpop.f32.mrb[0].mxu0
      %v9719 = vadd.f32 0.0, %v9718
      %v9720 = vpop.f32.mrb[0].mxu0
      %9721 = vmatprep.mubr.bf16.mxu0 0
      %9722 = vmatmul.mubr.bf16.gmra.mrb[0].mxu0 %v9124
      %v9723 = vpop.f32.mrb[0].mxu0
      %v9724 = vadd.f32 0.0, %v9723
      %v9725 = vpop.f32.mrb[0].mxu0
      %v9726 = vpop.f32.mrb[0].mxu0
      %v9727 = vadd.f32 0.0, %v9726
      %v9728 = vpop.f32.mrb[0].mxu0
      %9729 = vmatprep.mubr.bf16.mxu0 0
      %9730 = vmatmul.mubr.bf16.gmra.mrb[0].mxu0 %v9125
      %v9731 = vpop.f32.mrb[0].mxu0
      %v9732 = vadd.f32 0.0, %v9731
      %v9733 = vpop.f32.mrb[0].mxu0
      %v9734 = vpop.f32.mrb[0].mxu0
      %v9735 = vadd.f32 0.0, %v9734
      %v9736 = vpop.f32.mrb[0].mxu0
      %9737 = vmatprep.mubr.bf16.mxu0 0
      %9738 = vmatmul.mubr.bf16.gmra.mrb[0].mxu0 %v9126
      %v9739 = vpop.f32.mrb[0].mxu0
      %v9740 = vadd.f32 0.0, %v9739
      %v9741 = vpop.f32.mrb[0].mxu0
      %v9742 = vpop.f32.mrb[0].mxu0
      %v9743 = vadd.f32 0.0, %v9742
      %v9744 = vpop.f32.mrb[0].mxu0
      %9745 = vmatprep.mubr.bf16.mxu0 0
      %9746 = vmatmul.mubr.bf16.gmra.mrb[0].mxu0 %v9127
      %v9747 = vpop.f32.mrb[0].mxu0
      %v9748 = vadd.f32 0.0, %v9747
      %v9749 = vpop.f32.mrb[0].mxu0
      %v9750 = vpop.f32.mrb[0].mxu0
      %v9751 = vadd.f32 0.0, %v9750
      %v9752 = vpop.f32.mrb[0].mxu0
      %9753 = vmatprep.mubr.bf16.mxu0 0
      %9754 = vmatmul.mubr.bf16.gmra.mrb[0].mxu0 %v9128
      %v9755 = vpop.f32.mrb[0].mxu0
      %v9756 = vadd.f32 0.0, %v9755
      %v9757 = vpop.f32.mrb[0].mxu0
      %v9758 = vpop.f32.mrb[0].mxu0
      %v9759 = vadd.f32 0.0, %v9758
      %v9760 = vpop.f32.mrb[0].mxu0
      %9761 = vmatprep.mubr.bf16.mxu0 0
      %9762 = vmatmul.mubr.bf16.gmra.mrb[0].mxu0 %v9129
      %v9763 = vpop.f32.mrb[0].mxu0
      %v9764 = vadd.f32 0.0, %v9763
      %v9765 = vpop.f32.mrb[0].mxu0
      %v9766 = vpop.f32.mrb[0].mxu0
      %v9767 = vadd.f32 0.0, %v9766
      %v9768 = vpop.f32.mrb[0].mxu0
      %9769 = vmatprep.mubr.bf16.mxu0 0
      %9770 = vmatmul.mubr.bf16.gmra.mrb[0].mxu0 %v9130
      %v9771 = vpop.f32.mrb[0].mxu0
      %v9772 = vadd.f32 0.0, %v9771
      %v9773 = vpop.f32.mrb[0].mxu0
      %v9774 = vpop.f32.mrb[0].mxu0
      %v9775 = vadd.f32 0.0, %v9774
      %v9776 = vpop.f32.mrb[0].mxu0
      %9777 = vmatprep.mubr.bf16.mxu0 0
      %9778 = vmatmul.mubr.bf16.gmra.mrb[0].mxu0 %v9131
      %v9779 = vpop.f32.mrb[0].mxu0
      %v9780 = vadd.f32 0.0, %v9779
      %v9781 = vpop.f32.mrb[0].mxu0
      %v9782 = vpop.f32.mrb[0].mxu0
      %v9783 = vadd.f32 0.0, %v9782
      %v9784 = vpop.f32.mrb[0].mxu0
      %9785 = vmatprep.mubr.bf16.mxu0 0
      %9786 = vmatmul.mubr.bf16.gmra.mrb[0].mxu0 %v9132
      %v9787 = vpop.f32.mrb[0].mxu0
      %v9788 = vadd.f32 0.0, %v9787
      %v9789 = vpop.f32.mrb[0].mxu0
      %v9790 = vpop.f32.mrb[0].mxu0
      %v9791 = vadd.f32 0.0, %v9790
      %v9792 = vpop.f32.mrb[0].mxu0
      %9793 = vmatprep.mubr.bf16.mxu0 0
      %9794 = vmatmul.mubr.bf16.gmra.mrb[0].mxu0 %v9133
      %v9795 = vpop.f32.mrb[0].mxu0
      %v9796 = vadd.f32 0.0, %v9795
      %v9797 = vpop.f32.mrb[0].mxu0
      %v9798 = vpop.f32.mrb[0].mxu0
      %v9799 = vadd.f32 0.0, %v9798
      %v9800 = vpop.f32.mrb[0].mxu0
      %9801 = vmatprep.mubr.bf16.mxu0 0
      %9802 = vmatmul.mubr.bf16.gmra.mrb[0].mxu0 %v9134
      %v9803 = vpop.f32.mrb[0].mxu0
      %v9804 = vadd.f32 0.0, %v9803
      %v9805 = vpop.f32.mrb[0].mxu0
      %v9806 = vpop.f32.mrb[0].mxu0
      %v9807 = vadd.f32 0.0, %v9806
      %v9808 = vpop.f32.mrb[0].mxu0
      %9809 = vmatprep.mubr.bf16.mxu0 0
      %9810 = vmatmul.mubr.bf16.gmra.mrb[0].mxu0 %v9135
      %v9811 = vpop.f32.mrb[0].mxu0
      %v9812 = vadd.f32 0.0, %v9811
      %v9813 = vpop.f32.mrb[0].mxu0
      %v9814 = vpop.f32.mrb[0].mxu0
      %v9815 = vadd.f32 0.0, %v9814
      %v9816 = vpop.f32.mrb[0].mxu0
      %9817 = vmatprep.mubr.bf16.mxu0 0
      %9818 = vmatmul.mubr.bf16.gmra.mrb[0].mxu0 %v9136
      %v9819 = vpop.f32.mrb[0].mxu0
      %v9820 = vadd.f32 0.0, %v9819
      %v9821 = vpop.f32.mrb[0].mxu0
      %v9822 = vpop.f32.mrb[0].mxu0
      %v9823 = vadd.f32 0.0, %v9822
      %v9824 = vpop.f32.mrb[0].mxu0
      %9825 = vmatprep.mubr.bf16.mxu0 0
      %9826 = vmatmul.mubr.bf16.gmra.mrb[0].mxu0 %v9137
      %v9827 = vpop.f32.mrb[0].mxu0
      %v9828 = vadd.f32 0.0, %v9827
      %v9829 = vpop.f32.mrb[0].mxu0
      %v9830 = vpop.f32.mrb[0].mxu0
      %v9831 = vadd.f32 0.0, %v9830
      %v9832 = vpop.f32.mrb[0].mxu0
      %9833 = vmatprep.mubr.bf16.mxu0 0
      %9834 = vmatmul.mubr.bf16.gmra.mrb[0].mxu0 %v9138
      %v9835 = vpop.f32.mrb[0].mxu0
      %v9836 = vadd.f32 0.0, %v9835
      %v9837 = vpop.f32.mrb[0].mxu0
      %v9838 = vpop.f32.mrb[0].mxu0
      %v9839 = vadd.f32 0.0, %v9838
      %v9840 = vpop.f32.mrb[0].mxu0
      %9841 = vmatprep.mubr.bf16.mxu0 0
      %9842 = vmatmul.mubr.bf16.gmra.mrb[0].mxu0 %v9139
      %v9843 = vpop.f32.mrb[0].mxu0
      %v9844 = vadd.f32 0.0, %v9843
      %v9845 = vpop.f32.mrb[0].mxu0
      %v9846 = vpop.f32.mrb[0].mxu0
      %v9847 = vadd.f32 0.0, %v9846
      %v9848 = vpop.f32.mrb[0].mxu0
      %9849 = vmatprep.mubr.bf16.mxu0 0
      %9850 = vmatmul.mubr.bf16.gmra.mrb[0].mxu0 %v9140
      %v9851 = vpop.f32.mrb[0].mxu0
      %v9852 = vadd.f32 0.0, %v9851
      %v9853 = vpop.f32.mrb[0].mxu0
      %v9854 = vpop.f32.mrb[0].mxu0
      %v9855 = vadd.f32 0.0, %v9854
      %v9856 = vpop.f32.mrb[0].mxu0
      %9857 = vmatprep.mubr.bf16.mxu0 0
      %9858 = vmatmul.mubr.bf16.gmra.mrb[0].mxu0 %v9141
      %v9859 = vpop.f32.mrb[0].mxu0
      %v9860 = vadd.f32 0.0, %v9859
      %v9861 = vpop.f32.mrb[0].mxu0
      %v9862 = vpop.f32.mrb[0].mxu0
      %v9863 = vadd.f32 0.0, %v9862
      %v9864 = vpop.f32.mrb[0].mxu0
      %9865 = vmatprep.mubr.bf16.mxu0 0
      %9866 = vmatmul.mubr.bf16.gmra.mrb[0].mxu0 %v9142
      %v9867 = vpop.f32.mrb[0].mxu0
      %v9868 = vadd.f32 0.0, %v9867
      %v9869 = vpop.f32.mrb[0].mxu0
      %v9870 = vpop.f32.mrb[0].mxu0
      %v9871 = vadd.f32 0.0, %v9870
      %v9872 = vpop.f32.mrb[0].mxu0
      %9873 = vdwg.mxu0
      %v9874 = vrot.slane %v9684, 1
      %v9875 = vrot.slane %v9687, 1
      %v9876 = vrot.slane %v9692, 1
      %v9877 = vrot.slane %v9695, 1
      %v9878 = vrot.slane %v9700, 1
      %v9879 = vrot.slane %v9703, 1
      %v9880 = vrot.slane %v9708, 1
      %v9881 = vrot.slane %v9711, 1
      %v9882 = vrot.slane %v9716, 1
      %v9883 = vrot.slane %v9719, 1
      %v9884 = vrot.slane %v9724, 1
      %v9885 = vrot.slane %v9727, 1
      %v9886 = vrot.slane %v9732, 1
      %v9887 = vrot.slane %v9735, 1
      %v9888 = vrot.slane %v9740, 1
      %v9889 = vrot.slane %v9743, 1
      %v9890 = vrot.slane %v9748, 1
      %v9891 = vrot.slane %v9751, 1
      %v9892 = vrot.slane %v9756, 1
      %v9893 = vrot.slane %v9759, 1
      %v9894 = vrot.slane %v9764, 1
      %v9895 = vrot.slane %v9767, 1
      %v9896 = vrot.slane %v9772, 1
      %v9897 = vrot.slane %v9775, 1
      %v9898 = vrot.slane %v9780, 1
      %v9899 = vrot.slane %v9783, 1
      %v9900 = vrot.slane %v9788, 1
      %v9901 = vrot.slane %v9791, 1
      %v9902 = vrot.slane %v9796, 1
      %v9903 = vrot.slane %v9799, 1
      %v9904 = vrot.slane %v9804, 1
      %v9905 = vrot.slane %v9807, 1
      %v9906 = vrot.slane %v9812, 1
      %v9907 = vrot.slane %v9815, 1
      %v9908 = vrot.slane %v9820, 1
      %v9909 = vrot.slane %v9823, 1
      %v9910 = vrot.slane %v9828, 1
      %v9911 = vrot.slane %v9831, 1
      %v9912 = vrot.slane %v9836, 1
      %v9913 = vrot.slane %v9839, 1
      %v9914 = vrot.slane %v9844, 1
      %v9915 = vrot.slane %v9847, 1
      %v9916 = vrot.slane %v9852, 1
      %v9917 = vrot.slane %v9855, 1
      %v9918 = vrot.slane %v9860, 1
      %v9919 = vrot.slane %v9863, 1
      %v9920 = vrot.slane %v9868, 1
      %v9921 = vrot.slane %v9871, 1
      %v9922 = vsel %vm1634, %v9920, %v9921
      %v9923 = vsel %vm1634, %v9919, %v9920
      %v9924 = vsel %vm1634, %v9918, %v9919
      %v9925 = vsel %vm1634, %v9917, %v9918
      %v9926 = vsel %vm1634, %v9916, %v9917
      %v9927 = vsel %vm1634, %v9915, %v9916
      %v9928 = vsel %vm1634, %v9914, %v9915
      %v9929 = vsel %vm1634, %v9913, %v9914
      %v9930 = vsel %vm1634, %v9912, %v9913
      %v9931 = vsel %vm1634, %v9911, %v9912
      %v9932 = vsel %vm1634, %v9910, %v9911
      %v9933 = vsel %vm1634, %v9909, %v9910
      %v9934 = vsel %vm1634, %v9908, %v9909
      %v9935 = vsel %vm1634, %v9907, %v9908
      %v9936 = vsel %vm1634, %v9906, %v9907
      %v9937 = vsel %vm1634, %v9905, %v9906
      %v9938 = vsel %vm1634, %v9904, %v9905
      %v9939 = vsel %vm1634, %v9903, %v9904
      %v9940 = vsel %vm1634, %v9902, %v9903
      %v9941 = vsel %vm1634, %v9901, %v9902
      %v9942 = vsel %vm1634, %v9900, %v9901
      %v9943 = vsel %vm1634, %v9899, %v9900
      %v9944 = vsel %vm1634, %v9898, %v9899
      %v9945 = vsel %vm1634, %v9897, %v9898
      %v9946 = vsel %vm1634, %v9896, %v9897
      %v9947 = vsel %vm1634, %v9895, %v9896
      %v9948 = vsel %vm1634, %v9894, %v9895
      %v9949 = vsel %vm1634, %v9893, %v9894
      %v9950 = vsel %vm1634, %v9892, %v9893
      %v9951 = vsel %vm1634, %v9891, %v9892
      %v9952 = vsel %vm1634, %v9890, %v9891
      %v9953 = vsel %vm1634, %v9889, %v9890
      %v9954 = vsel %vm1634, %v9888, %v9889
      %v9955 = vsel %vm1634, %v9887, %v9888
      %v9956 = vsel %vm1634, %v9886, %v9887
      %v9957 = vsel %vm1634, %v9885, %v9886
      %v9958 = vsel %vm1634, %v9884, %v9885
      %v9959 = vsel %vm1634, %v9883, %v9884
      %v9960 = vsel %vm1634, %v9882, %v9883
      %v9961 = vsel %vm1634, %v9881, %v9882
      %v9962 = vsel %vm1634, %v9880, %v9881
      %v9963 = vsel %vm1634, %v9879, %v9880
      %v9964 = vsel %vm1634, %v9878, %v9879
      %v9965 = vsel %vm1634, %v9877, %v9878
      %v9966 = vsel %vm1634, %v9876, %v9877
      %v9967 = vsel %vm1634, %v9875, %v9876
      %v9968 = vsel %vm1634, %v9874, %v9875
      %v9969 = vsel %vm1634, %v9921, %v9874
      %v9970 = vld [vmem:[#allocation2] sm:$0xff]
      %v9971 = vld [vmem:[#allocation2 + $0x8] sm:$0xff]
      %v9972 = vld [vmem:[#allocation2 + $0x10] sm:$0xff]
      %v9973 = vld [vmem:[#allocation2 + $0x18] sm:$0xff]
      %v9974 = vld [vmem:[#allocation2 + $0x20] sm:$0xff]
      %v9975 = vld [vmem:[#allocation2 + $0x28] sm:$0xff]
      %v9976 = vld [vmem:[#allocation2 + $0x30] sm:$0xff]
      %v9977 = vld [vmem:[#allocation2 + $0x38] sm:$0xff]
      %v9978 = vld [vmem:[#allocation2 + $0x40] sm:$0xff]
      %v9979 = vld [vmem:[#allocation2 + $0x48] sm:$0xff]
      %v9980 = vld [vmem:[#allocation2 + $0x50] sm:$0xff]
      %v9981 = vld [vmem:[#allocation2 + $0x58] sm:$0xff]
      %v9982 = vld [vmem:[#allocation2 + $0x60] sm:$0xff]
      %v9983 = vld [vmem:[#allocation2 + $0x68] sm:$0xff]
      %v9984 = vld [vmem:[#allocation2 + $0x70] sm:$0xff]
      %v9985 = vld [vmem:[#allocation2 + $0x78] sm:$0xff]
      %v9986 = vld [vmem:[#allocation2 + $0x80] sm:$0xff]
      %v9987 = vld [vmem:[#allocation2 + $0x88] sm:$0xff]
      %v9988 = vld [vmem:[#allocation2 + $0x90] sm:$0xff]
      %v9989 = vld [vmem:[#allocation2 + $0x98] sm:$0xff]
      %v9990 = vld [vmem:[#allocation2 + $0xa0] sm:$0xff]
      %v9991 = vld [vmem:[#allocation2 + $0xa8] sm:$0xff]
      %v9992 = vld [vmem:[#allocation2 + $0xb0] sm:$0xff]
      %v9993 = vld [vmem:[#allocation2 + $0xb8] sm:$0xff]
      %v9994 = vld [vmem:[#allocation2 + $0xc0] sm:$0xff]
      %v9995 = vld [vmem:[#allocation2 + $0xc8] sm:$0xff]
      %v9996 = vld [vmem:[#allocation2 + $0xd0] sm:$0xff]
      %v9997 = vld [vmem:[#allocation2 + $0xd8] sm:$0xff]
      %v9998 = vld [vmem:[#allocation2 + $0xe0] sm:$0xff]
      %v9999 = vld [vmem:[#allocation2 + $0xe8] sm:$0xff]
      %v10000 = vld [vmem:[#allocation2 + $0xf0] sm:$0xff]
      %v10001 = vld [vmem:[#allocation2 + $0xf8] sm:$0xff]
      %v10002 = vld [vmem:[#allocation2 + $0x100] sm:$0xff]
      %v10003 = vld [vmem:[#allocation2 + $0x108] sm:$0xff]
      %v10004 = vld [vmem:[#allocation2 + $0x110] sm:$0xff]
      %v10005 = vld [vmem:[#allocation2 + $0x118] sm:$0xff]
      %v10006 = vld [vmem:[#allocation2 + $0x120] sm:$0xff]
      %v10007 = vld [vmem:[#allocation2 + $0x128] sm:$0xff]
      %v10008 = vld [vmem:[#allocation2 + $0x130] sm:$0xff]
      %v10009 = vld [vmem:[#allocation2 + $0x138] sm:$0xff]
      %v10010 = vld [vmem:[#allocation2 + $0x140] sm:$0xff]
      %v10011 = vld [vmem:[#allocation2 + $0x148] sm:$0xff]
      %v10012 = vld [vmem:[#allocation2 + $0x150] sm:$0xff]
      %v10013 = vld [vmem:[#allocation2 + $0x158] sm:$0xff]
      %v10014 = vld [vmem:[#allocation2 + $0x160] sm:$0xff]
      %v10015 = vld [vmem:[#allocation2 + $0x168] sm:$0xff]
      %v10016 = vld [vmem:[#allocation2 + $0x170] sm:$0xff]
      %v10017 = vld [vmem:[#allocation2 + $0x178] sm:$0xff]
      %v10018 = vadd.f32 %v9970, %v9968
      %v10019 = vadd.f32 %v9971, %v9967
      %v10020 = vadd.f32 %v9972, %v9966
      %v10021 = vadd.f32 %v9973, %v9965
      %v10022 = vadd.f32 %v9974, %v9964
      %v10023 = vadd.f32 %v9975, %v9963
      %v10024 = vadd.f32 %v9976, %v9962
      %v10025 = vadd.f32 %v9977, %v9961
      %v10026 = vadd.f32 %v9978, %v9960
      %v10027 = vadd.f32 %v9979, %v9959
      %v10028 = vadd.f32 %v9980, %v9958
      %v10029 = vadd.f32 %v9981, %v9957
      %v10030 = vadd.f32 %v9982, %v9956
      %v10031 = vadd.f32 %v9983, %v9955
      %v10032 = vadd.f32 %v9984, %v9954
      %v10033 = vadd.f32 %v9985, %v9953
      %v10034 = vadd.f32 %v9986, %v9952
      %v10035 = vadd.f32 %v9987, %v9951
      %v10036 = vadd.f32 %v9988, %v9950
      %v10037 = vadd.f32 %v9989, %v9949
      %v10038 = vadd.f32 %v9990, %v9948
      %v10039 = vadd.f32 %v9991, %v9947
      %v10040 = vadd.f32 %v9992, %v9946
      %v10041 = vadd.f32 %v9993, %v9945
      %v10042 = vadd.f32 %v9994, %v9944
      %v10043 = vadd.f32 %v9995, %v9943
      %v10044 = vadd.f32 %v9996, %v9942
      %v10045 = vadd.f32 %v9997, %v9941
      %v10046 = vadd.f32 %v9998, %v9940
      %v10047 = vadd.f32 %v9999, %v9939
      %v10048 = vadd.f32 %v10000, %v9938
      %v10049 = vadd.f32 %v10001, %v9937
      %v10050 = vadd.f32 %v10002, %v9936
      %v10051 = vadd.f32 %v10003, %v9935
      %v10052 = vadd.f32 %v10004, %v9934
      %v10053 = vadd.f32 %v10005, %v9933
      %v10054 = vadd.f32 %v10006, %v9932
      %v10055 = vadd.f32 %v10007, %v9931
      %v10056 = vadd.f32 %v10008, %v9930
      %v10057 = vadd.f32 %v10009, %v9929
      %v10058 = vadd.f32 %v10010, %v9928
      %v10059 = vadd.f32 %v10011, %v9927
      %v10060 = vadd.f32 %v10012, %v9926
      %v10061 = vadd.f32 %v10013, %v9925
      %v10062 = vadd.f32 %v10014, %v9924
      %v10063 = vadd.f32 %v10015, %v9923
      %v10064 = vadd.f32 %v10016, %v9922
      %v10065 = vadd.f32 %v10017, %v9969
      %10066 = vst [vmem:[#allocation2] sm:$0xff] %v10018
      %10067 = vst [vmem:[#allocation2 + $0x8] sm:$0xff] %v10019
      %10068 = vst [vmem:[#allocation2 + $0x10] sm:$0xff] %v10020
      %10069 = vst [vmem:[#allocation2 + $0x18] sm:$0xff] %v10021
      %10070 = vst [vmem:[#allocation2 + $0x20] sm:$0xff] %v10022
      %10071 = vst [vmem:[#allocation2 + $0x28] sm:$0xff] %v10023
      %10072 = vst [vmem:[#allocation2 + $0x30] sm:$0xff] %v10024
      %10073 = vst [vmem:[#allocation2 + $0x38] sm:$0xff] %v10025
      %10074 = vst [vmem:[#allocation2 + $0x40] sm:$0xff] %v10026
      %10075 = vst [vmem:[#allocation2 + $0x48] sm:$0xff] %v10027
      %10076 = vst [vmem:[#allocation2 + $0x50] sm:$0xff] %v10028
      %10077 = vst [vmem:[#allocation2 + $0x58] sm:$0xff] %v10029
      %10078 = vst [vmem:[#allocation2 + $0x60] sm:$0xff] %v10030
      %10079 = vst [vmem:[#allocation2 + $0x68] sm:$0xff] %v10031
      %10080 = vst [vmem:[#allocation2 + $0x70] sm:$0xff] %v10032
      %10081 = vst [vmem:[#allocation2 + $0x78] sm:$0xff] %v10033
      %10082 = vst [vmem:[#allocation2 + $0x80] sm:$0xff] %v10034
      %10083 = vst [vmem:[#allocation2 + $0x88] sm:$0xff] %v10035
      %10084 = vst [vmem:[#allocation2 + $0x90] sm:$0xff] %v10036
      %10085 = vst [vmem:[#allocation2 + $0x98] sm:$0xff] %v10037
      %10086 = vst [vmem:[#allocation2 + $0xa0] sm:$0xff] %v10038
      %10087 = vst [vmem:[#allocation2 + $0xa8] sm:$0xff] %v10039
      %10088 = vst [vmem:[#allocation2 + $0xb0] sm:$0xff] %v10040
      %10089 = vst [vmem:[#allocation2 + $0xb8] sm:$0xff] %v10041
      %10090 = vst [vmem:[#allocation2 + $0xc0] sm:$0xff] %v10042
      %10091 = vst [vmem:[#allocation2 + $0xc8] sm:$0xff] %v10043
      %10092 = vst [vmem:[#allocation2 + $0xd0] sm:$0xff] %v10044
      %10093 = vst [vmem:[#allocation2 + $0xd8] sm:$0xff] %v10045
      %10094 = vst [vmem:[#allocation2 + $0xe0] sm:$0xff] %v10046
      %10095 = vst [vmem:[#allocation2 + $0xe8] sm:$0xff] %v10047
      %10096 = vst [vmem:[#allocation2 + $0xf0] sm:$0xff] %v10048
      %10097 = vst [vmem:[#allocation2 + $0xf8] sm:$0xff] %v10049
      %10098 = vst [vmem:[#allocation2 + $0x100] sm:$0xff] %v10050
      %10099 = vst [vmem:[#allocation2 + $0x108] sm:$0xff] %v10051
      %10100 = vst [vmem:[#allocation2 + $0x110] sm:$0xff] %v10052
      %10101 = vst [vmem:[#allocation2 + $0x118] sm:$0xff] %v10053
      %10102 = vst [vmem:[#allocation2 + $0x120] sm:$0xff] %v10054
      %10103 = vst [vmem:[#allocation2 + $0x128] sm:$0xff] %v10055
      %10104 = vst [vmem:[#allocation2 + $0x130] sm:$0xff] %v10056
      %10105 = vst [vmem:[#allocation2 + $0x138] sm:$0xff] %v10057
      %10106 = vst [vmem:[#allocation2 + $0x140] sm:$0xff] %v10058
      %10107 = vst [vmem:[#allocation2 + $0x148] sm:$0xff] %v10059
      %10108 = vst [vmem:[#allocation2 + $0x150] sm:$0xff] %v10060
      %10109 = vst [vmem:[#allocation2 + $0x158] sm:$0xff] %v10061
      %10110 = vst [vmem:[#allocation2 + $0x160] sm:$0xff] %v10062
      %10111 = vst [vmem:[#allocation2 + $0x168] sm:$0xff] %v10063
      %10112 = vst [vmem:[#allocation2 + $0x170] sm:$0xff] %v10064
      %10113 = vst [vmem:[#allocation2 + $0x178] sm:$0xff] %v10065
      %s10114 = scalar_lea.vmem %s3, 512
      %v10115 = vld [vmem:[%s10114] sm:$0xf]
      %v10116 = vld [vmem:[%s10114 + $0x4] sm:$0xf]
      %v10117 = vld [vmem:[%s10114 + $0x8] sm:$0xf]
      %v10118 = vld [vmem:[%s10114 + $0xc] sm:$0xf]
      %v10119 = vld [vmem:[%s10114 + $0x10] sm:$0xf]
      %v10120 = vld [vmem:[%s10114 + $0x14] sm:$0xf]
      %v10121 = vld [vmem:[%s10114 + $0x18] sm:$0xf]
      %v10122 = vld [vmem:[%s10114 + $0x1c] sm:$0xf]
      %v10123 = vld [vmem:[%s10114 + $0x20] sm:$0xf]
      %v10124 = vld [vmem:[%s10114 + $0x24] sm:$0xf]
      %v10125 = vld [vmem:[%s10114 + $0x28] sm:$0xf]
      %v10126 = vld [vmem:[%s10114 + $0x2c] sm:$0xf]
      %v10127 = vld [vmem:[%s10114 + $0x30] sm:$0xf]
      %v10128 = vld [vmem:[%s10114 + $0x34] sm:$0xf]
      %v10129 = vld [vmem:[%s10114 + $0x38] sm:$0xf]
      %v10130 = vld [vmem:[%s10114 + $0x3c] sm:$0xf]
      %v10147 = vunpack.c.l.b16 %v10115
      %v10148 = vunpack.c.l.b16 %v10116
      %v10149 = vunpack.c.l.b16 %v10117
      %v10150 = vunpack.c.l.b16 %v10118
      %v10151 = vunpack.c.l.b16 %v10119
      %v10152 = vunpack.c.l.b16 %v10120
      %v10153 = vunpack.c.l.b16 %v10121
      %v10154 = vunpack.c.l.b16 %v10122
      %v10155 = vunpack.c.l.b16 %v10123
      %v10156 = vunpack.c.l.b16 %v10124
      %v10157 = vunpack.c.l.b16 %v10125
      %v10158 = vunpack.c.l.b16 %v10126
      %v10159 = vunpack.c.l.b16 %v10127
      %v10160 = vunpack.c.l.b16 %v10128
      %v10161 = vunpack.c.l.b16 %v10129
      %v10162 = vunpack.c.l.b16 %v10130
      %v10163 = vpack.c.b16 %v10148, %v10147
      %v10164 = vpack.c.b16 %v10150, %v10149
      %v10165 = vpack.c.b16 %v10152, %v10151
      %v10166 = vpack.c.b16 %v10154, %v10153
      %v10167 = vpack.c.b16 %v10156, %v10155
      %v10168 = vpack.c.b16 %v10158, %v10157
      %v10169 = vpack.c.b16 %v10160, %v10159
      %v10170 = vpack.c.b16 %v10162, %v10161
      %10179 = vmatprep.subr.bf16.mxu0 0
      %10180 = vmatpush1.bf16.msra.mxu0 %v10163
      %10181 = vmatprep.subr.bf16.mxu0 0
      %10182 = vmatpush1.bf16.msra.mxu0 %v10164
      %10183 = vmatprep.subr.bf16.mxu0 0
      %10184 = vmatpush1.bf16.msra.mxu0 %v10165
      %10185 = vmatprep.subr.bf16.mxu0 0
      %10186 = vmatpush1.bf16.msra.mxu0 %v10166
      %10187 = vmatprep.subr.bf16.mxu0 0
      %10188 = vmatpush1.bf16.msra.mxu0 %v10167
      %10189 = vmatprep.subr.bf16.mxu0 0
      %10190 = vmatpush1.bf16.msra.mxu0 %v10168
      %10191 = vmatprep.subr.bf16.mxu0 0
      %10192 = vmatpush1.bf16.msra.mxu0 %v10169
      %10193 = vmatprep.subr.bf16.mxu0 0
      %10194 = vmatpush1.bf16.msra.mxu0 %v10170
      %10195 = vmatprep.subr.bf16.mxu0 0
      %10196 = vmatpush1.bf16.msra.mxu0 0
      %10197 = vmatprep.subr.bf16.mxu0 0
      %10198 = vmatpush1.bf16.msra.mxu0 0
      %10199 = vmatprep.subr.bf16.mxu0 0
      %10200 = vmatpush1.bf16.msra.mxu0 0
      %10201 = vmatprep.subr.bf16.mxu0 0
      %10202 = vmatpush1.bf16.msra.mxu0 0
      %10203 = vmatprep.subr.bf16.mxu0 0
      %10204 = vmatpush1.bf16.msra.mxu0 0
      %10205 = vmatprep.subr.bf16.mxu0 0
      %10206 = vmatpush1.bf16.msra.mxu0 0
      %10207 = vmatprep.subr.bf16.mxu0 0
      %10208 = vmatpush1.bf16.msra.mxu0 0
      %10209 = vmatprep.subr.bf16.mxu0 0
      %10210 = vmatpush1.bf16.msra.mxu0 0
      %10211 = vmatprep.mubr.bf16.mxu0 0
      %10212 = vmatmul.mubr.bf16.gmra.mrb[0].mxu0 %v9119
      %v10213 = vpop.f32.mrb[0].mxu0
      %v10214 = vadd.f32 0.0, %v10213
      %v10215 = vpop.f32.mrb[0].mxu0
      %v10216 = vpop.f32.mrb[0].mxu0
      %v10217 = vadd.f32 0.0, %v10216
      %v10218 = vpop.f32.mrb[0].mxu0
      %10219 = vmatprep.mubr.bf16.mxu0 0
      %10220 = vmatmul.mubr.bf16.gmra.mrb[0].mxu0 %v9120
      %v10221 = vpop.f32.mrb[0].mxu0
      %v10222 = vadd.f32 0.0, %v10221
      %v10223 = vpop.f32.mrb[0].mxu0
      %v10224 = vpop.f32.mrb[0].mxu0
      %v10225 = vadd.f32 0.0, %v10224
      %v10226 = vpop.f32.mrb[0].mxu0
      %10227 = vmatprep.mubr.bf16.mxu0 0
      %10228 = vmatmul.mubr.bf16.gmra.mrb[0].mxu0 %v9121
      %v10229 = vpop.f32.mrb[0].mxu0
      %v10230 = vadd.f32 0.0, %v10229
      %v10231 = vpop.f32.mrb[0].mxu0
      %v10232 = vpop.f32.mrb[0].mxu0
      %v10233 = vadd.f32 0.0, %v10232
      %v10234 = vpop.f32.mrb[0].mxu0
      %10235 = vmatprep.mubr.bf16.mxu0 0
      %10236 = vmatmul.mubr.bf16.gmra.mrb[0].mxu0 %v9122
      %v10237 = vpop.f32.mrb[0].mxu0
      %v10238 = vadd.f32 0.0, %v10237
      %v10239 = vpop.f32.mrb[0].mxu0
      %v10240 = vpop.f32.mrb[0].mxu0
      %v10241 = vadd.f32 0.0, %v10240
      %v10242 = vpop.f32.mrb[0].mxu0
      %10243 = vmatprep.mubr.bf16.mxu0 0
      %10244 = vmatmul.mubr.bf16.gmra.mrb[0].mxu0 %v9123
      %v10245 = vpop.f32.mrb[0].mxu0
      %v10246 = vadd.f32 0.0, %v10245
      %v10247 = vpop.f32.mrb[0].mxu0
      %v10248 = vpop.f32.mrb[0].mxu0
      %v10249 = vadd.f32 0.0, %v10248
      %v10250 = vpop.f32.mrb[0].mxu0
      %10251 = vmatprep.mubr.bf16.mxu0 0
      %10252 = vmatmul.mubr.bf16.gmra.mrb[0].mxu0 %v9124
      %v10253 = vpop.f32.mrb[0].mxu0
      %v10254 = vadd.f32 0.0, %v10253
      %v10255 = vpop.f32.mrb[0].mxu0
      %v10256 = vpop.f32.mrb[0].mxu0
      %v10257 = vadd.f32 0.0, %v10256
      %v10258 = vpop.f32.mrb[0].mxu0
      %10259 = vmatprep.mubr.bf16.mxu0 0
      %10260 = vmatmul.mubr.bf16.gmra.mrb[0].mxu0 %v9125
      %v10261 = vpop.f32.mrb[0].mxu0
      %v10262 = vadd.f32 0.0, %v10261
      %v10263 = vpop.f32.mrb[0].mxu0
      %v10264 = vpop.f32.mrb[0].mxu0
      %v10265 = vadd.f32 0.0, %v10264
      %v10266 = vpop.f32.mrb[0].mxu0
      %10267 = vmatprep.mubr.bf16.mxu0 0
      %10268 = vmatmul.mubr.bf16.gmra.mrb[0].mxu0 %v9126
      %v10269 = vpop.f32.mrb[0].mxu0
      %v10270 = vadd.f32 0.0, %v10269
      %v10271 = vpop.f32.mrb[0].mxu0
      %v10272 = vpop.f32.mrb[0].mxu0
      %v10273 = vadd.f32 0.0, %v10272
      %v10274 = vpop.f32.mrb[0].mxu0
      %10275 = vmatprep.mubr.bf16.mxu0 0
      %10276 = vmatmul.mubr.bf16.gmra.mrb[0].mxu0 %v9127
      %v10277 = vpop.f32.mrb[0].mxu0
      %v10278 = vadd.f32 0.0, %v10277
      %v10279 = vpop.f32.mrb[0].mxu0
      %v10280 = vpop.f32.mrb[0].mxu0
      %v10281 = vadd.f32 0.0, %v10280
      %v10282 = vpop.f32.mrb[0].mxu0
      %10283 = vmatprep.mubr.bf16.mxu0 0
      %10284 = vmatmul.mubr.bf16.gmra.mrb[0].mxu0 %v9128
      %v10285 = vpop.f32.mrb[0].mxu0
      %v10286 = vadd.f32 0.0, %v10285
      %v10287 = vpop.f32.mrb[0].mxu0
      %v10288 = vpop.f32.mrb[0].mxu0
      %v10289 = vadd.f32 0.0, %v10288
      %v10290 = vpop.f32.mrb[0].mxu0
      %10291 = vmatprep.mubr.bf16.mxu0 0
      %10292 = vmatmul.mubr.bf16.gmra.mrb[0].mxu0 %v9129
      %v10293 = vpop.f32.mrb[0].mxu0
      %v10294 = vadd.f32 0.0, %v10293
      %v10295 = vpop.f32.mrb[0].mxu0
      %v10296 = vpop.f32.mrb[0].mxu0
      %v10297 = vadd.f32 0.0, %v10296
      %v10298 = vpop.f32.mrb[0].mxu0
      %10299 = vmatprep.mubr.bf16.mxu0 0
      %10300 = vmatmul.mubr.bf16.gmra.mrb[0].mxu0 %v9130
      %v10301 = vpop.f32.mrb[0].mxu0
      %v10302 = vadd.f32 0.0, %v10301
      %v10303 = vpop.f32.mrb[0].mxu0
      %v10304 = vpop.f32.mrb[0].mxu0
      %v10305 = vadd.f32 0.0, %v10304
      %v10306 = vpop.f32.mrb[0].mxu0
      %10307 = vmatprep.mubr.bf16.mxu0 0
      %10308 = vmatmul.mubr.bf16.gmra.mrb[0].mxu0 %v9131
      %v10309 = vpop.f32.mrb[0].mxu0
      %v10310 = vadd.f32 0.0, %v10309
      %v10311 = vpop.f32.mrb[0].mxu0
      %v10312 = vpop.f32.mrb[0].mxu0
      %v10313 = vadd.f32 0.0, %v10312
      %v10314 = vpop.f32.mrb[0].mxu0
      %10315 = vmatprep.mubr.bf16.mxu0 0
      %10316 = vmatmul.mubr.bf16.gmra.mrb[0].mxu0 %v9132
      %v10317 = vpop.f32.mrb[0].mxu0
      %v10318 = vadd.f32 0.0, %v10317
      %v10319 = vpop.f32.mrb[0].mxu0
      %v10320 = vpop.f32.mrb[0].mxu0
      %v10321 = vadd.f32 0.0, %v10320
      %v10322 = vpop.f32.mrb[0].mxu0
      %10323 = vmatprep.mubr.bf16.mxu0 0
      %10324 = vmatmul.mubr.bf16.gmra.mrb[0].mxu0 %v9133
      %v10325 = vpop.f32.mrb[0].mxu0
      %v10326 = vadd.f32 0.0, %v10325
      %v10327 = vpop.f32.mrb[0].mxu0
      %v10328 = vpop.f32.mrb[0].mxu0
      %v10329 = vadd.f32 0.0, %v10328
      %v10330 = vpop.f32.mrb[0].mxu0
      %10331 = vmatprep.mubr.bf16.mxu0 0
      %10332 = vmatmul.mubr.bf16.gmra.mrb[0].mxu0 %v9134
      %v10333 = vpop.f32.mrb[0].mxu0
      %v10334 = vadd.f32 0.0, %v10333
      %v10335 = vpop.f32.mrb[0].mxu0
      %v10336 = vpop.f32.mrb[0].mxu0
      %v10337 = vadd.f32 0.0, %v10336
      %v10338 = vpop.f32.mrb[0].mxu0
      %10339 = vmatprep.mubr.bf16.mxu0 0
      %10340 = vmatmul.mubr.bf16.gmra.mrb[0].mxu0 %v9135
      %v10341 = vpop.f32.mrb[0].mxu0
      %v10342 = vadd.f32 0.0, %v10341
      %v10343 = vpop.f32.mrb[0].mxu0
      %v10344 = vpop.f32.mrb[0].mxu0
      %v10345 = vadd.f32 0.0, %v10344
      %v10346 = vpop.f32.mrb[0].mxu0
      %10347 = vmatprep.mubr.bf16.mxu0 0
      %10348 = vmatmul.mubr.bf16.gmra.mrb[0].mxu0 %v9136
      %v10349 = vpop.f32.mrb[0].mxu0
      %v10350 = vadd.f32 0.0, %v10349
      %v10351 = vpop.f32.mrb[0].mxu0
      %v10352 = vpop.f32.mrb[0].mxu0
      %v10353 = vadd.f32 0.0, %v10352
      %v10354 = vpop.f32.mrb[0].mxu0
      %10355 = vmatprep.mubr.bf16.mxu0 0
      %10356 = vmatmul.mubr.bf16.gmra.mrb[0].mxu0 %v9137
      %v10357 = vpop.f32.mrb[0].mxu0
      %v10358 = vadd.f32 0.0, %v10357
      %v10359 = vpop.f32.mrb[0].mxu0
      %v10360 = vpop.f32.mrb[0].mxu0
      %v10361 = vadd.f32 0.0, %v10360
      %v10362 = vpop.f32.mrb[0].mxu0
      %10363 = vmatprep.mubr.bf16.mxu0 0
      %10364 = vmatmul.mubr.bf16.gmra.mrb[0].mxu0 %v9138
      %v10365 = vpop.f32.mrb[0].mxu0
      %v10366 = vadd.f32 0.0, %v10365
      %v10367 = vpop.f32.mrb[0].mxu0
      %v10368 = vpop.f32.mrb[0].mxu0
      %v10369 = vadd.f32 0.0, %v10368
      %v10370 = vpop.f32.mrb[0].mxu0
      %10371 = vmatprep.mubr.bf16.mxu0 0
      %10372 = vmatmul.mubr.bf16.gmra.mrb[0].mxu0 %v9139
      %v10373 = vpop.f32.mrb[0].mxu0
      %v10374 = vadd.f32 0.0, %v10373
      %v10375 = vpop.f32.mrb[0].mxu0
      %v10376 = vpop.f32.mrb[0].mxu0
      %v10377 = vadd.f32 0.0, %v10376
      %v10378 = vpop.f32.mrb[0].mxu0
      %10379 = vmatprep.mubr.bf16.mxu0 0
      %10380 = vmatmul.mubr.bf16.gmra.mrb[0].mxu0 %v9140
      %v10381 = vpop.f32.mrb[0].mxu0
      %v10382 = vadd.f32 0.0, %v10381
      %v10383 = vpop.f32.mrb[0].mxu0
      %v10384 = vpop.f32.mrb[0].mxu0
      %v10385 = vadd.f32 0.0, %v10384
      %v10386 = vpop.f32.mrb[0].mxu0
      %10387 = vmatprep.mubr.bf16.mxu0 0
      %10388 = vmatmul.mubr.bf16.gmra.mrb[0].mxu0 %v9141
      %v10389 = vpop.f32.mrb[0].mxu0
      %v10390 = vadd.f32 0.0, %v10389
      %v10391 = vpop.f32.mrb[0].mxu0
      %v10392 = vpop.f32.mrb[0].mxu0
      %v10393 = vadd.f32 0.0, %v10392
      %v10394 = vpop.f32.mrb[0].mxu0
      %10395 = vmatprep.mubr.bf16.mxu0 0
      %10396 = vmatmul.mubr.bf16.gmra.mrb[0].mxu0 %v9142
      %v10397 = vpop.f32.mrb[0].mxu0
      %v10398 = vadd.f32 0.0, %v10397
      %v10399 = vpop.f32.mrb[0].mxu0
      %v10400 = vpop.f32.mrb[0].mxu0
      %v10401 = vadd.f32 0.0, %v10400
      %v10402 = vpop.f32.mrb[0].mxu0
      %10403 = vdwg.mxu0
      %v10404 = vrot.slane %v10214, 2
      %v10405 = vrot.slane %v10217, 2
      %v10406 = vrot.slane %v10222, 2
      %v10407 = vrot.slane %v10225, 2
      %v10408 = vrot.slane %v10230, 2
      %v10409 = vrot.slane %v10233, 2
      %v10410 = vrot.slane %v10238, 2
      %v10411 = vrot.slane %v10241, 2
      %v10412 = vrot.slane %v10246, 2
      %v10413 = vrot.slane %v10249, 2
      %v10414 = vrot.slane %v10254, 2
      %v10415 = vrot.slane %v10257, 2
      %v10416 = vrot.slane %v10262, 2
      %v10417 = vrot.slane %v10265, 2
      %v10418 = vrot.slane %v10270, 2
      %v10419 = vrot.slane %v10273, 2
      %v10420 = vrot.slane %v10278, 2
      %v10421 = vrot.slane %v10281, 2
      %v10422 = vrot.slane %v10286, 2
      %v10423 = vrot.slane %v10289, 2
      %v10424 = vrot.slane %v10294, 2
      %v10425 = vrot.slane %v10297, 2
      %v10426 = vrot.slane %v10302, 2
      %v10427 = vrot.slane %v10305, 2
      %v10428 = vrot.slane %v10310, 2
      %v10429 = vrot.slane %v10313, 2
      %v10430 = vrot.slane %v10318, 2
      %v10431 = vrot.slane %v10321, 2
      %v10432 = vrot.slane %v10326, 2
      %v10433 = vrot.slane %v10329, 2
      %v10434 = vrot.slane %v10334, 2
      %v10435 = vrot.slane %v10337, 2
      %v10436 = vrot.slane %v10342, 2
      %v10437 = vrot.slane %v10345, 2
      %v10438 = vrot.slane %v10350, 2
      %v10439 = vrot.slane %v10353, 2
      %v10440 = vrot.slane %v10358, 2
      %v10441 = vrot.slane %v10361, 2
      %v10442 = vrot.slane %v10366, 2
      %v10443 = vrot.slane %v10369, 2
      %v10444 = vrot.slane %v10374, 2
      %v10445 = vrot.slane %v10377, 2
      %v10446 = vrot.slane %v10382, 2
      %v10447 = vrot.slane %v10385, 2
      %v10448 = vrot.slane %v10390, 2
      %v10449 = vrot.slane %v10393, 2
      %v10450 = vrot.slane %v10398, 2
      %v10451 = vrot.slane %v10401, 2
      %v10452 = vsel %vm7078, %v10450, %v10451
      %v10453 = vsel %vm7078, %v10449, %v10450
      %v10454 = vsel %vm7078, %v10448, %v10449
      %v10455 = vsel %vm7078, %v10447, %v10448
      %v10456 = vsel %vm7078, %v10446, %v10447
      %v10457 = vsel %vm7078, %v10445, %v10446
      %v10458 = vsel %vm7078, %v10444, %v10445
      %v10459 = vsel %vm7078, %v10443, %v10444
      %v10460 = vsel %vm7078, %v10442, %v10443
      %v10461 = vsel %vm7078, %v10441, %v10442
      %v10462 = vsel %vm7078, %v10440, %v10441
      %v10463 = vsel %vm7078, %v10439, %v10440
      %v10464 = vsel %vm7078, %v10438, %v10439
      %v10465 = vsel %vm7078, %v10437, %v10438
      %v10466 = vsel %vm7078, %v10436, %v10437
      %v10467 = vsel %vm7078, %v10435, %v10436
      %v10468 = vsel %vm7078, %v10434, %v10435
      %v10469 = vsel %vm7078, %v10433, %v10434
      %v10470 = vsel %vm7078, %v10432, %v10433
      %v10471 = vsel %vm7078, %v10431, %v10432
      %v10472 = vsel %vm7078, %v10430, %v10431
      %v10473 = vsel %vm7078, %v10429, %v10430
      %v10474 = vsel %vm7078, %v10428, %v10429
      %v10475 = vsel %vm7078, %v10427, %v10428
      %v10476 = vsel %vm7078, %v10426, %v10427
      %v10477 = vsel %vm7078, %v10425, %v10426
      %v10478 = vsel %vm7078, %v10424, %v10425
      %v10479 = vsel %vm7078, %v10423, %v10424
      %v10480 = vsel %vm7078, %v10422, %v10423
      %v10481 = vsel %vm7078, %v10421, %v10422
      %v10482 = vsel %vm7078, %v10420, %v10421
      %v10483 = vsel %vm7078, %v10419, %v10420
      %v10484 = vsel %vm7078, %v10418, %v10419
      %v10485 = vsel %vm7078, %v10417, %v10418
      %v10486 = vsel %vm7078, %v10416, %v10417
      %v10487 = vsel %vm7078, %v10415, %v10416
      %v10488 = vsel %vm7078, %v10414, %v10415
      %v10489 = vsel %vm7078, %v10413, %v10414
      %v10490 = vsel %vm7078, %v10412, %v10413
      %v10491 = vsel %vm7078, %v10411, %v10412
      %v10492 = vsel %vm7078, %v10410, %v10411
      %v10493 = vsel %vm7078, %v10409, %v10410
      %v10494 = vsel %vm7078, %v10408, %v10409
      %v10495 = vsel %vm7078, %v10407, %v10408
      %v10496 = vsel %vm7078, %v10406, %v10407
      %v10497 = vsel %vm7078, %v10405, %v10406
      %v10498 = vsel %vm7078, %v10404, %v10405
      %v10499 = vsel %vm7078, %v10451, %v10404
      %v10500 = vld [vmem:[#allocation2] sm:$0xff]
      %v10501 = vld [vmem:[#allocation2 + $0x8] sm:$0xff]
      %v10502 = vld [vmem:[#allocation2 + $0x10] sm:$0xff]
      %v10503 = vld [vmem:[#allocation2 + $0x18] sm:$0xff]
      %v10504 = vld [vmem:[#allocation2 + $0x20] sm:$0xff]
      %v10505 = vld [vmem:[#allocation2 + $0x28] sm:$0xff]
      %v10506 = vld [vmem:[#allocation2 + $0x30] sm:$0xff]
      %v10507 = vld [vmem:[#allocation2 + $0x38] sm:$0xff]
      %v10508 = vld [vmem:[#allocation2 + $0x40] sm:$0xff]
      %v10509 = vld [vmem:[#allocation2 + $0x48] sm:$0xff]
      %v10510 = vld [vmem:[#allocation2 + $0x50] sm:$0xff]
      %v10511 = vld [vmem:[#allocation2 + $0x58] sm:$0xff]
      %v10512 = vld [vmem:[#allocation2 + $0x60] sm:$0xff]
      %v10513 = vld [vmem:[#allocation2 + $0x68] sm:$0xff]
      %v10514 = vld [vmem:[#allocation2 + $0x70] sm:$0xff]
      %v10515 = vld [vmem:[#allocation2 + $0x78] sm:$0xff]
      %v10516 = vld [vmem:[#allocation2 + $0x80] sm:$0xff]
      %v10517 = vld [vmem:[#allocation2 + $0x88] sm:$0xff]
      %v10518 = vld [vmem:[#allocation2 + $0x90] sm:$0xff]
      %v10519 = vld [vmem:[#allocation2 + $0x98] sm:$0xff]
      %v10520 = vld [vmem:[#allocation2 + $0xa0] sm:$0xff]
      %v10521 = vld [vmem:[#allocation2 + $0xa8] sm:$0xff]
      %v10522 = vld [vmem:[#allocation2 + $0xb0] sm:$0xff]
      %v10523 = vld [vmem:[#allocation2 + $0xb8] sm:$0xff]
      %v10524 = vld [vmem:[#allocation2 + $0xc0] sm:$0xff]
      %v10525 = vld [vmem:[#allocation2 + $0xc8] sm:$0xff]
      %v10526 = vld [vmem:[#allocation2 + $0xd0] sm:$0xff]
      %v10527 = vld [vmem:[#allocation2 + $0xd8] sm:$0xff]
      %v10528 = vld [vmem:[#allocation2 + $0xe0] sm:$0xff]
      %v10529 = vld [vmem:[#allocation2 + $0xe8] sm:$0xff]
      %v10530 = vld [vmem:[#allocation2 + $0xf0] sm:$0xff]
      %v10531 = vld [vmem:[#allocation2 + $0xf8] sm:$0xff]
      %v10532 = vld [vmem:[#allocation2 + $0x100] sm:$0xff]
      %v10533 = vld [vmem:[#allocation2 + $0x108] sm:$0xff]
      %v10534 = vld [vmem:[#allocation2 + $0x110] sm:$0xff]
      %v10535 = vld [vmem:[#allocation2 + $0x118] sm:$0xff]
      %v10536 = vld [vmem:[#allocation2 + $0x120] sm:$0xff]
      %v10537 = vld [vmem:[#allocation2 + $0x128] sm:$0xff]
      %v10538 = vld [vmem:[#allocation2 + $0x130] sm:$0xff]
      %v10539 = vld [vmem:[#allocation2 + $0x138] sm:$0xff]
      %v10540 = vld [vmem:[#allocation2 + $0x140] sm:$0xff]
      %v10541 = vld [vmem:[#allocation2 + $0x148] sm:$0xff]
      %v10542 = vld [vmem:[#allocation2 + $0x150] sm:$0xff]
      %v10543 = vld [vmem:[#allocation2 + $0x158] sm:$0xff]
      %v10544 = vld [vmem:[#allocation2 + $0x160] sm:$0xff]
      %v10545 = vld [vmem:[#allocation2 + $0x168] sm:$0xff]
      %v10546 = vld [vmem:[#allocation2 + $0x170] sm:$0xff]
      %v10547 = vld [vmem:[#allocation2 + $0x178] sm:$0xff]
      %v10548 = vadd.f32 %v10500, %v10498
      %v10549 = vadd.f32 %v10501, %v10497
      %v10550 = vadd.f32 %v10502, %v10496
      %v10551 = vadd.f32 %v10503, %v10495
      %v10552 = vadd.f32 %v10504, %v10494
      %v10553 = vadd.f32 %v10505, %v10493
      %v10554 = vadd.f32 %v10506, %v10492
      %v10555 = vadd.f32 %v10507, %v10491
      %v10556 = vadd.f32 %v10508, %v10490
      %v10557 = vadd.f32 %v10509, %v10489
      %v10558 = vadd.f32 %v10510, %v10488
      %v10559 = vadd.f32 %v10511, %v10487
      %v10560 = vadd.f32 %v10512, %v10486
      %v10561 = vadd.f32 %v10513, %v10485
      %v10562 = vadd.f32 %v10514, %v10484
      %v10563 = vadd.f32 %v10515, %v10483
      %v10564 = vadd.f32 %v10516, %v10482
      %v10565 = vadd.f32 %v10517, %v10481
      %v10566 = vadd.f32 %v10518, %v10480
      %v10567 = vadd.f32 %v10519, %v10479
      %v10568 = vadd.f32 %v10520, %v10478
      %v10569 = vadd.f32 %v10521, %v10477
      %v10570 = vadd.f32 %v10522, %v10476
      %v10571 = vadd.f32 %v10523, %v10475
      %v10572 = vadd.f32 %v10524, %v10474
      %v10573 = vadd.f32 %v10525, %v10473
      %v10574 = vadd.f32 %v10526, %v10472
      %v10575 = vadd.f32 %v10527, %v10471
      %v10576 = vadd.f32 %v10528, %v10470
      %v10577 = vadd.f32 %v10529, %v10469
      %v10578 = vadd.f32 %v10530, %v10468
      %v10579 = vadd.f32 %v10531, %v10467
      %v10580 = vadd.f32 %v10532, %v10466
      %v10581 = vadd.f32 %v10533, %v10465
      %v10582 = vadd.f32 %v10534, %v10464
      %v10583 = vadd.f32 %v10535, %v10463
      %v10584 = vadd.f32 %v10536, %v10462
      %v10585 = vadd.f32 %v10537, %v10461
      %v10586 = vadd.f32 %v10538, %v10460
      %v10587 = vadd.f32 %v10539, %v10459
      %v10588 = vadd.f32 %v10540, %v10458
      %v10589 = vadd.f32 %v10541, %v10457
      %v10590 = vadd.f32 %v10542, %v10456
      %v10591 = vadd.f32 %v10543, %v10455
      %v10592 = vadd.f32 %v10544, %v10454
      %v10593 = vadd.f32 %v10545, %v10453
      %v10594 = vadd.f32 %v10546, %v10452
      %v10595 = vadd.f32 %v10547, %v10499
      %10596 = vst [vmem:[#allocation2] sm:$0xff] %v10548
      %10597 = vst [vmem:[#allocation2 + $0x8] sm:$0xff] %v10549
      %10598 = vst [vmem:[#allocation2 + $0x10] sm:$0xff] %v10550
      %10599 = vst [vmem:[#allocation2 + $0x18] sm:$0xff] %v10551
      %10600 = vst [vmem:[#allocation2 + $0x20] sm:$0xff] %v10552
      %10601 = vst [vmem:[#allocation2 + $0x28] sm:$0xff] %v10553
      %10602 = vst [vmem:[#allocation2 + $0x30] sm:$0xff] %v10554
      %10603 = vst [vmem:[#allocation2 + $0x38] sm:$0xff] %v10555
      %10604 = vst [vmem:[#allocation2 + $0x40] sm:$0xff] %v10556
      %10605 = vst [vmem:[#allocation2 + $0x48] sm:$0xff] %v10557
      %10606 = vst [vmem:[#allocation2 + $0x50] sm:$0xff] %v10558
      %10607 = vst [vmem:[#allocation2 + $0x58] sm:$0xff] %v10559
      %10608 = vst [vmem:[#allocation2 + $0x60] sm:$0xff] %v10560
      %10609 = vst [vmem:[#allocation2 + $0x68] sm:$0xff] %v10561
      %10610 = vst [vmem:[#allocation2 + $0x70] sm:$0xff] %v10562
      %10611 = vst [vmem:[#allocation2 + $0x78] sm:$0xff] %v10563
      %10612 = vst [vmem:[#allocation2 + $0x80] sm:$0xff] %v10564
      %10613 = vst [vmem:[#allocation2 + $0x88] sm:$0xff] %v10565
      %10614 = vst [vmem:[#allocation2 + $0x90] sm:$0xff] %v10566
      %10615 = vst [vmem:[#allocation2 + $0x98] sm:$0xff] %v10567
      %10616 = vst [vmem:[#allocation2 + $0xa0] sm:$0xff] %v10568
      %10617 = vst [vmem:[#allocation2 + $0xa8] sm:$0xff] %v10569
      %10618 = vst [vmem:[#allocation2 + $0xb0] sm:$0xff] %v10570
      %10619 = vst [vmem:[#allocation2 + $0xb8] sm:$0xff] %v10571
      %10620 = vst [vmem:[#allocation2 + $0xc0] sm:$0xff] %v10572
      %10621 = vst [vmem:[#allocation2 + $0xc8] sm:$0xff] %v10573
      %10622 = vst [vmem:[#allocation2 + $0xd0] sm:$0xff] %v10574
      %10623 = vst [vmem:[#allocation2 + $0xd8] sm:$0xff] %v10575
      %10624 = vst [vmem:[#allocation2 + $0xe0] sm:$0xff] %v10576
      %10625 = vst [vmem:[#allocation2 + $0xe8] sm:$0xff] %v10577
      %10626 = vst [vmem:[#allocation2 + $0xf0] sm:$0xff] %v10578
      %10627 = vst [vmem:[#allocation2 + $0xf8] sm:$0xff] %v10579
      %10628 = vst [vmem:[#allocation2 + $0x100] sm:$0xff] %v10580
      %10629 = vst [vmem:[#allocation2 + $0x108] sm:$0xff] %v10581
      %10630 = vst [vmem:[#allocation2 + $0x110] sm:$0xff] %v10582
      %10631 = vst [vmem:[#allocation2 + $0x118] sm:$0xff] %v10583
      %10632 = vst [vmem:[#allocation2 + $0x120] sm:$0xff] %v10584
      %10633 = vst [vmem:[#allocation2 + $0x128] sm:$0xff] %v10585
      %10634 = vst [vmem:[#allocation2 + $0x130] sm:$0xff] %v10586
      %10635 = vst [vmem:[#allocation2 + $0x138] sm:$0xff] %v10587
      %10636 = vst [vmem:[#allocation2 + $0x140] sm:$0xff] %v10588
      %10637 = vst [vmem:[#allocation2 + $0x148] sm:$0xff] %v10589
      %10638 = vst [vmem:[#allocation2 + $0x150] sm:$0xff] %v10590
      %10639 = vst [vmem:[#allocation2 + $0x158] sm:$0xff] %v10591
      %10640 = vst [vmem:[#allocation2 + $0x160] sm:$0xff] %v10592
      %10641 = vst [vmem:[#allocation2 + $0x168] sm:$0xff] %v10593
      %10642 = vst [vmem:[#allocation2 + $0x170] sm:$0xff] %v10594
      %10643 = vst [vmem:[#allocation2 + $0x178] sm:$0xff] %v10595
      %v10644 = vld [vmem:[#allocation2] sm:$0xff]
      %v10645 = vld [vmem:[#allocation2 + $0x8] sm:$0xff]
      %v10646 = vld [vmem:[#allocation2 + $0x18] sm:$0xff]
      %v10647 = vld [vmem:[#allocation2 + $0x20] sm:$0xff]
      %v10648 = vld [vmem:[#allocation2 + $0x30] sm:$0xff]
      %v10649 = vld [vmem:[#allocation2 + $0x38] sm:$0xff]
      %v10650 = vld [vmem:[#allocation2 + $0x48] sm:$0xff]
      %v10651 = vld [vmem:[#allocation2 + $0x50] sm:$0xff]
      %v10652 = vld [vmem:[#allocation2 + $0x60] sm:$0xff]
      %v10653 = vld [vmem:[#allocation2 + $0x68] sm:$0xff]
      %v10654 = vld [vmem:[#allocation2 + $0x78] sm:$0xff]
      %v10655 = vld [vmem:[#allocation2 + $0x80] sm:$0xff]
      %v10656 = vld [vmem:[#allocation2 + $0x90] sm:$0xff]
      %v10657 = vld [vmem:[#allocation2 + $0x98] sm:$0xff]
      %v10658 = vld [vmem:[#allocation2 + $0xa8] sm:$0xff]
      %v10659 = vld [vmem:[#allocation2 + $0xb0] sm:$0xff]
      %v10660 = vld [vmem:[#allocation2 + $0xc0] sm:$0xff]
      %v10661 = vld [vmem:[#allocation2 + $0xc8] sm:$0xff]
      %v10662 = vld [vmem:[#allocation2 + $0xd8] sm:$0xff]
      %v10663 = vld [vmem:[#allocation2 + $0xe0] sm:$0xff]
      %v10664 = vld [vmem:[#allocation2 + $0xf0] sm:$0xff]
      %v10665 = vld [vmem:[#allocation2 + $0xf8] sm:$0xff]
      %v10666 = vld [vmem:[#allocation2 + $0x108] sm:$0xff]
      %v10667 = vld [vmem:[#allocation2 + $0x110] sm:$0xff]
      %v10668 = vld [vmem:[#allocation2 + $0x120] sm:$0xff]
      %v10669 = vld [vmem:[#allocation2 + $0x128] sm:$0xff]
      %v10670 = vld [vmem:[#allocation2 + $0x138] sm:$0xff]
      %v10671 = vld [vmem:[#allocation2 + $0x140] sm:$0xff]
      %v10672 = vld [vmem:[#allocation2 + $0x150] sm:$0xff]
      %v10673 = vld [vmem:[#allocation2 + $0x158] sm:$0xff]
      %v10674 = vld [vmem:[#allocation2 + $0x168] sm:$0xff]
      %v10675 = vld [vmem:[#allocation2 + $0x170] sm:$0xff]
      %v10676 = vld [vmem:[%s4] sm:$0x1]
      %v10678 = vlaneseq
      %v10679 = vshrl.u32 %v10678, 7
      %v10680 = vsub.s32 0, %v10679
      %v10681 = vrot.slane %v10676, %v10680
      %v10683 = vadd.f32 %v10644, %v10681
      %v10684 = vadd.f32 %v10645, %v10681
      %v10685 = vadd.f32 %v10646, %v10681
      %v10686 = vadd.f32 %v10647, %v10681
      %v10687 = vadd.f32 %v10648, %v10681
      %v10688 = vadd.f32 %v10649, %v10681
      %v10689 = vadd.f32 %v10650, %v10681
      %v10690 = vadd.f32 %v10651, %v10681
      %v10691 = vadd.f32 %v10652, %v10681
      %v10692 = vadd.f32 %v10653, %v10681
      %v10693 = vadd.f32 %v10654, %v10681
      %v10694 = vadd.f32 %v10655, %v10681
      %v10695 = vadd.f32 %v10656, %v10681
      %v10696 = vadd.f32 %v10657, %v10681
      %v10697 = vadd.f32 %v10658, %v10681
      %v10698 = vadd.f32 %v10659, %v10681
      %v10699 = vadd.f32 %v10660, %v10681
      %v10700 = vadd.f32 %v10661, %v10681
      %v10701 = vadd.f32 %v10662, %v10681
      %v10702 = vadd.f32 %v10663, %v10681
      %v10703 = vadd.f32 %v10664, %v10681
      %v10704 = vadd.f32 %v10665, %v10681
      %v10705 = vadd.f32 %v10666, %v10681
      %v10706 = vadd.f32 %v10667, %v10681
      %v10707 = vadd.f32 %v10668, %v10681
      %v10708 = vadd.f32 %v10669, %v10681
      %v10709 = vadd.f32 %v10670, %v10681
      %v10710 = vadd.f32 %v10671, %v10681
      %v10711 = vadd.f32 %v10672, %v10681
      %v10712 = vadd.f32 %v10673, %v10681
      %v10713 = vadd.f32 %v10674, %v10681
      %v10714 = vadd.f32 %v10675, %v10681
      %v10715 = vmax.f32 %v10683, 0.0
      %v10716 = vmax.f32 %v10684, 0.0
      %v10717 = vmax.f32 %v10685, 0.0
      %v10718 = vmax.f32 %v10686, 0.0
      %v10719 = vmax.f32 %v10687, 0.0
      %v10720 = vmax.f32 %v10688, 0.0
      %v10721 = vmax.f32 %v10689, 0.0
      %v10722 = vmax.f32 %v10690, 0.0
      %v10723 = vmax.f32 %v10691, 0.0
      %v10724 = vmax.f32 %v10692, 0.0
      %v10725 = vmax.f32 %v10693, 0.0
      %v10726 = vmax.f32 %v10694, 0.0
      %v10727 = vmax.f32 %v10695, 0.0
      %v10728 = vmax.f32 %v10696, 0.0
      %v10729 = vmax.f32 %v10697, 0.0
      %v10730 = vmax.f32 %v10698, 0.0
      %v10731 = vmax.f32 %v10699, 0.0
      %v10732 = vmax.f32 %v10700, 0.0
      %v10733 = vmax.f32 %v10701, 0.0
      %v10734 = vmax.f32 %v10702, 0.0
      %v10735 = vmax.f32 %v10703, 0.0
      %v10736 = vmax.f32 %v10704, 0.0
      %v10737 = vmax.f32 %v10705, 0.0
      %v10738 = vmax.f32 %v10706, 0.0
      %v10739 = vmax.f32 %v10707, 0.0
      %v10740 = vmax.f32 %v10708, 0.0
      %v10741 = vmax.f32 %v10709, 0.0
      %v10742 = vmax.f32 %v10710, 0.0
      %v10743 = vmax.f32 %v10711, 0.0
      %v10744 = vmax.f32 %v10712, 0.0
      %v10745 = vmax.f32 %v10713, 0.0
      %v10746 = vmax.f32 %v10714, 0.0
      %v10747 = vpack.c.bf16 %v10716, %v10715
      %v10748 = vpack.c.bf16 %v10718, %v10717
      %v10749 = vpack.c.bf16 %v10720, %v10719
      %v10750 = vpack.c.bf16 %v10722, %v10721
      %v10751 = vpack.c.bf16 %v10724, %v10723
      %v10752 = vpack.c.bf16 %v10726, %v10725
      %v10753 = vpack.c.bf16 %v10728, %v10727
      %v10754 = vpack.c.bf16 %v10730, %v10729
      %v10755 = vpack.c.bf16 %v10732, %v10731
      %v10756 = vpack.c.bf16 %v10734, %v10733
      %v10757 = vpack.c.bf16 %v10736, %v10735
      %v10758 = vpack.c.bf16 %v10738, %v10737
      %v10759 = vpack.c.bf16 %v10740, %v10739
      %v10760 = vpack.c.bf16 %v10742, %v10741
      %v10761 = vpack.c.bf16 %v10744, %v10743
      %v10762 = vpack.c.bf16 %v10746, %v10745
      %v10779 = vunpack.c.l.b16 %v10747
      %v10780 = vunpack.c.h.b16 %v10747
      %v10781 = vunpack.c.l.b16 %v10748
      %v10782 = vunpack.c.h.b16 %v10748
      %v10783 = vunpack.c.l.b16 %v10749
      %v10784 = vunpack.c.h.b16 %v10749
      %v10785 = vunpack.c.l.b16 %v10750
      %v10786 = vunpack.c.h.b16 %v10750
      %v10787 = vunpack.c.l.b16 %v10751
      %v10788 = vunpack.c.h.b16 %v10751
      %v10789 = vunpack.c.l.b16 %v10752
      %v10790 = vunpack.c.h.b16 %v10752
      %v10791 = vunpack.c.l.b16 %v10753
      %v10792 = vunpack.c.h.b16 %v10753
      %v10793 = vunpack.c.l.b16 %v10754
      %v10794 = vunpack.c.h.b16 %v10754
      %v10795 = vunpack.c.l.b16 %v10755
      %v10796 = vunpack.c.h.b16 %v10755
      %v10797 = vunpack.c.l.b16 %v10756
      %v10798 = vunpack.c.h.b16 %v10756
      %v10799 = vunpack.c.l.b16 %v10757
      %v10800 = vunpack.c.h.b16 %v10757
      %v10801 = vunpack.c.l.b16 %v10758
      %v10802 = vunpack.c.h.b16 %v10758
      %v10803 = vunpack.c.l.b16 %v10759
      %v10804 = vunpack.c.h.b16 %v10759
      %v10805 = vunpack.c.l.b16 %v10760
      %v10806 = vunpack.c.h.b16 %v10760
      %v10807 = vunpack.c.l.b16 %v10761
      %v10808 = vunpack.c.h.b16 %v10761
      %v10809 = vunpack.c.l.b16 %v10762
      %v10810 = vunpack.c.h.b16 %v10762
      %v10811 = vpack.c.b16 %v10779, %v10779
      %v10812 = vpack.c.b16 %v10780, %v10780
      %v10813 = vpack.c.b16 %v10781, %v10781
      %v10814 = vpack.c.b16 %v10782, %v10782
      %v10815 = vpack.c.b16 %v10783, %v10783
      %v10816 = vpack.c.b16 %v10784, %v10784
      %v10817 = vpack.c.b16 %v10785, %v10785
      %v10818 = vpack.c.b16 %v10786, %v10786
      %v10819 = vpack.c.b16 %v10787, %v10787
      %v10820 = vpack.c.b16 %v10788, %v10788
      %v10821 = vpack.c.b16 %v10789, %v10789
      %v10822 = vpack.c.b16 %v10790, %v10790
      %v10823 = vpack.c.b16 %v10791, %v10791
      %v10824 = vpack.c.b16 %v10792, %v10792
      %v10825 = vpack.c.b16 %v10793, %v10793
      %v10826 = vpack.c.b16 %v10794, %v10794
      %v10827 = vpack.c.b16 %v10795, %v10795
      %v10828 = vpack.c.b16 %v10796, %v10796
      %v10829 = vpack.c.b16 %v10797, %v10797
      %v10830 = vpack.c.b16 %v10798, %v10798
      %v10831 = vpack.c.b16 %v10799, %v10799
      %v10832 = vpack.c.b16 %v10800, %v10800
      %v10833 = vpack.c.b16 %v10801, %v10801
      %v10834 = vpack.c.b16 %v10802, %v10802
      %v10835 = vpack.c.b16 %v10803, %v10803
      %v10836 = vpack.c.b16 %v10804, %v10804
      %v10837 = vpack.c.b16 %v10805, %v10805
      %v10838 = vpack.c.b16 %v10806, %v10806
      %v10839 = vpack.c.b16 %v10807, %v10807
      %v10840 = vpack.c.b16 %v10808, %v10808
      %v10841 = vpack.c.b16 %v10809, %v10809
      %v10842 = vpack.c.b16 %v10810, %v10810
      %10875 = vst [vmem:[%s231] sm:$0xf] %v10811
      %10876 = vst [vmem:[%s231 + $0x4] sm:$0xf] %v10812
      %10877 = vst [vmem:[%s231 + $0x8] sm:$0xf] %v10813
      %10878 = vst [vmem:[%s231 + $0xc] sm:$0xf] %v10814
      %10879 = vst [vmem:[%s231 + $0x10] sm:$0xf] %v10815
      %10880 = vst [vmem:[%s231 + $0x14] sm:$0xf] %v10816
      %10881 = vst [vmem:[%s231 + $0x18] sm:$0xf] %v10817
      %10882 = vst [vmem:[%s231 + $0x1c] sm:$0xf] %v10818
      %10883 = vst [vmem:[%s231 + $0x20] sm:$0xf] %v10819
      %10884 = vst [vmem:[%s231 + $0x24] sm:$0xf] %v10820
      %10885 = vst [vmem:[%s231 + $0x28] sm:$0xf] %v10821
      %10886 = vst [vmem:[%s231 + $0x2c] sm:$0xf] %v10822
      %10887 = vst [vmem:[%s231 + $0x30] sm:$0xf] %v10823
      %10888 = vst [vmem:[%s231 + $0x34] sm:$0xf] %v10824
      %10889 = vst [vmem:[%s231 + $0x38] sm:$0xf] %v10825
      %10890 = vst [vmem:[%s231 + $0x3c] sm:$0xf] %v10826
      %10891 = vst [vmem:[%s231 + $0x40] sm:$0xf] %v10827
      %10892 = vst [vmem:[%s231 + $0x44] sm:$0xf] %v10828
      %10893 = vst [vmem:[%s231 + $0x48] sm:$0xf] %v10829
      %10894 = vst [vmem:[%s231 + $0x4c] sm:$0xf] %v10830
      %10895 = vst [vmem:[%s231 + $0x50] sm:$0xf] %v10831
      %10896 = vst [vmem:[%s231 + $0x54] sm:$0xf] %v10832
      %10897 = vst [vmem:[%s231 + $0x58] sm:$0xf] %v10833
      %10898 = vst [vmem:[%s231 + $0x5c] sm:$0xf] %v10834
      %10899 = vst [vmem:[%s231 + $0x60] sm:$0xf] %v10835
      %10900 = vst [vmem:[%s231 + $0x64] sm:$0xf] %v10836
      %10901 = vst [vmem:[%s231 + $0x68] sm:$0xf] %v10837
      %10902 = vst [vmem:[%s231 + $0x6c] sm:$0xf] %v10838
      %10903 = vst [vmem:[%s231 + $0x70] sm:$0xf] %v10839
      %10904 = vst [vmem:[%s231 + $0x74] sm:$0xf] %v10840
      %10905 = vst [vmem:[%s231 + $0x78] sm:$0xf] %v10841
      %10906 = vst [vmem:[%s231 + $0x7c] sm:$0xf] %v10842
      %s10907 = smul.u32 16, %s16
      %p10908 = scmp.lt.s32.totalorder %s10907, 31
      %s10909 = scalar_select %p10908, %s10907, 31
      %s10910 = smul.addr %s10909, 2
      %s10911 = smul.addr %s10910, 4
      %s10912 = scalar_lea.vmem %s5, %s10911
      // Predicated region
      $region41: #{conv_block_forward.1} parent=39 // pred_check
        %p10913 = pneg %p144
      $region42: #{conv_block_forward.1} parent=39 // pred_check_branch
        %10915 = sbr.rel (%p10913) target = $region44
      $region43: #{conv_block_forward.1} parent=39 // pred_region
        %s10916 = smul.u32 16, %s16
      $region44: #{conv_block_forward.1} parent=39 // pred_fallthru
        _
    $region40: #{conv_block_forward.1} parent=5 // pred_fallthru
      _
    %p10917 = scmp.le.s32.totalorder 2, %s11
    // Predicated region
    $region45: #{conv_block_forward.1} parent=5 // pred_check
      %p10918 = pneg %p10917
    $region46: #{conv_block_forward.1} parent=5 // pred_check_branch
      %10920 = sbr.rel (%p10918) target = $region48
    $region47: #{conv_block_forward.1} parent=5 // pred_region
      %s10921 = ssub.s32 %s11, 2
      // Predicated region
      $region49: #{conv_block_forward.1} parent=47 // pred_check
        %p10922 = pneg %p150
      $region50: #{conv_block_forward.1} parent=47 // pred_check_branch
        %10924 = sbr.rel (%p10922) target = $region52
      $region51: #{conv_block_forward.1} parent=47 // pred_region
        %s10925 = smul.u32 16, %s17
        %p10926 = scmp.lt.s32.totalorder %s10925, 31
        %s10927 = scalar_select %p10926, %s10925, 31
        %s10928 = smul.addr %s10927, 2
        %s10929 = smul.addr %s10928, 4
        %s10930 = scalar_lea.vmem %s5, %s10929
      $region52: #{conv_block_forward.1} parent=47 // pred_fallthru
        _
    $region48: #{conv_block_forward.1} parent=5 // pred_fallthru
      _
  $region6: #{conv_block_forward.1} parent=0 // loop_footer
    %s15 = sadd.s32 1, %s11
  $region7: #{conv_block_forward.1} parent=0 // loop_footer_branch
    %10 = sbr.rel target = $region3
  $region8: #{conv_block_forward.1} parent=0 // loop_exit
    _

</llo_original>
